<compile_context>
chip_gen: v6e
topology: v6e:2x2x1
jax: 0.10.0
libtpu: 0.0.40
codegen_flags: <defaults>
</compile_context>

<pallas_src>
import functools

import jax
import jax.numpy as jnp
from jax.experimental import pallas as pl
from jax.experimental.pallas import tpu as pltpu


# Sublane-aligned column offset of the un-padded image inside the padded VMEM scratch.
# Interior occupies W-columns [8, 8+W) -> tile-aligned (offset 8, size 16) stores.
_W_OFF = 8


# ----------------------------- Pallas kernels -----------------------------

def _conv_stack_kernel(x_ref, w1_ref, b1_ref, w2_ref, b2_ref, o_ref,
                       xp1_ref, xp2_ref, *, N, H, W, K):
    """Fused conv1+ReLU -> conv2+ReLU, entirely VMEM-resident.

    x_ref : (N, H, W, C0)      NHWC input
    w*_ref: (K, K, Cin, Cout)  HWIO weights, b*_ref: (1, Cout)
    o_ref : (N*H*W, C2)        rows in (n, h, w) order, cols = channels
    xp*_ref: zero-padded activation scratch, shape (N, H+2, _W_OFF+W+1, C)
    """

    def pad_into(dst_ref, val):
        # Zero the scratch, then write the activation at a tile-aligned interior offset.
        dst_ref[...] = jnp.zeros(dst_ref.shape, jnp.float32)
        dst_ref[:, 1:H + 1, _W_OFF:_W_OFF + W, :] = val

    def conv_relu(xp, w_ref, b_ref):
        # xp: padded activation (loaded value). Decompose the 3x3 conv into K*K shifted
        # matmuls over the channel dim (MXU path); init the accumulator from the first tap.
        cin = w_ref.shape[2]
        acc = None
        for kh in range(K):
            for kw in range(K):
                patch = xp[:, kh:kh + H, _W_OFF - 1 + kw:_W_OFF - 1 + kw + W, :]
                patch = patch.reshape(N * H * W, cin)
                part = jnp.dot(patch, w_ref[kh, kw],
                               preferred_element_type=jnp.float32)
                acc = part if acc is None else acc + part
        return jnp.maximum(acc + b_ref[...], 0.0)

    pad_into(xp1_ref, x_ref[...])
    h1 = conv_relu(xp1_ref[...], w1_ref, b1_ref)                 # (N*H*W, C1)
    pad_into(xp2_ref, h1.reshape(N, H, W, h1.shape[-1]))
    h2 = conv_relu(xp2_ref[...], w2_ref, b2_ref)                 # (N*H*W, C2)
    o_ref[...] = h2


def _mlp_stack_kernel(x_ref, w1_ref, b1_ref, w2_ref, b2_ref, o_ref):
    """Fused fc1 + ReLU + fc2 (weights stored as (in, out) == torch_weight.T)."""
    h = jnp.dot(x_ref[...], w1_ref[...], preferred_element_type=jnp.float32) + b1_ref[...]
    h = jnp.maximum(h, 0.0)
    o_ref[...] = jnp.dot(h, w2_ref[...], preferred_element_type=jnp.float32) + b2_ref[...]


# ----------------------------- wrappers -----------------------------

def conv_stack(x_nhwc, w1, b1, w2, b2):
    N, H, W, C0 = x_nhwc.shape
    K = w1.shape[0]
    C1 = w1.shape[-1]
    C2 = w2.shape[-1]
    wpad = _W_OFF + W + 1
    kernel = functools.partial(_conv_stack_kernel, N=N, H=H, W=W, K=K)
    return pl.pallas_call(
        kernel,
        out_shape=jax.ShapeDtypeStruct((N * H * W, C2), jnp.float32),
        in_specs=[pl.BlockSpec(memory_space=pltpu.MemorySpace.VMEM)] * 5,
        out_specs=pl.BlockSpec(memory_space=pltpu.MemorySpace.VMEM),
        scratch_shapes=[pltpu.VMEM((N, H + 2, wpad, C0), jnp.float32),
                        pltpu.VMEM((N, H + 2, wpad, C1), jnp.float32)],
    )(x_nhwc, w1, b1, w2, b2)


def mlp_stack(x, w1, b1, w2, b2):
    M = x.shape[0]
    out_dim = w2.shape[-1]
    return pl.pallas_call(
        _mlp_stack_kernel,
        out_shape=jax.ShapeDtypeStruct((M, out_dim), jnp.float32),
        in_specs=[pl.BlockSpec(memory_space=pltpu.MemorySpace.VMEM)] * 5,
        out_specs=pl.BlockSpec(memory_space=pltpu.MemorySpace.VMEM),
    )(x, w1, b1, w2, b2)


def model_forward(x_nchw, params):
    """Equivalent of Model.forward: conv_part -> view(batch, -1) -> mlp_part."""
    batch = x_nchw.shape[0]
    x_nhwc = jnp.transpose(x_nchw, (0, 2, 3, 1))      # tiny (8 KB) layout op
    h = conv_stack(x_nhwc, params['conv1_w'], params['conv1_b'],
                   params['conv2_w'], params['conv2_b'])          # (N*H*W, C2)
    # Row-major (N*H*W, C2) -> (N, H*W*C2): identical memory order (per-sample HWC flatten).
    # Torch's CHW flatten order is reproduced by the fc1 weight row permutation baked at init.
    flat = h.reshape(batch, -1)
    return mlp_stack(flat, params['fc1_w'], params['fc1_b'],
                     params['fc2_w'], params['fc2_b'])


# ----------------------------- deterministic params -----------------------------

def _uniform(key, shape, bound):
    return jax.random.uniform(key, shape, jnp.float32, -bound, bound)


def init_params(key):
    ks = jax.random.split(key, 8)
    # Conv layers: torch default init ~ U(-sqrt(k), sqrt(k)), k = 1/(Cin*KH*KW)
    c1_fan_in = 4 * 3 * 3
    c2_fan_in = 8 * 3 * 3
    C2, H, W = 8, 16, 16
    fc1_in, fc1_out = C2 * H * W, 32
    fc2_in, fc2_out = 32, 10

    # fc1 weight generated in torch's (C,H,W)-flattened row order (== torch_weight.T), then
    # row-permuted ONCE on the host to the kernel's (H,W,C) flatten order (zero runtime cost).
    fc1_w_chw = _uniform(ks[4], (fc1_in, fc1_out), (6.0 / (fc1_in + fc1_out)) ** 0.5)  # xavier
    fc1_w_hwc = jnp.transpose(fc1_w_chw.reshape(C2, H, W, fc1_out),
                              (1, 2, 0, 3)).reshape(fc1_in, fc1_out)

    params = {
        'conv1_w': _uniform(ks[0], (3, 3, 4, 8), (1.0 / c1_fan_in) ** 0.5),   # HWIO
        'conv1_b': _uniform(ks[1], (1, 8), (1.0 / c1_fan_in) ** 0.5),
        'conv2_w': _uniform(ks[2], (3, 3, 8, 8), (1.0 / c2_fan_in) ** 0.5),
        'conv2_b': _uniform(ks[3], (1, 8), (1.0 / c2_fan_in) ** 0.5),
        'fc1_w': fc1_w_hwc,
        'fc1_b': _uniform(ks[5], (1, fc1_out), (1.0 / fc1_in) ** 0.5),
        'fc2_w': _uniform(ks[6], (fc2_in, fc2_out), (6.0 / (fc2_in + fc2_out)) ** 0.5),  # xavier
        'fc2_b': _uniform(ks[7], (1, fc2_out), (1.0 / fc2_in) ** 0.5),
    }
    return params


if __name__ == "__main__":
    key = jax.random.PRNGKey(0)
    k_x, k_p = jax.random.split(key)
    x = jax.random.normal(k_x, (2, 4, 16, 16), jnp.float32)  # NCHW, like the torch module
    params = init_params(k_p)

    fwd = jax.jit(model_forward)
    out = jax.block_until_ready(fwd(x, params))
    assert out.shape == (2, 10), out.shape
    assert bool(jnp.all(jnp.isfinite(out)))
    print("KERNEL_OK")
</pallas_src>

<mosaic_0001>
module attributes {stable_mosaic.version = 11 : i64} {
  func.func @_conv_stack_kernel(%arg0: memref<2x16x16x4xf32, #tpu.memory_space<vmem>>, %arg1: memref<3x3x4x8xf32, #tpu.memory_space<vmem>>, %arg2: memref<1x8xf32, #tpu.memory_space<vmem>>, %arg3: memref<3x3x8x8xf32, #tpu.memory_space<vmem>>, %arg4: memref<1x8xf32, #tpu.memory_space<vmem>>, %arg5: memref<512x8xf32, #tpu.memory_space<vmem>>, %arg6: memref<2x18x25x4xf32, #tpu.memory_space<vmem>>, %arg7: memref<2x18x25x8xf32, #tpu.memory_space<vmem>>) attributes {dimension_semantics = [], scalar_prefetch = 0 : i64, scratch_operands = 2 : i64, tpu.core_type = #tpu.core_type<tc>} {
    %c0 = arith.constant 0 : index
    %c0_0 = arith.constant 0 : index
    %c0_1 = arith.constant 0 : index
    %c0_2 = arith.constant 0 : index
    %0 = vector.load %arg0[%c0, %c0_0, %c0_1, %c0_2] : memref<2x16x16x4xf32, #tpu.memory_space<vmem>>, vector<2x16x16x4xf32>
    %cst = arith.constant 0.000000e+00 : f32
    %1 = vector.broadcast %cst : f32 to vector<2x18x25x4xf32>
    %c0_3 = arith.constant 0 : index
    %c0_4 = arith.constant 0 : index
    %c0_5 = arith.constant 0 : index
    %c0_6 = arith.constant 0 : index
    %2 = vector.load %arg6[%c0_3, %c0_4, %c0_5, %c0_6] : memref<2x18x25x4xf32, #tpu.memory_space<vmem>>, vector<2x18x25x4xf32>
    tpu.vector_store %arg6[%c0_3, %c0_4, %c0_5, %c0_6], %1 {strides = array<i32>} : memref<2x18x25x4xf32, #tpu.memory_space<vmem>>, vector<2x18x25x4xf32>,
    %c0_7 = arith.constant 0 : index
    %c1 = arith.constant 1 : index
    %c8 = arith.constant 8 : index
    %c0_8 = arith.constant 0 : index
    %3 = vector.load %arg6[%c0_7, %c1, %c8, %c0_8] : memref<2x18x25x4xf32, #tpu.memory_space<vmem>>, vector<2x16x16x4xf32>
    tpu.vector_store %arg6[%c0_7, %c1, %c8, %c0_8], %0 {strides = array<i32>} : memref<2x18x25x4xf32, #tpu.memory_space<vmem>>, vector<2x16x16x4xf32>,
    %c0_9 = arith.constant 0 : index
    %c0_10 = arith.constant 0 : index
    %c0_11 = arith.constant 0 : index
    %c0_12 = arith.constant 0 : index
    %4 = vector.load %arg6[%c0_9, %c0_10, %c0_11, %c0_12] : memref<2x18x25x4xf32, #tpu.memory_space<vmem>>, vector<2x18x25x4xf32>
    %5 = vector.extract_strided_slice %4 {offsets = [0, 0, 7, 0], sizes = [2, 16, 16, 4], strides = [1, 1, 1, 1]} : vector<2x18x25x4xf32> to vector<2x16x16x4xf32>
    %6 = vector.shape_cast %5 : vector<2x16x16x4xf32> to vector<512x4xf32>
    %c0_13 = arith.constant 0 : index
    %c0_14 = arith.constant 0 : index
    %c0_15 = arith.constant 0 : index
    %c0_16 = arith.constant 0 : index
    %7 = vector.load %arg1[%c0_13, %c0_14, %c0_15, %c0_16] : memref<3x3x4x8xf32, #tpu.memory_space<vmem>>, vector<1x1x4x8xf32>
    %8 = vector.shape_cast %7 : vector<1x1x4x8xf32> to vector<4x8xf32>
    %cst_17 = arith.constant dense<0.000000e+00> : vector<512x8xf32>
    %9 = tpu.matmul %6, %8, %cst_17 {dimension_numbers = #tpu.dot_dimension_numbers<[1], [0], [0], [1], [0, 0, 1, 1], [], []>} : vector<512x4xf32>, vector<4x8xf32>, vector<512x8xf32> -> vector<512x8xf32>
    %10 = vector.extract_strided_slice %4 {offsets = [0, 0, 8, 0], sizes = [2, 16, 16, 4], strides = [1, 1, 1, 1]} : vector<2x18x25x4xf32> to vector<2x16x16x4xf32>
    %11 = vector.shape_cast %10 : vector<2x16x16x4xf32> to vector<512x4xf32>
    %c0_18 = arith.constant 0 : index
    %c1_19 = arith.constant 1 : index
    %c0_20 = arith.constant 0 : index
    %c0_21 = arith.constant 0 : index
    %12 = vector.load %arg1[%c0_18, %c1_19, %c0_20, %c0_21] : memref<3x3x4x8xf32, #tpu.memory_space<vmem>>, vector<1x1x4x8xf32>
    %13 = vector.shape_cast %12 : vector<1x1x4x8xf32> to vector<4x8xf32>
    %cst_22 = arith.constant dense<0.000000e+00> : vector<512x8xf32>
    %14 = tpu.matmul %11, %13, %cst_22 {dimension_numbers = #tpu.dot_dimension_numbers<[1], [0], [0], [1], [0, 0, 1, 1], [], []>} : vector<512x4xf32>, vector<4x8xf32>, vector<512x8xf32> -> vector<512x8xf32>
    %15 = arith.addf %9, %14 : vector<512x8xf32>
    %16 = vector.extract_strided_slice %4 {offsets = [0, 0, 9, 0], sizes = [2, 16, 16, 4], strides = [1, 1, 1, 1]} : vector<2x18x25x4xf32> to vector<2x16x16x4xf32>
    %17 = vector.shape_cast %16 : vector<2x16x16x4xf32> to vector<512x4xf32>
    %c0_23 = arith.constant 0 : index
    %c2 = arith.constant 2 : index
    %c0_24 = arith.constant 0 : index
    %c0_25 = arith.constant 0 : index
    %18 = vector.load %arg1[%c0_23, %c2, %c0_24, %c0_25] : memref<3x3x4x8xf32, #tpu.memory_space<vmem>>, vector<1x1x4x8xf32>
    %19 = vector.shape_cast %18 : vector<1x1x4x8xf32> to vector<4x8xf32>
    %cst_26 = arith.constant dense<0.000000e+00> : vector<512x8xf32>
    %20 = tpu.matmul %17, %19, %cst_26 {dimension_numbers = #tpu.dot_dimension_numbers<[1], [0], [0], [1], [0, 0, 1, 1], [], []>} : vector<512x4xf32>, vector<4x8xf32>, vector<512x8xf32> -> vector<512x8xf32>
    %21 = arith.addf %15, %20 : vector<512x8xf32>
    %22 = vector.extract_strided_slice %4 {offsets = [0, 1, 7, 0], sizes = [2, 16, 16, 4], strides = [1, 1, 1, 1]} : vector<2x18x25x4xf32> to vector<2x16x16x4xf32>
    %23 = vector.shape_cast %22 : vector<2x16x16x4xf32> to vector<512x4xf32>
    %c1_27 = arith.constant 1 : index
    %c0_28 = arith.constant 0 : index
    %c0_29 = arith.constant 0 : index
    %c0_30 = arith.constant 0 : index
    %24 = vector.load %arg1[%c1_27, %c0_28, %c0_29, %c0_30] : memref<3x3x4x8xf32, #tpu.memory_space<vmem>>, vector<1x1x4x8xf32>
    %25 = vector.shape_cast %24 : vector<1x1x4x8xf32> to vector<4x8xf32>
    %cst_31 = arith.constant dense<0.000000e+00> : vector<512x8xf32>
    %26 = tpu.matmul %23, %25, %cst_31 {dimension_numbers = #tpu.dot_dimension_numbers<[1], [0], [0], [1], [0, 0, 1, 1], [], []>} : vector<512x4xf32>, vector<4x8xf32>, vector<512x8xf32> -> vector<512x8xf32>
    %27 = arith.addf %21, %26 : vector<512x8xf32>
    %28 = vector.extract_strided_slice %4 {offsets = [0, 1, 8, 0], sizes = [2, 16, 16, 4], strides = [1, 1, 1, 1]} : vector<2x18x25x4xf32> to vector<2x16x16x4xf32>
    %29 = vector.shape_cast %28 : vector<2x16x16x4xf32> to vector<512x4xf32>
    %c1_32 = arith.constant 1 : index
    %c1_33 = arith.constant 1 : index
    %c0_34 = arith.constant 0 : index
    %c0_35 = arith.constant 0 : index
    %30 = vector.load %arg1[%c1_32, %c1_33, %c0_34, %c0_35] : memref<3x3x4x8xf32, #tpu.memory_space<vmem>>, vector<1x1x4x8xf32>
    %31 = vector.shape_cast %30 : vector<1x1x4x8xf32> to vector<4x8xf32>
    %cst_36 = arith.constant dense<0.000000e+00> : vector<512x8xf32>
    %32 = tpu.matmul %29, %31, %cst_36 {dimension_numbers = #tpu.dot_dimension_numbers<[1], [0], [0], [1], [0, 0, 1, 1], [], []>} : vector<512x4xf32>, vector<4x8xf32>, vector<512x8xf32> -> vector<512x8xf32>
    %33 = arith.addf %27, %32 : vector<512x8xf32>
    %34 = vector.extract_strided_slice %4 {offsets = [0, 1, 9, 0], sizes = [2, 16, 16, 4], strides = [1, 1, 1, 1]} : vector<2x18x25x4xf32> to vector<2x16x16x4xf32>
    %35 = vector.shape_cast %34 : vector<2x16x16x4xf32> to vector<512x4xf32>
    %c1_37 = arith.constant 1 : index
    %c2_38 = arith.constant 2 : index
    %c0_39 = arith.constant 0 : index
    %c0_40 = arith.constant 0 : index
    %36 = vector.load %arg1[%c1_37, %c2_38, %c0_39, %c0_40] : memref<3x3x4x8xf32, #tpu.memory_space<vmem>>, vector<1x1x4x8xf32>
    %37 = vector.shape_cast %36 : vector<1x1x4x8xf32> to vector<4x8xf32>
    %cst_41 = arith.constant dense<0.000000e+00> : vector<512x8xf32>
    %38 = tpu.matmul %35, %37, %cst_41 {dimension_numbers = #tpu.dot_dimension_numbers<[1], [0], [0], [1], [0, 0, 1, 1], [], []>} : vector<512x4xf32>, vector<4x8xf32>, vector<512x8xf32> -> vector<512x8xf32>
    %39 = arith.addf %33, %38 : vector<512x8xf32>
    %40 = vector.extract_strided_slice %4 {offsets = [0, 2, 7, 0], sizes = [2, 16, 16, 4], strides = [1, 1, 1, 1]} : vector<2x18x25x4xf32> to vector<2x16x16x4xf32>
    %41 = vector.shape_cast %40 : vector<2x16x16x4xf32> to vector<512x4xf32>
    %c2_42 = arith.constant 2 : index
    %c0_43 = arith.constant 0 : index
    %c0_44 = arith.constant 0 : index
    %c0_45 = arith.constant 0 : index
    %42 = vector.load %arg1[%c2_42, %c0_43, %c0_44, %c0_45] : memref<3x3x4x8xf32, #tpu.memory_space<vmem>>, vector<1x1x4x8xf32>
    %43 = vector.shape_cast %42 : vector<1x1x4x8xf32> to vector<4x8xf32>
    %cst_46 = arith.constant dense<0.000000e+00> : vector<512x8xf32>
    %44 = tpu.matmul %41, %43, %cst_46 {dimension_numbers = #tpu.dot_dimension_numbers<[1], [0], [0], [1], [0, 0, 1, 1], [], []>} : vector<512x4xf32>, vector<4x8xf32>, vector<512x8xf32> -> vector<512x8xf32>
    %45 = arith.addf %39, %44 : vector<512x8xf32>
    %46 = vector.extract_strided_slice %4 {offsets = [0, 2, 8, 0], sizes = [2, 16, 16, 4], strides = [1, 1, 1, 1]} : vector<2x18x25x4xf32> to vector<2x16x16x4xf32>
    %47 = vector.shape_cast %46 : vector<2x16x16x4xf32> to vector<512x4xf32>
    %c2_47 = arith.constant 2 : index
    %c1_48 = arith.constant 1 : index
    %c0_49 = arith.constant 0 : index
    %c0_50 = arith.constant 0 : index
    %48 = vector.load %arg1[%c2_47, %c1_48, %c0_49, %c0_50] : memref<3x3x4x8xf32, #tpu.memory_space<vmem>>, vector<1x1x4x8xf32>
    %49 = vector.shape_cast %48 : vector<1x1x4x8xf32> to vector<4x8xf32>
    %cst_51 = arith.constant dense<0.000000e+00> : vector<512x8xf32>
    %50 = tpu.matmul %47, %49, %cst_51 {dimension_numbers = #tpu.dot_dimension_numbers<[1], [0], [0], [1], [0, 0, 1, 1], [], []>} : vector<512x4xf32>, vector<4x8xf32>, vector<512x8xf32> -> vector<512x8xf32>
    %51 = arith.addf %45, %50 : vector<512x8xf32>
    %52 = vector.extract_strided_slice %4 {offsets = [0, 2, 9, 0], sizes = [2, 16, 16, 4], strides = [1, 1, 1, 1]} : vector<2x18x25x4xf32> to vector<2x16x16x4xf32>
    %53 = vector.shape_cast %52 : vector<2x16x16x4xf32> to vector<512x4xf32>
    %c2_52 = arith.constant 2 : index
    %c2_53 = arith.constant 2 : index
    %c0_54 = arith.constant 0 : index
    %c0_55 = arith.constant 0 : index
    %54 = vector.load %arg1[%c2_52, %c2_53, %c0_54, %c0_55] : memref<3x3x4x8xf32, #tpu.memory_space<vmem>>, vector<1x1x4x8xf32>
    %55 = vector.shape_cast %54 : vector<1x1x4x8xf32> to vector<4x8xf32>
    %cst_56 = arith.constant dense<0.000000e+00> : vector<512x8xf32>
    %56 = tpu.matmul %53, %55, %cst_56 {dimension_numbers = #tpu.dot_dimension_numbers<[1], [0], [0], [1], [0, 0, 1, 1], [], []>} : vector<512x4xf32>, vector<4x8xf32>, vector<512x8xf32> -> vector<512x8xf32>
    %57 = arith.addf %51, %56 : vector<512x8xf32>
    %c0_57 = arith.constant 0 : index
    %c0_58 = arith.constant 0 : index
    %58 = vector.load %arg2[%c0_57, %c0_58] : memref<1x8xf32, #tpu.memory_space<vmem>>, vector<1x8xf32>
    %59 = vector.broadcast %58 : vector<1x8xf32> to vector<512x8xf32>
    %60 = arith.addf %57, %59 : vector<512x8xf32>
    %cst_59 = arith.constant 0.000000e+00 : f32
    %61 = vector.broadcast %cst_59 : f32 to vector<512x8xf32>
    %62 = arith.maximumf %60, %61 : vector<512x8xf32>
    %63 = vector.shape_cast %62 : vector<512x8xf32> to vector<2x16x16x8xf32>
    %cst_60 = arith.constant 0.000000e+00 : f32
    %64 = vector.broadcast %cst_60 : f32 to vector<2x18x25x8xf32>
    %c0_61 = arith.constant 0 : index
    %c0_62 = arith.constant 0 : index
    %c0_63 = arith.constant 0 : index
    %c0_64 = arith.constant 0 : index
    %65 = vector.load %arg7[%c0_61, %c0_62, %c0_63, %c0_64] : memref<2x18x25x8xf32, #tpu.memory_space<vmem>>, vector<2x18x25x8xf32>
    tpu.vector_store %arg7[%c0_61, %c0_62, %c0_63, %c0_64], %64 {strides = array<i32>} : memref<2x18x25x8xf32, #tpu.memory_space<vmem>>, vector<2x18x25x8xf32>,
    %c0_65 = arith.constant 0 : index
    %c1_66 = arith.constant 1 : index
    %c8_67 = arith.constant 8 : index
    %c0_68 = arith.constant 0 : index
    %66 = vector.load %arg7[%c0_65, %c1_66, %c8_67, %c0_68] : memref<2x18x25x8xf32, #tpu.memory_space<vmem>>, vector<2x16x16x8xf32>
    tpu.vector_store %arg7[%c0_65, %c1_66, %c8_67, %c0_68], %63 {strides = array<i32>} : memref<2x18x25x8xf32, #tpu.memory_space<vmem>>, vector<2x16x16x8xf32>,
    %c0_69 = arith.constant 0 : index
    %c0_70 = arith.constant 0 : index
    %c0_71 = arith.constant 0 : index
    %c0_72 = arith.constant 0 : index
    %67 = vector.load %arg7[%c0_69, %c0_70, %c0_71, %c0_72] : memref<2x18x25x8xf32, #tpu.memory_space<vmem>>, vector<2x18x25x8xf32>
    %68 = vector.extract_strided_slice %67 {offsets = [0, 0, 7, 0], sizes = [2, 16, 16, 8], strides = [1, 1, 1, 1]} : vector<2x18x25x8xf32> to vector<2x16x16x8xf32>
    %69 = vector.shape_cast %68 : vector<2x16x16x8xf32> to vector<512x8xf32>
    %c0_73 = arith.constant 0 : index
    %c0_74 = arith.constant 0 : index
    %c0_75 = arith.constant 0 : index
    %c0_76 = arith.constant 0 : index
    %70 = vector.load %arg3[%c0_73, %c0_74, %c0_75, %c0_76] : memref<3x3x8x8xf32, #tpu.memory_space<vmem>>, vector<1x1x8x8xf32>
    %71 = vector.shape_cast %70 : vector<1x1x8x8xf32> to vector<8x8xf32>
    %cst_77 = arith.constant dense<0.000000e+00> : vector<512x8xf32>
    %72 = tpu.matmul %69, %71, %cst_77 {dimension_numbers = #tpu.dot_dimension_numbers<[1], [0], [0], [1], [0, 0, 1, 1], [], []>} : vector<512x8xf32>, vector<8x8xf32>, vector<512x8xf32> -> vector<512x8xf32>
    %73 = vector.extract_strided_slice %67 {offsets = [0, 0, 8, 0], sizes = [2, 16, 16, 8], strides = [1, 1, 1, 1]} : vector<2x18x25x8xf32> to vector<2x16x16x8xf32>
    %74 = vector.shape_cast %73 : vector<2x16x16x8xf32> to vector<512x8xf32>
    %c0_78 = arith.constant 0 : index
    %c1_79 = arith.constant 1 : index
    %c0_80 = arith.constant 0 : index
    %c0_81 = arith.constant 0 : index
    %75 = vector.load %arg3[%c0_78, %c1_79, %c0_80, %c0_81] : memref<3x3x8x8xf32, #tpu.memory_space<vmem>>, vector<1x1x8x8xf32>
    %76 = vector.shape_cast %75 : vector<1x1x8x8xf32> to vector<8x8xf32>
    %cst_82 = arith.constant dense<0.000000e+00> : vector<512x8xf32>
    %77 = tpu.matmul %74, %76, %cst_82 {dimension_numbers = #tpu.dot_dimension_numbers<[1], [0], [0], [1], [0, 0, 1, 1], [], []>} : vector<512x8xf32>, vector<8x8xf32>, vector<512x8xf32> -> vector<512x8xf32>
    %78 = arith.addf %72, %77 : vector<512x8xf32>
    %79 = vector.extract_strided_slice %67 {offsets = [0, 0, 9, 0], sizes = [2, 16, 16, 8], strides = [1, 1, 1, 1]} : vector<2x18x25x8xf32> to vector<2x16x16x8xf32>
    %80 = vector.shape_cast %79 : vector<2x16x16x8xf32> to vector<512x8xf32>
    %c0_83 = arith.constant 0 : index
    %c2_84 = arith.constant 2 : index
    %c0_85 = arith.constant 0 : index
    %c0_86 = arith.constant 0 : index
    %81 = vector.load %arg3[%c0_83, %c2_84, %c0_85, %c0_86] : memref<3x3x8x8xf32, #tpu.memory_space<vmem>>, vector<1x1x8x8xf32>
    %82 = vector.shape_cast %81 : vector<1x1x8x8xf32> to vector<8x8xf32>
    %cst_87 = arith.constant dense<0.000000e+00> : vector<512x8xf32>
    %83 = tpu.matmul %80, %82, %cst_87 {dimension_numbers = #tpu.dot_dimension_numbers<[1], [0], [0], [1], [0, 0, 1, 1], [], []>} : vector<512x8xf32>, vector<8x8xf32>, vector<512x8xf32> -> vector<512x8xf32>
    %84 = arith.addf %78, %83 : vector<512x8xf32>
    %85 = vector.extract_strided_slice %67 {offsets = [0, 1, 7, 0], sizes = [2, 16, 16, 8], strides = [1, 1, 1, 1]} : vector<2x18x25x8xf32> to vector<2x16x16x8xf32>
    %86 = vector.shape_cast %85 : vector<2x16x16x8xf32> to vector<512x8xf32>
    %c1_88 = arith.constant 1 : index
    %c0_89 = arith.constant 0 : index
    %c0_90 = arith.constant 0 : index
    %c0_91 = arith.constant 0 : index
    %87 = vector.load %arg3[%c1_88, %c0_89, %c0_90, %c0_91] : memref<3x3x8x8xf32, #tpu.memory_space<vmem>>, vector<1x1x8x8xf32>
    %88 = vector.shape_cast %87 : vector<1x1x8x8xf32> to vector<8x8xf32>
    %cst_92 = arith.constant dense<0.000000e+00> : vector<512x8xf32>
    %89 = tpu.matmul %86, %88, %cst_92 {dimension_numbers = #tpu.dot_dimension_numbers<[1], [0], [0], [1], [0, 0, 1, 1], [], []>} : vector<512x8xf32>, vector<8x8xf32>, vector<512x8xf32> -> vector<512x8xf32>
    %90 = arith.addf %84, %89 : vector<512x8xf32>
    %91 = vector.extract_strided_slice %67 {offsets = [0, 1, 8, 0], sizes = [2, 16, 16, 8], strides = [1, 1, 1, 1]} : vector<2x18x25x8xf32> to vector<2x16x16x8xf32>
    %92 = vector.shape_cast %91 : vector<2x16x16x8xf32> to vector<512x8xf32>
    %c1_93 = arith.constant 1 : index
    %c1_94 = arith.constant 1 : index
    %c0_95 = arith.constant 0 : index
    %c0_96 = arith.constant 0 : index
    %93 = vector.load %arg3[%c1_93, %c1_94, %c0_95, %c0_96] : memref<3x3x8x8xf32, #tpu.memory_space<vmem>>, vector<1x1x8x8xf32>
    %94 = vector.shape_cast %93 : vector<1x1x8x8xf32> to vector<8x8xf32>
    %cst_97 = arith.constant dense<0.000000e+00> : vector<512x8xf32>
    %95 = tpu.matmul %92, %94, %cst_97 {dimension_numbers = #tpu.dot_dimension_numbers<[1], [0], [0], [1], [0, 0, 1, 1], [], []>} : vector<512x8xf32>, vector<8x8xf32>, vector<512x8xf32> -> vector<512x8xf32>
    %96 = arith.addf %90, %95 : vector<512x8xf32>
    %97 = vector.extract_strided_slice %67 {offsets = [0, 1, 9, 0], sizes = [2, 16, 16, 8], strides = [1, 1, 1, 1]} : vector<2x18x25x8xf32> to vector<2x16x16x8xf32>
    %98 = vector.shape_cast %97 : vector<2x16x16x8xf32> to vector<512x8xf32>
    %c1_98 = arith.constant 1 : index
    %c2_99 = arith.constant 2 : index
    %c0_100 = arith.constant 0 : index
    %c0_101 = arith.constant 0 : index
    %99 = vector.load %arg3[%c1_98, %c2_99, %c0_100, %c0_101] : memref<3x3x8x8xf32, #tpu.memory_space<vmem>>, vector<1x1x8x8xf32>
    %100 = vector.shape_cast %99 : vector<1x1x8x8xf32> to vector<8x8xf32>
    %cst_102 = arith.constant dense<0.000000e+00> : vector<512x8xf32>
    %101 = tpu.matmul %98, %100, %cst_102 {dimension_numbers = #tpu.dot_dimension_numbers<[1], [0], [0], [1], [0, 0, 1, 1], [], []>} : vector<512x8xf32>, vector<8x8xf32>, vector<512x8xf32> -> vector<512x8xf32>
    %102 = arith.addf %96, %101 : vector<512x8xf32>
    %103 = vector.extract_strided_slice %67 {offsets = [0, 2, 7, 0], sizes = [2, 16, 16, 8], strides = [1, 1, 1, 1]} : vector<2x18x25x8xf32> to vector<2x16x16x8xf32>
    %104 = vector.shape_cast %103 : vector<2x16x16x8xf32> to vector<512x8xf32>
    %c2_103 = arith.constant 2 : index
    %c0_104 = arith.constant 0 : index
    %c0_105 = arith.constant 0 : index
    %c0_106 = arith.constant 0 : index
    %105 = vector.load %arg3[%c2_103, %c0_104, %c0_105, %c0_106] : memref<3x3x8x8xf32, #tpu.memory_space<vmem>>, vector<1x1x8x8xf32>
    %106 = vector.shape_cast %105 : vector<1x1x8x8xf32> to vector<8x8xf32>
    %cst_107 = arith.constant dense<0.000000e+00> : vector<512x8xf32>
    %107 = tpu.matmul %104, %106, %cst_107 {dimension_numbers = #tpu.dot_dimension_numbers<[1], [0], [0], [1], [0, 0, 1, 1], [], []>} : vector<512x8xf32>, vector<8x8xf32>, vector<512x8xf32> -> vector<512x8xf32>
    %108 = arith.addf %102, %107 : vector<512x8xf32>
    %109 = vector.extract_strided_slice %67 {offsets = [0, 2, 8, 0], sizes = [2, 16, 16, 8], strides = [1, 1, 1, 1]} : vector<2x18x25x8xf32> to vector<2x16x16x8xf32>
    %110 = vector.shape_cast %109 : vector<2x16x16x8xf32> to vector<512x8xf32>
    %c2_108 = arith.constant 2 : index
    %c1_109 = arith.constant 1 : index
    %c0_110 = arith.constant 0 : index
    %c0_111 = arith.constant 0 : index
    %111 = vector.load %arg3[%c2_108, %c1_109, %c0_110, %c0_111] : memref<3x3x8x8xf32, #tpu.memory_space<vmem>>, vector<1x1x8x8xf32>
    %112 = vector.shape_cast %111 : vector<1x1x8x8xf32> to vector<8x8xf32>
    %cst_112 = arith.constant dense<0.000000e+00> : vector<512x8xf32>
    %113 = tpu.matmul %110, %112, %cst_112 {dimension_numbers = #tpu.dot_dimension_numbers<[1], [0], [0], [1], [0, 0, 1, 1], [], []>} : vector<512x8xf32>, vector<8x8xf32>, vector<512x8xf32> -> vector<512x8xf32>
    %114 = arith.addf %108, %113 : vector<512x8xf32>
    %115 = vector.extract_strided_slice %67 {offsets = [0, 2, 9, 0], sizes = [2, 16, 16, 8], strides = [1, 1, 1, 1]} : vector<2x18x25x8xf32> to vector<2x16x16x8xf32>
    %116 = vector.shape_cast %115 : vector<2x16x16x8xf32> to vector<512x8xf32>
    %c2_113 = arith.constant 2 : index
    %c2_114 = arith.constant 2 : index
    %c0_115 = arith.constant 0 : index
    %c0_116 = arith.constant 0 : index
    %117 = vector.load %arg3[%c2_113, %c2_114, %c0_115, %c0_116] : memref<3x3x8x8xf32, #tpu.memory_space<vmem>>, vector<1x1x8x8xf32>
    %118 = vector.shape_cast %117 : vector<1x1x8x8xf32> to vector<8x8xf32>
    %cst_117 = arith.constant dense<0.000000e+00> : vector<512x8xf32>
    %119 = tpu.matmul %116, %118, %cst_117 {dimension_numbers = #tpu.dot_dimension_numbers<[1], [0], [0], [1], [0, 0, 1, 1], [], []>} : vector<512x8xf32>, vector<8x8xf32>, vector<512x8xf32> -> vector<512x8xf32>
    %120 = arith.addf %114, %119 : vector<512x8xf32>
    %c0_118 = arith.constant 0 : index
    %c0_119 = arith.constant 0 : index
    %121 = vector.load %arg4[%c0_118, %c0_119] : memref<1x8xf32, #tpu.memory_space<vmem>>, vector<1x8xf32>
    %122 = vector.broadcast %121 : vector<1x8xf32> to vector<512x8xf32>
    %123 = arith.addf %120, %122 : vector<512x8xf32>
    %cst_120 = arith.constant 0.000000e+00 : f32
    %124 = vector.broadcast %cst_120 : f32 to vector<512x8xf32>
    %125 = arith.maximumf %123, %124 : vector<512x8xf32>
    %c0_121 = arith.constant 0 : index
    %c0_122 = arith.constant 0 : index
    %126 = vector.load %arg5[%c0_121, %c0_122] : memref<512x8xf32, #tpu.memory_space<vmem>>, vector<512x8xf32>
    tpu.vector_store %arg5[%c0_121, %c0_122], %125 {strides = array<i32>} : memref<512x8xf32, #tpu.memory_space<vmem>>, vector<512x8xf32>,
    return
  }
}

module attributes {stable_mosaic.version = 11 : i64} {
  func.func @_mlp_stack_kernel(%arg0: memref<2x2048xf32, #tpu.memory_space<vmem>>, %arg1: memref<2048x32xf32, #tpu.memory_space<vmem>>, %arg2: memref<1x32xf32, #tpu.memory_space<vmem>>, %arg3: memref<32x10xf32, #tpu.memory_space<vmem>>, %arg4: memref<1x10xf32, #tpu.memory_space<vmem>>, %arg5: memref<2x10xf32, #tpu.memory_space<vmem>>) attributes {dimension_semantics = [], scalar_prefetch = 0 : i64, scratch_operands = 0 : i64, tpu.core_type = #tpu.core_type<tc>} {
    %c0 = arith.constant 0 : index
    %c0_0 = arith.constant 0 : index
    %0 = vector.load %arg0[%c0, %c0_0] : memref<2x2048xf32, #tpu.memory_space<vmem>>, vector<2x2048xf32>
    %c0_1 = arith.constant 0 : index
    %c0_2 = arith.constant 0 : index
    %1 = vector.load %arg1[%c0_1, %c0_2] : memref<2048x32xf32, #tpu.memory_space<vmem>>, vector<2048x32xf32>
    %cst = arith.constant dense<0.000000e+00> : vector<2x32xf32>
    %2 = tpu.matmul %0, %1, %cst {dimension_numbers = #tpu.dot_dimension_numbers<[1], [0], [0], [1], [0, 0, 1, 1], [], []>} : vector<2x2048xf32>, vector<2048x32xf32>, vector<2x32xf32> -> vector<2x32xf32>
    %c0_3 = arith.constant 0 : index
    %c0_4 = arith.constant 0 : index
    %3 = vector.load %arg2[%c0_3, %c0_4] : memref<1x32xf32, #tpu.memory_space<vmem>>, vector<1x32xf32>
    %4 = vector.broadcast %3 : vector<1x32xf32> to vector<2x32xf32>
    %5 = arith.addf %2, %4 : vector<2x32xf32>
    %cst_5 = arith.constant 0.000000e+00 : f32
    %6 = vector.broadcast %cst_5 : f32 to vector<2x32xf32>
    %7 = arith.maximumf %5, %6 : vector<2x32xf32>
    %c0_6 = arith.constant 0 : index
    %c0_7 = arith.constant 0 : index
    %8 = vector.load %arg3[%c0_6, %c0_7] : memref<32x10xf32, #tpu.memory_space<vmem>>, vector<32x10xf32>
    %cst_8 = arith.constant dense<0.000000e+00> : vector<2x10xf32>
    %9 = tpu.matmul %7, %8, %cst_8 {dimension_numbers = #tpu.dot_dimension_numbers<[1], [0], [0], [1], [0, 0, 1, 1], [], []>} : vector<2x32xf32>, vector<32x10xf32>, vector<2x10xf32> -> vector<2x10xf32>
    %c0_9 = arith.constant 0 : index
    %c0_10 = arith.constant 0 : index
    %10 = vector.load %arg4[%c0_9, %c0_10] : memref<1x10xf32, #tpu.memory_space<vmem>>, vector<1x10xf32>
    %11 = vector.broadcast %10 : vector<1x10xf32> to vector<2x10xf32>
    %12 = arith.addf %9, %11 : vector<2x10xf32>
    %c0_11 = arith.constant 0 : index
    %c0_12 = arith.constant 0 : index
    %13 = vector.load %arg5[%c0_11, %c0_12] : memref<2x10xf32, #tpu.memory_space<vmem>>, vector<2x10xf32>
    tpu.vector_store %arg5[%c0_11, %c0_12], %12 {strides = array<i32>} : memref<2x10xf32, #tpu.memory_space<vmem>>, vector<2x10xf32>,
    return
  }
}

</mosaic_0001>

<llo_original>
// kernel: model_forward.3
$region0: #{model_forward.3}
  #allocation0 [shape = 'u32[]', space=smem, size = 0x4, offset = 0x4, fixed_abs, tag = 'smem constant byte address 0x4 - core index']
  #allocation1 [shape = 'u32[144,128]{1,0:T(1,128)}', space=vmem, size = 0x12000, scoped, tag = 'internal scratch']
  %s0 = inlined_call_operand.vmem [shape: f32[2,2048], index: 0, kind: input, shape index: {}]
  %s1 = inlined_call_operand.vmem [shape: f32[2048,32], index: 1, kind: input, shape index: {}]
  %s2 = inlined_call_operand.vmem [shape: f32[1,32], index: 2, kind: input, shape index: {}]
  %s3 = inlined_call_operand.vmem [shape: f32[32,10], index: 3, kind: input, shape index: {}]
  %s4 = inlined_call_operand.vmem [shape: f32[1,10], index: 4, kind: input, shape index: {}]
  %s5 = inlined_call_operand.hbm [shape: f32[2,10], index: 5, kind: output, shape index: {}]
  %s6 = sld [smem:[#allocation0]]
  $region30: #{model_forward.3} parent=0
    _
  %s8 = ssub.s32 1, %s6
  %s9 = scalar_select 0, %s8, %s6
  $region1: #{model_forward.3} parent=0
    #allocation2 [shape = 'u8[1024]{0}', space=vmem, size = 0x400, scoped, tag = 'output window, operand 0, single buffered']
    #allocation3 [shape = 's32[1]{0}', space=sflag, size = 0x4, scoped, tag = 'scoped memory for model_forward.3']
    %10 = vsyncpa [#allocation3], 0
    // Predicated region
    $region2: #{model_forward.3} parent=1 // pred_check
      _
    $region3: #{model_forward.3} parent=1 // pred_check_branch
      %12 = sbr.rel (0) target = $region5
    $region4: #{model_forward.3} parent=1 // pred_region
      _
    $region5: #{model_forward.3} parent=1 // pred_fallthru
      _
    // Predicated region
    $region6: #{model_forward.3} parent=1 // pred_check
      _
    $region7: #{model_forward.3} parent=1 // pred_check_branch
      %14 = sbr.rel (0) target = $region9
    $region8: #{model_forward.3} parent=1 // pred_region
      _
    $region9: #{model_forward.3} parent=1 // pred_fallthru
      _
    // Predicated region
    $region10: #{model_forward.3} parent=1 // pred_check
      _
    $region11: #{model_forward.3} parent=1 // pred_check_branch
      %16 = sbr.rel (0) target = $region13
    $region12: #{model_forward.3} parent=1 // pred_region
      _
    $region13: #{model_forward.3} parent=1 // pred_fallthru
      _
    // Predicated region
    $region14: #{model_forward.3} parent=1 // pred_check
      _
    $region15: #{model_forward.3} parent=1 // pred_check_branch
      %18 = sbr.rel (0) target = $region17
    $region16: #{model_forward.3} parent=1 // pred_region
      _
    $region17: #{model_forward.3} parent=1 // pred_fallthru
      _
    // Predicated region
    $region18: #{model_forward.3} parent=1 // pred_check
      _
    $region19: #{model_forward.3} parent=1 // pred_check_branch
      %20 = sbr.rel (0) target = $region21
    $region20: #{model_forward.3} parent=1 // pred_region
      _
    $region21: #{model_forward.3} parent=1 // pred_fallthru
      _
    %v21 = vld [vmem:[%s0] sm:$0xff]
    %v22 = vld [vmem:[%s0 + $0x8] sm:$0xff]
    %v23 = vld [vmem:[%s0 + $0x10] sm:$0xff]
    %v24 = vld [vmem:[%s0 + $0x18] sm:$0xff]
    %v25 = vld [vmem:[%s1] sm:$0xff]
    %v26 = vld [vmem:[%s1 + $0x8] sm:$0xff]
    %v27 = vld [vmem:[%s1 + $0x10] sm:$0xff]
    %v28 = vld [vmem:[%s1 + $0x18] sm:$0xff]
    %v29 = vld [vmem:[%s1 + $0x20] sm:$0xff]
    %v30 = vld [vmem:[%s1 + $0x28] sm:$0xff]
    %v31 = vld [vmem:[%s1 + $0x30] sm:$0xff]
    %v32 = vld [vmem:[%s1 + $0x38] sm:$0xff]
    %v33 = vld [vmem:[%s1 + $0x40] sm:$0xff]
    %v34 = vld [vmem:[%s1 + $0x48] sm:$0xff]
    %v35 = vld [vmem:[%s1 + $0x50] sm:$0xff]
    %v36 = vld [vmem:[%s1 + $0x58] sm:$0xff]
    %v37 = vld [vmem:[%s1 + $0x60] sm:$0xff]
    %v38 = vld [vmem:[%s1 + $0x68] sm:$0xff]
    %v39 = vld [vmem:[%s1 + $0x70] sm:$0xff]
    %v40 = vld [vmem:[%s1 + $0x78] sm:$0xff]
    %v41 = vld [vmem:[%s1 + $0x80] sm:$0xff]
    %v42 = vld [vmem:[%s1 + $0x88] sm:$0xff]
    %v43 = vld [vmem:[%s1 + $0x90] sm:$0xff]
    %v44 = vld [vmem:[%s1 + $0x98] sm:$0xff]
    %v45 = vld [vmem:[%s1 + $0xa0] sm:$0xff]
    %v46 = vld [vmem:[%s1 + $0xa8] sm:$0xff]
    %v47 = vld [vmem:[%s1 + $0xb0] sm:$0xff]
    %v48 = vld [vmem:[%s1 + $0xb8] sm:$0xff]
    %v49 = vld [vmem:[%s1 + $0xc0] sm:$0xff]
    %v50 = vld [vmem:[%s1 + $0xc8] sm:$0xff]
    %v51 = vld [vmem:[%s1 + $0xd0] sm:$0xff]
    %v52 = vld [vmem:[%s1 + $0xd8] sm:$0xff]
    %v53 = vld [vmem:[%s1 + $0xe0] sm:$0xff]
    %v54 = vld [vmem:[%s1 + $0xe8] sm:$0xff]
    %v55 = vld [vmem:[%s1 + $0xf0] sm:$0xff]
    %v56 = vld [vmem:[%s1 + $0xf8] sm:$0xff]
    %v57 = vld [vmem:[%s1 + $0x100] sm:$0xff]
    %v58 = vld [vmem:[%s1 + $0x108] sm:$0xff]
    %v59 = vld [vmem:[%s1 + $0x110] sm:$0xff]
    %v60 = vld [vmem:[%s1 + $0x118] sm:$0xff]
    %v61 = vld [vmem:[%s1 + $0x120] sm:$0xff]
    %v62 = vld [vmem:[%s1 + $0x128] sm:$0xff]
    %v63 = vld [vmem:[%s1 + $0x130] sm:$0xff]
    %v64 = vld [vmem:[%s1 + $0x138] sm:$0xff]
    %v65 = vld [vmem:[%s1 + $0x140] sm:$0xff]
    %v66 = vld [vmem:[%s1 + $0x148] sm:$0xff]
    %v67 = vld [vmem:[%s1 + $0x150] sm:$0xff]
    %v68 = vld [vmem:[%s1 + $0x158] sm:$0xff]
    %v69 = vld [vmem:[%s1 + $0x160] sm:$0xff]
    %v70 = vld [vmem:[%s1 + $0x168] sm:$0xff]
    %v71 = vld [vmem:[%s1 + $0x170] sm:$0xff]
    %v72 = vld [vmem:[%s1 + $0x178] sm:$0xff]
    %v73 = vld [vmem:[%s1 + $0x180] sm:$0xff]
    %v74 = vld [vmem:[%s1 + $0x188] sm:$0xff]
    %v75 = vld [vmem:[%s1 + $0x190] sm:$0xff]
    %v76 = vld [vmem:[%s1 + $0x198] sm:$0xff]
    %v77 = vld [vmem:[%s1 + $0x1a0] sm:$0xff]
    %v78 = vld [vmem:[%s1 + $0x1a8] sm:$0xff]
    %v79 = vld [vmem:[%s1 + $0x1b0] sm:$0xff]
    %v80 = vld [vmem:[%s1 + $0x1b8] sm:$0xff]
    %v81 = vld [vmem:[%s1 + $0x1c0] sm:$0xff]
    %v82 = vld [vmem:[%s1 + $0x1c8] sm:$0xff]
    %v83 = vld [vmem:[%s1 + $0x1d0] sm:$0xff]
    %v84 = vld [vmem:[%s1 + $0x1d8] sm:$0xff]
    %v85 = vld [vmem:[%s1 + $0x1e0] sm:$0xff]
    %v86 = vld [vmem:[%s1 + $0x1e8] sm:$0xff]
    %v87 = vld [vmem:[%s1 + $0x1f0] sm:$0xff]
    %v88 = vld [vmem:[%s1 + $0x1f8] sm:$0xff]
    %v89 = vld [vmem:[%s1 + $0x200] sm:$0xff]
    %v90 = vld [vmem:[%s1 + $0x208] sm:$0xff]
    %v91 = vld [vmem:[%s1 + $0x210] sm:$0xff]
    %v92 = vld [vmem:[%s1 + $0x218] sm:$0xff]
    %v93 = vld [vmem:[%s1 + $0x220] sm:$0xff]
    %v94 = vld [vmem:[%s1 + $0x228] sm:$0xff]
    %v95 = vld [vmem:[%s1 + $0x230] sm:$0xff]
    %v96 = vld [vmem:[%s1 + $0x238] sm:$0xff]
    %v97 = vld [vmem:[%s1 + $0x240] sm:$0xff]
    %v98 = vld [vmem:[%s1 + $0x248] sm:$0xff]
    %v99 = vld [vmem:[%s1 + $0x250] sm:$0xff]
    %v100 = vld [vmem:[%s1 + $0x258] sm:$0xff]
    %v101 = vld [vmem:[%s1 + $0x260] sm:$0xff]
    %v102 = vld [vmem:[%s1 + $0x268] sm:$0xff]
    %v103 = vld [vmem:[%s1 + $0x270] sm:$0xff]
    %v104 = vld [vmem:[%s1 + $0x278] sm:$0xff]
    %v105 = vld [vmem:[%s1 + $0x280] sm:$0xff]
    %v106 = vld [vmem:[%s1 + $0x288] sm:$0xff]
    %v107 = vld [vmem:[%s1 + $0x290] sm:$0xff]
    %v108 = vld [vmem:[%s1 + $0x298] sm:$0xff]
    %v109 = vld [vmem:[%s1 + $0x2a0] sm:$0xff]
    %v110 = vld [vmem:[%s1 + $0x2a8] sm:$0xff]
    %v111 = vld [vmem:[%s1 + $0x2b0] sm:$0xff]
    %v112 = vld [vmem:[%s1 + $0x2b8] sm:$0xff]
    %v113 = vld [vmem:[%s1 + $0x2c0] sm:$0xff]
    %v114 = vld [vmem:[%s1 + $0x2c8] sm:$0xff]
    %v115 = vld [vmem:[%s1 + $0x2d0] sm:$0xff]
    %v116 = vld [vmem:[%s1 + $0x2d8] sm:$0xff]
    %v117 = vld [vmem:[%s1 + $0x2e0] sm:$0xff]
    %v118 = vld [vmem:[%s1 + $0x2e8] sm:$0xff]
    %v119 = vld [vmem:[%s1 + $0x2f0] sm:$0xff]
    %v120 = vld [vmem:[%s1 + $0x2f8] sm:$0xff]
    %v121 = vld [vmem:[%s1 + $0x300] sm:$0xff]
    %v122 = vld [vmem:[%s1 + $0x308] sm:$0xff]
    %v123 = vld [vmem:[%s1 + $0x310] sm:$0xff]
    %v124 = vld [vmem:[%s1 + $0x318] sm:$0xff]
    %v125 = vld [vmem:[%s1 + $0x320] sm:$0xff]
    %v126 = vld [vmem:[%s1 + $0x328] sm:$0xff]
    %v127 = vld [vmem:[%s1 + $0x330] sm:$0xff]
    %v128 = vld [vmem:[%s1 + $0x338] sm:$0xff]
    %v129 = vld [vmem:[%s1 + $0x340] sm:$0xff]
    %v130 = vld [vmem:[%s1 + $0x348] sm:$0xff]
    %v131 = vld [vmem:[%s1 + $0x350] sm:$0xff]
    %v132 = vld [vmem:[%s1 + $0x358] sm:$0xff]
    %v133 = vld [vmem:[%s1 + $0x360] sm:$0xff]
    %v134 = vld [vmem:[%s1 + $0x368] sm:$0xff]
    %v135 = vld [vmem:[%s1 + $0x370] sm:$0xff]
    %v136 = vld [vmem:[%s1 + $0x378] sm:$0xff]
    %v137 = vld [vmem:[%s1 + $0x380] sm:$0xff]
    %v138 = vld [vmem:[%s1 + $0x388] sm:$0xff]
    %v139 = vld [vmem:[%s1 + $0x390] sm:$0xff]
    %v140 = vld [vmem:[%s1 + $0x398] sm:$0xff]
    %v141 = vld [vmem:[%s1 + $0x3a0] sm:$0xff]
    %v142 = vld [vmem:[%s1 + $0x3a8] sm:$0xff]
    %v143 = vld [vmem:[%s1 + $0x3b0] sm:$0xff]
    %v144 = vld [vmem:[%s1 + $0x3b8] sm:$0xff]
    %v145 = vld [vmem:[%s1 + $0x3c0] sm:$0xff]
    %v146 = vld [vmem:[%s1 + $0x3c8] sm:$0xff]
    %v147 = vld [vmem:[%s1 + $0x3d0] sm:$0xff]
    %v148 = vld [vmem:[%s1 + $0x3d8] sm:$0xff]
    %v149 = vld [vmem:[%s1 + $0x3e0] sm:$0xff]
    %v150 = vld [vmem:[%s1 + $0x3e8] sm:$0xff]
    %v151 = vld [vmem:[%s1 + $0x3f0] sm:$0xff]
    %v152 = vld [vmem:[%s1 + $0x3f8] sm:$0xff]
    %v153 = vld [vmem:[%s1 + $0x400] sm:$0xff]
    %v154 = vld [vmem:[%s1 + $0x408] sm:$0xff]
    %v155 = vld [vmem:[%s1 + $0x410] sm:$0xff]
    %v156 = vld [vmem:[%s1 + $0x418] sm:$0xff]
    %v157 = vld [vmem:[%s1 + $0x420] sm:$0xff]
    %v158 = vld [vmem:[%s1 + $0x428] sm:$0xff]
    %v159 = vld [vmem:[%s1 + $0x430] sm:$0xff]
    %v160 = vld [vmem:[%s1 + $0x438] sm:$0xff]
    %v161 = vld [vmem:[%s1 + $0x440] sm:$0xff]
    %v162 = vld [vmem:[%s1 + $0x448] sm:$0xff]
    %v163 = vld [vmem:[%s1 + $0x450] sm:$0xff]
    %v164 = vld [vmem:[%s1 + $0x458] sm:$0xff]
    %v165 = vld [vmem:[%s1 + $0x460] sm:$0xff]
    %v166 = vld [vmem:[%s1 + $0x468] sm:$0xff]
    %v167 = vld [vmem:[%s1 + $0x470] sm:$0xff]
    %v168 = vld [vmem:[%s1 + $0x478] sm:$0xff]
    %v169 = vld [vmem:[%s1 + $0x480] sm:$0xff]
    %v170 = vld [vmem:[%s1 + $0x488] sm:$0xff]
    %v171 = vld [vmem:[%s1 + $0x490] sm:$0xff]
    %v172 = vld [vmem:[%s1 + $0x498] sm:$0xff]
    %v173 = vld [vmem:[%s1 + $0x4a0] sm:$0xff]
    %v174 = vld [vmem:[%s1 + $0x4a8] sm:$0xff]
    %v175 = vld [vmem:[%s1 + $0x4b0] sm:$0xff]
    %v176 = vld [vmem:[%s1 + $0x4b8] sm:$0xff]
    %v177 = vld [vmem:[%s1 + $0x4c0] sm:$0xff]
    %v178 = vld [vmem:[%s1 + $0x4c8] sm:$0xff]
    %v179 = vld [vmem:[%s1 + $0x4d0] sm:$0xff]
    %v180 = vld [vmem:[%s1 + $0x4d8] sm:$0xff]
    %v181 = vld [vmem:[%s1 + $0x4e0] sm:$0xff]
    %v182 = vld [vmem:[%s1 + $0x4e8] sm:$0xff]
    %v183 = vld [vmem:[%s1 + $0x4f0] sm:$0xff]
    %v184 = vld [vmem:[%s1 + $0x4f8] sm:$0xff]
    %v185 = vld [vmem:[%s1 + $0x500] sm:$0xff]
    %v186 = vld [vmem:[%s1 + $0x508] sm:$0xff]
    %v187 = vld [vmem:[%s1 + $0x510] sm:$0xff]
    %v188 = vld [vmem:[%s1 + $0x518] sm:$0xff]
    %v189 = vld [vmem:[%s1 + $0x520] sm:$0xff]
    %v190 = vld [vmem:[%s1 + $0x528] sm:$0xff]
    %v191 = vld [vmem:[%s1 + $0x530] sm:$0xff]
    %v192 = vld [vmem:[%s1 + $0x538] sm:$0xff]
    %v193 = vld [vmem:[%s1 + $0x540] sm:$0xff]
    %v194 = vld [vmem:[%s1 + $0x548] sm:$0xff]
    %v195 = vld [vmem:[%s1 + $0x550] sm:$0xff]
    %v196 = vld [vmem:[%s1 + $0x558] sm:$0xff]
    %v197 = vld [vmem:[%s1 + $0x560] sm:$0xff]
    %v198 = vld [vmem:[%s1 + $0x568] sm:$0xff]
    %v199 = vld [vmem:[%s1 + $0x570] sm:$0xff]
    %v200 = vld [vmem:[%s1 + $0x578] sm:$0xff]
    %v201 = vld [vmem:[%s1 + $0x580] sm:$0xff]
    %v202 = vld [vmem:[%s1 + $0x588] sm:$0xff]
    %v203 = vld [vmem:[%s1 + $0x590] sm:$0xff]
    %v204 = vld [vmem:[%s1 + $0x598] sm:$0xff]
    %v205 = vld [vmem:[%s1 + $0x5a0] sm:$0xff]
    %v206 = vld [vmem:[%s1 + $0x5a8] sm:$0xff]
    %v207 = vld [vmem:[%s1 + $0x5b0] sm:$0xff]
    %v208 = vld [vmem:[%s1 + $0x5b8] sm:$0xff]
    %v209 = vld [vmem:[%s1 + $0x5c0] sm:$0xff]
    %v210 = vld [vmem:[%s1 + $0x5c8] sm:$0xff]
    %v211 = vld [vmem:[%s1 + $0x5d0] sm:$0xff]
    %v212 = vld [vmem:[%s1 + $0x5d8] sm:$0xff]
    %v213 = vld [vmem:[%s1 + $0x5e0] sm:$0xff]
    %v214 = vld [vmem:[%s1 + $0x5e8] sm:$0xff]
    %v215 = vld [vmem:[%s1 + $0x5f0] sm:$0xff]
    %v216 = vld [vmem:[%s1 + $0x5f8] sm:$0xff]
    %v217 = vld [vmem:[%s1 + $0x600] sm:$0xff]
    %v218 = vld [vmem:[%s1 + $0x608] sm:$0xff]
    %v219 = vld [vmem:[%s1 + $0x610] sm:$0xff]
    %v220 = vld [vmem:[%s1 + $0x618] sm:$0xff]
    %v221 = vld [vmem:[%s1 + $0x620] sm:$0xff]
    %v222 = vld [vmem:[%s1 + $0x628] sm:$0xff]
    %v223 = vld [vmem:[%s1 + $0x630] sm:$0xff]
    %v224 = vld [vmem:[%s1 + $0x638] sm:$0xff]
    %v225 = vld [vmem:[%s1 + $0x640] sm:$0xff]
    %v226 = vld [vmem:[%s1 + $0x648] sm:$0xff]
    %v227 = vld [vmem:[%s1 + $0x650] sm:$0xff]
    %v228 = vld [vmem:[%s1 + $0x658] sm:$0xff]
    %v229 = vld [vmem:[%s1 + $0x660] sm:$0xff]
    %v230 = vld [vmem:[%s1 + $0x668] sm:$0xff]
    %v231 = vld [vmem:[%s1 + $0x670] sm:$0xff]
    %v232 = vld [vmem:[%s1 + $0x678] sm:$0xff]
    %v233 = vld [vmem:[%s1 + $0x680] sm:$0xff]
    %v234 = vld [vmem:[%s1 + $0x688] sm:$0xff]
    %v235 = vld [vmem:[%s1 + $0x690] sm:$0xff]
    %v236 = vld [vmem:[%s1 + $0x698] sm:$0xff]
    %v237 = vld [vmem:[%s1 + $0x6a0] sm:$0xff]
    %v238 = vld [vmem:[%s1 + $0x6a8] sm:$0xff]
    %v239 = vld [vmem:[%s1 + $0x6b0] sm:$0xff]
    %v240 = vld [vmem:[%s1 + $0x6b8] sm:$0xff]
    %v241 = vld [vmem:[%s1 + $0x6c0] sm:$0xff]
    %v242 = vld [vmem:[%s1 + $0x6c8] sm:$0xff]
    %v243 = vld [vmem:[%s1 + $0x6d0] sm:$0xff]
    %v244 = vld [vmem:[%s1 + $0x6d8] sm:$0xff]
    %v245 = vld [vmem:[%s1 + $0x6e0] sm:$0xff]
    %v246 = vld [vmem:[%s1 + $0x6e8] sm:$0xff]
    %v247 = vld [vmem:[%s1 + $0x6f0] sm:$0xff]
    %v248 = vld [vmem:[%s1 + $0x6f8] sm:$0xff]
    %v249 = vld [vmem:[%s1 + $0x700] sm:$0xff]
    %v250 = vld [vmem:[%s1 + $0x708] sm:$0xff]
    %v251 = vld [vmem:[%s1 + $0x710] sm:$0xff]
    %v252 = vld [vmem:[%s1 + $0x718] sm:$0xff]
    %v253 = vld [vmem:[%s1 + $0x720] sm:$0xff]
    %v254 = vld [vmem:[%s1 + $0x728] sm:$0xff]
    %v255 = vld [vmem:[%s1 + $0x730] sm:$0xff]
    %v256 = vld [vmem:[%s1 + $0x738] sm:$0xff]
    %v257 = vld [vmem:[%s1 + $0x740] sm:$0xff]
    %v258 = vld [vmem:[%s1 + $0x748] sm:$0xff]
    %v259 = vld [vmem:[%s1 + $0x750] sm:$0xff]
    %v260 = vld [vmem:[%s1 + $0x758] sm:$0xff]
    %v261 = vld [vmem:[%s1 + $0x760] sm:$0xff]
    %v262 = vld [vmem:[%s1 + $0x768] sm:$0xff]
    %v263 = vld [vmem:[%s1 + $0x770] sm:$0xff]
    %v264 = vld [vmem:[%s1 + $0x778] sm:$0xff]
    %v265 = vld [vmem:[%s1 + $0x780] sm:$0xff]
    %v266 = vld [vmem:[%s1 + $0x788] sm:$0xff]
    %v267 = vld [vmem:[%s1 + $0x790] sm:$0xff]
    %v268 = vld [vmem:[%s1 + $0x798] sm:$0xff]
    %v269 = vld [vmem:[%s1 + $0x7a0] sm:$0xff]
    %v270 = vld [vmem:[%s1 + $0x7a8] sm:$0xff]
    %v271 = vld [vmem:[%s1 + $0x7b0] sm:$0xff]
    %v272 = vld [vmem:[%s1 + $0x7b8] sm:$0xff]
    %v273 = vld [vmem:[%s1 + $0x7c0] sm:$0xff]
    %v274 = vld [vmem:[%s1 + $0x7c8] sm:$0xff]
    %v275 = vld [vmem:[%s1 + $0x7d0] sm:$0xff]
    %v276 = vld [vmem:[%s1 + $0x7d8] sm:$0xff]
    %v277 = vld [vmem:[%s1 + $0x7e0] sm:$0xff]
    %v278 = vld [vmem:[%s1 + $0x7e8] sm:$0xff]
    %v279 = vld [vmem:[%s1 + $0x7f0] sm:$0xff]
    %v280 = vld [vmem:[%s1 + $0x7f8] sm:$0xff]
    %v281 = vld [vmem:[%s2] sm:$0x1]
    %v283 = vlaneseq
    %v284 = vshrl.u32 %v283, 7
    %v285 = vsub.s32 0, %v284
    %v286 = vrot.slane %v281, %v285
    %v292 = vcombine.high %v21, %v21
    %v294 = vunpack.c.l.s4 1983009808
    %v295 = vunpack.c.0.s8 %v294
    %v296 = vlaneseq
    %v297 = vshrl.u32 %v296, 7
    %v298 = vsub.s32 %v295, %v297
    %v299 = vrot.slane %v21, %v298
    %v301 = vunpack.c.l.s4 1983009808
    %v302 = vunpack.c.0.s8 %v301
    %v303 = vlaneseq
    %v304 = vshrl.u32 %v303, 7
    %v305 = vsub.s32 %v302, %v304
    %v306 = vrot.slane %v292, %v305
    %v307 = vcombine.high %v299, %v299
    %v308 = vcombine.high %v306, %v306
    %v309 = vcombine.high %v22, %v22
    %v311 = vunpack.c.l.s4 1983009808
    %v312 = vunpack.c.0.s8 %v311
    %v313 = vlaneseq
    %v314 = vshrl.u32 %v313, 7
    %v315 = vsub.s32 %v312, %v314
    %v316 = vrot.slane %v22, %v315
    %v318 = vunpack.c.l.s4 1983009808
    %v319 = vunpack.c.0.s8 %v318
    %v320 = vlaneseq
    %v321 = vshrl.u32 %v320, 7
    %v322 = vsub.s32 %v319, %v321
    %v323 = vrot.slane %v309, %v322
    %v324 = vcombine.high %v316, %v316
    %v325 = vcombine.high %v323, %v323
    %v326 = vcombine.high %v23, %v23
    %v328 = vunpack.c.l.s4 1983009808
    %v329 = vunpack.c.0.s8 %v328
    %v330 = vlaneseq
    %v331 = vshrl.u32 %v330, 7
    %v332 = vsub.s32 %v329, %v331
    %v333 = vrot.slane %v23, %v332
    %v335 = vunpack.c.l.s4 1983009808
    %v336 = vunpack.c.0.s8 %v335
    %v337 = vlaneseq
    %v338 = vshrl.u32 %v337, 7
    %v339 = vsub.s32 %v336, %v338
    %v340 = vrot.slane %v326, %v339
    %v341 = vcombine.high %v333, %v333
    %v342 = vcombine.high %v340, %v340
    %v343 = vcombine.high %v24, %v24
    %v345 = vunpack.c.l.s4 1983009808
    %v346 = vunpack.c.0.s8 %v345
    %v347 = vlaneseq
    %v348 = vshrl.u32 %v347, 7
    %v349 = vsub.s32 %v346, %v348
    %v350 = vrot.slane %v24, %v349
    %v352 = vunpack.c.l.s4 1983009808
    %v353 = vunpack.c.0.s8 %v352
    %v354 = vlaneseq
    %v355 = vshrl.u32 %v354, 7
    %v356 = vsub.s32 %v353, %v355
    %v357 = vrot.slane %v343, %v356
    %v358 = vcombine.high %v350, %v350
    %v359 = vcombine.high %v357, %v357
    %376 = vmatprep.subr.mxu0 0.0
    %377 = vmatpush1.msra.mxu0 %v40
    %378 = vmatprep.subr.mxu0 0.0
    %379 = vmatpush1.msra.mxu0 %v39
    %380 = vmatprep.subr.mxu0 0.0
    %381 = vmatpush1.msra.mxu0 %v38
    %382 = vmatprep.subr.mxu0 0.0
    %383 = vmatpush1.msra.mxu0 %v37
    %384 = vmatprep.subr.mxu0 0.0
    %385 = vmatpush1.msra.mxu0 %v36
    %386 = vmatprep.subr.mxu0 0.0
    %387 = vmatpush1.msra.mxu0 %v35
    %388 = vmatprep.subr.mxu0 0.0
    %389 = vmatpush1.msra.mxu0 %v34
    %390 = vmatprep.subr.mxu0 0.0
    %391 = vmatpush1.msra.mxu0 %v33
    %392 = vmatprep.subr.mxu0 0.0
    %393 = vmatpush1.msra.mxu0 %v32
    %394 = vmatprep.subr.mxu0 0.0
    %395 = vmatpush1.msra.mxu0 %v31
    %396 = vmatprep.subr.mxu0 0.0
    %397 = vmatpush1.msra.mxu0 %v30
    %398 = vmatprep.subr.mxu0 0.0
    %399 = vmatpush1.msra.mxu0 %v29
    %400 = vmatprep.subr.mxu0 0.0
    %401 = vmatpush1.msra.mxu0 %v28
    %402 = vmatprep.subr.mxu0 0.0
    %403 = vmatpush1.msra.mxu0 %v27
    %404 = vmatprep.subr.mxu0 0.0
    %405 = vmatpush1.msra.mxu0 %v26
    %406 = vmatprep.subr.mxu0 0.0
    %407 = vmatpush1.msra.mxu0 %v25
    %408 = vmatprep.subr.mxu0 0.0
    %409 = vmatpush2.msra.mxu0 %v56
    %410 = vmatprep.subr.mxu0 0.0
    %411 = vmatpush2.msra.mxu0 %v55
    %412 = vmatprep.subr.mxu0 0.0
    %413 = vmatpush2.msra.mxu0 %v54
    %414 = vmatprep.subr.mxu0 0.0
    %415 = vmatpush2.msra.mxu0 %v53
    %416 = vmatprep.subr.mxu0 0.0
    %417 = vmatpush2.msra.mxu0 %v52
    %418 = vmatprep.subr.mxu0 0.0
    %419 = vmatpush2.msra.mxu0 %v51
    %420 = vmatprep.subr.mxu0 0.0
    %421 = vmatpush2.msra.mxu0 %v50
    %422 = vmatprep.subr.mxu0 0.0
    %423 = vmatpush2.msra.mxu0 %v49
    %424 = vmatprep.subr.mxu0 0.0
    %425 = vmatpush2.msra.mxu0 %v48
    %426 = vmatprep.subr.mxu0 0.0
    %427 = vmatpush2.msra.mxu0 %v47
    %428 = vmatprep.subr.mxu0 0.0
    %429 = vmatpush2.msra.mxu0 %v46
    %430 = vmatprep.subr.mxu0 0.0
    %431 = vmatpush2.msra.mxu0 %v45
    %432 = vmatprep.subr.mxu0 0.0
    %433 = vmatpush2.msra.mxu0 %v44
    %434 = vmatprep.subr.mxu0 0.0
    %435 = vmatpush2.msra.mxu0 %v43
    %436 = vmatprep.subr.mxu0 0.0
    %437 = vmatpush2.msra.mxu0 %v42
    %438 = vmatprep.subr.mxu0 0.0
    %439 = vmatpush2.msra.mxu0 %v41
    %440 = vmatprep.mubr.f32.mxu0 %v307
    %441 = vmatmul.mubr.f32.gmra.mxu0 %v299
    %v442 = vpop.f32.mrf.mxu0
    %v443 = vadd.f32 %v286, %v442
    %v444 = vpop.f32.mrf.mxu0
    %445 = vdwg.mxu0
    %446 = vmatprep.subr.mxu0 0.0
    %447 = vmatpush1.msra.mxu0 %v72
    %448 = vmatprep.subr.mxu0 0.0
    %449 = vmatpush1.msra.mxu0 %v71
    %450 = vmatprep.subr.mxu0 0.0
    %451 = vmatpush1.msra.mxu0 %v70
    %452 = vmatprep.subr.mxu0 0.0
    %453 = vmatpush1.msra.mxu0 %v69
    %454 = vmatprep.subr.mxu0 0.0
    %455 = vmatpush1.msra.mxu0 %v68
    %456 = vmatprep.subr.mxu0 0.0
    %457 = vmatpush1.msra.mxu0 %v67
    %458 = vmatprep.subr.mxu0 0.0
    %459 = vmatpush1.msra.mxu0 %v66
    %460 = vmatprep.subr.mxu0 0.0
    %461 = vmatpush1.msra.mxu0 %v65
    %462 = vmatprep.subr.mxu0 0.0
    %463 = vmatpush1.msra.mxu0 %v64
    %464 = vmatprep.subr.mxu0 0.0
    %465 = vmatpush1.msra.mxu0 %v63
    %466 = vmatprep.subr.mxu0 0.0
    %467 = vmatpush1.msra.mxu0 %v62
    %468 = vmatprep.subr.mxu0 0.0
    %469 = vmatpush1.msra.mxu0 %v61
    %470 = vmatprep.subr.mxu0 0.0
    %471 = vmatpush1.msra.mxu0 %v60
    %472 = vmatprep.subr.mxu0 0.0
    %473 = vmatpush1.msra.mxu0 %v59
    %474 = vmatprep.subr.mxu0 0.0
    %475 = vmatpush1.msra.mxu0 %v58
    %476 = vmatprep.subr.mxu0 0.0
    %477 = vmatpush1.msra.mxu0 %v57
    %478 = vmatprep.subr.mxu0 0.0
    %479 = vmatpush2.msra.mxu0 %v88
    %480 = vmatprep.subr.mxu0 0.0
    %481 = vmatpush2.msra.mxu0 %v87
    %482 = vmatprep.subr.mxu0 0.0
    %483 = vmatpush2.msra.mxu0 %v86
    %484 = vmatprep.subr.mxu0 0.0
    %485 = vmatpush2.msra.mxu0 %v85
    %486 = vmatprep.subr.mxu0 0.0
    %487 = vmatpush2.msra.mxu0 %v84
    %488 = vmatprep.subr.mxu0 0.0
    %489 = vmatpush2.msra.mxu0 %v83
    %490 = vmatprep.subr.mxu0 0.0
    %491 = vmatpush2.msra.mxu0 %v82
    %492 = vmatprep.subr.mxu0 0.0
    %493 = vmatpush2.msra.mxu0 %v81
    %494 = vmatprep.subr.mxu0 0.0
    %495 = vmatpush2.msra.mxu0 %v80
    %496 = vmatprep.subr.mxu0 0.0
    %497 = vmatpush2.msra.mxu0 %v79
    %498 = vmatprep.subr.mxu0 0.0
    %499 = vmatpush2.msra.mxu0 %v78
    %500 = vmatprep.subr.mxu0 0.0
    %501 = vmatpush2.msra.mxu0 %v77
    %502 = vmatprep.subr.mxu0 0.0
    %503 = vmatpush2.msra.mxu0 %v76
    %504 = vmatprep.subr.mxu0 0.0
    %505 = vmatpush2.msra.mxu0 %v75
    %506 = vmatprep.subr.mxu0 0.0
    %507 = vmatpush2.msra.mxu0 %v74
    %508 = vmatprep.subr.mxu0 0.0
    %509 = vmatpush2.msra.mxu0 %v73
    %510 = vmatprep.mubr.f32.mxu0 %v308
    %511 = vmatmul.mubr.f32.gmra.mxu0 %v306
    %v512 = vpop.f32.mrf.mxu0
    %v513 = vadd.f32 %v443, %v512
    %v514 = vpop.f32.mrf.mxu0
    %515 = vdwg.mxu0
    %516 = vmatprep.subr.mxu0 0.0
    %517 = vmatpush1.msra.mxu0 %v104
    %518 = vmatprep.subr.mxu0 0.0
    %519 = vmatpush1.msra.mxu0 %v103
    %520 = vmatprep.subr.mxu0 0.0
    %521 = vmatpush1.msra.mxu0 %v102
    %522 = vmatprep.subr.mxu0 0.0
    %523 = vmatpush1.msra.mxu0 %v101
    %524 = vmatprep.subr.mxu0 0.0
    %525 = vmatpush1.msra.mxu0 %v100
    %526 = vmatprep.subr.mxu0 0.0
    %527 = vmatpush1.msra.mxu0 %v99
    %528 = vmatprep.subr.mxu0 0.0
    %529 = vmatpush1.msra.mxu0 %v98
    %530 = vmatprep.subr.mxu0 0.0
    %531 = vmatpush1.msra.mxu0 %v97
    %532 = vmatprep.subr.mxu0 0.0
    %533 = vmatpush1.msra.mxu0 %v96
    %534 = vmatprep.subr.mxu0 0.0
    %535 = vmatpush1.msra.mxu0 %v95
    %536 = vmatprep.subr.mxu0 0.0
    %537 = vmatpush1.msra.mxu0 %v94
    %538 = vmatprep.subr.mxu0 0.0
    %539 = vmatpush1.msra.mxu0 %v93
    %540 = vmatprep.subr.mxu0 0.0
    %541 = vmatpush1.msra.mxu0 %v92
    %542 = vmatprep.subr.mxu0 0.0
    %543 = vmatpush1.msra.mxu0 %v91
    %544 = vmatprep.subr.mxu0 0.0
    %545 = vmatpush1.msra.mxu0 %v90
    %546 = vmatprep.subr.mxu0 0.0
    %547 = vmatpush1.msra.mxu0 %v89
    %548 = vmatprep.subr.mxu0 0.0
    %549 = vmatpush2.msra.mxu0 %v120
    %550 = vmatprep.subr.mxu0 0.0
    %551 = vmatpush2.msra.mxu0 %v119
    %552 = vmatprep.subr.mxu0 0.0
    %553 = vmatpush2.msra.mxu0 %v118
    %554 = vmatprep.subr.mxu0 0.0
    %555 = vmatpush2.msra.mxu0 %v117
    %556 = vmatprep.subr.mxu0 0.0
    %557 = vmatpush2.msra.mxu0 %v116
    %558 = vmatprep.subr.mxu0 0.0
    %559 = vmatpush2.msra.mxu0 %v115
    %560 = vmatprep.subr.mxu0 0.0
    %561 = vmatpush2.msra.mxu0 %v114
    %562 = vmatprep.subr.mxu0 0.0
    %563 = vmatpush2.msra.mxu0 %v113
    %564 = vmatprep.subr.mxu0 0.0
    %565 = vmatpush2.msra.mxu0 %v112
    %566 = vmatprep.subr.mxu0 0.0
    %567 = vmatpush2.msra.mxu0 %v111
    %568 = vmatprep.subr.mxu0 0.0
    %569 = vmatpush2.msra.mxu0 %v110
    %570 = vmatprep.subr.mxu0 0.0
    %571 = vmatpush2.msra.mxu0 %v109
    %572 = vmatprep.subr.mxu0 0.0
    %573 = vmatpush2.msra.mxu0 %v108
    %574 = vmatprep.subr.mxu0 0.0
    %575 = vmatpush2.msra.mxu0 %v107
    %576 = vmatprep.subr.mxu0 0.0
    %577 = vmatpush2.msra.mxu0 %v106
    %578 = vmatprep.subr.mxu0 0.0
    %579 = vmatpush2.msra.mxu0 %v105
    %580 = vmatprep.mubr.f32.mxu0 %v324
    %581 = vmatmul.mubr.f32.gmra.mxu0 %v316
    %v582 = vpop.f32.mrf.mxu0
    %v583 = vadd.f32 %v513, %v582
    %v584 = vpop.f32.mrf.mxu0
    %585 = vdwg.mxu0
    %586 = vmatprep.subr.mxu0 0.0
    %587 = vmatpush1.msra.mxu0 %v136
    %588 = vmatprep.subr.mxu0 0.0
    %589 = vmatpush1.msra.mxu0 %v135
    %590 = vmatprep.subr.mxu0 0.0
    %591 = vmatpush1.msra.mxu0 %v134
    %592 = vmatprep.subr.mxu0 0.0
    %593 = vmatpush1.msra.mxu0 %v133
    %594 = vmatprep.subr.mxu0 0.0
    %595 = vmatpush1.msra.mxu0 %v132
    %596 = vmatprep.subr.mxu0 0.0
    %597 = vmatpush1.msra.mxu0 %v131
    %598 = vmatprep.subr.mxu0 0.0
    %599 = vmatpush1.msra.mxu0 %v130
    %600 = vmatprep.subr.mxu0 0.0
    %601 = vmatpush1.msra.mxu0 %v129
    %602 = vmatprep.subr.mxu0 0.0
    %603 = vmatpush1.msra.mxu0 %v128
    %604 = vmatprep.subr.mxu0 0.0
    %605 = vmatpush1.msra.mxu0 %v127
    %606 = vmatprep.subr.mxu0 0.0
    %607 = vmatpush1.msra.mxu0 %v126
    %608 = vmatprep.subr.mxu0 0.0
    %609 = vmatpush1.msra.mxu0 %v125
    %610 = vmatprep.subr.mxu0 0.0
    %611 = vmatpush1.msra.mxu0 %v124
    %612 = vmatprep.subr.mxu0 0.0
    %613 = vmatpush1.msra.mxu0 %v123
    %614 = vmatprep.subr.mxu0 0.0
    %615 = vmatpush1.msra.mxu0 %v122
    %616 = vmatprep.subr.mxu0 0.0
    %617 = vmatpush1.msra.mxu0 %v121
    %618 = vmatprep.subr.mxu0 0.0
    %619 = vmatpush2.msra.mxu0 %v152
    %620 = vmatprep.subr.mxu0 0.0
    %621 = vmatpush2.msra.mxu0 %v151
    %622 = vmatprep.subr.mxu0 0.0
    %623 = vmatpush2.msra.mxu0 %v150
    %624 = vmatprep.subr.mxu0 0.0
    %625 = vmatpush2.msra.mxu0 %v149
    %626 = vmatprep.subr.mxu0 0.0
    %627 = vmatpush2.msra.mxu0 %v148
    %628 = vmatprep.subr.mxu0 0.0
    %629 = vmatpush2.msra.mxu0 %v147
    %630 = vmatprep.subr.mxu0 0.0
    %631 = vmatpush2.msra.mxu0 %v146
    %632 = vmatprep.subr.mxu0 0.0
    %633 = vmatpush2.msra.mxu0 %v145
    %634 = vmatprep.subr.mxu0 0.0
    %635 = vmatpush2.msra.mxu0 %v144
    %636 = vmatprep.subr.mxu0 0.0
    %637 = vmatpush2.msra.mxu0 %v143
    %638 = vmatprep.subr.mxu0 0.0
    %639 = vmatpush2.msra.mxu0 %v142
    %640 = vmatprep.subr.mxu0 0.0
    %641 = vmatpush2.msra.mxu0 %v141
    %642 = vmatprep.subr.mxu0 0.0
    %643 = vmatpush2.msra.mxu0 %v140
    %644 = vmatprep.subr.mxu0 0.0
    %645 = vmatpush2.msra.mxu0 %v139
    %646 = vmatprep.subr.mxu0 0.0
    %647 = vmatpush2.msra.mxu0 %v138
    %648 = vmatprep.subr.mxu0 0.0
    %649 = vmatpush2.msra.mxu0 %v137
    %650 = vmatprep.mubr.f32.mxu0 %v325
    %651 = vmatmul.mubr.f32.gmra.mxu0 %v323
    %v652 = vpop.f32.mrf.mxu0
    %v653 = vadd.f32 %v583, %v652
    %v654 = vpop.f32.mrf.mxu0
    %655 = vdwg.mxu0
    %656 = vmatprep.subr.mxu0 0.0
    %657 = vmatpush1.msra.mxu0 %v168
    %658 = vmatprep.subr.mxu0 0.0
    %659 = vmatpush1.msra.mxu0 %v167
    %660 = vmatprep.subr.mxu0 0.0
    %661 = vmatpush1.msra.mxu0 %v166
    %662 = vmatprep.subr.mxu0 0.0
    %663 = vmatpush1.msra.mxu0 %v165
    %664 = vmatprep.subr.mxu0 0.0
    %665 = vmatpush1.msra.mxu0 %v164
    %666 = vmatprep.subr.mxu0 0.0
    %667 = vmatpush1.msra.mxu0 %v163
    %668 = vmatprep.subr.mxu0 0.0
    %669 = vmatpush1.msra.mxu0 %v162
    %670 = vmatprep.subr.mxu0 0.0
    %671 = vmatpush1.msra.mxu0 %v161
    %672 = vmatprep.subr.mxu0 0.0
    %673 = vmatpush1.msra.mxu0 %v160
    %674 = vmatprep.subr.mxu0 0.0
    %675 = vmatpush1.msra.mxu0 %v159
    %676 = vmatprep.subr.mxu0 0.0
    %677 = vmatpush1.msra.mxu0 %v158
    %678 = vmatprep.subr.mxu0 0.0
    %679 = vmatpush1.msra.mxu0 %v157
    %680 = vmatprep.subr.mxu0 0.0
    %681 = vmatpush1.msra.mxu0 %v156
    %682 = vmatprep.subr.mxu0 0.0
    %683 = vmatpush1.msra.mxu0 %v155
    %684 = vmatprep.subr.mxu0 0.0
    %685 = vmatpush1.msra.mxu0 %v154
    %686 = vmatprep.subr.mxu0 0.0
    %687 = vmatpush1.msra.mxu0 %v153
    %688 = vmatprep.subr.mxu0 0.0
    %689 = vmatpush2.msra.mxu0 %v184
    %690 = vmatprep.subr.mxu0 0.0
    %691 = vmatpush2.msra.mxu0 %v183
    %692 = vmatprep.subr.mxu0 0.0
    %693 = vmatpush2.msra.mxu0 %v182
    %694 = vmatprep.subr.mxu0 0.0
    %695 = vmatpush2.msra.mxu0 %v181
    %696 = vmatprep.subr.mxu0 0.0
    %697 = vmatpush2.msra.mxu0 %v180
    %698 = vmatprep.subr.mxu0 0.0
    %699 = vmatpush2.msra.mxu0 %v179
    %700 = vmatprep.subr.mxu0 0.0
    %701 = vmatpush2.msra.mxu0 %v178
    %702 = vmatprep.subr.mxu0 0.0
    %703 = vmatpush2.msra.mxu0 %v177
    %704 = vmatprep.subr.mxu0 0.0
    %705 = vmatpush2.msra.mxu0 %v176
    %706 = vmatprep.subr.mxu0 0.0
    %707 = vmatpush2.msra.mxu0 %v175
    %708 = vmatprep.subr.mxu0 0.0
    %709 = vmatpush2.msra.mxu0 %v174
    %710 = vmatprep.subr.mxu0 0.0
    %711 = vmatpush2.msra.mxu0 %v173
    %712 = vmatprep.subr.mxu0 0.0
    %713 = vmatpush2.msra.mxu0 %v172
    %714 = vmatprep.subr.mxu0 0.0
    %715 = vmatpush2.msra.mxu0 %v171
    %716 = vmatprep.subr.mxu0 0.0
    %717 = vmatpush2.msra.mxu0 %v170
    %718 = vmatprep.subr.mxu0 0.0
    %719 = vmatpush2.msra.mxu0 %v169
    %720 = vmatprep.mubr.f32.mxu0 %v341
    %721 = vmatmul.mubr.f32.gmra.mxu0 %v333
    %v722 = vpop.f32.mrf.mxu0
    %v723 = vadd.f32 %v653, %v722
    %v724 = vpop.f32.mrf.mxu0
    %725 = vdwg.mxu0
    %726 = vmatprep.subr.mxu0 0.0
    %727 = vmatpush1.msra.mxu0 %v200
    %728 = vmatprep.subr.mxu0 0.0
    %729 = vmatpush1.msra.mxu0 %v199
    %730 = vmatprep.subr.mxu0 0.0
    %731 = vmatpush1.msra.mxu0 %v198
    %732 = vmatprep.subr.mxu0 0.0
    %733 = vmatpush1.msra.mxu0 %v197
    %734 = vmatprep.subr.mxu0 0.0
    %735 = vmatpush1.msra.mxu0 %v196
    %736 = vmatprep.subr.mxu0 0.0
    %737 = vmatpush1.msra.mxu0 %v195
    %738 = vmatprep.subr.mxu0 0.0
    %739 = vmatpush1.msra.mxu0 %v194
    %740 = vmatprep.subr.mxu0 0.0
    %741 = vmatpush1.msra.mxu0 %v193
    %742 = vmatprep.subr.mxu0 0.0
    %743 = vmatpush1.msra.mxu0 %v192
    %744 = vmatprep.subr.mxu0 0.0
    %745 = vmatpush1.msra.mxu0 %v191
    %746 = vmatprep.subr.mxu0 0.0
    %747 = vmatpush1.msra.mxu0 %v190
    %748 = vmatprep.subr.mxu0 0.0
    %749 = vmatpush1.msra.mxu0 %v189
    %750 = vmatprep.subr.mxu0 0.0
    %751 = vmatpush1.msra.mxu0 %v188
    %752 = vmatprep.subr.mxu0 0.0
    %753 = vmatpush1.msra.mxu0 %v187
    %754 = vmatprep.subr.mxu0 0.0
    %755 = vmatpush1.msra.mxu0 %v186
    %756 = vmatprep.subr.mxu0 0.0
    %757 = vmatpush1.msra.mxu0 %v185
    %758 = vmatprep.subr.mxu0 0.0
    %759 = vmatpush2.msra.mxu0 %v216
    %760 = vmatprep.subr.mxu0 0.0
    %761 = vmatpush2.msra.mxu0 %v215
    %762 = vmatprep.subr.mxu0 0.0
    %763 = vmatpush2.msra.mxu0 %v214
    %764 = vmatprep.subr.mxu0 0.0
    %765 = vmatpush2.msra.mxu0 %v213
    %766 = vmatprep.subr.mxu0 0.0
    %767 = vmatpush2.msra.mxu0 %v212
    %768 = vmatprep.subr.mxu0 0.0
    %769 = vmatpush2.msra.mxu0 %v211
    %770 = vmatprep.subr.mxu0 0.0
    %771 = vmatpush2.msra.mxu0 %v210
    %772 = vmatprep.subr.mxu0 0.0
    %773 = vmatpush2.msra.mxu0 %v209
    %774 = vmatprep.subr.mxu0 0.0
    %775 = vmatpush2.msra.mxu0 %v208
    %776 = vmatprep.subr.mxu0 0.0
    %777 = vmatpush2.msra.mxu0 %v207
    %778 = vmatprep.subr.mxu0 0.0
    %779 = vmatpush2.msra.mxu0 %v206
    %780 = vmatprep.subr.mxu0 0.0
    %781 = vmatpush2.msra.mxu0 %v205
    %782 = vmatprep.subr.mxu0 0.0
    %783 = vmatpush2.msra.mxu0 %v204
    %784 = vmatprep.subr.mxu0 0.0
    %785 = vmatpush2.msra.mxu0 %v203
    %786 = vmatprep.subr.mxu0 0.0
    %787 = vmatpush2.msra.mxu0 %v202
    %788 = vmatprep.subr.mxu0 0.0
    %789 = vmatpush2.msra.mxu0 %v201
    %790 = vmatprep.mubr.f32.mxu0 %v342
    %791 = vmatmul.mubr.f32.gmra.mxu0 %v340
    %v792 = vpop.f32.mrf.mxu0
    %v793 = vadd.f32 %v723, %v792
    %v794 = vpop.f32.mrf.mxu0
    %795 = vdwg.mxu0
    %796 = vmatprep.subr.mxu0 0.0
    %797 = vmatpush1.msra.mxu0 %v232
    %798 = vmatprep.subr.mxu0 0.0
    %799 = vmatpush1.msra.mxu0 %v231
    %800 = vmatprep.subr.mxu0 0.0
    %801 = vmatpush1.msra.mxu0 %v230
    %802 = vmatprep.subr.mxu0 0.0
    %803 = vmatpush1.msra.mxu0 %v229
    %804 = vmatprep.subr.mxu0 0.0
    %805 = vmatpush1.msra.mxu0 %v228
    %806 = vmatprep.subr.mxu0 0.0
    %807 = vmatpush1.msra.mxu0 %v227
    %808 = vmatprep.subr.mxu0 0.0
    %809 = vmatpush1.msra.mxu0 %v226
    %810 = vmatprep.subr.mxu0 0.0
    %811 = vmatpush1.msra.mxu0 %v225
    %812 = vmatprep.subr.mxu0 0.0
    %813 = vmatpush1.msra.mxu0 %v224
    %814 = vmatprep.subr.mxu0 0.0
    %815 = vmatpush1.msra.mxu0 %v223
    %816 = vmatprep.subr.mxu0 0.0
    %817 = vmatpush1.msra.mxu0 %v222
    %818 = vmatprep.subr.mxu0 0.0
    %819 = vmatpush1.msra.mxu0 %v221
    %820 = vmatprep.subr.mxu0 0.0
    %821 = vmatpush1.msra.mxu0 %v220
    %822 = vmatprep.subr.mxu0 0.0
    %823 = vmatpush1.msra.mxu0 %v219
    %824 = vmatprep.subr.mxu0 0.0
    %825 = vmatpush1.msra.mxu0 %v218
    %826 = vmatprep.subr.mxu0 0.0
    %827 = vmatpush1.msra.mxu0 %v217
    %828 = vmatprep.subr.mxu0 0.0
    %829 = vmatpush2.msra.mxu0 %v248
    %830 = vmatprep.subr.mxu0 0.0
    %831 = vmatpush2.msra.mxu0 %v247
    %832 = vmatprep.subr.mxu0 0.0
    %833 = vmatpush2.msra.mxu0 %v246
    %834 = vmatprep.subr.mxu0 0.0
    %835 = vmatpush2.msra.mxu0 %v245
    %836 = vmatprep.subr.mxu0 0.0
    %837 = vmatpush2.msra.mxu0 %v244
    %838 = vmatprep.subr.mxu0 0.0
    %839 = vmatpush2.msra.mxu0 %v243
    %840 = vmatprep.subr.mxu0 0.0
    %841 = vmatpush2.msra.mxu0 %v242
    %842 = vmatprep.subr.mxu0 0.0
    %843 = vmatpush2.msra.mxu0 %v241
    %844 = vmatprep.subr.mxu0 0.0
    %845 = vmatpush2.msra.mxu0 %v240
    %846 = vmatprep.subr.mxu0 0.0
    %847 = vmatpush2.msra.mxu0 %v239
    %848 = vmatprep.subr.mxu0 0.0
    %849 = vmatpush2.msra.mxu0 %v238
    %850 = vmatprep.subr.mxu0 0.0
    %851 = vmatpush2.msra.mxu0 %v237
    %852 = vmatprep.subr.mxu0 0.0
    %853 = vmatpush2.msra.mxu0 %v236
    %854 = vmatprep.subr.mxu0 0.0
    %855 = vmatpush2.msra.mxu0 %v235
    %856 = vmatprep.subr.mxu0 0.0
    %857 = vmatpush2.msra.mxu0 %v234
    %858 = vmatprep.subr.mxu0 0.0
    %859 = vmatpush2.msra.mxu0 %v233
    %860 = vmatprep.mubr.f32.mxu0 %v358
    %861 = vmatmul.mubr.f32.gmra.mxu0 %v350
    %v862 = vpop.f32.mrf.mxu0
    %v863 = vadd.f32 %v793, %v862
    %v864 = vpop.f32.mrf.mxu0
    %865 = vdwg.mxu0
    %866 = vmatprep.subr.mxu0 0.0
    %867 = vmatpush1.msra.mxu0 %v264
    %868 = vmatprep.subr.mxu0 0.0
    %869 = vmatpush1.msra.mxu0 %v263
    %870 = vmatprep.subr.mxu0 0.0
    %871 = vmatpush1.msra.mxu0 %v262
    %872 = vmatprep.subr.mxu0 0.0
    %873 = vmatpush1.msra.mxu0 %v261
    %874 = vmatprep.subr.mxu0 0.0
    %875 = vmatpush1.msra.mxu0 %v260
    %876 = vmatprep.subr.mxu0 0.0
    %877 = vmatpush1.msra.mxu0 %v259
    %878 = vmatprep.subr.mxu0 0.0
    %879 = vmatpush1.msra.mxu0 %v258
    %880 = vmatprep.subr.mxu0 0.0
    %881 = vmatpush1.msra.mxu0 %v257
    %882 = vmatprep.subr.mxu0 0.0
    %883 = vmatpush1.msra.mxu0 %v256
    %884 = vmatprep.subr.mxu0 0.0
    %885 = vmatpush1.msra.mxu0 %v255
    %886 = vmatprep.subr.mxu0 0.0
    %887 = vmatpush1.msra.mxu0 %v254
    %888 = vmatprep.subr.mxu0 0.0
    %889 = vmatpush1.msra.mxu0 %v253
    %890 = vmatprep.subr.mxu0 0.0
    %891 = vmatpush1.msra.mxu0 %v252
    %892 = vmatprep.subr.mxu0 0.0
    %893 = vmatpush1.msra.mxu0 %v251
    %894 = vmatprep.subr.mxu0 0.0
    %895 = vmatpush1.msra.mxu0 %v250
    %896 = vmatprep.subr.mxu0 0.0
    %897 = vmatpush1.msra.mxu0 %v249
    %898 = vmatprep.subr.mxu0 0.0
    %899 = vmatpush2.msra.mxu0 %v280
    %900 = vmatprep.subr.mxu0 0.0
    %901 = vmatpush2.msra.mxu0 %v279
    %902 = vmatprep.subr.mxu0 0.0
    %903 = vmatpush2.msra.mxu0 %v278
    %904 = vmatprep.subr.mxu0 0.0
    %905 = vmatpush2.msra.mxu0 %v277
    %906 = vmatprep.subr.mxu0 0.0
    %907 = vmatpush2.msra.mxu0 %v276
    %908 = vmatprep.subr.mxu0 0.0
    %909 = vmatpush2.msra.mxu0 %v275
    %910 = vmatprep.subr.mxu0 0.0
    %911 = vmatpush2.msra.mxu0 %v274
    %912 = vmatprep.subr.mxu0 0.0
    %913 = vmatpush2.msra.mxu0 %v273
    %914 = vmatprep.subr.mxu0 0.0
    %915 = vmatpush2.msra.mxu0 %v272
    %916 = vmatprep.subr.mxu0 0.0
    %917 = vmatpush2.msra.mxu0 %v271
    %918 = vmatprep.subr.mxu0 0.0
    %919 = vmatpush2.msra.mxu0 %v270
    %920 = vmatprep.subr.mxu0 0.0
    %921 = vmatpush2.msra.mxu0 %v269
    %922 = vmatprep.subr.mxu0 0.0
    %923 = vmatpush2.msra.mxu0 %v268
    %924 = vmatprep.subr.mxu0 0.0
    %925 = vmatpush2.msra.mxu0 %v267
    %926 = vmatprep.subr.mxu0 0.0
    %927 = vmatpush2.msra.mxu0 %v266
    %928 = vmatprep.subr.mxu0 0.0
    %929 = vmatpush2.msra.mxu0 %v265
    %930 = vmatprep.mubr.f32.mxu0 %v359
    %931 = vmatmul.mubr.f32.gmra.mxu0 %v357
    %v932 = vpop.f32.mrf.mxu0
    %v933 = vadd.f32 %v863, %v932
    %v934 = vpop.f32.mrf.mxu0
    %935 = vdwg.mxu0
    %v936 = vmax.f32 %v933, 0.0
    %v937 = vld [vmem:[%s3] sm:$0xff]
    %v938 = vld [vmem:[%s3 + $0x8] sm:$0xff]
    %v939 = vld [vmem:[%s3 + $0x10] sm:$0xff]
    %v940 = vld [vmem:[%s3 + $0x18] sm:$0xff]
    %v941 = vld [vmem:[%s4] sm:$0x1]
    %v943 = vlaneseq
    %v944 = vshrl.u32 %v943, 7
    %v945 = vsub.s32 0, %v944
    %v946 = vrot.slane %v941, %v945
    %vm948 = vcmask 261120
    %v950 = vsel %vm948, %v936, 0
    %952 = vmatprep.subr.mxu0 0.0
    %953 = vmatpush1.msra.mxu0 0.0
    %954 = vmatprep.subr.mxu0 0.0
    %955 = vmatpush1.msra.mxu0 0.0
    %956 = vmatprep.subr.mxu0 0.0
    %957 = vmatpush1.msra.mxu0 0.0
    %958 = vmatprep.subr.mxu0 0.0
    %959 = vmatpush1.msra.mxu0 0.0
    %960 = vmatprep.subr.mxu0 0.0
    %961 = vmatpush1.msra.mxu0 0.0
    %962 = vmatprep.subr.mxu0 0.0
    %963 = vmatpush1.msra.mxu0 0.0
    %964 = vmatprep.subr.mxu0 0.0
    %965 = vmatpush1.msra.mxu0 0.0
    %966 = vmatprep.subr.mxu0 0.0
    %967 = vmatpush1.msra.mxu0 0.0
    %968 = vmatprep.subr.mxu0 0.0
    %969 = vmatpush1.msra.mxu0 0.0
    %970 = vmatprep.subr.mxu0 0.0
    %971 = vmatpush1.msra.mxu0 0.0
    %972 = vmatprep.subr.mxu0 0.0
    %973 = vmatpush1.msra.mxu0 0.0
    %974 = vmatprep.subr.mxu0 0.0
    %975 = vmatpush1.msra.mxu0 0.0
    %976 = vmatprep.subr.mxu0 0.0
    %977 = vmatpush1.msra.mxu0 %v940
    %978 = vmatprep.subr.mxu0 0.0
    %979 = vmatpush1.msra.mxu0 %v939
    %980 = vmatprep.subr.mxu0 0.0
    %981 = vmatpush1.msra.mxu0 %v938
    %982 = vmatprep.subr.mxu0 0.0
    %983 = vmatpush1.msra.mxu0 %v937
    %984 = vmatprep.subr.mxu0 0.0
    %985 = vmatpush2.msra.mxu0 0.0
    %986 = vmatprep.subr.mxu0 0.0
    %987 = vmatpush2.msra.mxu0 0.0
    %988 = vmatprep.subr.mxu0 0.0
    %989 = vmatpush2.msra.mxu0 0.0
    %990 = vmatprep.subr.mxu0 0.0
    %991 = vmatpush2.msra.mxu0 0.0
    %992 = vmatprep.subr.mxu0 0.0
    %993 = vmatpush2.msra.mxu0 0.0
    %994 = vmatprep.subr.mxu0 0.0
    %995 = vmatpush2.msra.mxu0 0.0
    %996 = vmatprep.subr.mxu0 0.0
    %997 = vmatpush2.msra.mxu0 0.0
    %998 = vmatprep.subr.mxu0 0.0
    %999 = vmatpush2.msra.mxu0 0.0
    %1000 = vmatprep.subr.mxu0 0.0
    %1001 = vmatpush2.msra.mxu0 0.0
    %1002 = vmatprep.subr.mxu0 0.0
    %1003 = vmatpush2.msra.mxu0 0.0
    %1004 = vmatprep.subr.mxu0 0.0
    %1005 = vmatpush2.msra.mxu0 0.0
    %1006 = vmatprep.subr.mxu0 0.0
    %1007 = vmatpush2.msra.mxu0 0.0
    %1008 = vmatprep.subr.mxu0 0.0
    %1009 = vmatpush2.msra.mxu0 0.0
    %1010 = vmatprep.subr.mxu0 0.0
    %1011 = vmatpush2.msra.mxu0 0.0
    %1012 = vmatprep.subr.mxu0 0.0
    %1013 = vmatpush2.msra.mxu0 0.0
    %1014 = vmatprep.subr.mxu0 0.0
    %1015 = vmatpush2.msra.mxu0 0.0
    %1016 = vmatprep.mubr.f32.mxu0 0.0
    %1017 = vmatmul.mubr.f32.gmra.mxu0 %v950
    %v1018 = vpop.f32.mrf.mxu0
    %v1019 = vadd.f32 %v946, %v1018
    %v1020 = vpop.f32.mrf.mxu0
    %1021 = vdwg.mxu0
    %vm1022 = vcmask 74752
    %1023 = vst.msk [vmem:[#allocation2] sm:$0x3] %vm1022, %v1019
    // Predicated region
    $region22: #{model_forward.3} parent=1 // pred_check
      _
    $region23: #{model_forward.3} parent=1 // pred_check_branch
      %1025 = sbr.rel (0) target = $region25
    $region24: #{model_forward.3} parent=1 // pred_region
      %s1027 = ssub.s32 32, 32
      %1028 = vsyncadd [#allocation3], %s1027
      %s1030 = sshll.u32 [#allocation2], 4
      %s1031 = int_to_ptr.vmem [resolvable:$true] %s1030
      %1033 = dma.vmem_to_hbm [thread:$0]  %s1031, 32, %s5, [#allocation3]
    $region25: #{model_forward.3} parent=1 // pred_fallthru
      _
    // Predicated region
    $region26: #{model_forward.3} parent=1 // pred_check
      _
    $region27: #{model_forward.3} parent=1 // pred_check_branch
      %1035 = sbr.rel (0) target = $region29
    $region28: #{model_forward.3} parent=1 // pred_region
      %1036 = dma.done [#allocation3], 32
    $region29: #{model_forward.3} parent=1 // pred_fallthru
      _
    %1037 = vsyncpa [#allocation3], 1

// kernel: model_forward.2
$region0: #{model_forward.2}
  #allocation0 [shape = 'u32[]', space=smem, size = 0x4, offset = 0x4, fixed_abs, tag = 'smem constant byte address 0x4 - core index']
  #allocation1 [shape = 'u32[144,128]{1,0:T(1,128)}', space=vmem, size = 0x12000, scoped, tag = 'internal scratch']
  #allocation2 [shape = 'f32[2,18,25,4]{3,2,1,0:T(8,128)}', space=vmem, size = 0x90000, scoped, tag = 'scratch operand']
  #allocation3 [shape = 'f32[2,18,25,8]{3,2,1,0:T(8,128)}', space=vmem, size = 0x90000, scoped, tag = 'scratch operand']
  %s0 = inlined_call_operand.vmem [shape: f32[2,16,16,4], index: 0, kind: input, shape index: {}]
  %s1 = inlined_call_operand.vmem [shape: f32[3,3,4,8], index: 1, kind: input, shape index: {}]
  %s2 = inlined_call_operand.vmem [shape: f32[1,8], index: 2, kind: input, shape index: {}]
  %s3 = inlined_call_operand.vmem [shape: f32[3,3,8,8], index: 3, kind: input, shape index: {}]
  %s4 = inlined_call_operand.vmem [shape: f32[1,8], index: 4, kind: input, shape index: {}]
  %s5 = inlined_call_operand.vmem [shape: f32[512,8], index: 5, kind: output, shape index: {}]
  %s6 = sld [smem:[#allocation0]]
  $region30: #{model_forward.2} parent=0
    _
  %s8 = ssub.s32 1, %s6
  %s9 = scalar_select 0, %s8, %s6
  // Predicated region
  $region2: #{model_forward.2} parent=0 // pred_check
    _
  $region3: #{model_forward.2} parent=0 // pred_check_branch
    %11 = sbr.rel (0) target = $region5
  $region4: #{model_forward.2} parent=0 // pred_region
    _
  $region5: #{model_forward.2} parent=0 // pred_fallthru
    _
  // Predicated region
  $region6: #{model_forward.2} parent=0 // pred_check
    _
  $region7: #{model_forward.2} parent=0 // pred_check_branch
    %13 = sbr.rel (0) target = $region9
  $region8: #{model_forward.2} parent=0 // pred_region
    _
  $region9: #{model_forward.2} parent=0 // pred_fallthru
    _
  // Predicated region
  $region10: #{model_forward.2} parent=0 // pred_check
    _
  $region11: #{model_forward.2} parent=0 // pred_check_branch
    %15 = sbr.rel (0) target = $region13
  $region12: #{model_forward.2} parent=0 // pred_region
    _
  $region13: #{model_forward.2} parent=0 // pred_fallthru
    _
  // Predicated region
  $region14: #{model_forward.2} parent=0 // pred_check
    _
  $region15: #{model_forward.2} parent=0 // pred_check_branch
    %17 = sbr.rel (0) target = $region17
  $region16: #{model_forward.2} parent=0 // pred_region
    _
  $region17: #{model_forward.2} parent=0 // pred_fallthru
    _
  // Predicated region
  $region18: #{model_forward.2} parent=0 // pred_check
    _
  $region19: #{model_forward.2} parent=0 // pred_check_branch
    %19 = sbr.rel (0) target = $region21
  $region20: #{model_forward.2} parent=0 // pred_region
    _
  $region21: #{model_forward.2} parent=0 // pred_fallthru
    _
  %v20 = vld [vmem:[%s0] sm:$0xff]
  %v21 = vld [vmem:[%s0 + $0x8] sm:$0xff]
  %v22 = vld [vmem:[%s0 + $0x10] sm:$0xff]
  %v23 = vld [vmem:[%s0 + $0x18] sm:$0xff]
  %v24 = vld [vmem:[%s0 + $0x20] sm:$0xff]
  %v25 = vld [vmem:[%s0 + $0x28] sm:$0xff]
  %v26 = vld [vmem:[%s0 + $0x30] sm:$0xff]
  %v27 = vld [vmem:[%s0 + $0x38] sm:$0xff]
  %v28 = vld [vmem:[%s0 + $0x40] sm:$0xff]
  %v29 = vld [vmem:[%s0 + $0x48] sm:$0xff]
  %v30 = vld [vmem:[%s0 + $0x50] sm:$0xff]
  %v31 = vld [vmem:[%s0 + $0x58] sm:$0xff]
  %v32 = vld [vmem:[%s0 + $0x60] sm:$0xff]
  %v33 = vld [vmem:[%s0 + $0x68] sm:$0xff]
  %v34 = vld [vmem:[%s0 + $0x70] sm:$0xff]
  %v35 = vld [vmem:[%s0 + $0x78] sm:$0xff]
  %v36 = vld [vmem:[%s0 + $0x80] sm:$0xff]
  %v37 = vld [vmem:[%s0 + $0x88] sm:$0xff]
  %v38 = vld [vmem:[%s0 + $0x90] sm:$0xff]
  %v39 = vld [vmem:[%s0 + $0x98] sm:$0xff]
  %v40 = vld [vmem:[%s0 + $0xa0] sm:$0xff]
  %v41 = vld [vmem:[%s0 + $0xa8] sm:$0xff]
  %v42 = vld [vmem:[%s0 + $0xb0] sm:$0xff]
  %v43 = vld [vmem:[%s0 + $0xb8] sm:$0xff]
  %v44 = vld [vmem:[%s0 + $0xc0] sm:$0xff]
  %v45 = vld [vmem:[%s0 + $0xc8] sm:$0xff]
  %v46 = vld [vmem:[%s0 + $0xd0] sm:$0xff]
  %v47 = vld [vmem:[%s0 + $0xd8] sm:$0xff]
  %v48 = vld [vmem:[%s0 + $0xe0] sm:$0xff]
  %v49 = vld [vmem:[%s0 + $0xe8] sm:$0xff]
  %v50 = vld [vmem:[%s0 + $0xf0] sm:$0xff]
  %v51 = vld [vmem:[%s0 + $0xf8] sm:$0xff]
  %v52 = vld [vmem:[%s0 + $0x100] sm:$0xff]
  %v53 = vld [vmem:[%s0 + $0x108] sm:$0xff]
  %v54 = vld [vmem:[%s0 + $0x110] sm:$0xff]
  %v55 = vld [vmem:[%s0 + $0x118] sm:$0xff]
  %v56 = vld [vmem:[%s0 + $0x120] sm:$0xff]
  %v57 = vld [vmem:[%s0 + $0x128] sm:$0xff]
  %v58 = vld [vmem:[%s0 + $0x130] sm:$0xff]
  %v59 = vld [vmem:[%s0 + $0x138] sm:$0xff]
  %v60 = vld [vmem:[%s0 + $0x140] sm:$0xff]
  %v61 = vld [vmem:[%s0 + $0x148] sm:$0xff]
  %v62 = vld [vmem:[%s0 + $0x150] sm:$0xff]
  %v63 = vld [vmem:[%s0 + $0x158] sm:$0xff]
  %v64 = vld [vmem:[%s0 + $0x160] sm:$0xff]
  %v65 = vld [vmem:[%s0 + $0x168] sm:$0xff]
  %v66 = vld [vmem:[%s0 + $0x170] sm:$0xff]
  %v67 = vld [vmem:[%s0 + $0x178] sm:$0xff]
  %v68 = vld [vmem:[%s0 + $0x180] sm:$0xff]
  %v69 = vld [vmem:[%s0 + $0x188] sm:$0xff]
  %v70 = vld [vmem:[%s0 + $0x190] sm:$0xff]
  %v71 = vld [vmem:[%s0 + $0x198] sm:$0xff]
  %v72 = vld [vmem:[%s0 + $0x1a0] sm:$0xff]
  %v73 = vld [vmem:[%s0 + $0x1a8] sm:$0xff]
  %v74 = vld [vmem:[%s0 + $0x1b0] sm:$0xff]
  %v75 = vld [vmem:[%s0 + $0x1b8] sm:$0xff]
  %v76 = vld [vmem:[%s0 + $0x1c0] sm:$0xff]
  %v77 = vld [vmem:[%s0 + $0x1c8] sm:$0xff]
  %v78 = vld [vmem:[%s0 + $0x1d0] sm:$0xff]
  %v79 = vld [vmem:[%s0 + $0x1d8] sm:$0xff]
  %v80 = vld [vmem:[%s0 + $0x1e0] sm:$0xff]
  %v81 = vld [vmem:[%s0 + $0x1e8] sm:$0xff]
  %v82 = vld [vmem:[%s0 + $0x1f0] sm:$0xff]
  %v83 = vld [vmem:[%s0 + $0x1f8] sm:$0xff]
  %vm84 = vcmask 31744
  %85 = vst.msk [vmem:[#allocation2] sm:$0xff] %vm84, 0.0
  %86 = vst.msk [vmem:[#allocation2 + $0x8] sm:$0xff] %vm84, 0.0
  %87 = vst.msk [vmem:[#allocation2 + $0x10] sm:$0xff] %vm84, 0.0
  %vm88 = vcmask 24576
  %89 = vst.msk [vmem:[#allocation2 + $0x18] sm:$0x1] %vm88, 0.0
  %90 = vst.msk [vmem:[#allocation2 + $0x20] sm:$0xff] %vm84, 0.0
  %91 = vst.msk [vmem:[#allocation2 + $0x28] sm:$0xff] %vm84, 0.0
  %92 = vst.msk [vmem:[#allocation2 + $0x30] sm:$0xff] %vm84, 0.0
  %93 = vst.msk [vmem:[#allocation2 + $0x38] sm:$0x1] %vm88, 0.0
  %94 = vst.msk [vmem:[#allocation2 + $0x40] sm:$0xff] %vm84, 0.0
  %95 = vst.msk [vmem:[#allocation2 + $0x48] sm:$0xff] %vm84, 0.0
  %96 = vst.msk [vmem:[#allocation2 + $0x50] sm:$0xff] %vm84, 0.0
  %97 = vst.msk [vmem:[#allocation2 + $0x58] sm:$0x1] %vm88, 0.0
  %98 = vst.msk [vmem:[#allocation2 + $0x60] sm:$0xff] %vm84, 0.0
  %99 = vst.msk [vmem:[#allocation2 + $0x68] sm:$0xff] %vm84, 0.0
  %100 = vst.msk [vmem:[#allocation2 + $0x70] sm:$0xff] %vm84, 0.0
  %101 = vst.msk [vmem:[#allocation2 + $0x78] sm:$0x1] %vm88, 0.0
  %102 = vst.msk [vmem:[#allocation2 + $0x80] sm:$0xff] %vm84, 0.0
  %103 = vst.msk [vmem:[#allocation2 + $0x88] sm:$0xff] %vm84, 0.0
  %104 = vst.msk [vmem:[#allocation2 + $0x90] sm:$0xff] %vm84, 0.0
  %105 = vst.msk [vmem:[#allocation2 + $0x98] sm:$0x1] %vm88, 0.0
  %106 = vst.msk [vmem:[#allocation2 + $0xa0] sm:$0xff] %vm84, 0.0
  %107 = vst.msk [vmem:[#allocation2 + $0xa8] sm:$0xff] %vm84, 0.0
  %108 = vst.msk [vmem:[#allocation2 + $0xb0] sm:$0xff] %vm84, 0.0
  %109 = vst.msk [vmem:[#allocation2 + $0xb8] sm:$0x1] %vm88, 0.0
  %110 = vst.msk [vmem:[#allocation2 + $0xc0] sm:$0xff] %vm84, 0.0
  %111 = vst.msk [vmem:[#allocation2 + $0xc8] sm:$0xff] %vm84, 0.0
  %112 = vst.msk [vmem:[#allocation2 + $0xd0] sm:$0xff] %vm84, 0.0
  %113 = vst.msk [vmem:[#allocation2 + $0xd8] sm:$0x1] %vm88, 0.0
  %114 = vst.msk [vmem:[#allocation2 + $0xe0] sm:$0xff] %vm84, 0.0
  %115 = vst.msk [vmem:[#allocation2 + $0xe8] sm:$0xff] %vm84, 0.0
  %116 = vst.msk [vmem:[#allocation2 + $0xf0] sm:$0xff] %vm84, 0.0
  %117 = vst.msk [vmem:[#allocation2 + $0xf8] sm:$0x1] %vm88, 0.0
  %118 = vst.msk [vmem:[#allocation2 + $0x100] sm:$0xff] %vm84, 0.0
  %119 = vst.msk [vmem:[#allocation2 + $0x108] sm:$0xff] %vm84, 0.0
  %120 = vst.msk [vmem:[#allocation2 + $0x110] sm:$0xff] %vm84, 0.0
  %121 = vst.msk [vmem:[#allocation2 + $0x118] sm:$0x1] %vm88, 0.0
  %122 = vst.msk [vmem:[#allocation2 + $0x120] sm:$0xff] %vm84, 0.0
  %123 = vst.msk [vmem:[#allocation2 + $0x128] sm:$0xff] %vm84, 0.0
  %124 = vst.msk [vmem:[#allocation2 + $0x130] sm:$0xff] %vm84, 0.0
  %125 = vst.msk [vmem:[#allocation2 + $0x138] sm:$0x1] %vm88, 0.0
  %126 = vst.msk [vmem:[#allocation2 + $0x140] sm:$0xff] %vm84, 0.0
  %127 = vst.msk [vmem:[#allocation2 + $0x148] sm:$0xff] %vm84, 0.0
  %128 = vst.msk [vmem:[#allocation2 + $0x150] sm:$0xff] %vm84, 0.0
  %129 = vst.msk [vmem:[#allocation2 + $0x158] sm:$0x1] %vm88, 0.0
  %130 = vst.msk [vmem:[#allocation2 + $0x160] sm:$0xff] %vm84, 0.0
  %131 = vst.msk [vmem:[#allocation2 + $0x168] sm:$0xff] %vm84, 0.0
  %132 = vst.msk [vmem:[#allocation2 + $0x170] sm:$0xff] %vm84, 0.0
  %133 = vst.msk [vmem:[#allocation2 + $0x178] sm:$0x1] %vm88, 0.0
  %134 = vst.msk [vmem:[#allocation2 + $0x180] sm:$0xff] %vm84, 0.0
  %135 = vst.msk [vmem:[#allocation2 + $0x188] sm:$0xff] %vm84, 0.0
  %136 = vst.msk [vmem:[#allocation2 + $0x190] sm:$0xff] %vm84, 0.0
  %137 = vst.msk [vmem:[#allocation2 + $0x198] sm:$0x1] %vm88, 0.0
  %138 = vst.msk [vmem:[#allocation2 + $0x1a0] sm:$0xff] %vm84, 0.0
  %139 = vst.msk [vmem:[#allocation2 + $0x1a8] sm:$0xff] %vm84, 0.0
  %140 = vst.msk [vmem:[#allocation2 + $0x1b0] sm:$0xff] %vm84, 0.0
  %141 = vst.msk [vmem:[#allocation2 + $0x1b8] sm:$0x1] %vm88, 0.0
  %142 = vst.msk [vmem:[#allocation2 + $0x1c0] sm:$0xff] %vm84, 0.0
  %143 = vst.msk [vmem:[#allocation2 + $0x1c8] sm:$0xff] %vm84, 0.0
  %144 = vst.msk [vmem:[#allocation2 + $0x1d0] sm:$0xff] %vm84, 0.0
  %145 = vst.msk [vmem:[#allocation2 + $0x1d8] sm:$0x1] %vm88, 0.0
  %146 = vst.msk [vmem:[#allocation2 + $0x1e0] sm:$0xff] %vm84, 0.0
  %147 = vst.msk [vmem:[#allocation2 + $0x1e8] sm:$0xff] %vm84, 0.0
  %148 = vst.msk [vmem:[#allocation2 + $0x1f0] sm:$0xff] %vm84, 0.0
  %149 = vst.msk [vmem:[#allocation2 + $0x1f8] sm:$0x1] %vm88, 0.0
  %150 = vst.msk [vmem:[#allocation2 + $0x200] sm:$0xff] %vm84, 0.0
  %151 = vst.msk [vmem:[#allocation2 + $0x208] sm:$0xff] %vm84, 0.0
  %152 = vst.msk [vmem:[#allocation2 + $0x210] sm:$0xff] %vm84, 0.0
  %153 = vst.msk [vmem:[#allocation2 + $0x218] sm:$0x1] %vm88, 0.0
  %154 = vst.msk [vmem:[#allocation2 + $0x220] sm:$0xff] %vm84, 0.0
  %155 = vst.msk [vmem:[#allocation2 + $0x228] sm:$0xff] %vm84, 0.0
  %156 = vst.msk [vmem:[#allocation2 + $0x230] sm:$0xff] %vm84, 0.0
  %157 = vst.msk [vmem:[#allocation2 + $0x238] sm:$0x1] %vm88, 0.0
  %158 = vst.msk [vmem:[#allocation2 + $0x240] sm:$0xff] %vm84, 0.0
  %159 = vst.msk [vmem:[#allocation2 + $0x248] sm:$0xff] %vm84, 0.0
  %160 = vst.msk [vmem:[#allocation2 + $0x250] sm:$0xff] %vm84, 0.0
  %161 = vst.msk [vmem:[#allocation2 + $0x258] sm:$0x1] %vm88, 0.0
  %162 = vst.msk [vmem:[#allocation2 + $0x260] sm:$0xff] %vm84, 0.0
  %163 = vst.msk [vmem:[#allocation2 + $0x268] sm:$0xff] %vm84, 0.0
  %164 = vst.msk [vmem:[#allocation2 + $0x270] sm:$0xff] %vm84, 0.0
  %165 = vst.msk [vmem:[#allocation2 + $0x278] sm:$0x1] %vm88, 0.0
  %166 = vst.msk [vmem:[#allocation2 + $0x280] sm:$0xff] %vm84, 0.0
  %167 = vst.msk [vmem:[#allocation2 + $0x288] sm:$0xff] %vm84, 0.0
  %168 = vst.msk [vmem:[#allocation2 + $0x290] sm:$0xff] %vm84, 0.0
  %169 = vst.msk [vmem:[#allocation2 + $0x298] sm:$0x1] %vm88, 0.0
  %170 = vst.msk [vmem:[#allocation2 + $0x2a0] sm:$0xff] %vm84, 0.0
  %171 = vst.msk [vmem:[#allocation2 + $0x2a8] sm:$0xff] %vm84, 0.0
  %172 = vst.msk [vmem:[#allocation2 + $0x2b0] sm:$0xff] %vm84, 0.0
  %173 = vst.msk [vmem:[#allocation2 + $0x2b8] sm:$0x1] %vm88, 0.0
  %174 = vst.msk [vmem:[#allocation2 + $0x2c0] sm:$0xff] %vm84, 0.0
  %175 = vst.msk [vmem:[#allocation2 + $0x2c8] sm:$0xff] %vm84, 0.0
  %176 = vst.msk [vmem:[#allocation2 + $0x2d0] sm:$0xff] %vm84, 0.0
  %177 = vst.msk [vmem:[#allocation2 + $0x2d8] sm:$0x1] %vm88, 0.0
  %178 = vst.msk [vmem:[#allocation2 + $0x2e0] sm:$0xff] %vm84, 0.0
  %179 = vst.msk [vmem:[#allocation2 + $0x2e8] sm:$0xff] %vm84, 0.0
  %180 = vst.msk [vmem:[#allocation2 + $0x2f0] sm:$0xff] %vm84, 0.0
  %181 = vst.msk [vmem:[#allocation2 + $0x2f8] sm:$0x1] %vm88, 0.0
  %182 = vst.msk [vmem:[#allocation2 + $0x300] sm:$0xff] %vm84, 0.0
  %183 = vst.msk [vmem:[#allocation2 + $0x308] sm:$0xff] %vm84, 0.0
  %184 = vst.msk [vmem:[#allocation2 + $0x310] sm:$0xff] %vm84, 0.0
  %185 = vst.msk [vmem:[#allocation2 + $0x318] sm:$0x1] %vm88, 0.0
  %186 = vst.msk [vmem:[#allocation2 + $0x320] sm:$0xff] %vm84, 0.0
  %187 = vst.msk [vmem:[#allocation2 + $0x328] sm:$0xff] %vm84, 0.0
  %188 = vst.msk [vmem:[#allocation2 + $0x330] sm:$0xff] %vm84, 0.0
  %189 = vst.msk [vmem:[#allocation2 + $0x338] sm:$0x1] %vm88, 0.0
  %190 = vst.msk [vmem:[#allocation2 + $0x340] sm:$0xff] %vm84, 0.0
  %191 = vst.msk [vmem:[#allocation2 + $0x348] sm:$0xff] %vm84, 0.0
  %192 = vst.msk [vmem:[#allocation2 + $0x350] sm:$0xff] %vm84, 0.0
  %193 = vst.msk [vmem:[#allocation2 + $0x358] sm:$0x1] %vm88, 0.0
  %194 = vst.msk [vmem:[#allocation2 + $0x360] sm:$0xff] %vm84, 0.0
  %195 = vst.msk [vmem:[#allocation2 + $0x368] sm:$0xff] %vm84, 0.0
  %196 = vst.msk [vmem:[#allocation2 + $0x370] sm:$0xff] %vm84, 0.0
  %197 = vst.msk [vmem:[#allocation2 + $0x378] sm:$0x1] %vm88, 0.0
  %198 = vst.msk [vmem:[#allocation2 + $0x380] sm:$0xff] %vm84, 0.0
  %199 = vst.msk [vmem:[#allocation2 + $0x388] sm:$0xff] %vm84, 0.0
  %200 = vst.msk [vmem:[#allocation2 + $0x390] sm:$0xff] %vm84, 0.0
  %201 = vst.msk [vmem:[#allocation2 + $0x398] sm:$0x1] %vm88, 0.0
  %202 = vst.msk [vmem:[#allocation2 + $0x3a0] sm:$0xff] %vm84, 0.0
  %203 = vst.msk [vmem:[#allocation2 + $0x3a8] sm:$0xff] %vm84, 0.0
  %204 = vst.msk [vmem:[#allocation2 + $0x3b0] sm:$0xff] %vm84, 0.0
  %205 = vst.msk [vmem:[#allocation2 + $0x3b8] sm:$0x1] %vm88, 0.0
  %206 = vst.msk [vmem:[#allocation2 + $0x3c0] sm:$0xff] %vm84, 0.0
  %207 = vst.msk [vmem:[#allocation2 + $0x3c8] sm:$0xff] %vm84, 0.0
  %208 = vst.msk [vmem:[#allocation2 + $0x3d0] sm:$0xff] %vm84, 0.0
  %209 = vst.msk [vmem:[#allocation2 + $0x3d8] sm:$0x1] %vm88, 0.0
  %210 = vst.msk [vmem:[#allocation2 + $0x3e0] sm:$0xff] %vm84, 0.0
  %211 = vst.msk [vmem:[#allocation2 + $0x3e8] sm:$0xff] %vm84, 0.0
  %212 = vst.msk [vmem:[#allocation2 + $0x3f0] sm:$0xff] %vm84, 0.0
  %213 = vst.msk [vmem:[#allocation2 + $0x3f8] sm:$0x1] %vm88, 0.0
  %214 = vst.msk [vmem:[#allocation2 + $0x400] sm:$0xff] %vm84, 0.0
  %215 = vst.msk [vmem:[#allocation2 + $0x408] sm:$0xff] %vm84, 0.0
  %216 = vst.msk [vmem:[#allocation2 + $0x410] sm:$0xff] %vm84, 0.0
  %217 = vst.msk [vmem:[#allocation2 + $0x418] sm:$0x1] %vm88, 0.0
  %218 = vst.msk [vmem:[#allocation2 + $0x420] sm:$0xff] %vm84, 0.0
  %219 = vst.msk [vmem:[#allocation2 + $0x428] sm:$0xff] %vm84, 0.0
  %220 = vst.msk [vmem:[#allocation2 + $0x430] sm:$0xff] %vm84, 0.0
  %221 = vst.msk [vmem:[#allocation2 + $0x438] sm:$0x1] %vm88, 0.0
  %222 = vst.msk [vmem:[#allocation2 + $0x440] sm:$0xff] %vm84, 0.0
  %223 = vst.msk [vmem:[#allocation2 + $0x448] sm:$0xff] %vm84, 0.0
  %224 = vst.msk [vmem:[#allocation2 + $0x450] sm:$0xff] %vm84, 0.0
  %225 = vst.msk [vmem:[#allocation2 + $0x458] sm:$0x1] %vm88, 0.0
  %226 = vst.msk [vmem:[#allocation2 + $0x460] sm:$0xff] %vm84, 0.0
  %227 = vst.msk [vmem:[#allocation2 + $0x468] sm:$0xff] %vm84, 0.0
  %228 = vst.msk [vmem:[#allocation2 + $0x470] sm:$0xff] %vm84, 0.0
  %229 = vst.msk [vmem:[#allocation2 + $0x478] sm:$0x1] %vm88, 0.0
  %s230 = scalar_lea.vmem [#allocation2], 32
  %231 = vst.msk [vmem:[%s230 + $0x8] sm:$0xff] %vm84, %v20
  %232 = vst.msk [vmem:[%s230 + $0x10] sm:$0xff] %vm84, %v21
  %233 = vst.msk [vmem:[%s230 + $0x28] sm:$0xff] %vm84, %v22
  %234 = vst.msk [vmem:[%s230 + $0x30] sm:$0xff] %vm84, %v23
  %235 = vst.msk [vmem:[%s230 + $0x48] sm:$0xff] %vm84, %v24
  %236 = vst.msk [vmem:[%s230 + $0x50] sm:$0xff] %vm84, %v25
  %237 = vst.msk [vmem:[%s230 + $0x68] sm:$0xff] %vm84, %v26
  %238 = vst.msk [vmem:[%s230 + $0x70] sm:$0xff] %vm84, %v27
  %239 = vst.msk [vmem:[%s230 + $0x88] sm:$0xff] %vm84, %v28
  %240 = vst.msk [vmem:[%s230 + $0x90] sm:$0xff] %vm84, %v29
  %241 = vst.msk [vmem:[%s230 + $0xa8] sm:$0xff] %vm84, %v30
  %242 = vst.msk [vmem:[%s230 + $0xb0] sm:$0xff] %vm84, %v31
  %243 = vst.msk [vmem:[%s230 + $0xc8] sm:$0xff] %vm84, %v32
  %244 = vst.msk [vmem:[%s230 + $0xd0] sm:$0xff] %vm84, %v33
  %245 = vst.msk [vmem:[%s230 + $0xe8] sm:$0xff] %vm84, %v34
  %246 = vst.msk [vmem:[%s230 + $0xf0] sm:$0xff] %vm84, %v35
  %247 = vst.msk [vmem:[%s230 + $0x108] sm:$0xff] %vm84, %v36
  %248 = vst.msk [vmem:[%s230 + $0x110] sm:$0xff] %vm84, %v37
  %249 = vst.msk [vmem:[%s230 + $0x128] sm:$0xff] %vm84, %v38
  %250 = vst.msk [vmem:[%s230 + $0x130] sm:$0xff] %vm84, %v39
  %251 = vst.msk [vmem:[%s230 + $0x148] sm:$0xff] %vm84, %v40
  %252 = vst.msk [vmem:[%s230 + $0x150] sm:$0xff] %vm84, %v41
  %253 = vst.msk [vmem:[%s230 + $0x168] sm:$0xff] %vm84, %v42
  %254 = vst.msk [vmem:[%s230 + $0x170] sm:$0xff] %vm84, %v43
  %255 = vst.msk [vmem:[%s230 + $0x188] sm:$0xff] %vm84, %v44
  %256 = vst.msk [vmem:[%s230 + $0x190] sm:$0xff] %vm84, %v45
  %257 = vst.msk [vmem:[%s230 + $0x1a8] sm:$0xff] %vm84, %v46
  %258 = vst.msk [vmem:[%s230 + $0x1b0] sm:$0xff] %vm84, %v47
  %259 = vst.msk [vmem:[%s230 + $0x1c8] sm:$0xff] %vm84, %v48
  %260 = vst.msk [vmem:[%s230 + $0x1d0] sm:$0xff] %vm84, %v49
  %261 = vst.msk [vmem:[%s230 + $0x1e8] sm:$0xff] %vm84, %v50
  %262 = vst.msk [vmem:[%s230 + $0x1f0] sm:$0xff] %vm84, %v51
  %263 = vst.msk [vmem:[%s230 + $0x248] sm:$0xff] %vm84, %v52
  %264 = vst.msk [vmem:[%s230 + $0x250] sm:$0xff] %vm84, %v53
  %265 = vst.msk [vmem:[%s230 + $0x268] sm:$0xff] %vm84, %v54
  %266 = vst.msk [vmem:[%s230 + $0x270] sm:$0xff] %vm84, %v55
  %267 = vst.msk [vmem:[%s230 + $0x288] sm:$0xff] %vm84, %v56
  %268 = vst.msk [vmem:[%s230 + $0x290] sm:$0xff] %vm84, %v57
  %269 = vst.msk [vmem:[%s230 + $0x2a8] sm:$0xff] %vm84, %v58
  %270 = vst.msk [vmem:[%s230 + $0x2b0] sm:$0xff] %vm84, %v59
  %271 = vst.msk [vmem:[%s230 + $0x2c8] sm:$0xff] %vm84, %v60
  %272 = vst.msk [vmem:[%s230 + $0x2d0] sm:$0xff] %vm84, %v61
  %273 = vst.msk [vmem:[%s230 + $0x2e8] sm:$0xff] %vm84, %v62
  %274 = vst.msk [vmem:[%s230 + $0x2f0] sm:$0xff] %vm84, %v63
  %275 = vst.msk [vmem:[%s230 + $0x308] sm:$0xff] %vm84, %v64
  %276 = vst.msk [vmem:[%s230 + $0x310] sm:$0xff] %vm84, %v65
  %277 = vst.msk [vmem:[%s230 + $0x328] sm:$0xff] %vm84, %v66
  %278 = vst.msk [vmem:[%s230 + $0x330] sm:$0xff] %vm84, %v67
  %279 = vst.msk [vmem:[%s230 + $0x348] sm:$0xff] %vm84, %v68
  %280 = vst.msk [vmem:[%s230 + $0x350] sm:$0xff] %vm84, %v69
  %281 = vst.msk [vmem:[%s230 + $0x368] sm:$0xff] %vm84, %v70
  %282 = vst.msk [vmem:[%s230 + $0x370] sm:$0xff] %vm84, %v71
  %283 = vst.msk [vmem:[%s230 + $0x388] sm:$0xff] %vm84, %v72
  %284 = vst.msk [vmem:[%s230 + $0x390] sm:$0xff] %vm84, %v73
  %285 = vst.msk [vmem:[%s230 + $0x3a8] sm:$0xff] %vm84, %v74
  %286 = vst.msk [vmem:[%s230 + $0x3b0] sm:$0xff] %vm84, %v75
  %287 = vst.msk [vmem:[%s230 + $0x3c8] sm:$0xff] %vm84, %v76
  %288 = vst.msk [vmem:[%s230 + $0x3d0] sm:$0xff] %vm84, %v77
  %289 = vst.msk [vmem:[%s230 + $0x3e8] sm:$0xff] %vm84, %v78
  %290 = vst.msk [vmem:[%s230 + $0x3f0] sm:$0xff] %vm84, %v79
  %291 = vst.msk [vmem:[%s230 + $0x408] sm:$0xff] %vm84, %v80
  %292 = vst.msk [vmem:[%s230 + $0x410] sm:$0xff] %vm84, %v81
  %293 = vst.msk [vmem:[%s230 + $0x428] sm:$0xff] %vm84, %v82
  %294 = vst.msk [vmem:[%s230 + $0x430] sm:$0xff] %vm84, %v83
  %v295 = vld [vmem:[#allocation2] sm:$0xff]
  %v296 = vld [vmem:[#allocation2 + $0x8] sm:$0xff]
  %v297 = vld [vmem:[#allocation2 + $0x10] sm:$0xff]
  %v298 = vld [vmem:[#allocation2 + $0x18] sm:$0x1]
  %v299 = vld [vmem:[#allocation2 + $0x20] sm:$0xff]
  %v300 = vld [vmem:[#allocation2 + $0x28] sm:$0xff]
  %v301 = vld [vmem:[#allocation2 + $0x30] sm:$0xff]
  %v302 = vld [vmem:[#allocation2 + $0x38] sm:$0x1]
  %v303 = vld [vmem:[#allocation2 + $0x40] sm:$0xff]
  %v304 = vld [vmem:[#allocation2 + $0x48] sm:$0xff]
  %v305 = vld [vmem:[#allocation2 + $0x50] sm:$0xff]
  %v306 = vld [vmem:[#allocation2 + $0x58] sm:$0x1]
  %v307 = vld [vmem:[#allocation2 + $0x60] sm:$0xff]
  %v308 = vld [vmem:[#allocation2 + $0x68] sm:$0xff]
  %v309 = vld [vmem:[#allocation2 + $0x70] sm:$0xff]
  %v310 = vld [vmem:[#allocation2 + $0x78] sm:$0x1]
  %v311 = vld [vmem:[#allocation2 + $0x80] sm:$0xff]
  %v312 = vld [vmem:[#allocation2 + $0x88] sm:$0xff]
  %v313 = vld [vmem:[#allocation2 + $0x90] sm:$0xff]
  %v314 = vld [vmem:[#allocation2 + $0x98] sm:$0x1]
  %v315 = vld [vmem:[#allocation2 + $0xa0] sm:$0xff]
  %v316 = vld [vmem:[#allocation2 + $0xa8] sm:$0xff]
  %v317 = vld [vmem:[#allocation2 + $0xb0] sm:$0xff]
  %v318 = vld [vmem:[#allocation2 + $0xb8] sm:$0x1]
  %v319 = vld [vmem:[#allocation2 + $0xc0] sm:$0xff]
  %v320 = vld [vmem:[#allocation2 + $0xc8] sm:$0xff]
  %v321 = vld [vmem:[#allocation2 + $0xd0] sm:$0xff]
  %v322 = vld [vmem:[#allocation2 + $0xd8] sm:$0x1]
  %v323 = vld [vmem:[#allocation2 + $0xe0] sm:$0xff]
  %v324 = vld [vmem:[#allocation2 + $0xe8] sm:$0xff]
  %v325 = vld [vmem:[#allocation2 + $0xf0] sm:$0xff]
  %v326 = vld [vmem:[#allocation2 + $0xf8] sm:$0x1]
  %v327 = vld [vmem:[#allocation2 + $0x100] sm:$0xff]
  %v328 = vld [vmem:[#allocation2 + $0x108] sm:$0xff]
  %v329 = vld [vmem:[#allocation2 + $0x110] sm:$0xff]
  %v330 = vld [vmem:[#allocation2 + $0x118] sm:$0x1]
  %v331 = vld [vmem:[#allocation2 + $0x120] sm:$0xff]
  %v332 = vld [vmem:[#allocation2 + $0x128] sm:$0xff]
  %v333 = vld [vmem:[#allocation2 + $0x130] sm:$0xff]
  %v334 = vld [vmem:[#allocation2 + $0x138] sm:$0x1]
  %v335 = vld [vmem:[#allocation2 + $0x140] sm:$0xff]
  %v336 = vld [vmem:[#allocation2 + $0x148] sm:$0xff]
  %v337 = vld [vmem:[#allocation2 + $0x150] sm:$0xff]
  %v338 = vld [vmem:[#allocation2 + $0x158] sm:$0x1]
  %v339 = vld [vmem:[#allocation2 + $0x160] sm:$0xff]
  %v340 = vld [vmem:[#allocation2 + $0x168] sm:$0xff]
  %v341 = vld [vmem:[#allocation2 + $0x170] sm:$0xff]
  %v342 = vld [vmem:[#allocation2 + $0x178] sm:$0x1]
  %v343 = vld [vmem:[#allocation2 + $0x180] sm:$0xff]
  %v344 = vld [vmem:[#allocation2 + $0x188] sm:$0xff]
  %v345 = vld [vmem:[#allocation2 + $0x190] sm:$0xff]
  %v346 = vld [vmem:[#allocation2 + $0x198] sm:$0x1]
  %v347 = vld [vmem:[#allocation2 + $0x1a0] sm:$0xff]
  %v348 = vld [vmem:[#allocation2 + $0x1a8] sm:$0xff]
  %v349 = vld [vmem:[#allocation2 + $0x1b0] sm:$0xff]
  %v350 = vld [vmem:[#allocation2 + $0x1b8] sm:$0x1]
  %v351 = vld [vmem:[#allocation2 + $0x1c0] sm:$0xff]
  %v352 = vld [vmem:[#allocation2 + $0x1c8] sm:$0xff]
  %v353 = vld [vmem:[#allocation2 + $0x1d0] sm:$0xff]
  %v354 = vld [vmem:[#allocation2 + $0x1d8] sm:$0x1]
  %v355 = vld [vmem:[#allocation2 + $0x1e0] sm:$0xff]
  %v356 = vld [vmem:[#allocation2 + $0x1e8] sm:$0xff]
  %v357 = vld [vmem:[#allocation2 + $0x1f0] sm:$0xff]
  %v358 = vld [vmem:[#allocation2 + $0x1f8] sm:$0x1]
  %v359 = vld [vmem:[#allocation2 + $0x200] sm:$0xff]
  %v360 = vld [vmem:[#allocation2 + $0x208] sm:$0xff]
  %v361 = vld [vmem:[#allocation2 + $0x210] sm:$0xff]
  %v362 = vld [vmem:[#allocation2 + $0x218] sm:$0x1]
  %v363 = vld [vmem:[#allocation2 + $0x220] sm:$0xff]
  %v364 = vld [vmem:[#allocation2 + $0x228] sm:$0xff]
  %v365 = vld [vmem:[#allocation2 + $0x230] sm:$0xff]
  %v366 = vld [vmem:[#allocation2 + $0x238] sm:$0x1]
  %v367 = vld [vmem:[#allocation2 + $0x240] sm:$0xff]
  %v368 = vld [vmem:[#allocation2 + $0x248] sm:$0xff]
  %v369 = vld [vmem:[#allocation2 + $0x250] sm:$0xff]
  %v370 = vld [vmem:[#allocation2 + $0x258] sm:$0x1]
  %v371 = vld [vmem:[#allocation2 + $0x260] sm:$0xff]
  %v372 = vld [vmem:[#allocation2 + $0x268] sm:$0xff]
  %v373 = vld [vmem:[#allocation2 + $0x270] sm:$0xff]
  %v374 = vld [vmem:[#allocation2 + $0x278] sm:$0x1]
  %v375 = vld [vmem:[#allocation2 + $0x280] sm:$0xff]
  %v376 = vld [vmem:[#allocation2 + $0x288] sm:$0xff]
  %v377 = vld [vmem:[#allocation2 + $0x290] sm:$0xff]
  %v378 = vld [vmem:[#allocation2 + $0x298] sm:$0x1]
  %v379 = vld [vmem:[#allocation2 + $0x2a0] sm:$0xff]
  %v380 = vld [vmem:[#allocation2 + $0x2a8] sm:$0xff]
  %v381 = vld [vmem:[#allocation2 + $0x2b0] sm:$0xff]
  %v382 = vld [vmem:[#allocation2 + $0x2b8] sm:$0x1]
  %v383 = vld [vmem:[#allocation2 + $0x2c0] sm:$0xff]
  %v384 = vld [vmem:[#allocation2 + $0x2c8] sm:$0xff]
  %v385 = vld [vmem:[#allocation2 + $0x2d0] sm:$0xff]
  %v386 = vld [vmem:[#allocation2 + $0x2d8] sm:$0x1]
  %v387 = vld [vmem:[#allocation2 + $0x2e0] sm:$0xff]
  %v388 = vld [vmem:[#allocation2 + $0x2e8] sm:$0xff]
  %v389 = vld [vmem:[#allocation2 + $0x2f0] sm:$0xff]
  %v390 = vld [vmem:[#allocation2 + $0x2f8] sm:$0x1]
  %v391 = vld [vmem:[#allocation2 + $0x300] sm:$0xff]
  %v392 = vld [vmem:[#allocation2 + $0x308] sm:$0xff]
  %v393 = vld [vmem:[#allocation2 + $0x310] sm:$0xff]
  %v394 = vld [vmem:[#allocation2 + $0x318] sm:$0x1]
  %v395 = vld [vmem:[#allocation2 + $0x320] sm:$0xff]
  %v396 = vld [vmem:[#allocation2 + $0x328] sm:$0xff]
  %v397 = vld [vmem:[#allocation2 + $0x330] sm:$0xff]
  %v398 = vld [vmem:[#allocation2 + $0x338] sm:$0x1]
  %v399 = vld [vmem:[#allocation2 + $0x340] sm:$0xff]
  %v400 = vld [vmem:[#allocation2 + $0x348] sm:$0xff]
  %v401 = vld [vmem:[#allocation2 + $0x350] sm:$0xff]
  %v402 = vld [vmem:[#allocation2 + $0x358] sm:$0x1]
  %v403 = vld [vmem:[#allocation2 + $0x360] sm:$0xff]
  %v404 = vld [vmem:[#allocation2 + $0x368] sm:$0xff]
  %v405 = vld [vmem:[#allocation2 + $0x370] sm:$0xff]
  %v406 = vld [vmem:[#allocation2 + $0x378] sm:$0x1]
  %v407 = vld [vmem:[#allocation2 + $0x380] sm:$0xff]
  %v408 = vld [vmem:[#allocation2 + $0x388] sm:$0xff]
  %v409 = vld [vmem:[#allocation2 + $0x390] sm:$0xff]
  %v410 = vld [vmem:[#allocation2 + $0x398] sm:$0x1]
  %v411 = vld [vmem:[#allocation2 + $0x3a0] sm:$0xff]
  %v412 = vld [vmem:[#allocation2 + $0x3a8] sm:$0xff]
  %v413 = vld [vmem:[#allocation2 + $0x3b0] sm:$0xff]
  %v414 = vld [vmem:[#allocation2 + $0x3b8] sm:$0x1]
  %v415 = vld [vmem:[#allocation2 + $0x3c0] sm:$0xff]
  %v416 = vld [vmem:[#allocation2 + $0x3c8] sm:$0xff]
  %v417 = vld [vmem:[#allocation2 + $0x3d0] sm:$0xff]
  %v418 = vld [vmem:[#allocation2 + $0x3d8] sm:$0x1]
  %v419 = vld [vmem:[#allocation2 + $0x3e0] sm:$0xff]
  %v420 = vld [vmem:[#allocation2 + $0x3e8] sm:$0xff]
  %v421 = vld [vmem:[#allocation2 + $0x3f0] sm:$0xff]
  %v422 = vld [vmem:[#allocation2 + $0x3f8] sm:$0x1]
  %v423 = vld [vmem:[#allocation2 + $0x400] sm:$0xff]
  %v424 = vld [vmem:[#allocation2 + $0x408] sm:$0xff]
  %v425 = vld [vmem:[#allocation2 + $0x410] sm:$0xff]
  %v426 = vld [vmem:[#allocation2 + $0x418] sm:$0x1]
  %v427 = vld [vmem:[#allocation2 + $0x420] sm:$0xff]
  %v428 = vld [vmem:[#allocation2 + $0x428] sm:$0xff]
  %v429 = vld [vmem:[#allocation2 + $0x430] sm:$0xff]
  %v430 = vld [vmem:[#allocation2 + $0x438] sm:$0x1]
  %v431 = vld [vmem:[#allocation2 + $0x440] sm:$0xff]
  %v432 = vld [vmem:[#allocation2 + $0x448] sm:$0xff]
  %v433 = vld [vmem:[#allocation2 + $0x450] sm:$0xff]
  %v434 = vld [vmem:[#allocation2 + $0x458] sm:$0x1]
  %v435 = vld [vmem:[#allocation2 + $0x460] sm:$0xff]
  %v436 = vld [vmem:[#allocation2 + $0x468] sm:$0xff]
  %v437 = vld [vmem:[#allocation2 + $0x470] sm:$0xff]
  %v438 = vld [vmem:[#allocation2 + $0x478] sm:$0x1]
  %vm535 = vcmask 1040384
  %v536 = vrot.slane %v295, 7
  %v537 = vrot.slane %v296, 7
  %v538 = vsel %vm535, %v536, %v537
  %v539 = vrot.slane %v297, 7
  %v540 = vsel %vm535, %v537, %v539
  %v541 = vrot.slane %v299, 7
  %v542 = vrot.slane %v300, 7
  %v543 = vsel %vm535, %v541, %v542
  %v544 = vrot.slane %v301, 7
  %v545 = vsel %vm535, %v542, %v544
  %v546 = vrot.slane %v303, 7
  %v547 = vrot.slane %v304, 7
  %v548 = vsel %vm535, %v546, %v547
  %v549 = vrot.slane %v305, 7
  %v550 = vsel %vm535, %v547, %v549
  %v551 = vrot.slane %v307, 7
  %v552 = vrot.slane %v308, 7
  %v553 = vsel %vm535, %v551, %v552
  %v554 = vrot.slane %v309, 7
  %v555 = vsel %vm535, %v552, %v554
  %v556 = vrot.slane %v311, 7
  %v557 = vrot.slane %v312, 7
  %v558 = vsel %vm535, %v556, %v557
  %v559 = vrot.slane %v313, 7
  %v560 = vsel %vm535, %v557, %v559
  %v561 = vrot.slane %v315, 7
  %v562 = vrot.slane %v316, 7
  %v563 = vsel %vm535, %v561, %v562
  %v564 = vrot.slane %v317, 7
  %v565 = vsel %vm535, %v562, %v564
  %v566 = vrot.slane %v319, 7
  %v567 = vrot.slane %v320, 7
  %v568 = vsel %vm535, %v566, %v567
  %v569 = vrot.slane %v321, 7
  %v570 = vsel %vm535, %v567, %v569
  %v571 = vrot.slane %v323, 7
  %v572 = vrot.slane %v324, 7
  %v573 = vsel %vm535, %v571, %v572
  %v574 = vrot.slane %v325, 7
  %v575 = vsel %vm535, %v572, %v574
  %v576 = vrot.slane %v327, 7
  %v577 = vrot.slane %v328, 7
  %v578 = vsel %vm535, %v576, %v577
  %v579 = vrot.slane %v329, 7
  %v580 = vsel %vm535, %v577, %v579
  %v581 = vrot.slane %v331, 7
  %v582 = vrot.slane %v332, 7
  %v583 = vsel %vm535, %v581, %v582
  %v584 = vrot.slane %v333, 7
  %v585 = vsel %vm535, %v582, %v584
  %v586 = vrot.slane %v335, 7
  %v587 = vrot.slane %v336, 7
  %v588 = vsel %vm535, %v586, %v587
  %v589 = vrot.slane %v337, 7
  %v590 = vsel %vm535, %v587, %v589
  %v591 = vrot.slane %v339, 7
  %v592 = vrot.slane %v340, 7
  %v593 = vsel %vm535, %v591, %v592
  %v594 = vrot.slane %v341, 7
  %v595 = vsel %vm535, %v592, %v594
  %v596 = vrot.slane %v343, 7
  %v597 = vrot.slane %v344, 7
  %v598 = vsel %vm535, %v596, %v597
  %v599 = vrot.slane %v345, 7
  %v600 = vsel %vm535, %v597, %v599
  %v601 = vrot.slane %v347, 7
  %v602 = vrot.slane %v348, 7
  %v603 = vsel %vm535, %v601, %v602
  %v604 = vrot.slane %v349, 7
  %v605 = vsel %vm535, %v602, %v604
  %v606 = vrot.slane %v351, 7
  %v607 = vrot.slane %v352, 7
  %v608 = vsel %vm535, %v606, %v607
  %v609 = vrot.slane %v353, 7
  %v610 = vsel %vm535, %v607, %v609
  %v611 = vrot.slane %v355, 7
  %v612 = vrot.slane %v356, 7
  %v613 = vsel %vm535, %v611, %v612
  %v614 = vrot.slane %v357, 7
  %v615 = vsel %vm535, %v612, %v614
  %v616 = vrot.slane %v367, 7
  %v617 = vrot.slane %v368, 7
  %v618 = vsel %vm535, %v616, %v617
  %v619 = vrot.slane %v369, 7
  %v620 = vsel %vm535, %v617, %v619
  %v621 = vrot.slane %v371, 7
  %v622 = vrot.slane %v372, 7
  %v623 = vsel %vm535, %v621, %v622
  %v624 = vrot.slane %v373, 7
  %v625 = vsel %vm535, %v622, %v624
  %v626 = vrot.slane %v375, 7
  %v627 = vrot.slane %v376, 7
  %v628 = vsel %vm535, %v626, %v627
  %v629 = vrot.slane %v377, 7
  %v630 = vsel %vm535, %v627, %v629
  %v631 = vrot.slane %v379, 7
  %v632 = vrot.slane %v380, 7
  %v633 = vsel %vm535, %v631, %v632
  %v634 = vrot.slane %v381, 7
  %v635 = vsel %vm535, %v632, %v634
  %v636 = vrot.slane %v383, 7
  %v637 = vrot.slane %v384, 7
  %v638 = vsel %vm535, %v636, %v637
  %v639 = vrot.slane %v385, 7
  %v640 = vsel %vm535, %v637, %v639
  %v641 = vrot.slane %v387, 7
  %v642 = vrot.slane %v388, 7
  %v643 = vsel %vm535, %v641, %v642
  %v644 = vrot.slane %v389, 7
  %v645 = vsel %vm535, %v642, %v644
  %v646 = vrot.slane %v391, 7
  %v647 = vrot.slane %v392, 7
  %v648 = vsel %vm535, %v646, %v647
  %v649 = vrot.slane %v393, 7
  %v650 = vsel %vm535, %v647, %v649
  %v651 = vrot.slane %v395, 7
  %v652 = vrot.slane %v396, 7
  %v653 = vsel %vm535, %v651, %v652
  %v654 = vrot.slane %v397, 7
  %v655 = vsel %vm535, %v652, %v654
  %v656 = vrot.slane %v399, 7
  %v657 = vrot.slane %v400, 7
  %v658 = vsel %vm535, %v656, %v657
  %v659 = vrot.slane %v401, 7
  %v660 = vsel %vm535, %v657, %v659
  %v661 = vrot.slane %v403, 7
  %v662 = vrot.slane %v404, 7
  %v663 = vsel %vm535, %v661, %v662
  %v664 = vrot.slane %v405, 7
  %v665 = vsel %vm535, %v662, %v664
  %v666 = vrot.slane %v407, 7
  %v667 = vrot.slane %v408, 7
  %v668 = vsel %vm535, %v666, %v667
  %v669 = vrot.slane %v409, 7
  %v670 = vsel %vm535, %v667, %v669
  %v671 = vrot.slane %v411, 7
  %v672 = vrot.slane %v412, 7
  %v673 = vsel %vm535, %v671, %v672
  %v674 = vrot.slane %v413, 7
  %v675 = vsel %vm535, %v672, %v674
  %v676 = vrot.slane %v415, 7
  %v677 = vrot.slane %v416, 7
  %v678 = vsel %vm535, %v676, %v677
  %v679 = vrot.slane %v417, 7
  %v680 = vsel %vm535, %v677, %v679
  %v681 = vrot.slane %v419, 7
  %v682 = vrot.slane %v420, 7
  %v683 = vsel %vm535, %v681, %v682
  %v684 = vrot.slane %v421, 7
  %v685 = vsel %vm535, %v682, %v684
  %v686 = vrot.slane %v423, 7
  %v687 = vrot.slane %v424, 7
  %v688 = vsel %vm535, %v686, %v687
  %v689 = vrot.slane %v425, 7
  %v690 = vsel %vm535, %v687, %v689
  %v691 = vrot.slane %v427, 7
  %v692 = vrot.slane %v428, 7
  %v693 = vsel %vm535, %v691, %v692
  %v694 = vrot.slane %v429, 7
  %v695 = vsel %vm535, %v692, %v694
  %v696 = vld [vmem:[%s1] sm:$0xf]
  %s697 = scalar_lea.vmem %s1, 4
  %v698 = vld [vmem:[%s697] sm:$0xf]
  %v699 = vsel %vm84, %v296, 0
  %v701 = vsel %vm84, %v297, 0
  %v703 = vsel %vm84, %v300, 0
  %v705 = vsel %vm84, %v301, 0
  %v707 = vsel %vm84, %v304, 0
  %v709 = vsel %vm84, %v305, 0
  %v711 = vsel %vm84, %v308, 0
  %v713 = vsel %vm84, %v309, 0
  %v715 = vsel %vm84, %v312, 0
  %v717 = vsel %vm84, %v313, 0
  %v719 = vsel %vm84, %v316, 0
  %v721 = vsel %vm84, %v317, 0
  %v723 = vsel %vm84, %v320, 0
  %v725 = vsel %vm84, %v321, 0
  %v727 = vsel %vm84, %v324, 0
  %v729 = vsel %vm84, %v325, 0
  %v731 = vsel %vm84, %v328, 0
  %v733 = vsel %vm84, %v329, 0
  %v735 = vsel %vm84, %v332, 0
  %v737 = vsel %vm84, %v333, 0
  %v739 = vsel %vm84, %v336, 0
  %v741 = vsel %vm84, %v337, 0
  %v743 = vsel %vm84, %v340, 0
  %v745 = vsel %vm84, %v341, 0
  %v747 = vsel %vm84, %v344, 0
  %v749 = vsel %vm84, %v345, 0
  %v751 = vsel %vm84, %v348, 0
  %v753 = vsel %vm84, %v349, 0
  %v755 = vsel %vm84, %v352, 0
  %v757 = vsel %vm84, %v353, 0
  %v759 = vsel %vm84, %v356, 0
  %v761 = vsel %vm84, %v357, 0
  %v763 = vsel %vm84, %v368, 0
  %v765 = vsel %vm84, %v369, 0
  %v767 = vsel %vm84, %v372, 0
  %v769 = vsel %vm84, %v373, 0
  %v771 = vsel %vm84, %v376, 0
  %v773 = vsel %vm84, %v377, 0
  %v775 = vsel %vm84, %v380, 0
  %v777 = vsel %vm84, %v381, 0
  %v779 = vsel %vm84, %v384, 0
  %v781 = vsel %vm84, %v385, 0
  %v783 = vsel %vm84, %v388, 0
  %v785 = vsel %vm84, %v389, 0
  %v787 = vsel %vm84, %v392, 0
  %v789 = vsel %vm84, %v393, 0
  %v791 = vsel %vm84, %v396, 0
  %v793 = vsel %vm84, %v397, 0
  %v795 = vsel %vm84, %v400, 0
  %v797 = vsel %vm84, %v401, 0
  %v799 = vsel %vm84, %v404, 0
  %v801 = vsel %vm84, %v405, 0
  %v803 = vsel %vm84, %v408, 0
  %v805 = vsel %vm84, %v409, 0
  %v807 = vsel %vm84, %v412, 0
  %v809 = vsel %vm84, %v413, 0
  %v811 = vsel %vm84, %v416, 0
  %v813 = vsel %vm84, %v417, 0
  %v815 = vsel %vm84, %v420, 0
  %v817 = vsel %vm84, %v421, 0
  %v819 = vsel %vm84, %v424, 0
  %v821 = vsel %vm84, %v425, 0
  %v823 = vsel %vm84, %v428, 0
  %v825 = vsel %vm84, %v429, 0
  %vm827 = vcmask 1043456
  %v829 = vsel %vm827, %v698, 0
  %831 = vmatprep.subr.mxu0 0.0
  %832 = vmatpush1.msra.mxu0 0.0
  %833 = vmatprep.subr.mxu0 0.0
  %834 = vmatpush1.msra.mxu0 0.0
  %835 = vmatprep.subr.mxu0 0.0
  %836 = vmatpush1.msra.mxu0 0.0
  %837 = vmatprep.subr.mxu0 0.0
  %838 = vmatpush1.msra.mxu0 0.0
  %839 = vmatprep.subr.mxu0 0.0
  %840 = vmatpush1.msra.mxu0 0.0
  %841 = vmatprep.subr.mxu0 0.0
  %842 = vmatpush1.msra.mxu0 0.0
  %843 = vmatprep.subr.mxu0 0.0
  %844 = vmatpush1.msra.mxu0 0.0
  %845 = vmatprep.subr.mxu0 0.0
  %846 = vmatpush1.msra.mxu0 0.0
  %847 = vmatprep.subr.mxu0 0.0
  %848 = vmatpush1.msra.mxu0 0.0
  %849 = vmatprep.subr.mxu0 0.0
  %850 = vmatpush1.msra.mxu0 0.0
  %851 = vmatprep.subr.mxu0 0.0
  %852 = vmatpush1.msra.mxu0 0.0
  %853 = vmatprep.subr.mxu0 0.0
  %854 = vmatpush1.msra.mxu0 0.0
  %855 = vmatprep.subr.mxu0 0.0
  %856 = vmatpush1.msra.mxu0 0.0
  %857 = vmatprep.subr.mxu0 0.0
  %858 = vmatpush1.msra.mxu0 0.0
  %859 = vmatprep.subr.mxu0 0.0
  %860 = vmatpush1.msra.mxu0 0.0
  %861 = vmatprep.subr.mxu0 0.0
  %862 = vmatpush1.msra.mxu0 %v829
  %863 = vmatprep.subr.mxu0 0.0
  %864 = vmatpush2.msra.mxu0 0.0
  %865 = vmatprep.subr.mxu0 0.0
  %866 = vmatpush2.msra.mxu0 0.0
  %867 = vmatprep.subr.mxu0 0.0
  %868 = vmatpush2.msra.mxu0 0.0
  %869 = vmatprep.subr.mxu0 0.0
  %870 = vmatpush2.msra.mxu0 0.0
  %871 = vmatprep.subr.mxu0 0.0
  %872 = vmatpush2.msra.mxu0 0.0
  %873 = vmatprep.subr.mxu0 0.0
  %874 = vmatpush2.msra.mxu0 0.0
  %875 = vmatprep.subr.mxu0 0.0
  %876 = vmatpush2.msra.mxu0 0.0
  %877 = vmatprep.subr.mxu0 0.0
  %878 = vmatpush2.msra.mxu0 0.0
  %879 = vmatprep.subr.mxu0 0.0
  %880 = vmatpush2.msra.mxu0 0.0
  %881 = vmatprep.subr.mxu0 0.0
  %882 = vmatpush2.msra.mxu0 0.0
  %883 = vmatprep.subr.mxu0 0.0
  %884 = vmatpush2.msra.mxu0 0.0
  %885 = vmatprep.subr.mxu0 0.0
  %886 = vmatpush2.msra.mxu0 0.0
  %887 = vmatprep.subr.mxu0 0.0
  %888 = vmatpush2.msra.mxu0 0.0
  %889 = vmatprep.subr.mxu0 0.0
  %890 = vmatpush2.msra.mxu0 0.0
  %891 = vmatprep.subr.mxu0 0.0
  %892 = vmatpush2.msra.mxu0 0.0
  %893 = vmatprep.subr.mxu0 0.0
  %894 = vmatpush2.msra.mxu0 0.0
  %895 = vmatprep.mubr.f32.mxu0 0.0
  %896 = vmatmul.mubr.f32.gmra.mxu0 %v699
  %v897 = vpop.f32.mrf.mxu0
  %v898 = vadd.f32 0.0, %v897
  %v899 = vpop.f32.mrf.mxu0
  %900 = vmatprep.mubr.f32.mxu0 0.0
  %901 = vmatmul.mubr.f32.gmra.mxu0 %v701
  %v902 = vpop.f32.mrf.mxu0
  %v903 = vadd.f32 0.0, %v902
  %v904 = vpop.f32.mrf.mxu0
  %905 = vmatprep.mubr.f32.mxu0 0.0
  %906 = vmatmul.mubr.f32.gmra.mxu0 %v703
  %v907 = vpop.f32.mrf.mxu0
  %v908 = vadd.f32 0.0, %v907
  %v909 = vpop.f32.mrf.mxu0
  %910 = vmatprep.mubr.f32.mxu0 0.0
  %911 = vmatmul.mubr.f32.gmra.mxu0 %v705
  %v912 = vpop.f32.mrf.mxu0
  %v913 = vadd.f32 0.0, %v912
  %v914 = vpop.f32.mrf.mxu0
  %915 = vmatprep.mubr.f32.mxu0 0.0
  %916 = vmatmul.mubr.f32.gmra.mxu0 %v707
  %v917 = vpop.f32.mrf.mxu0
  %v918 = vadd.f32 0.0, %v917
  %v919 = vpop.f32.mrf.mxu0
  %920 = vmatprep.mubr.f32.mxu0 0.0
  %921 = vmatmul.mubr.f32.gmra.mxu0 %v709
  %v922 = vpop.f32.mrf.mxu0
  %v923 = vadd.f32 0.0, %v922
  %v924 = vpop.f32.mrf.mxu0
  %925 = vmatprep.mubr.f32.mxu0 0.0
  %926 = vmatmul.mubr.f32.gmra.mxu0 %v711
  %v927 = vpop.f32.mrf.mxu0
  %v928 = vadd.f32 0.0, %v927
  %v929 = vpop.f32.mrf.mxu0
  %930 = vmatprep.mubr.f32.mxu0 0.0
  %931 = vmatmul.mubr.f32.gmra.mxu0 %v713
  %v932 = vpop.f32.mrf.mxu0
  %v933 = vadd.f32 0.0, %v932
  %v934 = vpop.f32.mrf.mxu0
  %935 = vmatprep.mubr.f32.mxu0 0.0
  %936 = vmatmul.mubr.f32.gmra.mxu0 %v715
  %v937 = vpop.f32.mrf.mxu0
  %v938 = vadd.f32 0.0, %v937
  %v939 = vpop.f32.mrf.mxu0
  %940 = vmatprep.mubr.f32.mxu0 0.0
  %941 = vmatmul.mubr.f32.gmra.mxu0 %v717
  %v942 = vpop.f32.mrf.mxu0
  %v943 = vadd.f32 0.0, %v942
  %v944 = vpop.f32.mrf.mxu0
  %945 = vmatprep.mubr.f32.mxu0 0.0
  %946 = vmatmul.mubr.f32.gmra.mxu0 %v719
  %v947 = vpop.f32.mrf.mxu0
  %v948 = vadd.f32 0.0, %v947
  %v949 = vpop.f32.mrf.mxu0
  %950 = vmatprep.mubr.f32.mxu0 0.0
  %951 = vmatmul.mubr.f32.gmra.mxu0 %v721
  %v952 = vpop.f32.mrf.mxu0
  %v953 = vadd.f32 0.0, %v952
  %v954 = vpop.f32.mrf.mxu0
  %955 = vmatprep.mubr.f32.mxu0 0.0
  %956 = vmatmul.mubr.f32.gmra.mxu0 %v723
  %v957 = vpop.f32.mrf.mxu0
  %v958 = vadd.f32 0.0, %v957
  %v959 = vpop.f32.mrf.mxu0
  %960 = vmatprep.mubr.f32.mxu0 0.0
  %961 = vmatmul.mubr.f32.gmra.mxu0 %v725
  %v962 = vpop.f32.mrf.mxu0
  %v963 = vadd.f32 0.0, %v962
  %v964 = vpop.f32.mrf.mxu0
  %965 = vmatprep.mubr.f32.mxu0 0.0
  %966 = vmatmul.mubr.f32.gmra.mxu0 %v727
  %v967 = vpop.f32.mrf.mxu0
  %v968 = vadd.f32 0.0, %v967
  %v969 = vpop.f32.mrf.mxu0
  %970 = vmatprep.mubr.f32.mxu0 0.0
  %971 = vmatmul.mubr.f32.gmra.mxu0 %v729
  %v972 = vpop.f32.mrf.mxu0
  %v973 = vadd.f32 0.0, %v972
  %v974 = vpop.f32.mrf.mxu0
  %975 = vmatprep.mubr.f32.mxu0 0.0
  %976 = vmatmul.mubr.f32.gmra.mxu0 %v731
  %v977 = vpop.f32.mrf.mxu0
  %v978 = vadd.f32 0.0, %v977
  %v979 = vpop.f32.mrf.mxu0
  %980 = vmatprep.mubr.f32.mxu0 0.0
  %981 = vmatmul.mubr.f32.gmra.mxu0 %v733
  %v982 = vpop.f32.mrf.mxu0
  %v983 = vadd.f32 0.0, %v982
  %v984 = vpop.f32.mrf.mxu0
  %985 = vmatprep.mubr.f32.mxu0 0.0
  %986 = vmatmul.mubr.f32.gmra.mxu0 %v735
  %v987 = vpop.f32.mrf.mxu0
  %v988 = vadd.f32 0.0, %v987
  %v989 = vpop.f32.mrf.mxu0
  %990 = vmatprep.mubr.f32.mxu0 0.0
  %991 = vmatmul.mubr.f32.gmra.mxu0 %v737
  %v992 = vpop.f32.mrf.mxu0
  %v993 = vadd.f32 0.0, %v992
  %v994 = vpop.f32.mrf.mxu0
  %995 = vmatprep.mubr.f32.mxu0 0.0
  %996 = vmatmul.mubr.f32.gmra.mxu0 %v739
  %v997 = vpop.f32.mrf.mxu0
  %v998 = vadd.f32 0.0, %v997
  %v999 = vpop.f32.mrf.mxu0
  %1000 = vmatprep.mubr.f32.mxu0 0.0
  %1001 = vmatmul.mubr.f32.gmra.mxu0 %v741
  %v1002 = vpop.f32.mrf.mxu0
  %v1003 = vadd.f32 0.0, %v1002
  %v1004 = vpop.f32.mrf.mxu0
  %1005 = vmatprep.mubr.f32.mxu0 0.0
  %1006 = vmatmul.mubr.f32.gmra.mxu0 %v743
  %v1007 = vpop.f32.mrf.mxu0
  %v1008 = vadd.f32 0.0, %v1007
  %v1009 = vpop.f32.mrf.mxu0
  %1010 = vmatprep.mubr.f32.mxu0 0.0
  %1011 = vmatmul.mubr.f32.gmra.mxu0 %v745
  %v1012 = vpop.f32.mrf.mxu0
  %v1013 = vadd.f32 0.0, %v1012
  %v1014 = vpop.f32.mrf.mxu0
  %1015 = vmatprep.mubr.f32.mxu0 0.0
  %1016 = vmatmul.mubr.f32.gmra.mxu0 %v747
  %v1017 = vpop.f32.mrf.mxu0
  %v1018 = vadd.f32 0.0, %v1017
  %v1019 = vpop.f32.mrf.mxu0
  %1020 = vmatprep.mubr.f32.mxu0 0.0
  %1021 = vmatmul.mubr.f32.gmra.mxu0 %v749
  %v1022 = vpop.f32.mrf.mxu0
  %v1023 = vadd.f32 0.0, %v1022
  %v1024 = vpop.f32.mrf.mxu0
  %1025 = vmatprep.mubr.f32.mxu0 0.0
  %1026 = vmatmul.mubr.f32.gmra.mxu0 %v751
  %v1027 = vpop.f32.mrf.mxu0
  %v1028 = vadd.f32 0.0, %v1027
  %v1029 = vpop.f32.mrf.mxu0
  %1030 = vmatprep.mubr.f32.mxu0 0.0
  %1031 = vmatmul.mubr.f32.gmra.mxu0 %v753
  %v1032 = vpop.f32.mrf.mxu0
  %v1033 = vadd.f32 0.0, %v1032
  %v1034 = vpop.f32.mrf.mxu0
  %1035 = vmatprep.mubr.f32.mxu0 0.0
  %1036 = vmatmul.mubr.f32.gmra.mxu0 %v755
  %v1037 = vpop.f32.mrf.mxu0
  %v1038 = vadd.f32 0.0, %v1037
  %v1039 = vpop.f32.mrf.mxu0
  %1040 = vmatprep.mubr.f32.mxu0 0.0
  %1041 = vmatmul.mubr.f32.gmra.mxu0 %v757
  %v1042 = vpop.f32.mrf.mxu0
  %v1043 = vadd.f32 0.0, %v1042
  %v1044 = vpop.f32.mrf.mxu0
  %1045 = vmatprep.mubr.f32.mxu0 0.0
  %1046 = vmatmul.mubr.f32.gmra.mxu0 %v759
  %v1047 = vpop.f32.mrf.mxu0
  %v1048 = vadd.f32 0.0, %v1047
  %v1049 = vpop.f32.mrf.mxu0
  %1050 = vmatprep.mubr.f32.mxu0 0.0
  %1051 = vmatmul.mubr.f32.gmra.mxu0 %v761
  %v1052 = vpop.f32.mrf.mxu0
  %v1053 = vadd.f32 0.0, %v1052
  %v1054 = vpop.f32.mrf.mxu0
  %1055 = vmatprep.mubr.f32.mxu0 0.0
  %1056 = vmatmul.mubr.f32.gmra.mxu0 %v763
  %v1057 = vpop.f32.mrf.mxu0
  %v1058 = vadd.f32 0.0, %v1057
  %v1059 = vpop.f32.mrf.mxu0
  %1060 = vmatprep.mubr.f32.mxu0 0.0
  %1061 = vmatmul.mubr.f32.gmra.mxu0 %v765
  %v1062 = vpop.f32.mrf.mxu0
  %v1063 = vadd.f32 0.0, %v1062
  %v1064 = vpop.f32.mrf.mxu0
  %1065 = vmatprep.mubr.f32.mxu0 0.0
  %1066 = vmatmul.mubr.f32.gmra.mxu0 %v767
  %v1067 = vpop.f32.mrf.mxu0
  %v1068 = vadd.f32 0.0, %v1067
  %v1069 = vpop.f32.mrf.mxu0
  %1070 = vmatprep.mubr.f32.mxu0 0.0
  %1071 = vmatmul.mubr.f32.gmra.mxu0 %v769
  %v1072 = vpop.f32.mrf.mxu0
  %v1073 = vadd.f32 0.0, %v1072
  %v1074 = vpop.f32.mrf.mxu0
  %1075 = vmatprep.mubr.f32.mxu0 0.0
  %1076 = vmatmul.mubr.f32.gmra.mxu0 %v771
  %v1077 = vpop.f32.mrf.mxu0
  %v1078 = vadd.f32 0.0, %v1077
  %v1079 = vpop.f32.mrf.mxu0
  %1080 = vmatprep.mubr.f32.mxu0 0.0
  %1081 = vmatmul.mubr.f32.gmra.mxu0 %v773
  %v1082 = vpop.f32.mrf.mxu0
  %v1083 = vadd.f32 0.0, %v1082
  %v1084 = vpop.f32.mrf.mxu0
  %1085 = vmatprep.mubr.f32.mxu0 0.0
  %1086 = vmatmul.mubr.f32.gmra.mxu0 %v775
  %v1087 = vpop.f32.mrf.mxu0
  %v1088 = vadd.f32 0.0, %v1087
  %v1089 = vpop.f32.mrf.mxu0
  %1090 = vmatprep.mubr.f32.mxu0 0.0
  %1091 = vmatmul.mubr.f32.gmra.mxu0 %v777
  %v1092 = vpop.f32.mrf.mxu0
  %v1093 = vadd.f32 0.0, %v1092
  %v1094 = vpop.f32.mrf.mxu0
  %1095 = vmatprep.mubr.f32.mxu0 0.0
  %1096 = vmatmul.mubr.f32.gmra.mxu0 %v779
  %v1097 = vpop.f32.mrf.mxu0
  %v1098 = vadd.f32 0.0, %v1097
  %v1099 = vpop.f32.mrf.mxu0
  %1100 = vmatprep.mubr.f32.mxu0 0.0
  %1101 = vmatmul.mubr.f32.gmra.mxu0 %v781
  %v1102 = vpop.f32.mrf.mxu0
  %v1103 = vadd.f32 0.0, %v1102
  %v1104 = vpop.f32.mrf.mxu0
  %1105 = vmatprep.mubr.f32.mxu0 0.0
  %1106 = vmatmul.mubr.f32.gmra.mxu0 %v783
  %v1107 = vpop.f32.mrf.mxu0
  %v1108 = vadd.f32 0.0, %v1107
  %v1109 = vpop.f32.mrf.mxu0
  %1110 = vmatprep.mubr.f32.mxu0 0.0
  %1111 = vmatmul.mubr.f32.gmra.mxu0 %v785
  %v1112 = vpop.f32.mrf.mxu0
  %v1113 = vadd.f32 0.0, %v1112
  %v1114 = vpop.f32.mrf.mxu0
  %1115 = vmatprep.mubr.f32.mxu0 0.0
  %1116 = vmatmul.mubr.f32.gmra.mxu0 %v787
  %v1117 = vpop.f32.mrf.mxu0
  %v1118 = vadd.f32 0.0, %v1117
  %v1119 = vpop.f32.mrf.mxu0
  %1120 = vmatprep.mubr.f32.mxu0 0.0
  %1121 = vmatmul.mubr.f32.gmra.mxu0 %v789
  %v1122 = vpop.f32.mrf.mxu0
  %v1123 = vadd.f32 0.0, %v1122
  %v1124 = vpop.f32.mrf.mxu0
  %1125 = vmatprep.mubr.f32.mxu0 0.0
  %1126 = vmatmul.mubr.f32.gmra.mxu0 %v791
  %v1127 = vpop.f32.mrf.mxu0
  %v1128 = vadd.f32 0.0, %v1127
  %v1129 = vpop.f32.mrf.mxu0
  %1130 = vmatprep.mubr.f32.mxu0 0.0
  %1131 = vmatmul.mubr.f32.gmra.mxu0 %v793
  %v1132 = vpop.f32.mrf.mxu0
  %v1133 = vadd.f32 0.0, %v1132
  %v1134 = vpop.f32.mrf.mxu0
  %1135 = vmatprep.mubr.f32.mxu0 0.0
  %1136 = vmatmul.mubr.f32.gmra.mxu0 %v795
  %v1137 = vpop.f32.mrf.mxu0
  %v1138 = vadd.f32 0.0, %v1137
  %v1139 = vpop.f32.mrf.mxu0
  %1140 = vmatprep.mubr.f32.mxu0 0.0
  %1141 = vmatmul.mubr.f32.gmra.mxu0 %v797
  %v1142 = vpop.f32.mrf.mxu0
  %v1143 = vadd.f32 0.0, %v1142
  %v1144 = vpop.f32.mrf.mxu0
  %1145 = vmatprep.mubr.f32.mxu0 0.0
  %1146 = vmatmul.mubr.f32.gmra.mxu0 %v799
  %v1147 = vpop.f32.mrf.mxu0
  %v1148 = vadd.f32 0.0, %v1147
  %v1149 = vpop.f32.mrf.mxu0
  %1150 = vmatprep.mubr.f32.mxu0 0.0
  %1151 = vmatmul.mubr.f32.gmra.mxu0 %v801
  %v1152 = vpop.f32.mrf.mxu0
  %v1153 = vadd.f32 0.0, %v1152
  %v1154 = vpop.f32.mrf.mxu0
  %1155 = vmatprep.mubr.f32.mxu0 0.0
  %1156 = vmatmul.mubr.f32.gmra.mxu0 %v803
  %v1157 = vpop.f32.mrf.mxu0
  %v1158 = vadd.f32 0.0, %v1157
  %v1159 = vpop.f32.mrf.mxu0
  %1160 = vmatprep.mubr.f32.mxu0 0.0
  %1161 = vmatmul.mubr.f32.gmra.mxu0 %v805
  %v1162 = vpop.f32.mrf.mxu0
  %v1163 = vadd.f32 0.0, %v1162
  %v1164 = vpop.f32.mrf.mxu0
  %1165 = vmatprep.mubr.f32.mxu0 0.0
  %1166 = vmatmul.mubr.f32.gmra.mxu0 %v807
  %v1167 = vpop.f32.mrf.mxu0
  %v1168 = vadd.f32 0.0, %v1167
  %v1169 = vpop.f32.mrf.mxu0
  %1170 = vmatprep.mubr.f32.mxu0 0.0
  %1171 = vmatmul.mubr.f32.gmra.mxu0 %v809
  %v1172 = vpop.f32.mrf.mxu0
  %v1173 = vadd.f32 0.0, %v1172
  %v1174 = vpop.f32.mrf.mxu0
  %1175 = vmatprep.mubr.f32.mxu0 0.0
  %1176 = vmatmul.mubr.f32.gmra.mxu0 %v811
  %v1177 = vpop.f32.mrf.mxu0
  %v1178 = vadd.f32 0.0, %v1177
  %v1179 = vpop.f32.mrf.mxu0
  %1180 = vmatprep.mubr.f32.mxu0 0.0
  %1181 = vmatmul.mubr.f32.gmra.mxu0 %v813
  %v1182 = vpop.f32.mrf.mxu0
  %v1183 = vadd.f32 0.0, %v1182
  %v1184 = vpop.f32.mrf.mxu0
  %1185 = vmatprep.mubr.f32.mxu0 0.0
  %1186 = vmatmul.mubr.f32.gmra.mxu0 %v815
  %v1187 = vpop.f32.mrf.mxu0
  %v1188 = vadd.f32 0.0, %v1187
  %v1189 = vpop.f32.mrf.mxu0
  %1190 = vmatprep.mubr.f32.mxu0 0.0
  %1191 = vmatmul.mubr.f32.gmra.mxu0 %v817
  %v1192 = vpop.f32.mrf.mxu0
  %v1193 = vadd.f32 0.0, %v1192
  %v1194 = vpop.f32.mrf.mxu0
  %1195 = vmatprep.mubr.f32.mxu0 0.0
  %1196 = vmatmul.mubr.f32.gmra.mxu0 %v819
  %v1197 = vpop.f32.mrf.mxu0
  %v1198 = vadd.f32 0.0, %v1197
  %v1199 = vpop.f32.mrf.mxu0
  %1200 = vmatprep.mubr.f32.mxu0 0.0
  %1201 = vmatmul.mubr.f32.gmra.mxu0 %v821
  %v1202 = vpop.f32.mrf.mxu0
  %v1203 = vadd.f32 0.0, %v1202
  %v1204 = vpop.f32.mrf.mxu0
  %1205 = vmatprep.mubr.f32.mxu0 0.0
  %1206 = vmatmul.mubr.f32.gmra.mxu0 %v823
  %v1207 = vpop.f32.mrf.mxu0
  %v1208 = vadd.f32 0.0, %v1207
  %v1209 = vpop.f32.mrf.mxu0
  %1210 = vmatprep.mubr.f32.mxu0 0.0
  %1211 = vmatmul.mubr.f32.gmra.mxu0 %v825
  %v1212 = vpop.f32.mrf.mxu0
  %v1213 = vadd.f32 0.0, %v1212
  %v1214 = vpop.f32.mrf.mxu0
  %1215 = vdwg.mxu0
  %v1216 = vsel %vm84, %v538, 0
  %v1218 = vsel %vm84, %v540, 0
  %v1220 = vsel %vm84, %v543, 0
  %v1222 = vsel %vm84, %v545, 0
  %v1224 = vsel %vm84, %v548, 0
  %v1226 = vsel %vm84, %v550, 0
  %v1228 = vsel %vm84, %v553, 0
  %v1230 = vsel %vm84, %v555, 0
  %v1232 = vsel %vm84, %v558, 0
  %v1234 = vsel %vm84, %v560, 0
  %v1236 = vsel %vm84, %v563, 0
  %v1238 = vsel %vm84, %v565, 0
  %v1240 = vsel %vm84, %v568, 0
  %v1242 = vsel %vm84, %v570, 0
  %v1244 = vsel %vm84, %v573, 0
  %v1246 = vsel %vm84, %v575, 0
  %v1248 = vsel %vm84, %v578, 0
  %v1250 = vsel %vm84, %v580, 0
  %v1252 = vsel %vm84, %v583, 0
  %v1254 = vsel %vm84, %v585, 0
  %v1256 = vsel %vm84, %v588, 0
  %v1258 = vsel %vm84, %v590, 0
  %v1260 = vsel %vm84, %v593, 0
  %v1262 = vsel %vm84, %v595, 0
  %v1264 = vsel %vm84, %v598, 0
  %v1266 = vsel %vm84, %v600, 0
  %v1268 = vsel %vm84, %v603, 0
  %v1270 = vsel %vm84, %v605, 0
  %v1272 = vsel %vm84, %v608, 0
  %v1274 = vsel %vm84, %v610, 0
  %v1276 = vsel %vm84, %v613, 0
  %v1278 = vsel %vm84, %v615, 0
  %v1280 = vsel %vm84, %v618, 0
  %v1282 = vsel %vm84, %v620, 0
  %v1284 = vsel %vm84, %v623, 0
  %v1286 = vsel %vm84, %v625, 0
  %v1288 = vsel %vm84, %v628, 0
  %v1290 = vsel %vm84, %v630, 0
  %v1292 = vsel %vm84, %v633, 0
  %v1294 = vsel %vm84, %v635, 0
  %v1296 = vsel %vm84, %v638, 0
  %v1298 = vsel %vm84, %v640, 0
  %v1300 = vsel %vm84, %v643, 0
  %v1302 = vsel %vm84, %v645, 0
  %v1304 = vsel %vm84, %v648, 0
  %v1306 = vsel %vm84, %v650, 0
  %v1308 = vsel %vm84, %v653, 0
  %v1310 = vsel %vm84, %v655, 0
  %v1312 = vsel %vm84, %v658, 0
  %v1314 = vsel %vm84, %v660, 0
  %v1316 = vsel %vm84, %v663, 0
  %v1318 = vsel %vm84, %v665, 0
  %v1320 = vsel %vm84, %v668, 0
  %v1322 = vsel %vm84, %v670, 0
  %v1324 = vsel %vm84, %v673, 0
  %v1326 = vsel %vm84, %v675, 0
  %v1328 = vsel %vm84, %v678, 0
  %v1330 = vsel %vm84, %v680, 0
  %v1332 = vsel %vm84, %v683, 0
  %v1334 = vsel %vm84, %v685, 0
  %v1336 = vsel %vm84, %v688, 0
  %v1338 = vsel %vm84, %v690, 0
  %v1340 = vsel %vm84, %v693, 0
  %v1342 = vsel %vm84, %v695, 0
  %v1345 = vsel %vm827, %v696, 0
  %1347 = vmatprep.subr.mxu0 0.0
  %1348 = vmatpush1.msra.mxu0 0.0
  %1349 = vmatprep.subr.mxu0 0.0
  %1350 = vmatpush1.msra.mxu0 0.0
  %1351 = vmatprep.subr.mxu0 0.0
  %1352 = vmatpush1.msra.mxu0 0.0
  %1353 = vmatprep.subr.mxu0 0.0
  %1354 = vmatpush1.msra.mxu0 0.0
  %1355 = vmatprep.subr.mxu0 0.0
  %1356 = vmatpush1.msra.mxu0 0.0
  %1357 = vmatprep.subr.mxu0 0.0
  %1358 = vmatpush1.msra.mxu0 0.0
  %1359 = vmatprep.subr.mxu0 0.0
  %1360 = vmatpush1.msra.mxu0 0.0
  %1361 = vmatprep.subr.mxu0 0.0
  %1362 = vmatpush1.msra.mxu0 0.0
  %1363 = vmatprep.subr.mxu0 0.0
  %1364 = vmatpush1.msra.mxu0 0.0
  %1365 = vmatprep.subr.mxu0 0.0
  %1366 = vmatpush1.msra.mxu0 0.0
  %1367 = vmatprep.subr.mxu0 0.0
  %1368 = vmatpush1.msra.mxu0 0.0
  %1369 = vmatprep.subr.mxu0 0.0
  %1370 = vmatpush1.msra.mxu0 0.0
  %1371 = vmatprep.subr.mxu0 0.0
  %1372 = vmatpush1.msra.mxu0 0.0
  %1373 = vmatprep.subr.mxu0 0.0
  %1374 = vmatpush1.msra.mxu0 0.0
  %1375 = vmatprep.subr.mxu0 0.0
  %1376 = vmatpush1.msra.mxu0 0.0
  %1377 = vmatprep.subr.mxu0 0.0
  %1378 = vmatpush1.msra.mxu0 %v1345
  %1379 = vmatprep.subr.mxu0 0.0
  %1380 = vmatpush2.msra.mxu0 0.0
  %1381 = vmatprep.subr.mxu0 0.0
  %1382 = vmatpush2.msra.mxu0 0.0
  %1383 = vmatprep.subr.mxu0 0.0
  %1384 = vmatpush2.msra.mxu0 0.0
  %1385 = vmatprep.subr.mxu0 0.0
  %1386 = vmatpush2.msra.mxu0 0.0
  %1387 = vmatprep.subr.mxu0 0.0
  %1388 = vmatpush2.msra.mxu0 0.0
  %1389 = vmatprep.subr.mxu0 0.0
  %1390 = vmatpush2.msra.mxu0 0.0
  %1391 = vmatprep.subr.mxu0 0.0
  %1392 = vmatpush2.msra.mxu0 0.0
  %1393 = vmatprep.subr.mxu0 0.0
  %1394 = vmatpush2.msra.mxu0 0.0
  %1395 = vmatprep.subr.mxu0 0.0
  %1396 = vmatpush2.msra.mxu0 0.0
  %1397 = vmatprep.subr.mxu0 0.0
  %1398 = vmatpush2.msra.mxu0 0.0
  %1399 = vmatprep.subr.mxu0 0.0
  %1400 = vmatpush2.msra.mxu0 0.0
  %1401 = vmatprep.subr.mxu0 0.0
  %1402 = vmatpush2.msra.mxu0 0.0
  %1403 = vmatprep.subr.mxu0 0.0
  %1404 = vmatpush2.msra.mxu0 0.0
  %1405 = vmatprep.subr.mxu0 0.0
  %1406 = vmatpush2.msra.mxu0 0.0
  %1407 = vmatprep.subr.mxu0 0.0
  %1408 = vmatpush2.msra.mxu0 0.0
  %1409 = vmatprep.subr.mxu0 0.0
  %1410 = vmatpush2.msra.mxu0 0.0
  %1411 = vmatprep.mubr.f32.mxu0 0.0
  %1412 = vmatmul.mubr.f32.gmra.mxu0 %v1216
  %v1413 = vpop.f32.mrf.mxu0
  %v1414 = vadd.f32 %v898, %v1413
  %v1415 = vpop.f32.mrf.mxu0
  %1416 = vmatprep.mubr.f32.mxu0 0.0
  %1417 = vmatmul.mubr.f32.gmra.mxu0 %v1218
  %v1418 = vpop.f32.mrf.mxu0
  %v1419 = vadd.f32 %v903, %v1418
  %v1420 = vpop.f32.mrf.mxu0
  %1421 = vmatprep.mubr.f32.mxu0 0.0
  %1422 = vmatmul.mubr.f32.gmra.mxu0 %v1220
  %v1423 = vpop.f32.mrf.mxu0
  %v1424 = vadd.f32 %v908, %v1423
  %v1425 = vpop.f32.mrf.mxu0
  %1426 = vmatprep.mubr.f32.mxu0 0.0
  %1427 = vmatmul.mubr.f32.gmra.mxu0 %v1222
  %v1428 = vpop.f32.mrf.mxu0
  %v1429 = vadd.f32 %v913, %v1428
  %v1430 = vpop.f32.mrf.mxu0
  %1431 = vmatprep.mubr.f32.mxu0 0.0
  %1432 = vmatmul.mubr.f32.gmra.mxu0 %v1224
  %v1433 = vpop.f32.mrf.mxu0
  %v1434 = vadd.f32 %v918, %v1433
  %v1435 = vpop.f32.mrf.mxu0
  %1436 = vmatprep.mubr.f32.mxu0 0.0
  %1437 = vmatmul.mubr.f32.gmra.mxu0 %v1226
  %v1438 = vpop.f32.mrf.mxu0
  %v1439 = vadd.f32 %v923, %v1438
  %v1440 = vpop.f32.mrf.mxu0
  %1441 = vmatprep.mubr.f32.mxu0 0.0
  %1442 = vmatmul.mubr.f32.gmra.mxu0 %v1228
  %v1443 = vpop.f32.mrf.mxu0
  %v1444 = vadd.f32 %v928, %v1443
  %v1445 = vpop.f32.mrf.mxu0
  %1446 = vmatprep.mubr.f32.mxu0 0.0
  %1447 = vmatmul.mubr.f32.gmra.mxu0 %v1230
  %v1448 = vpop.f32.mrf.mxu0
  %v1449 = vadd.f32 %v933, %v1448
  %v1450 = vpop.f32.mrf.mxu0
  %1451 = vmatprep.mubr.f32.mxu0 0.0
  %1452 = vmatmul.mubr.f32.gmra.mxu0 %v1232
  %v1453 = vpop.f32.mrf.mxu0
  %v1454 = vadd.f32 %v938, %v1453
  %v1455 = vpop.f32.mrf.mxu0
  %1456 = vmatprep.mubr.f32.mxu0 0.0
  %1457 = vmatmul.mubr.f32.gmra.mxu0 %v1234
  %v1458 = vpop.f32.mrf.mxu0
  %v1459 = vadd.f32 %v943, %v1458
  %v1460 = vpop.f32.mrf.mxu0
  %1461 = vmatprep.mubr.f32.mxu0 0.0
  %1462 = vmatmul.mubr.f32.gmra.mxu0 %v1236
  %v1463 = vpop.f32.mrf.mxu0
  %v1464 = vadd.f32 %v948, %v1463
  %v1465 = vpop.f32.mrf.mxu0
  %1466 = vmatprep.mubr.f32.mxu0 0.0
  %1467 = vmatmul.mubr.f32.gmra.mxu0 %v1238
  %v1468 = vpop.f32.mrf.mxu0
  %v1469 = vadd.f32 %v953, %v1468
  %v1470 = vpop.f32.mrf.mxu0
  %1471 = vmatprep.mubr.f32.mxu0 0.0
  %1472 = vmatmul.mubr.f32.gmra.mxu0 %v1240
  %v1473 = vpop.f32.mrf.mxu0
  %v1474 = vadd.f32 %v958, %v1473
  %v1475 = vpop.f32.mrf.mxu0
  %1476 = vmatprep.mubr.f32.mxu0 0.0
  %1477 = vmatmul.mubr.f32.gmra.mxu0 %v1242
  %v1478 = vpop.f32.mrf.mxu0
  %v1479 = vadd.f32 %v963, %v1478
  %v1480 = vpop.f32.mrf.mxu0
  %1481 = vmatprep.mubr.f32.mxu0 0.0
  %1482 = vmatmul.mubr.f32.gmra.mxu0 %v1244
  %v1483 = vpop.f32.mrf.mxu0
  %v1484 = vadd.f32 %v968, %v1483
  %v1485 = vpop.f32.mrf.mxu0
  %1486 = vmatprep.mubr.f32.mxu0 0.0
  %1487 = vmatmul.mubr.f32.gmra.mxu0 %v1246
  %v1488 = vpop.f32.mrf.mxu0
  %v1489 = vadd.f32 %v973, %v1488
  %v1490 = vpop.f32.mrf.mxu0
  %1491 = vmatprep.mubr.f32.mxu0 0.0
  %1492 = vmatmul.mubr.f32.gmra.mxu0 %v1248
  %v1493 = vpop.f32.mrf.mxu0
  %v1494 = vadd.f32 %v978, %v1493
  %v1495 = vpop.f32.mrf.mxu0
  %1496 = vmatprep.mubr.f32.mxu0 0.0
  %1497 = vmatmul.mubr.f32.gmra.mxu0 %v1250
  %v1498 = vpop.f32.mrf.mxu0
  %v1499 = vadd.f32 %v983, %v1498
  %v1500 = vpop.f32.mrf.mxu0
  %1501 = vmatprep.mubr.f32.mxu0 0.0
  %1502 = vmatmul.mubr.f32.gmra.mxu0 %v1252
  %v1503 = vpop.f32.mrf.mxu0
  %v1504 = vadd.f32 %v988, %v1503
  %v1505 = vpop.f32.mrf.mxu0
  %1506 = vmatprep.mubr.f32.mxu0 0.0
  %1507 = vmatmul.mubr.f32.gmra.mxu0 %v1254
  %v1508 = vpop.f32.mrf.mxu0
  %v1509 = vadd.f32 %v993, %v1508
  %v1510 = vpop.f32.mrf.mxu0
  %1511 = vmatprep.mubr.f32.mxu0 0.0
  %1512 = vmatmul.mubr.f32.gmra.mxu0 %v1256
  %v1513 = vpop.f32.mrf.mxu0
  %v1514 = vadd.f32 %v998, %v1513
  %v1515 = vpop.f32.mrf.mxu0
  %1516 = vmatprep.mubr.f32.mxu0 0.0
  %1517 = vmatmul.mubr.f32.gmra.mxu0 %v1258
  %v1518 = vpop.f32.mrf.mxu0
  %v1519 = vadd.f32 %v1003, %v1518
  %v1520 = vpop.f32.mrf.mxu0
  %1521 = vmatprep.mubr.f32.mxu0 0.0
  %1522 = vmatmul.mubr.f32.gmra.mxu0 %v1260
  %v1523 = vpop.f32.mrf.mxu0
  %v1524 = vadd.f32 %v1008, %v1523
  %v1525 = vpop.f32.mrf.mxu0
  %1526 = vmatprep.mubr.f32.mxu0 0.0
  %1527 = vmatmul.mubr.f32.gmra.mxu0 %v1262
  %v1528 = vpop.f32.mrf.mxu0
  %v1529 = vadd.f32 %v1013, %v1528
  %v1530 = vpop.f32.mrf.mxu0
  %1531 = vmatprep.mubr.f32.mxu0 0.0
  %1532 = vmatmul.mubr.f32.gmra.mxu0 %v1264
  %v1533 = vpop.f32.mrf.mxu0
  %v1534 = vadd.f32 %v1018, %v1533
  %v1535 = vpop.f32.mrf.mxu0
  %1536 = vmatprep.mubr.f32.mxu0 0.0
  %1537 = vmatmul.mubr.f32.gmra.mxu0 %v1266
  %v1538 = vpop.f32.mrf.mxu0
  %v1539 = vadd.f32 %v1023, %v1538
  %v1540 = vpop.f32.mrf.mxu0
  %1541 = vmatprep.mubr.f32.mxu0 0.0
  %1542 = vmatmul.mubr.f32.gmra.mxu0 %v1268
  %v1543 = vpop.f32.mrf.mxu0
  %v1544 = vadd.f32 %v1028, %v1543
  %v1545 = vpop.f32.mrf.mxu0
  %1546 = vmatprep.mubr.f32.mxu0 0.0
  %1547 = vmatmul.mubr.f32.gmra.mxu0 %v1270
  %v1548 = vpop.f32.mrf.mxu0
  %v1549 = vadd.f32 %v1033, %v1548
  %v1550 = vpop.f32.mrf.mxu0
  %1551 = vmatprep.mubr.f32.mxu0 0.0
  %1552 = vmatmul.mubr.f32.gmra.mxu0 %v1272
  %v1553 = vpop.f32.mrf.mxu0
  %v1554 = vadd.f32 %v1038, %v1553
  %v1555 = vpop.f32.mrf.mxu0
  %1556 = vmatprep.mubr.f32.mxu0 0.0
  %1557 = vmatmul.mubr.f32.gmra.mxu0 %v1274
  %v1558 = vpop.f32.mrf.mxu0
  %v1559 = vadd.f32 %v1043, %v1558
  %v1560 = vpop.f32.mrf.mxu0
  %1561 = vmatprep.mubr.f32.mxu0 0.0
  %1562 = vmatmul.mubr.f32.gmra.mxu0 %v1276
  %v1563 = vpop.f32.mrf.mxu0
  %v1564 = vadd.f32 %v1048, %v1563
  %v1565 = vpop.f32.mrf.mxu0
  %1566 = vmatprep.mubr.f32.mxu0 0.0
  %1567 = vmatmul.mubr.f32.gmra.mxu0 %v1278
  %v1568 = vpop.f32.mrf.mxu0
  %v1569 = vadd.f32 %v1053, %v1568
  %v1570 = vpop.f32.mrf.mxu0
  %1571 = vmatprep.mubr.f32.mxu0 0.0
  %1572 = vmatmul.mubr.f32.gmra.mxu0 %v1280
  %v1573 = vpop.f32.mrf.mxu0
  %v1574 = vadd.f32 %v1058, %v1573
  %v1575 = vpop.f32.mrf.mxu0
  %1576 = vmatprep.mubr.f32.mxu0 0.0
  %1577 = vmatmul.mubr.f32.gmra.mxu0 %v1282
  %v1578 = vpop.f32.mrf.mxu0
  %v1579 = vadd.f32 %v1063, %v1578
  %v1580 = vpop.f32.mrf.mxu0
  %1581 = vmatprep.mubr.f32.mxu0 0.0
  %1582 = vmatmul.mubr.f32.gmra.mxu0 %v1284
  %v1583 = vpop.f32.mrf.mxu0
  %v1584 = vadd.f32 %v1068, %v1583
  %v1585 = vpop.f32.mrf.mxu0
  %1586 = vmatprep.mubr.f32.mxu0 0.0
  %1587 = vmatmul.mubr.f32.gmra.mxu0 %v1286
  %v1588 = vpop.f32.mrf.mxu0
  %v1589 = vadd.f32 %v1073, %v1588
  %v1590 = vpop.f32.mrf.mxu0
  %1591 = vmatprep.mubr.f32.mxu0 0.0
  %1592 = vmatmul.mubr.f32.gmra.mxu0 %v1288
  %v1593 = vpop.f32.mrf.mxu0
  %v1594 = vadd.f32 %v1078, %v1593
  %v1595 = vpop.f32.mrf.mxu0
  %1596 = vmatprep.mubr.f32.mxu0 0.0
  %1597 = vmatmul.mubr.f32.gmra.mxu0 %v1290
  %v1598 = vpop.f32.mrf.mxu0
  %v1599 = vadd.f32 %v1083, %v1598
  %v1600 = vpop.f32.mrf.mxu0
  %1601 = vmatprep.mubr.f32.mxu0 0.0
  %1602 = vmatmul.mubr.f32.gmra.mxu0 %v1292
  %v1603 = vpop.f32.mrf.mxu0
  %v1604 = vadd.f32 %v1088, %v1603
  %v1605 = vpop.f32.mrf.mxu0
  %1606 = vmatprep.mubr.f32.mxu0 0.0
  %1607 = vmatmul.mubr.f32.gmra.mxu0 %v1294
  %v1608 = vpop.f32.mrf.mxu0
  %v1609 = vadd.f32 %v1093, %v1608
  %v1610 = vpop.f32.mrf.mxu0
  %1611 = vmatprep.mubr.f32.mxu0 0.0
  %1612 = vmatmul.mubr.f32.gmra.mxu0 %v1296
  %v1613 = vpop.f32.mrf.mxu0
  %v1614 = vadd.f32 %v1098, %v1613
  %v1615 = vpop.f32.mrf.mxu0
  %1616 = vmatprep.mubr.f32.mxu0 0.0
  %1617 = vmatmul.mubr.f32.gmra.mxu0 %v1298
  %v1618 = vpop.f32.mrf.mxu0
  %v1619 = vadd.f32 %v1103, %v1618
  %v1620 = vpop.f32.mrf.mxu0
  %1621 = vmatprep.mubr.f32.mxu0 0.0
  %1622 = vmatmul.mubr.f32.gmra.mxu0 %v1300
  %v1623 = vpop.f32.mrf.mxu0
  %v1624 = vadd.f32 %v1108, %v1623
  %v1625 = vpop.f32.mrf.mxu0
  %1626 = vmatprep.mubr.f32.mxu0 0.0
  %1627 = vmatmul.mubr.f32.gmra.mxu0 %v1302
  %v1628 = vpop.f32.mrf.mxu0
  %v1629 = vadd.f32 %v1113, %v1628
  %v1630 = vpop.f32.mrf.mxu0
  %1631 = vmatprep.mubr.f32.mxu0 0.0
  %1632 = vmatmul.mubr.f32.gmra.mxu0 %v1304
  %v1633 = vpop.f32.mrf.mxu0
  %v1634 = vadd.f32 %v1118, %v1633
  %v1635 = vpop.f32.mrf.mxu0
  %1636 = vmatprep.mubr.f32.mxu0 0.0
  %1637 = vmatmul.mubr.f32.gmra.mxu0 %v1306
  %v1638 = vpop.f32.mrf.mxu0
  %v1639 = vadd.f32 %v1123, %v1638
  %v1640 = vpop.f32.mrf.mxu0
  %1641 = vmatprep.mubr.f32.mxu0 0.0
  %1642 = vmatmul.mubr.f32.gmra.mxu0 %v1308
  %v1643 = vpop.f32.mrf.mxu0
  %v1644 = vadd.f32 %v1128, %v1643
  %v1645 = vpop.f32.mrf.mxu0
  %1646 = vmatprep.mubr.f32.mxu0 0.0
  %1647 = vmatmul.mubr.f32.gmra.mxu0 %v1310
  %v1648 = vpop.f32.mrf.mxu0
  %v1649 = vadd.f32 %v1133, %v1648
  %v1650 = vpop.f32.mrf.mxu0
  %1651 = vmatprep.mubr.f32.mxu0 0.0
  %1652 = vmatmul.mubr.f32.gmra.mxu0 %v1312
  %v1653 = vpop.f32.mrf.mxu0
  %v1654 = vadd.f32 %v1138, %v1653
  %v1655 = vpop.f32.mrf.mxu0
  %1656 = vmatprep.mubr.f32.mxu0 0.0
  %1657 = vmatmul.mubr.f32.gmra.mxu0 %v1314
  %v1658 = vpop.f32.mrf.mxu0
  %v1659 = vadd.f32 %v1143, %v1658
  %v1660 = vpop.f32.mrf.mxu0
  %1661 = vmatprep.mubr.f32.mxu0 0.0
  %1662 = vmatmul.mubr.f32.gmra.mxu0 %v1316
  %v1663 = vpop.f32.mrf.mxu0
  %v1664 = vadd.f32 %v1148, %v1663
  %v1665 = vpop.f32.mrf.mxu0
  %1666 = vmatprep.mubr.f32.mxu0 0.0
  %1667 = vmatmul.mubr.f32.gmra.mxu0 %v1318
  %v1668 = vpop.f32.mrf.mxu0
  %v1669 = vadd.f32 %v1153, %v1668
  %v1670 = vpop.f32.mrf.mxu0
  %1671 = vmatprep.mubr.f32.mxu0 0.0
  %1672 = vmatmul.mubr.f32.gmra.mxu0 %v1320
  %v1673 = vpop.f32.mrf.mxu0
  %v1674 = vadd.f32 %v1158, %v1673
  %v1675 = vpop.f32.mrf.mxu0
  %1676 = vmatprep.mubr.f32.mxu0 0.0
  %1677 = vmatmul.mubr.f32.gmra.mxu0 %v1322
  %v1678 = vpop.f32.mrf.mxu0
  %v1679 = vadd.f32 %v1163, %v1678
  %v1680 = vpop.f32.mrf.mxu0
  %1681 = vmatprep.mubr.f32.mxu0 0.0
  %1682 = vmatmul.mubr.f32.gmra.mxu0 %v1324
  %v1683 = vpop.f32.mrf.mxu0
  %v1684 = vadd.f32 %v1168, %v1683
  %v1685 = vpop.f32.mrf.mxu0
  %1686 = vmatprep.mubr.f32.mxu0 0.0
  %1687 = vmatmul.mubr.f32.gmra.mxu0 %v1326
  %v1688 = vpop.f32.mrf.mxu0
  %v1689 = vadd.f32 %v1173, %v1688
  %v1690 = vpop.f32.mrf.mxu0
  %1691 = vmatprep.mubr.f32.mxu0 0.0
  %1692 = vmatmul.mubr.f32.gmra.mxu0 %v1328
  %v1693 = vpop.f32.mrf.mxu0
  %v1694 = vadd.f32 %v1178, %v1693
  %v1695 = vpop.f32.mrf.mxu0
  %1696 = vmatprep.mubr.f32.mxu0 0.0
  %1697 = vmatmul.mubr.f32.gmra.mxu0 %v1330
  %v1698 = vpop.f32.mrf.mxu0
  %v1699 = vadd.f32 %v1183, %v1698
  %v1700 = vpop.f32.mrf.mxu0
  %1701 = vmatprep.mubr.f32.mxu0 0.0
  %1702 = vmatmul.mubr.f32.gmra.mxu0 %v1332
  %v1703 = vpop.f32.mrf.mxu0
  %v1704 = vadd.f32 %v1188, %v1703
  %v1705 = vpop.f32.mrf.mxu0
  %1706 = vmatprep.mubr.f32.mxu0 0.0
  %1707 = vmatmul.mubr.f32.gmra.mxu0 %v1334
  %v1708 = vpop.f32.mrf.mxu0
  %v1709 = vadd.f32 %v1193, %v1708
  %v1710 = vpop.f32.mrf.mxu0
  %1711 = vmatprep.mubr.f32.mxu0 0.0
  %1712 = vmatmul.mubr.f32.gmra.mxu0 %v1336
  %v1713 = vpop.f32.mrf.mxu0
  %v1714 = vadd.f32 %v1198, %v1713
  %v1715 = vpop.f32.mrf.mxu0
  %1716 = vmatprep.mubr.f32.mxu0 0.0
  %1717 = vmatmul.mubr.f32.gmra.mxu0 %v1338
  %v1718 = vpop.f32.mrf.mxu0
  %v1719 = vadd.f32 %v1203, %v1718
  %v1720 = vpop.f32.mrf.mxu0
  %1721 = vmatprep.mubr.f32.mxu0 0.0
  %1722 = vmatmul.mubr.f32.gmra.mxu0 %v1340
  %v1723 = vpop.f32.mrf.mxu0
  %v1724 = vadd.f32 %v1208, %v1723
  %v1725 = vpop.f32.mrf.mxu0
  %1726 = vmatprep.mubr.f32.mxu0 0.0
  %1727 = vmatmul.mubr.f32.gmra.mxu0 %v1342
  %v1728 = vpop.f32.mrf.mxu0
  %v1729 = vadd.f32 %v1213, %v1728
  %v1730 = vpop.f32.mrf.mxu0
  %1731 = vdwg.mxu0
  %vm1764 = vcmask 1046528
  %v1765 = vrot.slane %v296, 1
  %v1766 = vrot.slane %v297, 1
  %v1767 = vsel %vm1764, %v1765, %v1766
  %v1768 = vrot.slane %v298, 1
  %v1769 = vsel %vm1764, %v1766, %v1768
  %v1770 = vrot.slane %v300, 1
  %v1771 = vrot.slane %v301, 1
  %v1772 = vsel %vm1764, %v1770, %v1771
  %v1773 = vrot.slane %v302, 1
  %v1774 = vsel %vm1764, %v1771, %v1773
  %v1775 = vrot.slane %v304, 1
  %v1776 = vrot.slane %v305, 1
  %v1777 = vsel %vm1764, %v1775, %v1776
  %v1778 = vrot.slane %v306, 1
  %v1779 = vsel %vm1764, %v1776, %v1778
  %v1780 = vrot.slane %v308, 1
  %v1781 = vrot.slane %v309, 1
  %v1782 = vsel %vm1764, %v1780, %v1781
  %v1783 = vrot.slane %v310, 1
  %v1784 = vsel %vm1764, %v1781, %v1783
  %v1785 = vrot.slane %v312, 1
  %v1786 = vrot.slane %v313, 1
  %v1787 = vsel %vm1764, %v1785, %v1786
  %v1788 = vrot.slane %v314, 1
  %v1789 = vsel %vm1764, %v1786, %v1788
  %v1790 = vrot.slane %v316, 1
  %v1791 = vrot.slane %v317, 1
  %v1792 = vsel %vm1764, %v1790, %v1791
  %v1793 = vrot.slane %v318, 1
  %v1794 = vsel %vm1764, %v1791, %v1793
  %v1795 = vrot.slane %v320, 1
  %v1796 = vrot.slane %v321, 1
  %v1797 = vsel %vm1764, %v1795, %v1796
  %v1798 = vrot.slane %v322, 1
  %v1799 = vsel %vm1764, %v1796, %v1798
  %v1800 = vrot.slane %v324, 1
  %v1801 = vrot.slane %v325, 1
  %v1802 = vsel %vm1764, %v1800, %v1801
  %v1803 = vrot.slane %v326, 1
  %v1804 = vsel %vm1764, %v1801, %v1803
  %v1805 = vrot.slane %v328, 1
  %v1806 = vrot.slane %v329, 1
  %v1807 = vsel %vm1764, %v1805, %v1806
  %v1808 = vrot.slane %v330, 1
  %v1809 = vsel %vm1764, %v1806, %v1808
  %v1810 = vrot.slane %v332, 1
  %v1811 = vrot.slane %v333, 1
  %v1812 = vsel %vm1764, %v1810, %v1811
  %v1813 = vrot.slane %v334, 1
  %v1814 = vsel %vm1764, %v1811, %v1813
  %v1815 = vrot.slane %v336, 1
  %v1816 = vrot.slane %v337, 1
  %v1817 = vsel %vm1764, %v1815, %v1816
  %v1818 = vrot.slane %v338, 1
  %v1819 = vsel %vm1764, %v1816, %v1818
  %v1820 = vrot.slane %v340, 1
  %v1821 = vrot.slane %v341, 1
  %v1822 = vsel %vm1764, %v1820, %v1821
  %v1823 = vrot.slane %v342, 1
  %v1824 = vsel %vm1764, %v1821, %v1823
  %v1825 = vrot.slane %v344, 1
  %v1826 = vrot.slane %v345, 1
  %v1827 = vsel %vm1764, %v1825, %v1826
  %v1828 = vrot.slane %v346, 1
  %v1829 = vsel %vm1764, %v1826, %v1828
  %v1830 = vrot.slane %v348, 1
  %v1831 = vrot.slane %v349, 1
  %v1832 = vsel %vm1764, %v1830, %v1831
  %v1833 = vrot.slane %v350, 1
  %v1834 = vsel %vm1764, %v1831, %v1833
  %v1835 = vrot.slane %v352, 1
  %v1836 = vrot.slane %v353, 1
  %v1837 = vsel %vm1764, %v1835, %v1836
  %v1838 = vrot.slane %v354, 1
  %v1839 = vsel %vm1764, %v1836, %v1838
  %v1840 = vrot.slane %v356, 1
  %v1841 = vrot.slane %v357, 1
  %v1842 = vsel %vm1764, %v1840, %v1841
  %v1843 = vrot.slane %v358, 1
  %v1844 = vsel %vm1764, %v1841, %v1843
  %v1845 = vrot.slane %v368, 1
  %v1846 = vrot.slane %v369, 1
  %v1847 = vsel %vm1764, %v1845, %v1846
  %v1848 = vrot.slane %v370, 1
  %v1849 = vsel %vm1764, %v1846, %v1848
  %v1850 = vrot.slane %v372, 1
  %v1851 = vrot.slane %v373, 1
  %v1852 = vsel %vm1764, %v1850, %v1851
  %v1853 = vrot.slane %v374, 1
  %v1854 = vsel %vm1764, %v1851, %v1853
  %v1855 = vrot.slane %v376, 1
  %v1856 = vrot.slane %v377, 1
  %v1857 = vsel %vm1764, %v1855, %v1856
  %v1858 = vrot.slane %v378, 1
  %v1859 = vsel %vm1764, %v1856, %v1858
  %v1860 = vrot.slane %v380, 1
  %v1861 = vrot.slane %v381, 1
  %v1862 = vsel %vm1764, %v1860, %v1861
  %v1863 = vrot.slane %v382, 1
  %v1864 = vsel %vm1764, %v1861, %v1863
  %v1865 = vrot.slane %v384, 1
  %v1866 = vrot.slane %v385, 1
  %v1867 = vsel %vm1764, %v1865, %v1866
  %v1868 = vrot.slane %v386, 1
  %v1869 = vsel %vm1764, %v1866, %v1868
  %v1870 = vrot.slane %v388, 1
  %v1871 = vrot.slane %v389, 1
  %v1872 = vsel %vm1764, %v1870, %v1871
  %v1873 = vrot.slane %v390, 1
  %v1874 = vsel %vm1764, %v1871, %v1873
  %v1875 = vrot.slane %v392, 1
  %v1876 = vrot.slane %v393, 1
  %v1877 = vsel %vm1764, %v1875, %v1876
  %v1878 = vrot.slane %v394, 1
  %v1879 = vsel %vm1764, %v1876, %v1878
  %v1880 = vrot.slane %v396, 1
  %v1881 = vrot.slane %v397, 1
  %v1882 = vsel %vm1764, %v1880, %v1881
  %v1883 = vrot.slane %v398, 1
  %v1884 = vsel %vm1764, %v1881, %v1883
  %v1885 = vrot.slane %v400, 1
  %v1886 = vrot.slane %v401, 1
  %v1887 = vsel %vm1764, %v1885, %v1886
  %v1888 = vrot.slane %v402, 1
  %v1889 = vsel %vm1764, %v1886, %v1888
  %v1890 = vrot.slane %v404, 1
  %v1891 = vrot.slane %v405, 1
  %v1892 = vsel %vm1764, %v1890, %v1891
  %v1893 = vrot.slane %v406, 1
  %v1894 = vsel %vm1764, %v1891, %v1893
  %v1895 = vrot.slane %v408, 1
  %v1896 = vrot.slane %v409, 1
  %v1897 = vsel %vm1764, %v1895, %v1896
  %v1898 = vrot.slane %v410, 1
  %v1899 = vsel %vm1764, %v1896, %v1898
  %v1900 = vrot.slane %v412, 1
  %v1901 = vrot.slane %v413, 1
  %v1902 = vsel %vm1764, %v1900, %v1901
  %v1903 = vrot.slane %v414, 1
  %v1904 = vsel %vm1764, %v1901, %v1903
  %v1905 = vrot.slane %v416, 1
  %v1906 = vrot.slane %v417, 1
  %v1907 = vsel %vm1764, %v1905, %v1906
  %v1908 = vrot.slane %v418, 1
  %v1909 = vsel %vm1764, %v1906, %v1908
  %v1910 = vrot.slane %v420, 1
  %v1911 = vrot.slane %v421, 1
  %v1912 = vsel %vm1764, %v1910, %v1911
  %v1913 = vrot.slane %v422, 1
  %v1914 = vsel %vm1764, %v1911, %v1913
  %v1915 = vrot.slane %v424, 1
  %v1916 = vrot.slane %v425, 1
  %v1917 = vsel %vm1764, %v1915, %v1916
  %v1918 = vrot.slane %v426, 1
  %v1919 = vsel %vm1764, %v1916, %v1918
  %v1920 = vrot.slane %v428, 1
  %v1921 = vrot.slane %v429, 1
  %v1922 = vsel %vm1764, %v1920, %v1921
  %v1923 = vrot.slane %v430, 1
  %v1924 = vsel %vm1764, %v1921, %v1923
  %s1925 = scalar_lea.vmem %s1, 8
  %v1926 = vld [vmem:[%s1925] sm:$0xf]
  %v1927 = vsel %vm84, %v1767, 0
  %v1929 = vsel %vm84, %v1769, 0
  %v1931 = vsel %vm84, %v1772, 0
  %v1933 = vsel %vm84, %v1774, 0
  %v1935 = vsel %vm84, %v1777, 0
  %v1937 = vsel %vm84, %v1779, 0
  %v1939 = vsel %vm84, %v1782, 0
  %v1941 = vsel %vm84, %v1784, 0
  %v1943 = vsel %vm84, %v1787, 0
  %v1945 = vsel %vm84, %v1789, 0
  %v1947 = vsel %vm84, %v1792, 0
  %v1949 = vsel %vm84, %v1794, 0
  %v1951 = vsel %vm84, %v1797, 0
  %v1953 = vsel %vm84, %v1799, 0
  %v1955 = vsel %vm84, %v1802, 0
  %v1957 = vsel %vm84, %v1804, 0
  %v1959 = vsel %vm84, %v1807, 0
  %v1961 = vsel %vm84, %v1809, 0
  %v1963 = vsel %vm84, %v1812, 0
  %v1965 = vsel %vm84, %v1814, 0
  %v1967 = vsel %vm84, %v1817, 0
  %v1969 = vsel %vm84, %v1819, 0
  %v1971 = vsel %vm84, %v1822, 0
  %v1973 = vsel %vm84, %v1824, 0
  %v1975 = vsel %vm84, %v1827, 0
  %v1977 = vsel %vm84, %v1829, 0
  %v1979 = vsel %vm84, %v1832, 0
  %v1981 = vsel %vm84, %v1834, 0
  %v1983 = vsel %vm84, %v1837, 0
  %v1985 = vsel %vm84, %v1839, 0
  %v1987 = vsel %vm84, %v1842, 0
  %v1989 = vsel %vm84, %v1844, 0
  %v1991 = vsel %vm84, %v1847, 0
  %v1993 = vsel %vm84, %v1849, 0
  %v1995 = vsel %vm84, %v1852, 0
  %v1997 = vsel %vm84, %v1854, 0
  %v1999 = vsel %vm84, %v1857, 0
  %v2001 = vsel %vm84, %v1859, 0
  %v2003 = vsel %vm84, %v1862, 0
  %v2005 = vsel %vm84, %v1864, 0
  %v2007 = vsel %vm84, %v1867, 0
  %v2009 = vsel %vm84, %v1869, 0
  %v2011 = vsel %vm84, %v1872, 0
  %v2013 = vsel %vm84, %v1874, 0
  %v2015 = vsel %vm84, %v1877, 0
  %v2017 = vsel %vm84, %v1879, 0
  %v2019 = vsel %vm84, %v1882, 0
  %v2021 = vsel %vm84, %v1884, 0
  %v2023 = vsel %vm84, %v1887, 0
  %v2025 = vsel %vm84, %v1889, 0
  %v2027 = vsel %vm84, %v1892, 0
  %v2029 = vsel %vm84, %v1894, 0
  %v2031 = vsel %vm84, %v1897, 0
  %v2033 = vsel %vm84, %v1899, 0
  %v2035 = vsel %vm84, %v1902, 0
  %v2037 = vsel %vm84, %v1904, 0
  %v2039 = vsel %vm84, %v1907, 0
  %v2041 = vsel %vm84, %v1909, 0
  %v2043 = vsel %vm84, %v1912, 0
  %v2045 = vsel %vm84, %v1914, 0
  %v2047 = vsel %vm84, %v1917, 0
  %v2049 = vsel %vm84, %v1919, 0
  %v2051 = vsel %vm84, %v1922, 0
  %v2053 = vsel %vm84, %v1924, 0
  %v2056 = vsel %vm827, %v1926, 0
  %2058 = vmatprep.subr.mxu0 0.0
  %2059 = vmatpush1.msra.mxu0 0.0
  %2060 = vmatprep.subr.mxu0 0.0
  %2061 = vmatpush1.msra.mxu0 0.0
  %2062 = vmatprep.subr.mxu0 0.0
  %2063 = vmatpush1.msra.mxu0 0.0
  %2064 = vmatprep.subr.mxu0 0.0
  %2065 = vmatpush1.msra.mxu0 0.0
  %2066 = vmatprep.subr.mxu0 0.0
  %2067 = vmatpush1.msra.mxu0 0.0
  %2068 = vmatprep.subr.mxu0 0.0
  %2069 = vmatpush1.msra.mxu0 0.0
  %2070 = vmatprep.subr.mxu0 0.0
  %2071 = vmatpush1.msra.mxu0 0.0
  %2072 = vmatprep.subr.mxu0 0.0
  %2073 = vmatpush1.msra.mxu0 0.0
  %2074 = vmatprep.subr.mxu0 0.0
  %2075 = vmatpush1.msra.mxu0 0.0
  %2076 = vmatprep.subr.mxu0 0.0
  %2077 = vmatpush1.msra.mxu0 0.0
  %2078 = vmatprep.subr.mxu0 0.0
  %2079 = vmatpush1.msra.mxu0 0.0
  %2080 = vmatprep.subr.mxu0 0.0
  %2081 = vmatpush1.msra.mxu0 0.0
  %2082 = vmatprep.subr.mxu0 0.0
  %2083 = vmatpush1.msra.mxu0 0.0
  %2084 = vmatprep.subr.mxu0 0.0
  %2085 = vmatpush1.msra.mxu0 0.0
  %2086 = vmatprep.subr.mxu0 0.0
  %2087 = vmatpush1.msra.mxu0 0.0
  %2088 = vmatprep.subr.mxu0 0.0
  %2089 = vmatpush1.msra.mxu0 %v2056
  %2090 = vmatprep.subr.mxu0 0.0
  %2091 = vmatpush2.msra.mxu0 0.0
  %2092 = vmatprep.subr.mxu0 0.0
  %2093 = vmatpush2.msra.mxu0 0.0
  %2094 = vmatprep.subr.mxu0 0.0
  %2095 = vmatpush2.msra.mxu0 0.0
  %2096 = vmatprep.subr.mxu0 0.0
  %2097 = vmatpush2.msra.mxu0 0.0
  %2098 = vmatprep.subr.mxu0 0.0
  %2099 = vmatpush2.msra.mxu0 0.0
  %2100 = vmatprep.subr.mxu0 0.0
  %2101 = vmatpush2.msra.mxu0 0.0
  %2102 = vmatprep.subr.mxu0 0.0
  %2103 = vmatpush2.msra.mxu0 0.0
  %2104 = vmatprep.subr.mxu0 0.0
  %2105 = vmatpush2.msra.mxu0 0.0
  %2106 = vmatprep.subr.mxu0 0.0
  %2107 = vmatpush2.msra.mxu0 0.0
  %2108 = vmatprep.subr.mxu0 0.0
  %2109 = vmatpush2.msra.mxu0 0.0
  %2110 = vmatprep.subr.mxu0 0.0
  %2111 = vmatpush2.msra.mxu0 0.0
  %2112 = vmatprep.subr.mxu0 0.0
  %2113 = vmatpush2.msra.mxu0 0.0
  %2114 = vmatprep.subr.mxu0 0.0
  %2115 = vmatpush2.msra.mxu0 0.0
  %2116 = vmatprep.subr.mxu0 0.0
  %2117 = vmatpush2.msra.mxu0 0.0
  %2118 = vmatprep.subr.mxu0 0.0
  %2119 = vmatpush2.msra.mxu0 0.0
  %2120 = vmatprep.subr.mxu0 0.0
  %2121 = vmatpush2.msra.mxu0 0.0
  %2122 = vmatprep.mubr.f32.mxu0 0.0
  %2123 = vmatmul.mubr.f32.gmra.mxu0 %v1927
  %v2124 = vpop.f32.mrf.mxu0
  %v2125 = vadd.f32 0.0, %v2124
  %v2126 = vpop.f32.mrf.mxu0
  %2127 = vmatprep.mubr.f32.mxu0 0.0
  %2128 = vmatmul.mubr.f32.gmra.mxu0 %v1929
  %v2129 = vpop.f32.mrf.mxu0
  %v2130 = vadd.f32 0.0, %v2129
  %v2131 = vpop.f32.mrf.mxu0
  %2132 = vmatprep.mubr.f32.mxu0 0.0
  %2133 = vmatmul.mubr.f32.gmra.mxu0 %v1931
  %v2134 = vpop.f32.mrf.mxu0
  %v2135 = vadd.f32 0.0, %v2134
  %v2136 = vpop.f32.mrf.mxu0
  %2137 = vmatprep.mubr.f32.mxu0 0.0
  %2138 = vmatmul.mubr.f32.gmra.mxu0 %v1933
  %v2139 = vpop.f32.mrf.mxu0
  %v2140 = vadd.f32 0.0, %v2139
  %v2141 = vpop.f32.mrf.mxu0
  %2142 = vmatprep.mubr.f32.mxu0 0.0
  %2143 = vmatmul.mubr.f32.gmra.mxu0 %v1935
  %v2144 = vpop.f32.mrf.mxu0
  %v2145 = vadd.f32 0.0, %v2144
  %v2146 = vpop.f32.mrf.mxu0
  %2147 = vmatprep.mubr.f32.mxu0 0.0
  %2148 = vmatmul.mubr.f32.gmra.mxu0 %v1937
  %v2149 = vpop.f32.mrf.mxu0
  %v2150 = vadd.f32 0.0, %v2149
  %v2151 = vpop.f32.mrf.mxu0
  %2152 = vmatprep.mubr.f32.mxu0 0.0
  %2153 = vmatmul.mubr.f32.gmra.mxu0 %v1939
  %v2154 = vpop.f32.mrf.mxu0
  %v2155 = vadd.f32 0.0, %v2154
  %v2156 = vpop.f32.mrf.mxu0
  %2157 = vmatprep.mubr.f32.mxu0 0.0
  %2158 = vmatmul.mubr.f32.gmra.mxu0 %v1941
  %v2159 = vpop.f32.mrf.mxu0
  %v2160 = vadd.f32 0.0, %v2159
  %v2161 = vpop.f32.mrf.mxu0
  %2162 = vmatprep.mubr.f32.mxu0 0.0
  %2163 = vmatmul.mubr.f32.gmra.mxu0 %v1943
  %v2164 = vpop.f32.mrf.mxu0
  %v2165 = vadd.f32 0.0, %v2164
  %v2166 = vpop.f32.mrf.mxu0
  %2167 = vmatprep.mubr.f32.mxu0 0.0
  %2168 = vmatmul.mubr.f32.gmra.mxu0 %v1945
  %v2169 = vpop.f32.mrf.mxu0
  %v2170 = vadd.f32 0.0, %v2169
  %v2171 = vpop.f32.mrf.mxu0
  %2172 = vmatprep.mubr.f32.mxu0 0.0
  %2173 = vmatmul.mubr.f32.gmra.mxu0 %v1947
  %v2174 = vpop.f32.mrf.mxu0
  %v2175 = vadd.f32 0.0, %v2174
  %v2176 = vpop.f32.mrf.mxu0
  %2177 = vmatprep.mubr.f32.mxu0 0.0
  %2178 = vmatmul.mubr.f32.gmra.mxu0 %v1949
  %v2179 = vpop.f32.mrf.mxu0
  %v2180 = vadd.f32 0.0, %v2179
  %v2181 = vpop.f32.mrf.mxu0
  %2182 = vmatprep.mubr.f32.mxu0 0.0
  %2183 = vmatmul.mubr.f32.gmra.mxu0 %v1951
  %v2184 = vpop.f32.mrf.mxu0
  %v2185 = vadd.f32 0.0, %v2184
  %v2186 = vpop.f32.mrf.mxu0
  %2187 = vmatprep.mubr.f32.mxu0 0.0
  %2188 = vmatmul.mubr.f32.gmra.mxu0 %v1953
  %v2189 = vpop.f32.mrf.mxu0
  %v2190 = vadd.f32 0.0, %v2189
  %v2191 = vpop.f32.mrf.mxu0
  %2192 = vmatprep.mubr.f32.mxu0 0.0
  %2193 = vmatmul.mubr.f32.gmra.mxu0 %v1955
  %v2194 = vpop.f32.mrf.mxu0
  %v2195 = vadd.f32 0.0, %v2194
  %v2196 = vpop.f32.mrf.mxu0
  %2197 = vmatprep.mubr.f32.mxu0 0.0
  %2198 = vmatmul.mubr.f32.gmra.mxu0 %v1957
  %v2199 = vpop.f32.mrf.mxu0
  %v2200 = vadd.f32 0.0, %v2199
  %v2201 = vpop.f32.mrf.mxu0
  %2202 = vmatprep.mubr.f32.mxu0 0.0
  %2203 = vmatmul.mubr.f32.gmra.mxu0 %v1959
  %v2204 = vpop.f32.mrf.mxu0
  %v2205 = vadd.f32 0.0, %v2204
  %v2206 = vpop.f32.mrf.mxu0
  %2207 = vmatprep.mubr.f32.mxu0 0.0
  %2208 = vmatmul.mubr.f32.gmra.mxu0 %v1961
  %v2209 = vpop.f32.mrf.mxu0
  %v2210 = vadd.f32 0.0, %v2209
  %v2211 = vpop.f32.mrf.mxu0
  %2212 = vmatprep.mubr.f32.mxu0 0.0
  %2213 = vmatmul.mubr.f32.gmra.mxu0 %v1963
  %v2214 = vpop.f32.mrf.mxu0
  %v2215 = vadd.f32 0.0, %v2214
  %v2216 = vpop.f32.mrf.mxu0
  %2217 = vmatprep.mubr.f32.mxu0 0.0
  %2218 = vmatmul.mubr.f32.gmra.mxu0 %v1965
  %v2219 = vpop.f32.mrf.mxu0
  %v2220 = vadd.f32 0.0, %v2219
  %v2221 = vpop.f32.mrf.mxu0
  %2222 = vmatprep.mubr.f32.mxu0 0.0
  %2223 = vmatmul.mubr.f32.gmra.mxu0 %v1967
  %v2224 = vpop.f32.mrf.mxu0
  %v2225 = vadd.f32 0.0, %v2224
  %v2226 = vpop.f32.mrf.mxu0
  %2227 = vmatprep.mubr.f32.mxu0 0.0
  %2228 = vmatmul.mubr.f32.gmra.mxu0 %v1969
  %v2229 = vpop.f32.mrf.mxu0
  %v2230 = vadd.f32 0.0, %v2229
  %v2231 = vpop.f32.mrf.mxu0
  %2232 = vmatprep.mubr.f32.mxu0 0.0
  %2233 = vmatmul.mubr.f32.gmra.mxu0 %v1971
  %v2234 = vpop.f32.mrf.mxu0
  %v2235 = vadd.f32 0.0, %v2234
  %v2236 = vpop.f32.mrf.mxu0
  %2237 = vmatprep.mubr.f32.mxu0 0.0
  %2238 = vmatmul.mubr.f32.gmra.mxu0 %v1973
  %v2239 = vpop.f32.mrf.mxu0
  %v2240 = vadd.f32 0.0, %v2239
  %v2241 = vpop.f32.mrf.mxu0
  %2242 = vmatprep.mubr.f32.mxu0 0.0
  %2243 = vmatmul.mubr.f32.gmra.mxu0 %v1975
  %v2244 = vpop.f32.mrf.mxu0
  %v2245 = vadd.f32 0.0, %v2244
  %v2246 = vpop.f32.mrf.mxu0
  %2247 = vmatprep.mubr.f32.mxu0 0.0
  %2248 = vmatmul.mubr.f32.gmra.mxu0 %v1977
  %v2249 = vpop.f32.mrf.mxu0
  %v2250 = vadd.f32 0.0, %v2249
  %v2251 = vpop.f32.mrf.mxu0
  %2252 = vmatprep.mubr.f32.mxu0 0.0
  %2253 = vmatmul.mubr.f32.gmra.mxu0 %v1979
  %v2254 = vpop.f32.mrf.mxu0
  %v2255 = vadd.f32 0.0, %v2254
  %v2256 = vpop.f32.mrf.mxu0
  %2257 = vmatprep.mubr.f32.mxu0 0.0
  %2258 = vmatmul.mubr.f32.gmra.mxu0 %v1981
  %v2259 = vpop.f32.mrf.mxu0
  %v2260 = vadd.f32 0.0, %v2259
  %v2261 = vpop.f32.mrf.mxu0
  %2262 = vmatprep.mubr.f32.mxu0 0.0
  %2263 = vmatmul.mubr.f32.gmra.mxu0 %v1983
  %v2264 = vpop.f32.mrf.mxu0
  %v2265 = vadd.f32 0.0, %v2264
  %v2266 = vpop.f32.mrf.mxu0
  %2267 = vmatprep.mubr.f32.mxu0 0.0
  %2268 = vmatmul.mubr.f32.gmra.mxu0 %v1985
  %v2269 = vpop.f32.mrf.mxu0
  %v2270 = vadd.f32 0.0, %v2269
  %v2271 = vpop.f32.mrf.mxu0
  %2272 = vmatprep.mubr.f32.mxu0 0.0
  %2273 = vmatmul.mubr.f32.gmra.mxu0 %v1987
  %v2274 = vpop.f32.mrf.mxu0
  %v2275 = vadd.f32 0.0, %v2274
  %v2276 = vpop.f32.mrf.mxu0
  %2277 = vmatprep.mubr.f32.mxu0 0.0
  %2278 = vmatmul.mubr.f32.gmra.mxu0 %v1989
  %v2279 = vpop.f32.mrf.mxu0
  %v2280 = vadd.f32 0.0, %v2279
  %v2281 = vpop.f32.mrf.mxu0
  %2282 = vmatprep.mubr.f32.mxu0 0.0
  %2283 = vmatmul.mubr.f32.gmra.mxu0 %v1991
  %v2284 = vpop.f32.mrf.mxu0
  %v2285 = vadd.f32 0.0, %v2284
  %v2286 = vpop.f32.mrf.mxu0
  %2287 = vmatprep.mubr.f32.mxu0 0.0
  %2288 = vmatmul.mubr.f32.gmra.mxu0 %v1993
  %v2289 = vpop.f32.mrf.mxu0
  %v2290 = vadd.f32 0.0, %v2289
  %v2291 = vpop.f32.mrf.mxu0
  %2292 = vmatprep.mubr.f32.mxu0 0.0
  %2293 = vmatmul.mubr.f32.gmra.mxu0 %v1995
  %v2294 = vpop.f32.mrf.mxu0
  %v2295 = vadd.f32 0.0, %v2294
  %v2296 = vpop.f32.mrf.mxu0
  %2297 = vmatprep.mubr.f32.mxu0 0.0
  %2298 = vmatmul.mubr.f32.gmra.mxu0 %v1997
  %v2299 = vpop.f32.mrf.mxu0
  %v2300 = vadd.f32 0.0, %v2299
  %v2301 = vpop.f32.mrf.mxu0
  %2302 = vmatprep.mubr.f32.mxu0 0.0
  %2303 = vmatmul.mubr.f32.gmra.mxu0 %v1999
  %v2304 = vpop.f32.mrf.mxu0
  %v2305 = vadd.f32 0.0, %v2304
  %v2306 = vpop.f32.mrf.mxu0
  %2307 = vmatprep.mubr.f32.mxu0 0.0
  %2308 = vmatmul.mubr.f32.gmra.mxu0 %v2001
  %v2309 = vpop.f32.mrf.mxu0
  %v2310 = vadd.f32 0.0, %v2309
  %v2311 = vpop.f32.mrf.mxu0
  %2312 = vmatprep.mubr.f32.mxu0 0.0
  %2313 = vmatmul.mubr.f32.gmra.mxu0 %v2003
  %v2314 = vpop.f32.mrf.mxu0
  %v2315 = vadd.f32 0.0, %v2314
  %v2316 = vpop.f32.mrf.mxu0
  %2317 = vmatprep.mubr.f32.mxu0 0.0
  %2318 = vmatmul.mubr.f32.gmra.mxu0 %v2005
  %v2319 = vpop.f32.mrf.mxu0
  %v2320 = vadd.f32 0.0, %v2319
  %v2321 = vpop.f32.mrf.mxu0
  %2322 = vmatprep.mubr.f32.mxu0 0.0
  %2323 = vmatmul.mubr.f32.gmra.mxu0 %v2007
  %v2324 = vpop.f32.mrf.mxu0
  %v2325 = vadd.f32 0.0, %v2324
  %v2326 = vpop.f32.mrf.mxu0
  %2327 = vmatprep.mubr.f32.mxu0 0.0
  %2328 = vmatmul.mubr.f32.gmra.mxu0 %v2009
  %v2329 = vpop.f32.mrf.mxu0
  %v2330 = vadd.f32 0.0, %v2329
  %v2331 = vpop.f32.mrf.mxu0
  %2332 = vmatprep.mubr.f32.mxu0 0.0
  %2333 = vmatmul.mubr.f32.gmra.mxu0 %v2011
  %v2334 = vpop.f32.mrf.mxu0
  %v2335 = vadd.f32 0.0, %v2334
  %v2336 = vpop.f32.mrf.mxu0
  %2337 = vmatprep.mubr.f32.mxu0 0.0
  %2338 = vmatmul.mubr.f32.gmra.mxu0 %v2013
  %v2339 = vpop.f32.mrf.mxu0
  %v2340 = vadd.f32 0.0, %v2339
  %v2341 = vpop.f32.mrf.mxu0
  %2342 = vmatprep.mubr.f32.mxu0 0.0
  %2343 = vmatmul.mubr.f32.gmra.mxu0 %v2015
  %v2344 = vpop.f32.mrf.mxu0
  %v2345 = vadd.f32 0.0, %v2344
  %v2346 = vpop.f32.mrf.mxu0
  %2347 = vmatprep.mubr.f32.mxu0 0.0
  %2348 = vmatmul.mubr.f32.gmra.mxu0 %v2017
  %v2349 = vpop.f32.mrf.mxu0
  %v2350 = vadd.f32 0.0, %v2349
  %v2351 = vpop.f32.mrf.mxu0
  %2352 = vmatprep.mubr.f32.mxu0 0.0
  %2353 = vmatmul.mubr.f32.gmra.mxu0 %v2019
  %v2354 = vpop.f32.mrf.mxu0
  %v2355 = vadd.f32 0.0, %v2354
  %v2356 = vpop.f32.mrf.mxu0
  %2357 = vmatprep.mubr.f32.mxu0 0.0
  %2358 = vmatmul.mubr.f32.gmra.mxu0 %v2021
  %v2359 = vpop.f32.mrf.mxu0
  %v2360 = vadd.f32 0.0, %v2359
  %v2361 = vpop.f32.mrf.mxu0
  %2362 = vmatprep.mubr.f32.mxu0 0.0
  %2363 = vmatmul.mubr.f32.gmra.mxu0 %v2023
  %v2364 = vpop.f32.mrf.mxu0
  %v2365 = vadd.f32 0.0, %v2364
  %v2366 = vpop.f32.mrf.mxu0
  %2367 = vmatprep.mubr.f32.mxu0 0.0
  %2368 = vmatmul.mubr.f32.gmra.mxu0 %v2025
  %v2369 = vpop.f32.mrf.mxu0
  %v2370 = vadd.f32 0.0, %v2369
  %v2371 = vpop.f32.mrf.mxu0
  %2372 = vmatprep.mubr.f32.mxu0 0.0
  %2373 = vmatmul.mubr.f32.gmra.mxu0 %v2027
  %v2374 = vpop.f32.mrf.mxu0
  %v2375 = vadd.f32 0.0, %v2374
  %v2376 = vpop.f32.mrf.mxu0
  %2377 = vmatprep.mubr.f32.mxu0 0.0
  %2378 = vmatmul.mubr.f32.gmra.mxu0 %v2029
  %v2379 = vpop.f32.mrf.mxu0
  %v2380 = vadd.f32 0.0, %v2379
  %v2381 = vpop.f32.mrf.mxu0
  %2382 = vmatprep.mubr.f32.mxu0 0.0
  %2383 = vmatmul.mubr.f32.gmra.mxu0 %v2031
  %v2384 = vpop.f32.mrf.mxu0
  %v2385 = vadd.f32 0.0, %v2384
  %v2386 = vpop.f32.mrf.mxu0
  %2387 = vmatprep.mubr.f32.mxu0 0.0
  %2388 = vmatmul.mubr.f32.gmra.mxu0 %v2033
  %v2389 = vpop.f32.mrf.mxu0
  %v2390 = vadd.f32 0.0, %v2389
  %v2391 = vpop.f32.mrf.mxu0
  %2392 = vmatprep.mubr.f32.mxu0 0.0
  %2393 = vmatmul.mubr.f32.gmra.mxu0 %v2035
  %v2394 = vpop.f32.mrf.mxu0
  %v2395 = vadd.f32 0.0, %v2394
  %v2396 = vpop.f32.mrf.mxu0
  %2397 = vmatprep.mubr.f32.mxu0 0.0
  %2398 = vmatmul.mubr.f32.gmra.mxu0 %v2037
  %v2399 = vpop.f32.mrf.mxu0
  %v2400 = vadd.f32 0.0, %v2399
  %v2401 = vpop.f32.mrf.mxu0
  %2402 = vmatprep.mubr.f32.mxu0 0.0
  %2403 = vmatmul.mubr.f32.gmra.mxu0 %v2039
  %v2404 = vpop.f32.mrf.mxu0
  %v2405 = vadd.f32 0.0, %v2404
  %v2406 = vpop.f32.mrf.mxu0
  %2407 = vmatprep.mubr.f32.mxu0 0.0
  %2408 = vmatmul.mubr.f32.gmra.mxu0 %v2041
  %v2409 = vpop.f32.mrf.mxu0
  %v2410 = vadd.f32 0.0, %v2409
  %v2411 = vpop.f32.mrf.mxu0
  %2412 = vmatprep.mubr.f32.mxu0 0.0
  %2413 = vmatmul.mubr.f32.gmra.mxu0 %v2043
  %v2414 = vpop.f32.mrf.mxu0
  %v2415 = vadd.f32 0.0, %v2414
  %v2416 = vpop.f32.mrf.mxu0
  %2417 = vmatprep.mubr.f32.mxu0 0.0
  %2418 = vmatmul.mubr.f32.gmra.mxu0 %v2045
  %v2419 = vpop.f32.mrf.mxu0
  %v2420 = vadd.f32 0.0, %v2419
  %v2421 = vpop.f32.mrf.mxu0
  %2422 = vmatprep.mubr.f32.mxu0 0.0
  %2423 = vmatmul.mubr.f32.gmra.mxu0 %v2047
  %v2424 = vpop.f32.mrf.mxu0
  %v2425 = vadd.f32 0.0, %v2424
  %v2426 = vpop.f32.mrf.mxu0
  %2427 = vmatprep.mubr.f32.mxu0 0.0
  %2428 = vmatmul.mubr.f32.gmra.mxu0 %v2049
  %v2429 = vpop.f32.mrf.mxu0
  %v2430 = vadd.f32 0.0, %v2429
  %v2431 = vpop.f32.mrf.mxu0
  %2432 = vmatprep.mubr.f32.mxu0 0.0
  %2433 = vmatmul.mubr.f32.gmra.mxu0 %v2051
  %v2434 = vpop.f32.mrf.mxu0
  %v2435 = vadd.f32 0.0, %v2434
  %v2436 = vpop.f32.mrf.mxu0
  %2437 = vmatprep.mubr.f32.mxu0 0.0
  %2438 = vmatmul.mubr.f32.gmra.mxu0 %v2053
  %v2439 = vpop.f32.mrf.mxu0
  %v2440 = vadd.f32 0.0, %v2439
  %v2441 = vpop.f32.mrf.mxu0
  %2442 = vdwg.mxu0
  %v2443 = vadd.f32 %v1414, %v2125
  %v2444 = vadd.f32 %v1419, %v2130
  %v2445 = vadd.f32 %v1424, %v2135
  %v2446 = vadd.f32 %v1429, %v2140
  %v2447 = vadd.f32 %v1434, %v2145
  %v2448 = vadd.f32 %v1439, %v2150
  %v2449 = vadd.f32 %v1444, %v2155
  %v2450 = vadd.f32 %v1449, %v2160
  %v2451 = vadd.f32 %v1454, %v2165
  %v2452 = vadd.f32 %v1459, %v2170
  %v2453 = vadd.f32 %v1464, %v2175
  %v2454 = vadd.f32 %v1469, %v2180
  %v2455 = vadd.f32 %v1474, %v2185
  %v2456 = vadd.f32 %v1479, %v2190
  %v2457 = vadd.f32 %v1484, %v2195
  %v2458 = vadd.f32 %v1489, %v2200
  %v2459 = vadd.f32 %v1494, %v2205
  %v2460 = vadd.f32 %v1499, %v2210
  %v2461 = vadd.f32 %v1504, %v2215
  %v2462 = vadd.f32 %v1509, %v2220
  %v2463 = vadd.f32 %v1514, %v2225
  %v2464 = vadd.f32 %v1519, %v2230
  %v2465 = vadd.f32 %v1524, %v2235
  %v2466 = vadd.f32 %v1529, %v2240
  %v2467 = vadd.f32 %v1534, %v2245
  %v2468 = vadd.f32 %v1539, %v2250
  %v2469 = vadd.f32 %v1544, %v2255
  %v2470 = vadd.f32 %v1549, %v2260
  %v2471 = vadd.f32 %v1554, %v2265
  %v2472 = vadd.f32 %v1559, %v2270
  %v2473 = vadd.f32 %v1564, %v2275
  %v2474 = vadd.f32 %v1569, %v2280
  %v2475 = vadd.f32 %v1574, %v2285
  %v2476 = vadd.f32 %v1579, %v2290
  %v2477 = vadd.f32 %v1584, %v2295
  %v2478 = vadd.f32 %v1589, %v2300
  %v2479 = vadd.f32 %v1594, %v2305
  %v2480 = vadd.f32 %v1599, %v2310
  %v2481 = vadd.f32 %v1604, %v2315
  %v2482 = vadd.f32 %v1609, %v2320
  %v2483 = vadd.f32 %v1614, %v2325
  %v2484 = vadd.f32 %v1619, %v2330
  %v2485 = vadd.f32 %v1624, %v2335
  %v2486 = vadd.f32 %v1629, %v2340
  %v2487 = vadd.f32 %v1634, %v2345
  %v2488 = vadd.f32 %v1639, %v2350
  %v2489 = vadd.f32 %v1644, %v2355
  %v2490 = vadd.f32 %v1649, %v2360
  %v2491 = vadd.f32 %v1654, %v2365
  %v2492 = vadd.f32 %v1659, %v2370
  %v2493 = vadd.f32 %v1664, %v2375
  %v2494 = vadd.f32 %v1669, %v2380
  %v2495 = vadd.f32 %v1674, %v2385
  %v2496 = vadd.f32 %v1679, %v2390
  %v2497 = vadd.f32 %v1684, %v2395
  %v2498 = vadd.f32 %v1689, %v2400
  %v2499 = vadd.f32 %v1694, %v2405
  %v2500 = vadd.f32 %v1699, %v2410
  %v2501 = vadd.f32 %v1704, %v2415
  %v2502 = vadd.f32 %v1709, %v2420
  %v2503 = vadd.f32 %v1714, %v2425
  %v2504 = vadd.f32 %v1719, %v2430
  %v2505 = vadd.f32 %v1724, %v2435
  %v2506 = vadd.f32 %v1729, %v2440
  %v2513 = vrot.slane %v359, 7
  %v2514 = vrot.slane %v360, 7
  %v2515 = vsel %vm535, %v2513, %v2514
  %v2516 = vrot.slane %v361, 7
  %v2517 = vsel %vm535, %v2514, %v2516
  %v2518 = vrot.slane %v431, 7
  %v2519 = vrot.slane %v432, 7
  %v2520 = vsel %vm535, %v2518, %v2519
  %v2521 = vrot.slane %v433, 7
  %v2522 = vsel %vm535, %v2519, %v2521
  %s2523 = scalar_lea.vmem %s1, 12
  %v2524 = vld [vmem:[%s2523] sm:$0xf]
  %v2525 = vsel %vm84, %v2515, 0
  %v2527 = vsel %vm84, %v2517, 0
  %v2529 = vsel %vm84, %v2520, 0
  %v2531 = vsel %vm84, %v2522, 0
  %v2534 = vsel %vm827, %v2524, 0
  %2536 = vmatprep.subr.mxu0 0.0
  %2537 = vmatpush1.msra.mxu0 0.0
  %2538 = vmatprep.subr.mxu0 0.0
  %2539 = vmatpush1.msra.mxu0 0.0
  %2540 = vmatprep.subr.mxu0 0.0
  %2541 = vmatpush1.msra.mxu0 0.0
  %2542 = vmatprep.subr.mxu0 0.0
  %2543 = vmatpush1.msra.mxu0 0.0
  %2544 = vmatprep.subr.mxu0 0.0
  %2545 = vmatpush1.msra.mxu0 0.0
  %2546 = vmatprep.subr.mxu0 0.0
  %2547 = vmatpush1.msra.mxu0 0.0
  %2548 = vmatprep.subr.mxu0 0.0
  %2549 = vmatpush1.msra.mxu0 0.0
  %2550 = vmatprep.subr.mxu0 0.0
  %2551 = vmatpush1.msra.mxu0 0.0
  %2552 = vmatprep.subr.mxu0 0.0
  %2553 = vmatpush1.msra.mxu0 0.0
  %2554 = vmatprep.subr.mxu0 0.0
  %2555 = vmatpush1.msra.mxu0 0.0
  %2556 = vmatprep.subr.mxu0 0.0
  %2557 = vmatpush1.msra.mxu0 0.0
  %2558 = vmatprep.subr.mxu0 0.0
  %2559 = vmatpush1.msra.mxu0 0.0
  %2560 = vmatprep.subr.mxu0 0.0
  %2561 = vmatpush1.msra.mxu0 0.0
  %2562 = vmatprep.subr.mxu0 0.0
  %2563 = vmatpush1.msra.mxu0 0.0
  %2564 = vmatprep.subr.mxu0 0.0
  %2565 = vmatpush1.msra.mxu0 0.0
  %2566 = vmatprep.subr.mxu0 0.0
  %2567 = vmatpush1.msra.mxu0 %v2534
  %2568 = vmatprep.subr.mxu0 0.0
  %2569 = vmatpush2.msra.mxu0 0.0
  %2570 = vmatprep.subr.mxu0 0.0
  %2571 = vmatpush2.msra.mxu0 0.0
  %2572 = vmatprep.subr.mxu0 0.0
  %2573 = vmatpush2.msra.mxu0 0.0
  %2574 = vmatprep.subr.mxu0 0.0
  %2575 = vmatpush2.msra.mxu0 0.0
  %2576 = vmatprep.subr.mxu0 0.0
  %2577 = vmatpush2.msra.mxu0 0.0
  %2578 = vmatprep.subr.mxu0 0.0
  %2579 = vmatpush2.msra.mxu0 0.0
  %2580 = vmatprep.subr.mxu0 0.0
  %2581 = vmatpush2.msra.mxu0 0.0
  %2582 = vmatprep.subr.mxu0 0.0
  %2583 = vmatpush2.msra.mxu0 0.0
  %2584 = vmatprep.subr.mxu0 0.0
  %2585 = vmatpush2.msra.mxu0 0.0
  %2586 = vmatprep.subr.mxu0 0.0
  %2587 = vmatpush2.msra.mxu0 0.0
  %2588 = vmatprep.subr.mxu0 0.0
  %2589 = vmatpush2.msra.mxu0 0.0
  %2590 = vmatprep.subr.mxu0 0.0
  %2591 = vmatpush2.msra.mxu0 0.0
  %2592 = vmatprep.subr.mxu0 0.0
  %2593 = vmatpush2.msra.mxu0 0.0
  %2594 = vmatprep.subr.mxu0 0.0
  %2595 = vmatpush2.msra.mxu0 0.0
  %2596 = vmatprep.subr.mxu0 0.0
  %2597 = vmatpush2.msra.mxu0 0.0
  %2598 = vmatprep.subr.mxu0 0.0
  %2599 = vmatpush2.msra.mxu0 0.0
  %2600 = vmatprep.mubr.f32.mxu0 0.0
  %2601 = vmatmul.mubr.f32.gmra.mxu0 %v1220
  %v2602 = vpop.f32.mrf.mxu0
  %v2603 = vadd.f32 0.0, %v2602
  %v2604 = vpop.f32.mrf.mxu0
  %2605 = vmatprep.mubr.f32.mxu0 0.0
  %2606 = vmatmul.mubr.f32.gmra.mxu0 %v1222
  %v2607 = vpop.f32.mrf.mxu0
  %v2608 = vadd.f32 0.0, %v2607
  %v2609 = vpop.f32.mrf.mxu0
  %2610 = vmatprep.mubr.f32.mxu0 0.0
  %2611 = vmatmul.mubr.f32.gmra.mxu0 %v1224
  %v2612 = vpop.f32.mrf.mxu0
  %v2613 = vadd.f32 0.0, %v2612
  %v2614 = vpop.f32.mrf.mxu0
  %2615 = vmatprep.mubr.f32.mxu0 0.0
  %2616 = vmatmul.mubr.f32.gmra.mxu0 %v1226
  %v2617 = vpop.f32.mrf.mxu0
  %v2618 = vadd.f32 0.0, %v2617
  %v2619 = vpop.f32.mrf.mxu0
  %2620 = vmatprep.mubr.f32.mxu0 0.0
  %2621 = vmatmul.mubr.f32.gmra.mxu0 %v1228
  %v2622 = vpop.f32.mrf.mxu0
  %v2623 = vadd.f32 0.0, %v2622
  %v2624 = vpop.f32.mrf.mxu0
  %2625 = vmatprep.mubr.f32.mxu0 0.0
  %2626 = vmatmul.mubr.f32.gmra.mxu0 %v1230
  %v2627 = vpop.f32.mrf.mxu0
  %v2628 = vadd.f32 0.0, %v2627
  %v2629 = vpop.f32.mrf.mxu0
  %2630 = vmatprep.mubr.f32.mxu0 0.0
  %2631 = vmatmul.mubr.f32.gmra.mxu0 %v1232
  %v2632 = vpop.f32.mrf.mxu0
  %v2633 = vadd.f32 0.0, %v2632
  %v2634 = vpop.f32.mrf.mxu0
  %2635 = vmatprep.mubr.f32.mxu0 0.0
  %2636 = vmatmul.mubr.f32.gmra.mxu0 %v1234
  %v2637 = vpop.f32.mrf.mxu0
  %v2638 = vadd.f32 0.0, %v2637
  %v2639 = vpop.f32.mrf.mxu0
  %2640 = vmatprep.mubr.f32.mxu0 0.0
  %2641 = vmatmul.mubr.f32.gmra.mxu0 %v1236
  %v2642 = vpop.f32.mrf.mxu0
  %v2643 = vadd.f32 0.0, %v2642
  %v2644 = vpop.f32.mrf.mxu0
  %2645 = vmatprep.mubr.f32.mxu0 0.0
  %2646 = vmatmul.mubr.f32.gmra.mxu0 %v1238
  %v2647 = vpop.f32.mrf.mxu0
  %v2648 = vadd.f32 0.0, %v2647
  %v2649 = vpop.f32.mrf.mxu0
  %2650 = vmatprep.mubr.f32.mxu0 0.0
  %2651 = vmatmul.mubr.f32.gmra.mxu0 %v1240
  %v2652 = vpop.f32.mrf.mxu0
  %v2653 = vadd.f32 0.0, %v2652
  %v2654 = vpop.f32.mrf.mxu0
  %2655 = vmatprep.mubr.f32.mxu0 0.0
  %2656 = vmatmul.mubr.f32.gmra.mxu0 %v1242
  %v2657 = vpop.f32.mrf.mxu0
  %v2658 = vadd.f32 0.0, %v2657
  %v2659 = vpop.f32.mrf.mxu0
  %2660 = vmatprep.mubr.f32.mxu0 0.0
  %2661 = vmatmul.mubr.f32.gmra.mxu0 %v1244
  %v2662 = vpop.f32.mrf.mxu0
  %v2663 = vadd.f32 0.0, %v2662
  %v2664 = vpop.f32.mrf.mxu0
  %2665 = vmatprep.mubr.f32.mxu0 0.0
  %2666 = vmatmul.mubr.f32.gmra.mxu0 %v1246
  %v2667 = vpop.f32.mrf.mxu0
  %v2668 = vadd.f32 0.0, %v2667
  %v2669 = vpop.f32.mrf.mxu0
  %2670 = vmatprep.mubr.f32.mxu0 0.0
  %2671 = vmatmul.mubr.f32.gmra.mxu0 %v1248
  %v2672 = vpop.f32.mrf.mxu0
  %v2673 = vadd.f32 0.0, %v2672
  %v2674 = vpop.f32.mrf.mxu0
  %2675 = vmatprep.mubr.f32.mxu0 0.0
  %2676 = vmatmul.mubr.f32.gmra.mxu0 %v1250
  %v2677 = vpop.f32.mrf.mxu0
  %v2678 = vadd.f32 0.0, %v2677
  %v2679 = vpop.f32.mrf.mxu0
  %2680 = vmatprep.mubr.f32.mxu0 0.0
  %2681 = vmatmul.mubr.f32.gmra.mxu0 %v1252
  %v2682 = vpop.f32.mrf.mxu0
  %v2683 = vadd.f32 0.0, %v2682
  %v2684 = vpop.f32.mrf.mxu0
  %2685 = vmatprep.mubr.f32.mxu0 0.0
  %2686 = vmatmul.mubr.f32.gmra.mxu0 %v1254
  %v2687 = vpop.f32.mrf.mxu0
  %v2688 = vadd.f32 0.0, %v2687
  %v2689 = vpop.f32.mrf.mxu0
  %2690 = vmatprep.mubr.f32.mxu0 0.0
  %2691 = vmatmul.mubr.f32.gmra.mxu0 %v1256
  %v2692 = vpop.f32.mrf.mxu0
  %v2693 = vadd.f32 0.0, %v2692
  %v2694 = vpop.f32.mrf.mxu0
  %2695 = vmatprep.mubr.f32.mxu0 0.0
  %2696 = vmatmul.mubr.f32.gmra.mxu0 %v1258
  %v2697 = vpop.f32.mrf.mxu0
  %v2698 = vadd.f32 0.0, %v2697
  %v2699 = vpop.f32.mrf.mxu0
  %2700 = vmatprep.mubr.f32.mxu0 0.0
  %2701 = vmatmul.mubr.f32.gmra.mxu0 %v1260
  %v2702 = vpop.f32.mrf.mxu0
  %v2703 = vadd.f32 0.0, %v2702
  %v2704 = vpop.f32.mrf.mxu0
  %2705 = vmatprep.mubr.f32.mxu0 0.0
  %2706 = vmatmul.mubr.f32.gmra.mxu0 %v1262
  %v2707 = vpop.f32.mrf.mxu0
  %v2708 = vadd.f32 0.0, %v2707
  %v2709 = vpop.f32.mrf.mxu0
  %2710 = vmatprep.mubr.f32.mxu0 0.0
  %2711 = vmatmul.mubr.f32.gmra.mxu0 %v1264
  %v2712 = vpop.f32.mrf.mxu0
  %v2713 = vadd.f32 0.0, %v2712
  %v2714 = vpop.f32.mrf.mxu0
  %2715 = vmatprep.mubr.f32.mxu0 0.0
  %2716 = vmatmul.mubr.f32.gmra.mxu0 %v1266
  %v2717 = vpop.f32.mrf.mxu0
  %v2718 = vadd.f32 0.0, %v2717
  %v2719 = vpop.f32.mrf.mxu0
  %2720 = vmatprep.mubr.f32.mxu0 0.0
  %2721 = vmatmul.mubr.f32.gmra.mxu0 %v1268
  %v2722 = vpop.f32.mrf.mxu0
  %v2723 = vadd.f32 0.0, %v2722
  %v2724 = vpop.f32.mrf.mxu0
  %2725 = vmatprep.mubr.f32.mxu0 0.0
  %2726 = vmatmul.mubr.f32.gmra.mxu0 %v1270
  %v2727 = vpop.f32.mrf.mxu0
  %v2728 = vadd.f32 0.0, %v2727
  %v2729 = vpop.f32.mrf.mxu0
  %2730 = vmatprep.mubr.f32.mxu0 0.0
  %2731 = vmatmul.mubr.f32.gmra.mxu0 %v1272
  %v2732 = vpop.f32.mrf.mxu0
  %v2733 = vadd.f32 0.0, %v2732
  %v2734 = vpop.f32.mrf.mxu0
  %2735 = vmatprep.mubr.f32.mxu0 0.0
  %2736 = vmatmul.mubr.f32.gmra.mxu0 %v1274
  %v2737 = vpop.f32.mrf.mxu0
  %v2738 = vadd.f32 0.0, %v2737
  %v2739 = vpop.f32.mrf.mxu0
  %2740 = vmatprep.mubr.f32.mxu0 0.0
  %2741 = vmatmul.mubr.f32.gmra.mxu0 %v1276
  %v2742 = vpop.f32.mrf.mxu0
  %v2743 = vadd.f32 0.0, %v2742
  %v2744 = vpop.f32.mrf.mxu0
  %2745 = vmatprep.mubr.f32.mxu0 0.0
  %2746 = vmatmul.mubr.f32.gmra.mxu0 %v1278
  %v2747 = vpop.f32.mrf.mxu0
  %v2748 = vadd.f32 0.0, %v2747
  %v2749 = vpop.f32.mrf.mxu0
  %2750 = vmatprep.mubr.f32.mxu0 0.0
  %2751 = vmatmul.mubr.f32.gmra.mxu0 %v2525
  %v2752 = vpop.f32.mrf.mxu0
  %v2753 = vadd.f32 0.0, %v2752
  %v2754 = vpop.f32.mrf.mxu0
  %2755 = vmatprep.mubr.f32.mxu0 0.0
  %2756 = vmatmul.mubr.f32.gmra.mxu0 %v2527
  %v2757 = vpop.f32.mrf.mxu0
  %v2758 = vadd.f32 0.0, %v2757
  %v2759 = vpop.f32.mrf.mxu0
  %2760 = vmatprep.mubr.f32.mxu0 0.0
  %2761 = vmatmul.mubr.f32.gmra.mxu0 %v1284
  %v2762 = vpop.f32.mrf.mxu0
  %v2763 = vadd.f32 0.0, %v2762
  %v2764 = vpop.f32.mrf.mxu0
  %2765 = vmatprep.mubr.f32.mxu0 0.0
  %2766 = vmatmul.mubr.f32.gmra.mxu0 %v1286
  %v2767 = vpop.f32.mrf.mxu0
  %v2768 = vadd.f32 0.0, %v2767
  %v2769 = vpop.f32.mrf.mxu0
  %2770 = vmatprep.mubr.f32.mxu0 0.0
  %2771 = vmatmul.mubr.f32.gmra.mxu0 %v1288
  %v2772 = vpop.f32.mrf.mxu0
  %v2773 = vadd.f32 0.0, %v2772
  %v2774 = vpop.f32.mrf.mxu0
  %2775 = vmatprep.mubr.f32.mxu0 0.0
  %2776 = vmatmul.mubr.f32.gmra.mxu0 %v1290
  %v2777 = vpop.f32.mrf.mxu0
  %v2778 = vadd.f32 0.0, %v2777
  %v2779 = vpop.f32.mrf.mxu0
  %2780 = vmatprep.mubr.f32.mxu0 0.0
  %2781 = vmatmul.mubr.f32.gmra.mxu0 %v1292
  %v2782 = vpop.f32.mrf.mxu0
  %v2783 = vadd.f32 0.0, %v2782
  %v2784 = vpop.f32.mrf.mxu0
  %2785 = vmatprep.mubr.f32.mxu0 0.0
  %2786 = vmatmul.mubr.f32.gmra.mxu0 %v1294
  %v2787 = vpop.f32.mrf.mxu0
  %v2788 = vadd.f32 0.0, %v2787
  %v2789 = vpop.f32.mrf.mxu0
  %2790 = vmatprep.mubr.f32.mxu0 0.0
  %2791 = vmatmul.mubr.f32.gmra.mxu0 %v1296
  %v2792 = vpop.f32.mrf.mxu0
  %v2793 = vadd.f32 0.0, %v2792
  %v2794 = vpop.f32.mrf.mxu0
  %2795 = vmatprep.mubr.f32.mxu0 0.0
  %2796 = vmatmul.mubr.f32.gmra.mxu0 %v1298
  %v2797 = vpop.f32.mrf.mxu0
  %v2798 = vadd.f32 0.0, %v2797
  %v2799 = vpop.f32.mrf.mxu0
  %2800 = vmatprep.mubr.f32.mxu0 0.0
  %2801 = vmatmul.mubr.f32.gmra.mxu0 %v1300
  %v2802 = vpop.f32.mrf.mxu0
  %v2803 = vadd.f32 0.0, %v2802
  %v2804 = vpop.f32.mrf.mxu0
  %2805 = vmatprep.mubr.f32.mxu0 0.0
  %2806 = vmatmul.mubr.f32.gmra.mxu0 %v1302
  %v2807 = vpop.f32.mrf.mxu0
  %v2808 = vadd.f32 0.0, %v2807
  %v2809 = vpop.f32.mrf.mxu0
  %2810 = vmatprep.mubr.f32.mxu0 0.0
  %2811 = vmatmul.mubr.f32.gmra.mxu0 %v1304
  %v2812 = vpop.f32.mrf.mxu0
  %v2813 = vadd.f32 0.0, %v2812
  %v2814 = vpop.f32.mrf.mxu0
  %2815 = vmatprep.mubr.f32.mxu0 0.0
  %2816 = vmatmul.mubr.f32.gmra.mxu0 %v1306
  %v2817 = vpop.f32.mrf.mxu0
  %v2818 = vadd.f32 0.0, %v2817
  %v2819 = vpop.f32.mrf.mxu0
  %2820 = vmatprep.mubr.f32.mxu0 0.0
  %2821 = vmatmul.mubr.f32.gmra.mxu0 %v1308
  %v2822 = vpop.f32.mrf.mxu0
  %v2823 = vadd.f32 0.0, %v2822
  %v2824 = vpop.f32.mrf.mxu0
  %2825 = vmatprep.mubr.f32.mxu0 0.0
  %2826 = vmatmul.mubr.f32.gmra.mxu0 %v1310
  %v2827 = vpop.f32.mrf.mxu0
  %v2828 = vadd.f32 0.0, %v2827
  %v2829 = vpop.f32.mrf.mxu0
  %2830 = vmatprep.mubr.f32.mxu0 0.0
  %2831 = vmatmul.mubr.f32.gmra.mxu0 %v1312
  %v2832 = vpop.f32.mrf.mxu0
  %v2833 = vadd.f32 0.0, %v2832
  %v2834 = vpop.f32.mrf.mxu0
  %2835 = vmatprep.mubr.f32.mxu0 0.0
  %2836 = vmatmul.mubr.f32.gmra.mxu0 %v1314
  %v2837 = vpop.f32.mrf.mxu0
  %v2838 = vadd.f32 0.0, %v2837
  %v2839 = vpop.f32.mrf.mxu0
  %2840 = vmatprep.mubr.f32.mxu0 0.0
  %2841 = vmatmul.mubr.f32.gmra.mxu0 %v1316
  %v2842 = vpop.f32.mrf.mxu0
  %v2843 = vadd.f32 0.0, %v2842
  %v2844 = vpop.f32.mrf.mxu0
  %2845 = vmatprep.mubr.f32.mxu0 0.0
  %2846 = vmatmul.mubr.f32.gmra.mxu0 %v1318
  %v2847 = vpop.f32.mrf.mxu0
  %v2848 = vadd.f32 0.0, %v2847
  %v2849 = vpop.f32.mrf.mxu0
  %2850 = vmatprep.mubr.f32.mxu0 0.0
  %2851 = vmatmul.mubr.f32.gmra.mxu0 %v1320
  %v2852 = vpop.f32.mrf.mxu0
  %v2853 = vadd.f32 0.0, %v2852
  %v2854 = vpop.f32.mrf.mxu0
  %2855 = vmatprep.mubr.f32.mxu0 0.0
  %2856 = vmatmul.mubr.f32.gmra.mxu0 %v1322
  %v2857 = vpop.f32.mrf.mxu0
  %v2858 = vadd.f32 0.0, %v2857
  %v2859 = vpop.f32.mrf.mxu0
  %2860 = vmatprep.mubr.f32.mxu0 0.0
  %2861 = vmatmul.mubr.f32.gmra.mxu0 %v1324
  %v2862 = vpop.f32.mrf.mxu0
  %v2863 = vadd.f32 0.0, %v2862
  %v2864 = vpop.f32.mrf.mxu0
  %2865 = vmatprep.mubr.f32.mxu0 0.0
  %2866 = vmatmul.mubr.f32.gmra.mxu0 %v1326
  %v2867 = vpop.f32.mrf.mxu0
  %v2868 = vadd.f32 0.0, %v2867
  %v2869 = vpop.f32.mrf.mxu0
  %2870 = vmatprep.mubr.f32.mxu0 0.0
  %2871 = vmatmul.mubr.f32.gmra.mxu0 %v1328
  %v2872 = vpop.f32.mrf.mxu0
  %v2873 = vadd.f32 0.0, %v2872
  %v2874 = vpop.f32.mrf.mxu0
  %2875 = vmatprep.mubr.f32.mxu0 0.0
  %2876 = vmatmul.mubr.f32.gmra.mxu0 %v1330
  %v2877 = vpop.f32.mrf.mxu0
  %v2878 = vadd.f32 0.0, %v2877
  %v2879 = vpop.f32.mrf.mxu0
  %2880 = vmatprep.mubr.f32.mxu0 0.0
  %2881 = vmatmul.mubr.f32.gmra.mxu0 %v1332
  %v2882 = vpop.f32.mrf.mxu0
  %v2883 = vadd.f32 0.0, %v2882
  %v2884 = vpop.f32.mrf.mxu0
  %2885 = vmatprep.mubr.f32.mxu0 0.0
  %2886 = vmatmul.mubr.f32.gmra.mxu0 %v1334
  %v2887 = vpop.f32.mrf.mxu0
  %v2888 = vadd.f32 0.0, %v2887
  %v2889 = vpop.f32.mrf.mxu0
  %2890 = vmatprep.mubr.f32.mxu0 0.0
  %2891 = vmatmul.mubr.f32.gmra.mxu0 %v1336
  %v2892 = vpop.f32.mrf.mxu0
  %v2893 = vadd.f32 0.0, %v2892
  %v2894 = vpop.f32.mrf.mxu0
  %2895 = vmatprep.mubr.f32.mxu0 0.0
  %2896 = vmatmul.mubr.f32.gmra.mxu0 %v1338
  %v2897 = vpop.f32.mrf.mxu0
  %v2898 = vadd.f32 0.0, %v2897
  %v2899 = vpop.f32.mrf.mxu0
  %2900 = vmatprep.mubr.f32.mxu0 0.0
  %2901 = vmatmul.mubr.f32.gmra.mxu0 %v1340
  %v2902 = vpop.f32.mrf.mxu0
  %v2903 = vadd.f32 0.0, %v2902
  %v2904 = vpop.f32.mrf.mxu0
  %2905 = vmatprep.mubr.f32.mxu0 0.0
  %2906 = vmatmul.mubr.f32.gmra.mxu0 %v1342
  %v2907 = vpop.f32.mrf.mxu0
  %v2908 = vadd.f32 0.0, %v2907
  %v2909 = vpop.f32.mrf.mxu0
  %2910 = vmatprep.mubr.f32.mxu0 0.0
  %2911 = vmatmul.mubr.f32.gmra.mxu0 %v2529
  %v2912 = vpop.f32.mrf.mxu0
  %v2913 = vadd.f32 0.0, %v2912
  %v2914 = vpop.f32.mrf.mxu0
  %2915 = vmatprep.mubr.f32.mxu0 0.0
  %2916 = vmatmul.mubr.f32.gmra.mxu0 %v2531
  %v2917 = vpop.f32.mrf.mxu0
  %v2918 = vadd.f32 0.0, %v2917
  %v2919 = vpop.f32.mrf.mxu0
  %2920 = vdwg.mxu0
  %v2921 = vadd.f32 %v2443, %v2603
  %v2922 = vadd.f32 %v2444, %v2608
  %v2923 = vadd.f32 %v2445, %v2613
  %v2924 = vadd.f32 %v2446, %v2618
  %v2925 = vadd.f32 %v2447, %v2623
  %v2926 = vadd.f32 %v2448, %v2628
  %v2927 = vadd.f32 %v2449, %v2633
  %v2928 = vadd.f32 %v2450, %v2638
  %v2929 = vadd.f32 %v2451, %v2643
  %v2930 = vadd.f32 %v2452, %v2648
  %v2931 = vadd.f32 %v2453, %v2653
  %v2932 = vadd.f32 %v2454, %v2658
  %v2933 = vadd.f32 %v2455, %v2663
  %v2934 = vadd.f32 %v2456, %v2668
  %v2935 = vadd.f32 %v2457, %v2673
  %v2936 = vadd.f32 %v2458, %v2678
  %v2937 = vadd.f32 %v2459, %v2683
  %v2938 = vadd.f32 %v2460, %v2688
  %v2939 = vadd.f32 %v2461, %v2693
  %v2940 = vadd.f32 %v2462, %v2698
  %v2941 = vadd.f32 %v2463, %v2703
  %v2942 = vadd.f32 %v2464, %v2708
  %v2943 = vadd.f32 %v2465, %v2713
  %v2944 = vadd.f32 %v2466, %v2718
  %v2945 = vadd.f32 %v2467, %v2723
  %v2946 = vadd.f32 %v2468, %v2728
  %v2947 = vadd.f32 %v2469, %v2733
  %v2948 = vadd.f32 %v2470, %v2738
  %v2949 = vadd.f32 %v2471, %v2743
  %v2950 = vadd.f32 %v2472, %v2748
  %v2951 = vadd.f32 %v2473, %v2753
  %v2952 = vadd.f32 %v2474, %v2758
  %v2953 = vadd.f32 %v2475, %v2763
  %v2954 = vadd.f32 %v2476, %v2768
  %v2955 = vadd.f32 %v2477, %v2773
  %v2956 = vadd.f32 %v2478, %v2778
  %v2957 = vadd.f32 %v2479, %v2783
  %v2958 = vadd.f32 %v2480, %v2788
  %v2959 = vadd.f32 %v2481, %v2793
  %v2960 = vadd.f32 %v2482, %v2798
  %v2961 = vadd.f32 %v2483, %v2803
  %v2962 = vadd.f32 %v2484, %v2808
  %v2963 = vadd.f32 %v2485, %v2813
  %v2964 = vadd.f32 %v2486, %v2818
  %v2965 = vadd.f32 %v2487, %v2823
  %v2966 = vadd.f32 %v2488, %v2828
  %v2967 = vadd.f32 %v2489, %v2833
  %v2968 = vadd.f32 %v2490, %v2838
  %v2969 = vadd.f32 %v2491, %v2843
  %v2970 = vadd.f32 %v2492, %v2848
  %v2971 = vadd.f32 %v2493, %v2853
  %v2972 = vadd.f32 %v2494, %v2858
  %v2973 = vadd.f32 %v2495, %v2863
  %v2974 = vadd.f32 %v2496, %v2868
  %v2975 = vadd.f32 %v2497, %v2873
  %v2976 = vadd.f32 %v2498, %v2878
  %v2977 = vadd.f32 %v2499, %v2883
  %v2978 = vadd.f32 %v2500, %v2888
  %v2979 = vadd.f32 %v2501, %v2893
  %v2980 = vadd.f32 %v2502, %v2898
  %v2981 = vadd.f32 %v2503, %v2903
  %v2982 = vadd.f32 %v2504, %v2908
  %v2983 = vadd.f32 %v2505, %v2913
  %v2984 = vadd.f32 %v2506, %v2918
  %s2985 = scalar_lea.vmem %s1, 16
  %v2986 = vld [vmem:[%s2985] sm:$0xf]
  %v2987 = vsel %vm84, %v360, 0
  %v2989 = vsel %vm84, %v361, 0
  %v2991 = vsel %vm84, %v432, 0
  %v2993 = vsel %vm84, %v433, 0
  %v2996 = vsel %vm827, %v2986, 0
  %2998 = vmatprep.subr.mxu0 0.0
  %2999 = vmatpush1.msra.mxu0 0.0
  %3000 = vmatprep.subr.mxu0 0.0
  %3001 = vmatpush1.msra.mxu0 0.0
  %3002 = vmatprep.subr.mxu0 0.0
  %3003 = vmatpush1.msra.mxu0 0.0
  %3004 = vmatprep.subr.mxu0 0.0
  %3005 = vmatpush1.msra.mxu0 0.0
  %3006 = vmatprep.subr.mxu0 0.0
  %3007 = vmatpush1.msra.mxu0 0.0
  %3008 = vmatprep.subr.mxu0 0.0
  %3009 = vmatpush1.msra.mxu0 0.0
  %3010 = vmatprep.subr.mxu0 0.0
  %3011 = vmatpush1.msra.mxu0 0.0
  %3012 = vmatprep.subr.mxu0 0.0
  %3013 = vmatpush1.msra.mxu0 0.0
  %3014 = vmatprep.subr.mxu0 0.0
  %3015 = vmatpush1.msra.mxu0 0.0
  %3016 = vmatprep.subr.mxu0 0.0
  %3017 = vmatpush1.msra.mxu0 0.0
  %3018 = vmatprep.subr.mxu0 0.0
  %3019 = vmatpush1.msra.mxu0 0.0
  %3020 = vmatprep.subr.mxu0 0.0
  %3021 = vmatpush1.msra.mxu0 0.0
  %3022 = vmatprep.subr.mxu0 0.0
  %3023 = vmatpush1.msra.mxu0 0.0
  %3024 = vmatprep.subr.mxu0 0.0
  %3025 = vmatpush1.msra.mxu0 0.0
  %3026 = vmatprep.subr.mxu0 0.0
  %3027 = vmatpush1.msra.mxu0 0.0
  %3028 = vmatprep.subr.mxu0 0.0
  %3029 = vmatpush1.msra.mxu0 %v2996
  %3030 = vmatprep.subr.mxu0 0.0
  %3031 = vmatpush2.msra.mxu0 0.0
  %3032 = vmatprep.subr.mxu0 0.0
  %3033 = vmatpush2.msra.mxu0 0.0
  %3034 = vmatprep.subr.mxu0 0.0
  %3035 = vmatpush2.msra.mxu0 0.0
  %3036 = vmatprep.subr.mxu0 0.0
  %3037 = vmatpush2.msra.mxu0 0.0
  %3038 = vmatprep.subr.mxu0 0.0
  %3039 = vmatpush2.msra.mxu0 0.0
  %3040 = vmatprep.subr.mxu0 0.0
  %3041 = vmatpush2.msra.mxu0 0.0
  %3042 = vmatprep.subr.mxu0 0.0
  %3043 = vmatpush2.msra.mxu0 0.0
  %3044 = vmatprep.subr.mxu0 0.0
  %3045 = vmatpush2.msra.mxu0 0.0
  %3046 = vmatprep.subr.mxu0 0.0
  %3047 = vmatpush2.msra.mxu0 0.0
  %3048 = vmatprep.subr.mxu0 0.0
  %3049 = vmatpush2.msra.mxu0 0.0
  %3050 = vmatprep.subr.mxu0 0.0
  %3051 = vmatpush2.msra.mxu0 0.0
  %3052 = vmatprep.subr.mxu0 0.0
  %3053 = vmatpush2.msra.mxu0 0.0
  %3054 = vmatprep.subr.mxu0 0.0
  %3055 = vmatpush2.msra.mxu0 0.0
  %3056 = vmatprep.subr.mxu0 0.0
  %3057 = vmatpush2.msra.mxu0 0.0
  %3058 = vmatprep.subr.mxu0 0.0
  %3059 = vmatpush2.msra.mxu0 0.0
  %3060 = vmatprep.subr.mxu0 0.0
  %3061 = vmatpush2.msra.mxu0 0.0
  %3062 = vmatprep.mubr.f32.mxu0 0.0
  %3063 = vmatmul.mubr.f32.gmra.mxu0 %v703
  %v3064 = vpop.f32.mrf.mxu0
  %v3065 = vadd.f32 0.0, %v3064
  %v3066 = vpop.f32.mrf.mxu0
  %3067 = vmatprep.mubr.f32.mxu0 0.0
  %3068 = vmatmul.mubr.f32.gmra.mxu0 %v705
  %v3069 = vpop.f32.mrf.mxu0
  %v3070 = vadd.f32 0.0, %v3069
  %v3071 = vpop.f32.mrf.mxu0
  %3072 = vmatprep.mubr.f32.mxu0 0.0
  %3073 = vmatmul.mubr.f32.gmra.mxu0 %v707
  %v3074 = vpop.f32.mrf.mxu0
  %v3075 = vadd.f32 0.0, %v3074
  %v3076 = vpop.f32.mrf.mxu0
  %3077 = vmatprep.mubr.f32.mxu0 0.0
  %3078 = vmatmul.mubr.f32.gmra.mxu0 %v709
  %v3079 = vpop.f32.mrf.mxu0
  %v3080 = vadd.f32 0.0, %v3079
  %v3081 = vpop.f32.mrf.mxu0
  %3082 = vmatprep.mubr.f32.mxu0 0.0
  %3083 = vmatmul.mubr.f32.gmra.mxu0 %v711
  %v3084 = vpop.f32.mrf.mxu0
  %v3085 = vadd.f32 0.0, %v3084
  %v3086 = vpop.f32.mrf.mxu0
  %3087 = vmatprep.mubr.f32.mxu0 0.0
  %3088 = vmatmul.mubr.f32.gmra.mxu0 %v713
  %v3089 = vpop.f32.mrf.mxu0
  %v3090 = vadd.f32 0.0, %v3089
  %v3091 = vpop.f32.mrf.mxu0
  %3092 = vmatprep.mubr.f32.mxu0 0.0
  %3093 = vmatmul.mubr.f32.gmra.mxu0 %v715
  %v3094 = vpop.f32.mrf.mxu0
  %v3095 = vadd.f32 0.0, %v3094
  %v3096 = vpop.f32.mrf.mxu0
  %3097 = vmatprep.mubr.f32.mxu0 0.0
  %3098 = vmatmul.mubr.f32.gmra.mxu0 %v717
  %v3099 = vpop.f32.mrf.mxu0
  %v3100 = vadd.f32 0.0, %v3099
  %v3101 = vpop.f32.mrf.mxu0
  %3102 = vmatprep.mubr.f32.mxu0 0.0
  %3103 = vmatmul.mubr.f32.gmra.mxu0 %v719
  %v3104 = vpop.f32.mrf.mxu0
  %v3105 = vadd.f32 0.0, %v3104
  %v3106 = vpop.f32.mrf.mxu0
  %3107 = vmatprep.mubr.f32.mxu0 0.0
  %3108 = vmatmul.mubr.f32.gmra.mxu0 %v721
  %v3109 = vpop.f32.mrf.mxu0
  %v3110 = vadd.f32 0.0, %v3109
  %v3111 = vpop.f32.mrf.mxu0
  %3112 = vmatprep.mubr.f32.mxu0 0.0
  %3113 = vmatmul.mubr.f32.gmra.mxu0 %v723
  %v3114 = vpop.f32.mrf.mxu0
  %v3115 = vadd.f32 0.0, %v3114
  %v3116 = vpop.f32.mrf.mxu0
  %3117 = vmatprep.mubr.f32.mxu0 0.0
  %3118 = vmatmul.mubr.f32.gmra.mxu0 %v725
  %v3119 = vpop.f32.mrf.mxu0
  %v3120 = vadd.f32 0.0, %v3119
  %v3121 = vpop.f32.mrf.mxu0
  %3122 = vmatprep.mubr.f32.mxu0 0.0
  %3123 = vmatmul.mubr.f32.gmra.mxu0 %v727
  %v3124 = vpop.f32.mrf.mxu0
  %v3125 = vadd.f32 0.0, %v3124
  %v3126 = vpop.f32.mrf.mxu0
  %3127 = vmatprep.mubr.f32.mxu0 0.0
  %3128 = vmatmul.mubr.f32.gmra.mxu0 %v729
  %v3129 = vpop.f32.mrf.mxu0
  %v3130 = vadd.f32 0.0, %v3129
  %v3131 = vpop.f32.mrf.mxu0
  %3132 = vmatprep.mubr.f32.mxu0 0.0
  %3133 = vmatmul.mubr.f32.gmra.mxu0 %v731
  %v3134 = vpop.f32.mrf.mxu0
  %v3135 = vadd.f32 0.0, %v3134
  %v3136 = vpop.f32.mrf.mxu0
  %3137 = vmatprep.mubr.f32.mxu0 0.0
  %3138 = vmatmul.mubr.f32.gmra.mxu0 %v733
  %v3139 = vpop.f32.mrf.mxu0
  %v3140 = vadd.f32 0.0, %v3139
  %v3141 = vpop.f32.mrf.mxu0
  %3142 = vmatprep.mubr.f32.mxu0 0.0
  %3143 = vmatmul.mubr.f32.gmra.mxu0 %v735
  %v3144 = vpop.f32.mrf.mxu0
  %v3145 = vadd.f32 0.0, %v3144
  %v3146 = vpop.f32.mrf.mxu0
  %3147 = vmatprep.mubr.f32.mxu0 0.0
  %3148 = vmatmul.mubr.f32.gmra.mxu0 %v737
  %v3149 = vpop.f32.mrf.mxu0
  %v3150 = vadd.f32 0.0, %v3149
  %v3151 = vpop.f32.mrf.mxu0
  %3152 = vmatprep.mubr.f32.mxu0 0.0
  %3153 = vmatmul.mubr.f32.gmra.mxu0 %v739
  %v3154 = vpop.f32.mrf.mxu0
  %v3155 = vadd.f32 0.0, %v3154
  %v3156 = vpop.f32.mrf.mxu0
  %3157 = vmatprep.mubr.f32.mxu0 0.0
  %3158 = vmatmul.mubr.f32.gmra.mxu0 %v741
  %v3159 = vpop.f32.mrf.mxu0
  %v3160 = vadd.f32 0.0, %v3159
  %v3161 = vpop.f32.mrf.mxu0
  %3162 = vmatprep.mubr.f32.mxu0 0.0
  %3163 = vmatmul.mubr.f32.gmra.mxu0 %v743
  %v3164 = vpop.f32.mrf.mxu0
  %v3165 = vadd.f32 0.0, %v3164
  %v3166 = vpop.f32.mrf.mxu0
  %3167 = vmatprep.mubr.f32.mxu0 0.0
  %3168 = vmatmul.mubr.f32.gmra.mxu0 %v745
  %v3169 = vpop.f32.mrf.mxu0
  %v3170 = vadd.f32 0.0, %v3169
  %v3171 = vpop.f32.mrf.mxu0
  %3172 = vmatprep.mubr.f32.mxu0 0.0
  %3173 = vmatmul.mubr.f32.gmra.mxu0 %v747
  %v3174 = vpop.f32.mrf.mxu0
  %v3175 = vadd.f32 0.0, %v3174
  %v3176 = vpop.f32.mrf.mxu0
  %3177 = vmatprep.mubr.f32.mxu0 0.0
  %3178 = vmatmul.mubr.f32.gmra.mxu0 %v749
  %v3179 = vpop.f32.mrf.mxu0
  %v3180 = vadd.f32 0.0, %v3179
  %v3181 = vpop.f32.mrf.mxu0
  %3182 = vmatprep.mubr.f32.mxu0 0.0
  %3183 = vmatmul.mubr.f32.gmra.mxu0 %v751
  %v3184 = vpop.f32.mrf.mxu0
  %v3185 = vadd.f32 0.0, %v3184
  %v3186 = vpop.f32.mrf.mxu0
  %3187 = vmatprep.mubr.f32.mxu0 0.0
  %3188 = vmatmul.mubr.f32.gmra.mxu0 %v753
  %v3189 = vpop.f32.mrf.mxu0
  %v3190 = vadd.f32 0.0, %v3189
  %v3191 = vpop.f32.mrf.mxu0
  %3192 = vmatprep.mubr.f32.mxu0 0.0
  %3193 = vmatmul.mubr.f32.gmra.mxu0 %v755
  %v3194 = vpop.f32.mrf.mxu0
  %v3195 = vadd.f32 0.0, %v3194
  %v3196 = vpop.f32.mrf.mxu0
  %3197 = vmatprep.mubr.f32.mxu0 0.0
  %3198 = vmatmul.mubr.f32.gmra.mxu0 %v757
  %v3199 = vpop.f32.mrf.mxu0
  %v3200 = vadd.f32 0.0, %v3199
  %v3201 = vpop.f32.mrf.mxu0
  %3202 = vmatprep.mubr.f32.mxu0 0.0
  %3203 = vmatmul.mubr.f32.gmra.mxu0 %v759
  %v3204 = vpop.f32.mrf.mxu0
  %v3205 = vadd.f32 0.0, %v3204
  %v3206 = vpop.f32.mrf.mxu0
  %3207 = vmatprep.mubr.f32.mxu0 0.0
  %3208 = vmatmul.mubr.f32.gmra.mxu0 %v761
  %v3209 = vpop.f32.mrf.mxu0
  %v3210 = vadd.f32 0.0, %v3209
  %v3211 = vpop.f32.mrf.mxu0
  %3212 = vmatprep.mubr.f32.mxu0 0.0
  %3213 = vmatmul.mubr.f32.gmra.mxu0 %v2987
  %v3214 = vpop.f32.mrf.mxu0
  %v3215 = vadd.f32 0.0, %v3214
  %v3216 = vpop.f32.mrf.mxu0
  %3217 = vmatprep.mubr.f32.mxu0 0.0
  %3218 = vmatmul.mubr.f32.gmra.mxu0 %v2989
  %v3219 = vpop.f32.mrf.mxu0
  %v3220 = vadd.f32 0.0, %v3219
  %v3221 = vpop.f32.mrf.mxu0
  %3222 = vmatprep.mubr.f32.mxu0 0.0
  %3223 = vmatmul.mubr.f32.gmra.mxu0 %v767
  %v3224 = vpop.f32.mrf.mxu0
  %v3225 = vadd.f32 0.0, %v3224
  %v3226 = vpop.f32.mrf.mxu0
  %3227 = vmatprep.mubr.f32.mxu0 0.0
  %3228 = vmatmul.mubr.f32.gmra.mxu0 %v769
  %v3229 = vpop.f32.mrf.mxu0
  %v3230 = vadd.f32 0.0, %v3229
  %v3231 = vpop.f32.mrf.mxu0
  %3232 = vmatprep.mubr.f32.mxu0 0.0
  %3233 = vmatmul.mubr.f32.gmra.mxu0 %v771
  %v3234 = vpop.f32.mrf.mxu0
  %v3235 = vadd.f32 0.0, %v3234
  %v3236 = vpop.f32.mrf.mxu0
  %3237 = vmatprep.mubr.f32.mxu0 0.0
  %3238 = vmatmul.mubr.f32.gmra.mxu0 %v773
  %v3239 = vpop.f32.mrf.mxu0
  %v3240 = vadd.f32 0.0, %v3239
  %v3241 = vpop.f32.mrf.mxu0
  %3242 = vmatprep.mubr.f32.mxu0 0.0
  %3243 = vmatmul.mubr.f32.gmra.mxu0 %v775
  %v3244 = vpop.f32.mrf.mxu0
  %v3245 = vadd.f32 0.0, %v3244
  %v3246 = vpop.f32.mrf.mxu0
  %3247 = vmatprep.mubr.f32.mxu0 0.0
  %3248 = vmatmul.mubr.f32.gmra.mxu0 %v777
  %v3249 = vpop.f32.mrf.mxu0
  %v3250 = vadd.f32 0.0, %v3249
  %v3251 = vpop.f32.mrf.mxu0
  %3252 = vmatprep.mubr.f32.mxu0 0.0
  %3253 = vmatmul.mubr.f32.gmra.mxu0 %v779
  %v3254 = vpop.f32.mrf.mxu0
  %v3255 = vadd.f32 0.0, %v3254
  %v3256 = vpop.f32.mrf.mxu0
  %3257 = vmatprep.mubr.f32.mxu0 0.0
  %3258 = vmatmul.mubr.f32.gmra.mxu0 %v781
  %v3259 = vpop.f32.mrf.mxu0
  %v3260 = vadd.f32 0.0, %v3259
  %v3261 = vpop.f32.mrf.mxu0
  %3262 = vmatprep.mubr.f32.mxu0 0.0
  %3263 = vmatmul.mubr.f32.gmra.mxu0 %v783
  %v3264 = vpop.f32.mrf.mxu0
  %v3265 = vadd.f32 0.0, %v3264
  %v3266 = vpop.f32.mrf.mxu0
  %3267 = vmatprep.mubr.f32.mxu0 0.0
  %3268 = vmatmul.mubr.f32.gmra.mxu0 %v785
  %v3269 = vpop.f32.mrf.mxu0
  %v3270 = vadd.f32 0.0, %v3269
  %v3271 = vpop.f32.mrf.mxu0
  %3272 = vmatprep.mubr.f32.mxu0 0.0
  %3273 = vmatmul.mubr.f32.gmra.mxu0 %v787
  %v3274 = vpop.f32.mrf.mxu0
  %v3275 = vadd.f32 0.0, %v3274
  %v3276 = vpop.f32.mrf.mxu0
  %3277 = vmatprep.mubr.f32.mxu0 0.0
  %3278 = vmatmul.mubr.f32.gmra.mxu0 %v789
  %v3279 = vpop.f32.mrf.mxu0
  %v3280 = vadd.f32 0.0, %v3279
  %v3281 = vpop.f32.mrf.mxu0
  %3282 = vmatprep.mubr.f32.mxu0 0.0
  %3283 = vmatmul.mubr.f32.gmra.mxu0 %v791
  %v3284 = vpop.f32.mrf.mxu0
  %v3285 = vadd.f32 0.0, %v3284
  %v3286 = vpop.f32.mrf.mxu0
  %3287 = vmatprep.mubr.f32.mxu0 0.0
  %3288 = vmatmul.mubr.f32.gmra.mxu0 %v793
  %v3289 = vpop.f32.mrf.mxu0
  %v3290 = vadd.f32 0.0, %v3289
  %v3291 = vpop.f32.mrf.mxu0
  %3292 = vmatprep.mubr.f32.mxu0 0.0
  %3293 = vmatmul.mubr.f32.gmra.mxu0 %v795
  %v3294 = vpop.f32.mrf.mxu0
  %v3295 = vadd.f32 0.0, %v3294
  %v3296 = vpop.f32.mrf.mxu0
  %3297 = vmatprep.mubr.f32.mxu0 0.0
  %3298 = vmatmul.mubr.f32.gmra.mxu0 %v797
  %v3299 = vpop.f32.mrf.mxu0
  %v3300 = vadd.f32 0.0, %v3299
  %v3301 = vpop.f32.mrf.mxu0
  %3302 = vmatprep.mubr.f32.mxu0 0.0
  %3303 = vmatmul.mubr.f32.gmra.mxu0 %v799
  %v3304 = vpop.f32.mrf.mxu0
  %v3305 = vadd.f32 0.0, %v3304
  %v3306 = vpop.f32.mrf.mxu0
  %3307 = vmatprep.mubr.f32.mxu0 0.0
  %3308 = vmatmul.mubr.f32.gmra.mxu0 %v801
  %v3309 = vpop.f32.mrf.mxu0
  %v3310 = vadd.f32 0.0, %v3309
  %v3311 = vpop.f32.mrf.mxu0
  %3312 = vmatprep.mubr.f32.mxu0 0.0
  %3313 = vmatmul.mubr.f32.gmra.mxu0 %v803
  %v3314 = vpop.f32.mrf.mxu0
  %v3315 = vadd.f32 0.0, %v3314
  %v3316 = vpop.f32.mrf.mxu0
  %3317 = vmatprep.mubr.f32.mxu0 0.0
  %3318 = vmatmul.mubr.f32.gmra.mxu0 %v805
  %v3319 = vpop.f32.mrf.mxu0
  %v3320 = vadd.f32 0.0, %v3319
  %v3321 = vpop.f32.mrf.mxu0
  %3322 = vmatprep.mubr.f32.mxu0 0.0
  %3323 = vmatmul.mubr.f32.gmra.mxu0 %v807
  %v3324 = vpop.f32.mrf.mxu0
  %v3325 = vadd.f32 0.0, %v3324
  %v3326 = vpop.f32.mrf.mxu0
  %3327 = vmatprep.mubr.f32.mxu0 0.0
  %3328 = vmatmul.mubr.f32.gmra.mxu0 %v809
  %v3329 = vpop.f32.mrf.mxu0
  %v3330 = vadd.f32 0.0, %v3329
  %v3331 = vpop.f32.mrf.mxu0
  %3332 = vmatprep.mubr.f32.mxu0 0.0
  %3333 = vmatmul.mubr.f32.gmra.mxu0 %v811
  %v3334 = vpop.f32.mrf.mxu0
  %v3335 = vadd.f32 0.0, %v3334
  %v3336 = vpop.f32.mrf.mxu0
  %3337 = vmatprep.mubr.f32.mxu0 0.0
  %3338 = vmatmul.mubr.f32.gmra.mxu0 %v813
  %v3339 = vpop.f32.mrf.mxu0
  %v3340 = vadd.f32 0.0, %v3339
  %v3341 = vpop.f32.mrf.mxu0
  %3342 = vmatprep.mubr.f32.mxu0 0.0
  %3343 = vmatmul.mubr.f32.gmra.mxu0 %v815
  %v3344 = vpop.f32.mrf.mxu0
  %v3345 = vadd.f32 0.0, %v3344
  %v3346 = vpop.f32.mrf.mxu0
  %3347 = vmatprep.mubr.f32.mxu0 0.0
  %3348 = vmatmul.mubr.f32.gmra.mxu0 %v817
  %v3349 = vpop.f32.mrf.mxu0
  %v3350 = vadd.f32 0.0, %v3349
  %v3351 = vpop.f32.mrf.mxu0
  %3352 = vmatprep.mubr.f32.mxu0 0.0
  %3353 = vmatmul.mubr.f32.gmra.mxu0 %v819
  %v3354 = vpop.f32.mrf.mxu0
  %v3355 = vadd.f32 0.0, %v3354
  %v3356 = vpop.f32.mrf.mxu0
  %3357 = vmatprep.mubr.f32.mxu0 0.0
  %3358 = vmatmul.mubr.f32.gmra.mxu0 %v821
  %v3359 = vpop.f32.mrf.mxu0
  %v3360 = vadd.f32 0.0, %v3359
  %v3361 = vpop.f32.mrf.mxu0
  %3362 = vmatprep.mubr.f32.mxu0 0.0
  %3363 = vmatmul.mubr.f32.gmra.mxu0 %v823
  %v3364 = vpop.f32.mrf.mxu0
  %v3365 = vadd.f32 0.0, %v3364
  %v3366 = vpop.f32.mrf.mxu0
  %3367 = vmatprep.mubr.f32.mxu0 0.0
  %3368 = vmatmul.mubr.f32.gmra.mxu0 %v825
  %v3369 = vpop.f32.mrf.mxu0
  %v3370 = vadd.f32 0.0, %v3369
  %v3371 = vpop.f32.mrf.mxu0
  %3372 = vmatprep.mubr.f32.mxu0 0.0
  %3373 = vmatmul.mubr.f32.gmra.mxu0 %v2991
  %v3374 = vpop.f32.mrf.mxu0
  %v3375 = vadd.f32 0.0, %v3374
  %v3376 = vpop.f32.mrf.mxu0
  %3377 = vmatprep.mubr.f32.mxu0 0.0
  %3378 = vmatmul.mubr.f32.gmra.mxu0 %v2993
  %v3379 = vpop.f32.mrf.mxu0
  %v3380 = vadd.f32 0.0, %v3379
  %v3381 = vpop.f32.mrf.mxu0
  %3382 = vdwg.mxu0
  %v3383 = vadd.f32 %v2921, %v3065
  %v3384 = vadd.f32 %v2922, %v3070
  %v3385 = vadd.f32 %v2923, %v3075
  %v3386 = vadd.f32 %v2924, %v3080
  %v3387 = vadd.f32 %v2925, %v3085
  %v3388 = vadd.f32 %v2926, %v3090
  %v3389 = vadd.f32 %v2927, %v3095
  %v3390 = vadd.f32 %v2928, %v3100
  %v3391 = vadd.f32 %v2929, %v3105
  %v3392 = vadd.f32 %v2930, %v3110
  %v3393 = vadd.f32 %v2931, %v3115
  %v3394 = vadd.f32 %v2932, %v3120
  %v3395 = vadd.f32 %v2933, %v3125
  %v3396 = vadd.f32 %v2934, %v3130
  %v3397 = vadd.f32 %v2935, %v3135
  %v3398 = vadd.f32 %v2936, %v3140
  %v3399 = vadd.f32 %v2937, %v3145
  %v3400 = vadd.f32 %v2938, %v3150
  %v3401 = vadd.f32 %v2939, %v3155
  %v3402 = vadd.f32 %v2940, %v3160
  %v3403 = vadd.f32 %v2941, %v3165
  %v3404 = vadd.f32 %v2942, %v3170
  %v3405 = vadd.f32 %v2943, %v3175
  %v3406 = vadd.f32 %v2944, %v3180
  %v3407 = vadd.f32 %v2945, %v3185
  %v3408 = vadd.f32 %v2946, %v3190
  %v3409 = vadd.f32 %v2947, %v3195
  %v3410 = vadd.f32 %v2948, %v3200
  %v3411 = vadd.f32 %v2949, %v3205
  %v3412 = vadd.f32 %v2950, %v3210
  %v3413 = vadd.f32 %v2951, %v3215
  %v3414 = vadd.f32 %v2952, %v3220
  %v3415 = vadd.f32 %v2953, %v3225
  %v3416 = vadd.f32 %v2954, %v3230
  %v3417 = vadd.f32 %v2955, %v3235
  %v3418 = vadd.f32 %v2956, %v3240
  %v3419 = vadd.f32 %v2957, %v3245
  %v3420 = vadd.f32 %v2958, %v3250
  %v3421 = vadd.f32 %v2959, %v3255
  %v3422 = vadd.f32 %v2960, %v3260
  %v3423 = vadd.f32 %v2961, %v3265
  %v3424 = vadd.f32 %v2962, %v3270
  %v3425 = vadd.f32 %v2963, %v3275
  %v3426 = vadd.f32 %v2964, %v3280
  %v3427 = vadd.f32 %v2965, %v3285
  %v3428 = vadd.f32 %v2966, %v3290
  %v3429 = vadd.f32 %v2967, %v3295
  %v3430 = vadd.f32 %v2968, %v3300
  %v3431 = vadd.f32 %v2969, %v3305
  %v3432 = vadd.f32 %v2970, %v3310
  %v3433 = vadd.f32 %v2971, %v3315
  %v3434 = vadd.f32 %v2972, %v3320
  %v3435 = vadd.f32 %v2973, %v3325
  %v3436 = vadd.f32 %v2974, %v3330
  %v3437 = vadd.f32 %v2975, %v3335
  %v3438 = vadd.f32 %v2976, %v3340
  %v3439 = vadd.f32 %v2977, %v3345
  %v3440 = vadd.f32 %v2978, %v3350
  %v3441 = vadd.f32 %v2979, %v3355
  %v3442 = vadd.f32 %v2980, %v3360
  %v3443 = vadd.f32 %v2981, %v3365
  %v3444 = vadd.f32 %v2982, %v3370
  %v3445 = vadd.f32 %v2983, %v3375
  %v3446 = vadd.f32 %v2984, %v3380
  %v3449 = vrot.slane %v360, 1
  %v3450 = vrot.slane %v361, 1
  %v3451 = vsel %vm1764, %v3449, %v3450
  %v3452 = vrot.slane %v362, 1
  %v3453 = vsel %vm1764, %v3450, %v3452
  %v3454 = vrot.slane %v432, 1
  %v3455 = vrot.slane %v433, 1
  %v3456 = vsel %vm1764, %v3454, %v3455
  %v3457 = vrot.slane %v434, 1
  %v3458 = vsel %vm1764, %v3455, %v3457
  %s3459 = scalar_lea.vmem %s1, 20
  %v3460 = vld [vmem:[%s3459] sm:$0xf]
  %v3461 = vsel %vm84, %v3451, 0
  %v3463 = vsel %vm84, %v3453, 0
  %v3465 = vsel %vm84, %v3456, 0
  %v3467 = vsel %vm84, %v3458, 0
  %v3470 = vsel %vm827, %v3460, 0
  %3472 = vmatprep.subr.mxu0 0.0
  %3473 = vmatpush1.msra.mxu0 0.0
  %3474 = vmatprep.subr.mxu0 0.0
  %3475 = vmatpush1.msra.mxu0 0.0
  %3476 = vmatprep.subr.mxu0 0.0
  %3477 = vmatpush1.msra.mxu0 0.0
  %3478 = vmatprep.subr.mxu0 0.0
  %3479 = vmatpush1.msra.mxu0 0.0
  %3480 = vmatprep.subr.mxu0 0.0
  %3481 = vmatpush1.msra.mxu0 0.0
  %3482 = vmatprep.subr.mxu0 0.0
  %3483 = vmatpush1.msra.mxu0 0.0
  %3484 = vmatprep.subr.mxu0 0.0
  %3485 = vmatpush1.msra.mxu0 0.0
  %3486 = vmatprep.subr.mxu0 0.0
  %3487 = vmatpush1.msra.mxu0 0.0
  %3488 = vmatprep.subr.mxu0 0.0
  %3489 = vmatpush1.msra.mxu0 0.0
  %3490 = vmatprep.subr.mxu0 0.0
  %3491 = vmatpush1.msra.mxu0 0.0
  %3492 = vmatprep.subr.mxu0 0.0
  %3493 = vmatpush1.msra.mxu0 0.0
  %3494 = vmatprep.subr.mxu0 0.0
  %3495 = vmatpush1.msra.mxu0 0.0
  %3496 = vmatprep.subr.mxu0 0.0
  %3497 = vmatpush1.msra.mxu0 0.0
  %3498 = vmatprep.subr.mxu0 0.0
  %3499 = vmatpush1.msra.mxu0 0.0
  %3500 = vmatprep.subr.mxu0 0.0
  %3501 = vmatpush1.msra.mxu0 0.0
  %3502 = vmatprep.subr.mxu0 0.0
  %3503 = vmatpush1.msra.mxu0 %v3470
  %3504 = vmatprep.subr.mxu0 0.0
  %3505 = vmatpush2.msra.mxu0 0.0
  %3506 = vmatprep.subr.mxu0 0.0
  %3507 = vmatpush2.msra.mxu0 0.0
  %3508 = vmatprep.subr.mxu0 0.0
  %3509 = vmatpush2.msra.mxu0 0.0
  %3510 = vmatprep.subr.mxu0 0.0
  %3511 = vmatpush2.msra.mxu0 0.0
  %3512 = vmatprep.subr.mxu0 0.0
  %3513 = vmatpush2.msra.mxu0 0.0
  %3514 = vmatprep.subr.mxu0 0.0
  %3515 = vmatpush2.msra.mxu0 0.0
  %3516 = vmatprep.subr.mxu0 0.0
  %3517 = vmatpush2.msra.mxu0 0.0
  %3518 = vmatprep.subr.mxu0 0.0
  %3519 = vmatpush2.msra.mxu0 0.0
  %3520 = vmatprep.subr.mxu0 0.0
  %3521 = vmatpush2.msra.mxu0 0.0
  %3522 = vmatprep.subr.mxu0 0.0
  %3523 = vmatpush2.msra.mxu0 0.0
  %3524 = vmatprep.subr.mxu0 0.0
  %3525 = vmatpush2.msra.mxu0 0.0
  %3526 = vmatprep.subr.mxu0 0.0
  %3527 = vmatpush2.msra.mxu0 0.0
  %3528 = vmatprep.subr.mxu0 0.0
  %3529 = vmatpush2.msra.mxu0 0.0
  %3530 = vmatprep.subr.mxu0 0.0
  %3531 = vmatpush2.msra.mxu0 0.0
  %3532 = vmatprep.subr.mxu0 0.0
  %3533 = vmatpush2.msra.mxu0 0.0
  %3534 = vmatprep.subr.mxu0 0.0
  %3535 = vmatpush2.msra.mxu0 0.0
  %3536 = vmatprep.mubr.f32.mxu0 0.0
  %3537 = vmatmul.mubr.f32.gmra.mxu0 %v1931
  %v3538 = vpop.f32.mrf.mxu0
  %v3539 = vadd.f32 0.0, %v3538
  %v3540 = vpop.f32.mrf.mxu0
  %3541 = vmatprep.mubr.f32.mxu0 0.0
  %3542 = vmatmul.mubr.f32.gmra.mxu0 %v1933
  %v3543 = vpop.f32.mrf.mxu0
  %v3544 = vadd.f32 0.0, %v3543
  %v3545 = vpop.f32.mrf.mxu0
  %3546 = vmatprep.mubr.f32.mxu0 0.0
  %3547 = vmatmul.mubr.f32.gmra.mxu0 %v1935
  %v3548 = vpop.f32.mrf.mxu0
  %v3549 = vadd.f32 0.0, %v3548
  %v3550 = vpop.f32.mrf.mxu0
  %3551 = vmatprep.mubr.f32.mxu0 0.0
  %3552 = vmatmul.mubr.f32.gmra.mxu0 %v1937
  %v3553 = vpop.f32.mrf.mxu0
  %v3554 = vadd.f32 0.0, %v3553
  %v3555 = vpop.f32.mrf.mxu0
  %3556 = vmatprep.mubr.f32.mxu0 0.0
  %3557 = vmatmul.mubr.f32.gmra.mxu0 %v1939
  %v3558 = vpop.f32.mrf.mxu0
  %v3559 = vadd.f32 0.0, %v3558
  %v3560 = vpop.f32.mrf.mxu0
  %3561 = vmatprep.mubr.f32.mxu0 0.0
  %3562 = vmatmul.mubr.f32.gmra.mxu0 %v1941
  %v3563 = vpop.f32.mrf.mxu0
  %v3564 = vadd.f32 0.0, %v3563
  %v3565 = vpop.f32.mrf.mxu0
  %3566 = vmatprep.mubr.f32.mxu0 0.0
  %3567 = vmatmul.mubr.f32.gmra.mxu0 %v1943
  %v3568 = vpop.f32.mrf.mxu0
  %v3569 = vadd.f32 0.0, %v3568
  %v3570 = vpop.f32.mrf.mxu0
  %3571 = vmatprep.mubr.f32.mxu0 0.0
  %3572 = vmatmul.mubr.f32.gmra.mxu0 %v1945
  %v3573 = vpop.f32.mrf.mxu0
  %v3574 = vadd.f32 0.0, %v3573
  %v3575 = vpop.f32.mrf.mxu0
  %3576 = vmatprep.mubr.f32.mxu0 0.0
  %3577 = vmatmul.mubr.f32.gmra.mxu0 %v1947
  %v3578 = vpop.f32.mrf.mxu0
  %v3579 = vadd.f32 0.0, %v3578
  %v3580 = vpop.f32.mrf.mxu0
  %3581 = vmatprep.mubr.f32.mxu0 0.0
  %3582 = vmatmul.mubr.f32.gmra.mxu0 %v1949
  %v3583 = vpop.f32.mrf.mxu0
  %v3584 = vadd.f32 0.0, %v3583
  %v3585 = vpop.f32.mrf.mxu0
  %3586 = vmatprep.mubr.f32.mxu0 0.0
  %3587 = vmatmul.mubr.f32.gmra.mxu0 %v1951
  %v3588 = vpop.f32.mrf.mxu0
  %v3589 = vadd.f32 0.0, %v3588
  %v3590 = vpop.f32.mrf.mxu0
  %3591 = vmatprep.mubr.f32.mxu0 0.0
  %3592 = vmatmul.mubr.f32.gmra.mxu0 %v1953
  %v3593 = vpop.f32.mrf.mxu0
  %v3594 = vadd.f32 0.0, %v3593
  %v3595 = vpop.f32.mrf.mxu0
  %3596 = vmatprep.mubr.f32.mxu0 0.0
  %3597 = vmatmul.mubr.f32.gmra.mxu0 %v1955
  %v3598 = vpop.f32.mrf.mxu0
  %v3599 = vadd.f32 0.0, %v3598
  %v3600 = vpop.f32.mrf.mxu0
  %3601 = vmatprep.mubr.f32.mxu0 0.0
  %3602 = vmatmul.mubr.f32.gmra.mxu0 %v1957
  %v3603 = vpop.f32.mrf.mxu0
  %v3604 = vadd.f32 0.0, %v3603
  %v3605 = vpop.f32.mrf.mxu0
  %3606 = vmatprep.mubr.f32.mxu0 0.0
  %3607 = vmatmul.mubr.f32.gmra.mxu0 %v1959
  %v3608 = vpop.f32.mrf.mxu0
  %v3609 = vadd.f32 0.0, %v3608
  %v3610 = vpop.f32.mrf.mxu0
  %3611 = vmatprep.mubr.f32.mxu0 0.0
  %3612 = vmatmul.mubr.f32.gmra.mxu0 %v1961
  %v3613 = vpop.f32.mrf.mxu0
  %v3614 = vadd.f32 0.0, %v3613
  %v3615 = vpop.f32.mrf.mxu0
  %3616 = vmatprep.mubr.f32.mxu0 0.0
  %3617 = vmatmul.mubr.f32.gmra.mxu0 %v1963
  %v3618 = vpop.f32.mrf.mxu0
  %v3619 = vadd.f32 0.0, %v3618
  %v3620 = vpop.f32.mrf.mxu0
  %3621 = vmatprep.mubr.f32.mxu0 0.0
  %3622 = vmatmul.mubr.f32.gmra.mxu0 %v1965
  %v3623 = vpop.f32.mrf.mxu0
  %v3624 = vadd.f32 0.0, %v3623
  %v3625 = vpop.f32.mrf.mxu0
  %3626 = vmatprep.mubr.f32.mxu0 0.0
  %3627 = vmatmul.mubr.f32.gmra.mxu0 %v1967
  %v3628 = vpop.f32.mrf.mxu0
  %v3629 = vadd.f32 0.0, %v3628
  %v3630 = vpop.f32.mrf.mxu0
  %3631 = vmatprep.mubr.f32.mxu0 0.0
  %3632 = vmatmul.mubr.f32.gmra.mxu0 %v1969
  %v3633 = vpop.f32.mrf.mxu0
  %v3634 = vadd.f32 0.0, %v3633
  %v3635 = vpop.f32.mrf.mxu0
  %3636 = vmatprep.mubr.f32.mxu0 0.0
  %3637 = vmatmul.mubr.f32.gmra.mxu0 %v1971
  %v3638 = vpop.f32.mrf.mxu0
  %v3639 = vadd.f32 0.0, %v3638
  %v3640 = vpop.f32.mrf.mxu0
  %3641 = vmatprep.mubr.f32.mxu0 0.0
  %3642 = vmatmul.mubr.f32.gmra.mxu0 %v1973
  %v3643 = vpop.f32.mrf.mxu0
  %v3644 = vadd.f32 0.0, %v3643
  %v3645 = vpop.f32.mrf.mxu0
  %3646 = vmatprep.mubr.f32.mxu0 0.0
  %3647 = vmatmul.mubr.f32.gmra.mxu0 %v1975
  %v3648 = vpop.f32.mrf.mxu0
  %v3649 = vadd.f32 0.0, %v3648
  %v3650 = vpop.f32.mrf.mxu0
  %3651 = vmatprep.mubr.f32.mxu0 0.0
  %3652 = vmatmul.mubr.f32.gmra.mxu0 %v1977
  %v3653 = vpop.f32.mrf.mxu0
  %v3654 = vadd.f32 0.0, %v3653
  %v3655 = vpop.f32.mrf.mxu0
  %3656 = vmatprep.mubr.f32.mxu0 0.0
  %3657 = vmatmul.mubr.f32.gmra.mxu0 %v1979
  %v3658 = vpop.f32.mrf.mxu0
  %v3659 = vadd.f32 0.0, %v3658
  %v3660 = vpop.f32.mrf.mxu0
  %3661 = vmatprep.mubr.f32.mxu0 0.0
  %3662 = vmatmul.mubr.f32.gmra.mxu0 %v1981
  %v3663 = vpop.f32.mrf.mxu0
  %v3664 = vadd.f32 0.0, %v3663
  %v3665 = vpop.f32.mrf.mxu0
  %3666 = vmatprep.mubr.f32.mxu0 0.0
  %3667 = vmatmul.mubr.f32.gmra.mxu0 %v1983
  %v3668 = vpop.f32.mrf.mxu0
  %v3669 = vadd.f32 0.0, %v3668
  %v3670 = vpop.f32.mrf.mxu0
  %3671 = vmatprep.mubr.f32.mxu0 0.0
  %3672 = vmatmul.mubr.f32.gmra.mxu0 %v1985
  %v3673 = vpop.f32.mrf.mxu0
  %v3674 = vadd.f32 0.0, %v3673
  %v3675 = vpop.f32.mrf.mxu0
  %3676 = vmatprep.mubr.f32.mxu0 0.0
  %3677 = vmatmul.mubr.f32.gmra.mxu0 %v1987
  %v3678 = vpop.f32.mrf.mxu0
  %v3679 = vadd.f32 0.0, %v3678
  %v3680 = vpop.f32.mrf.mxu0
  %3681 = vmatprep.mubr.f32.mxu0 0.0
  %3682 = vmatmul.mubr.f32.gmra.mxu0 %v1989
  %v3683 = vpop.f32.mrf.mxu0
  %v3684 = vadd.f32 0.0, %v3683
  %v3685 = vpop.f32.mrf.mxu0
  %3686 = vmatprep.mubr.f32.mxu0 0.0
  %3687 = vmatmul.mubr.f32.gmra.mxu0 %v3461
  %v3688 = vpop.f32.mrf.mxu0
  %v3689 = vadd.f32 0.0, %v3688
  %v3690 = vpop.f32.mrf.mxu0
  %3691 = vmatprep.mubr.f32.mxu0 0.0
  %3692 = vmatmul.mubr.f32.gmra.mxu0 %v3463
  %v3693 = vpop.f32.mrf.mxu0
  %v3694 = vadd.f32 0.0, %v3693
  %v3695 = vpop.f32.mrf.mxu0
  %3696 = vmatprep.mubr.f32.mxu0 0.0
  %3697 = vmatmul.mubr.f32.gmra.mxu0 %v1995
  %v3698 = vpop.f32.mrf.mxu0
  %v3699 = vadd.f32 0.0, %v3698
  %v3700 = vpop.f32.mrf.mxu0
  %3701 = vmatprep.mubr.f32.mxu0 0.0
  %3702 = vmatmul.mubr.f32.gmra.mxu0 %v1997
  %v3703 = vpop.f32.mrf.mxu0
  %v3704 = vadd.f32 0.0, %v3703
  %v3705 = vpop.f32.mrf.mxu0
  %3706 = vmatprep.mubr.f32.mxu0 0.0
  %3707 = vmatmul.mubr.f32.gmra.mxu0 %v1999
  %v3708 = vpop.f32.mrf.mxu0
  %v3709 = vadd.f32 0.0, %v3708
  %v3710 = vpop.f32.mrf.mxu0
  %3711 = vmatprep.mubr.f32.mxu0 0.0
  %3712 = vmatmul.mubr.f32.gmra.mxu0 %v2001
  %v3713 = vpop.f32.mrf.mxu0
  %v3714 = vadd.f32 0.0, %v3713
  %v3715 = vpop.f32.mrf.mxu0
  %3716 = vmatprep.mubr.f32.mxu0 0.0
  %3717 = vmatmul.mubr.f32.gmra.mxu0 %v2003
  %v3718 = vpop.f32.mrf.mxu0
  %v3719 = vadd.f32 0.0, %v3718
  %v3720 = vpop.f32.mrf.mxu0
  %3721 = vmatprep.mubr.f32.mxu0 0.0
  %3722 = vmatmul.mubr.f32.gmra.mxu0 %v2005
  %v3723 = vpop.f32.mrf.mxu0
  %v3724 = vadd.f32 0.0, %v3723
  %v3725 = vpop.f32.mrf.mxu0
  %3726 = vmatprep.mubr.f32.mxu0 0.0
  %3727 = vmatmul.mubr.f32.gmra.mxu0 %v2007
  %v3728 = vpop.f32.mrf.mxu0
  %v3729 = vadd.f32 0.0, %v3728
  %v3730 = vpop.f32.mrf.mxu0
  %3731 = vmatprep.mubr.f32.mxu0 0.0
  %3732 = vmatmul.mubr.f32.gmra.mxu0 %v2009
  %v3733 = vpop.f32.mrf.mxu0
  %v3734 = vadd.f32 0.0, %v3733
  %v3735 = vpop.f32.mrf.mxu0
  %3736 = vmatprep.mubr.f32.mxu0 0.0
  %3737 = vmatmul.mubr.f32.gmra.mxu0 %v2011
  %v3738 = vpop.f32.mrf.mxu0
  %v3739 = vadd.f32 0.0, %v3738
  %v3740 = vpop.f32.mrf.mxu0
  %3741 = vmatprep.mubr.f32.mxu0 0.0
  %3742 = vmatmul.mubr.f32.gmra.mxu0 %v2013
  %v3743 = vpop.f32.mrf.mxu0
  %v3744 = vadd.f32 0.0, %v3743
  %v3745 = vpop.f32.mrf.mxu0
  %3746 = vmatprep.mubr.f32.mxu0 0.0
  %3747 = vmatmul.mubr.f32.gmra.mxu0 %v2015
  %v3748 = vpop.f32.mrf.mxu0
  %v3749 = vadd.f32 0.0, %v3748
  %v3750 = vpop.f32.mrf.mxu0
  %3751 = vmatprep.mubr.f32.mxu0 0.0
  %3752 = vmatmul.mubr.f32.gmra.mxu0 %v2017
  %v3753 = vpop.f32.mrf.mxu0
  %v3754 = vadd.f32 0.0, %v3753
  %v3755 = vpop.f32.mrf.mxu0
  %3756 = vmatprep.mubr.f32.mxu0 0.0
  %3757 = vmatmul.mubr.f32.gmra.mxu0 %v2019
  %v3758 = vpop.f32.mrf.mxu0
  %v3759 = vadd.f32 0.0, %v3758
  %v3760 = vpop.f32.mrf.mxu0
  %3761 = vmatprep.mubr.f32.mxu0 0.0
  %3762 = vmatmul.mubr.f32.gmra.mxu0 %v2021
  %v3763 = vpop.f32.mrf.mxu0
  %v3764 = vadd.f32 0.0, %v3763
  %v3765 = vpop.f32.mrf.mxu0
  %3766 = vmatprep.mubr.f32.mxu0 0.0
  %3767 = vmatmul.mubr.f32.gmra.mxu0 %v2023
  %v3768 = vpop.f32.mrf.mxu0
  %v3769 = vadd.f32 0.0, %v3768
  %v3770 = vpop.f32.mrf.mxu0
  %3771 = vmatprep.mubr.f32.mxu0 0.0
  %3772 = vmatmul.mubr.f32.gmra.mxu0 %v2025
  %v3773 = vpop.f32.mrf.mxu0
  %v3774 = vadd.f32 0.0, %v3773
  %v3775 = vpop.f32.mrf.mxu0
  %3776 = vmatprep.mubr.f32.mxu0 0.0
  %3777 = vmatmul.mubr.f32.gmra.mxu0 %v2027
  %v3778 = vpop.f32.mrf.mxu0
  %v3779 = vadd.f32 0.0, %v3778
  %v3780 = vpop.f32.mrf.mxu0
  %3781 = vmatprep.mubr.f32.mxu0 0.0
  %3782 = vmatmul.mubr.f32.gmra.mxu0 %v2029
  %v3783 = vpop.f32.mrf.mxu0
  %v3784 = vadd.f32 0.0, %v3783
  %v3785 = vpop.f32.mrf.mxu0
  %3786 = vmatprep.mubr.f32.mxu0 0.0
  %3787 = vmatmul.mubr.f32.gmra.mxu0 %v2031
  %v3788 = vpop.f32.mrf.mxu0
  %v3789 = vadd.f32 0.0, %v3788
  %v3790 = vpop.f32.mrf.mxu0
  %3791 = vmatprep.mubr.f32.mxu0 0.0
  %3792 = vmatmul.mubr.f32.gmra.mxu0 %v2033
  %v3793 = vpop.f32.mrf.mxu0
  %v3794 = vadd.f32 0.0, %v3793
  %v3795 = vpop.f32.mrf.mxu0
  %3796 = vmatprep.mubr.f32.mxu0 0.0
  %3797 = vmatmul.mubr.f32.gmra.mxu0 %v2035
  %v3798 = vpop.f32.mrf.mxu0
  %v3799 = vadd.f32 0.0, %v3798
  %v3800 = vpop.f32.mrf.mxu0
  %3801 = vmatprep.mubr.f32.mxu0 0.0
  %3802 = vmatmul.mubr.f32.gmra.mxu0 %v2037
  %v3803 = vpop.f32.mrf.mxu0
  %v3804 = vadd.f32 0.0, %v3803
  %v3805 = vpop.f32.mrf.mxu0
  %3806 = vmatprep.mubr.f32.mxu0 0.0
  %3807 = vmatmul.mubr.f32.gmra.mxu0 %v2039
  %v3808 = vpop.f32.mrf.mxu0
  %v3809 = vadd.f32 0.0, %v3808
  %v3810 = vpop.f32.mrf.mxu0
  %3811 = vmatprep.mubr.f32.mxu0 0.0
  %3812 = vmatmul.mubr.f32.gmra.mxu0 %v2041
  %v3813 = vpop.f32.mrf.mxu0
  %v3814 = vadd.f32 0.0, %v3813
  %v3815 = vpop.f32.mrf.mxu0
  %3816 = vmatprep.mubr.f32.mxu0 0.0
  %3817 = vmatmul.mubr.f32.gmra.mxu0 %v2043
  %v3818 = vpop.f32.mrf.mxu0
  %v3819 = vadd.f32 0.0, %v3818
  %v3820 = vpop.f32.mrf.mxu0
  %3821 = vmatprep.mubr.f32.mxu0 0.0
  %3822 = vmatmul.mubr.f32.gmra.mxu0 %v2045
  %v3823 = vpop.f32.mrf.mxu0
  %v3824 = vadd.f32 0.0, %v3823
  %v3825 = vpop.f32.mrf.mxu0
  %3826 = vmatprep.mubr.f32.mxu0 0.0
  %3827 = vmatmul.mubr.f32.gmra.mxu0 %v2047
  %v3828 = vpop.f32.mrf.mxu0
  %v3829 = vadd.f32 0.0, %v3828
  %v3830 = vpop.f32.mrf.mxu0
  %3831 = vmatprep.mubr.f32.mxu0 0.0
  %3832 = vmatmul.mubr.f32.gmra.mxu0 %v2049
  %v3833 = vpop.f32.mrf.mxu0
  %v3834 = vadd.f32 0.0, %v3833
  %v3835 = vpop.f32.mrf.mxu0
  %3836 = vmatprep.mubr.f32.mxu0 0.0
  %3837 = vmatmul.mubr.f32.gmra.mxu0 %v2051
  %v3838 = vpop.f32.mrf.mxu0
  %v3839 = vadd.f32 0.0, %v3838
  %v3840 = vpop.f32.mrf.mxu0
  %3841 = vmatprep.mubr.f32.mxu0 0.0
  %3842 = vmatmul.mubr.f32.gmra.mxu0 %v2053
  %v3843 = vpop.f32.mrf.mxu0
  %v3844 = vadd.f32 0.0, %v3843
  %v3845 = vpop.f32.mrf.mxu0
  %3846 = vmatprep.mubr.f32.mxu0 0.0
  %3847 = vmatmul.mubr.f32.gmra.mxu0 %v3465
  %v3848 = vpop.f32.mrf.mxu0
  %v3849 = vadd.f32 0.0, %v3848
  %v3850 = vpop.f32.mrf.mxu0
  %3851 = vmatprep.mubr.f32.mxu0 0.0
  %3852 = vmatmul.mubr.f32.gmra.mxu0 %v3467
  %v3853 = vpop.f32.mrf.mxu0
  %v3854 = vadd.f32 0.0, %v3853
  %v3855 = vpop.f32.mrf.mxu0
  %3856 = vdwg.mxu0
  %v3857 = vadd.f32 %v3383, %v3539
  %v3858 = vadd.f32 %v3384, %v3544
  %v3859 = vadd.f32 %v3385, %v3549
  %v3860 = vadd.f32 %v3386, %v3554
  %v3861 = vadd.f32 %v3387, %v3559
  %v3862 = vadd.f32 %v3388, %v3564
  %v3863 = vadd.f32 %v3389, %v3569
  %v3864 = vadd.f32 %v3390, %v3574
  %v3865 = vadd.f32 %v3391, %v3579
  %v3866 = vadd.f32 %v3392, %v3584
  %v3867 = vadd.f32 %v3393, %v3589
  %v3868 = vadd.f32 %v3394, %v3594
  %v3869 = vadd.f32 %v3395, %v3599
  %v3870 = vadd.f32 %v3396, %v3604
  %v3871 = vadd.f32 %v3397, %v3609
  %v3872 = vadd.f32 %v3398, %v3614
  %v3873 = vadd.f32 %v3399, %v3619
  %v3874 = vadd.f32 %v3400, %v3624
  %v3875 = vadd.f32 %v3401, %v3629
  %v3876 = vadd.f32 %v3402, %v3634
  %v3877 = vadd.f32 %v3403, %v3639
  %v3878 = vadd.f32 %v3404, %v3644
  %v3879 = vadd.f32 %v3405, %v3649
  %v3880 = vadd.f32 %v3406, %v3654
  %v3881 = vadd.f32 %v3407, %v3659
  %v3882 = vadd.f32 %v3408, %v3664
  %v3883 = vadd.f32 %v3409, %v3669
  %v3884 = vadd.f32 %v3410, %v3674
  %v3885 = vadd.f32 %v3411, %v3679
  %v3886 = vadd.f32 %v3412, %v3684
  %v3887 = vadd.f32 %v3413, %v3689
  %v3888 = vadd.f32 %v3414, %v3694
  %v3889 = vadd.f32 %v3415, %v3699
  %v3890 = vadd.f32 %v3416, %v3704
  %v3891 = vadd.f32 %v3417, %v3709
  %v3892 = vadd.f32 %v3418, %v3714
  %v3893 = vadd.f32 %v3419, %v3719
  %v3894 = vadd.f32 %v3420, %v3724
  %v3895 = vadd.f32 %v3421, %v3729
  %v3896 = vadd.f32 %v3422, %v3734
  %v3897 = vadd.f32 %v3423, %v3739
  %v3898 = vadd.f32 %v3424, %v3744
  %v3899 = vadd.f32 %v3425, %v3749
  %v3900 = vadd.f32 %v3426, %v3754
  %v3901 = vadd.f32 %v3427, %v3759
  %v3902 = vadd.f32 %v3428, %v3764
  %v3903 = vadd.f32 %v3429, %v3769
  %v3904 = vadd.f32 %v3430, %v3774
  %v3905 = vadd.f32 %v3431, %v3779
  %v3906 = vadd.f32 %v3432, %v3784
  %v3907 = vadd.f32 %v3433, %v3789
  %v3908 = vadd.f32 %v3434, %v3794
  %v3909 = vadd.f32 %v3435, %v3799
  %v3910 = vadd.f32 %v3436, %v3804
  %v3911 = vadd.f32 %v3437, %v3809
  %v3912 = vadd.f32 %v3438, %v3814
  %v3913 = vadd.f32 %v3439, %v3819
  %v3914 = vadd.f32 %v3440, %v3824
  %v3915 = vadd.f32 %v3441, %v3829
  %v3916 = vadd.f32 %v3442, %v3834
  %v3917 = vadd.f32 %v3443, %v3839
  %v3918 = vadd.f32 %v3444, %v3844
  %v3919 = vadd.f32 %v3445, %v3849
  %v3920 = vadd.f32 %v3446, %v3854
  %v3927 = vrot.slane %v363, 7
  %v3928 = vrot.slane %v364, 7
  %v3929 = vsel %vm535, %v3927, %v3928
  %v3930 = vrot.slane %v365, 7
  %v3931 = vsel %vm535, %v3928, %v3930
  %v3932 = vrot.slane %v435, 7
  %v3933 = vrot.slane %v436, 7
  %v3934 = vsel %vm535, %v3932, %v3933
  %v3935 = vrot.slane %v437, 7
  %v3936 = vsel %vm535, %v3933, %v3935
  %s3937 = scalar_lea.vmem %s1, 24
  %v3938 = vld [vmem:[%s3937] sm:$0xf]
  %v3939 = vsel %vm84, %v3929, 0
  %v3941 = vsel %vm84, %v3931, 0
  %v3943 = vsel %vm84, %v3934, 0
  %v3945 = vsel %vm84, %v3936, 0
  %v3948 = vsel %vm827, %v3938, 0
  %3950 = vmatprep.subr.mxu0 0.0
  %3951 = vmatpush1.msra.mxu0 0.0
  %3952 = vmatprep.subr.mxu0 0.0
  %3953 = vmatpush1.msra.mxu0 0.0
  %3954 = vmatprep.subr.mxu0 0.0
  %3955 = vmatpush1.msra.mxu0 0.0
  %3956 = vmatprep.subr.mxu0 0.0
  %3957 = vmatpush1.msra.mxu0 0.0
  %3958 = vmatprep.subr.mxu0 0.0
  %3959 = vmatpush1.msra.mxu0 0.0
  %3960 = vmatprep.subr.mxu0 0.0
  %3961 = vmatpush1.msra.mxu0 0.0
  %3962 = vmatprep.subr.mxu0 0.0
  %3963 = vmatpush1.msra.mxu0 0.0
  %3964 = vmatprep.subr.mxu0 0.0
  %3965 = vmatpush1.msra.mxu0 0.0
  %3966 = vmatprep.subr.mxu0 0.0
  %3967 = vmatpush1.msra.mxu0 0.0
  %3968 = vmatprep.subr.mxu0 0.0
  %3969 = vmatpush1.msra.mxu0 0.0
  %3970 = vmatprep.subr.mxu0 0.0
  %3971 = vmatpush1.msra.mxu0 0.0
  %3972 = vmatprep.subr.mxu0 0.0
  %3973 = vmatpush1.msra.mxu0 0.0
  %3974 = vmatprep.subr.mxu0 0.0
  %3975 = vmatpush1.msra.mxu0 0.0
  %3976 = vmatprep.subr.mxu0 0.0
  %3977 = vmatpush1.msra.mxu0 0.0
  %3978 = vmatprep.subr.mxu0 0.0
  %3979 = vmatpush1.msra.mxu0 0.0
  %3980 = vmatprep.subr.mxu0 0.0
  %3981 = vmatpush1.msra.mxu0 %v3948
  %3982 = vmatprep.subr.mxu0 0.0
  %3983 = vmatpush2.msra.mxu0 0.0
  %3984 = vmatprep.subr.mxu0 0.0
  %3985 = vmatpush2.msra.mxu0 0.0
  %3986 = vmatprep.subr.mxu0 0.0
  %3987 = vmatpush2.msra.mxu0 0.0
  %3988 = vmatprep.subr.mxu0 0.0
  %3989 = vmatpush2.msra.mxu0 0.0
  %3990 = vmatprep.subr.mxu0 0.0
  %3991 = vmatpush2.msra.mxu0 0.0
  %3992 = vmatprep.subr.mxu0 0.0
  %3993 = vmatpush2.msra.mxu0 0.0
  %3994 = vmatprep.subr.mxu0 0.0
  %3995 = vmatpush2.msra.mxu0 0.0
  %3996 = vmatprep.subr.mxu0 0.0
  %3997 = vmatpush2.msra.mxu0 0.0
  %3998 = vmatprep.subr.mxu0 0.0
  %3999 = vmatpush2.msra.mxu0 0.0
  %4000 = vmatprep.subr.mxu0 0.0
  %4001 = vmatpush2.msra.mxu0 0.0
  %4002 = vmatprep.subr.mxu0 0.0
  %4003 = vmatpush2.msra.mxu0 0.0
  %4004 = vmatprep.subr.mxu0 0.0
  %4005 = vmatpush2.msra.mxu0 0.0
  %4006 = vmatprep.subr.mxu0 0.0
  %4007 = vmatpush2.msra.mxu0 0.0
  %4008 = vmatprep.subr.mxu0 0.0
  %4009 = vmatpush2.msra.mxu0 0.0
  %4010 = vmatprep.subr.mxu0 0.0
  %4011 = vmatpush2.msra.mxu0 0.0
  %4012 = vmatprep.subr.mxu0 0.0
  %4013 = vmatpush2.msra.mxu0 0.0
  %4014 = vmatprep.mubr.f32.mxu0 0.0
  %4015 = vmatmul.mubr.f32.gmra.mxu0 %v1224
  %v4016 = vpop.f32.mrf.mxu0
  %v4017 = vadd.f32 0.0, %v4016
  %v4018 = vpop.f32.mrf.mxu0
  %4019 = vmatprep.mubr.f32.mxu0 0.0
  %4020 = vmatmul.mubr.f32.gmra.mxu0 %v1226
  %v4021 = vpop.f32.mrf.mxu0
  %v4022 = vadd.f32 0.0, %v4021
  %v4023 = vpop.f32.mrf.mxu0
  %4024 = vmatprep.mubr.f32.mxu0 0.0
  %4025 = vmatmul.mubr.f32.gmra.mxu0 %v1228
  %v4026 = vpop.f32.mrf.mxu0
  %v4027 = vadd.f32 0.0, %v4026
  %v4028 = vpop.f32.mrf.mxu0
  %4029 = vmatprep.mubr.f32.mxu0 0.0
  %4030 = vmatmul.mubr.f32.gmra.mxu0 %v1230
  %v4031 = vpop.f32.mrf.mxu0
  %v4032 = vadd.f32 0.0, %v4031
  %v4033 = vpop.f32.mrf.mxu0
  %4034 = vmatprep.mubr.f32.mxu0 0.0
  %4035 = vmatmul.mubr.f32.gmra.mxu0 %v1232
  %v4036 = vpop.f32.mrf.mxu0
  %v4037 = vadd.f32 0.0, %v4036
  %v4038 = vpop.f32.mrf.mxu0
  %4039 = vmatprep.mubr.f32.mxu0 0.0
  %4040 = vmatmul.mubr.f32.gmra.mxu0 %v1234
  %v4041 = vpop.f32.mrf.mxu0
  %v4042 = vadd.f32 0.0, %v4041
  %v4043 = vpop.f32.mrf.mxu0
  %4044 = vmatprep.mubr.f32.mxu0 0.0
  %4045 = vmatmul.mubr.f32.gmra.mxu0 %v1236
  %v4046 = vpop.f32.mrf.mxu0
  %v4047 = vadd.f32 0.0, %v4046
  %v4048 = vpop.f32.mrf.mxu0
  %4049 = vmatprep.mubr.f32.mxu0 0.0
  %4050 = vmatmul.mubr.f32.gmra.mxu0 %v1238
  %v4051 = vpop.f32.mrf.mxu0
  %v4052 = vadd.f32 0.0, %v4051
  %v4053 = vpop.f32.mrf.mxu0
  %4054 = vmatprep.mubr.f32.mxu0 0.0
  %4055 = vmatmul.mubr.f32.gmra.mxu0 %v1240
  %v4056 = vpop.f32.mrf.mxu0
  %v4057 = vadd.f32 0.0, %v4056
  %v4058 = vpop.f32.mrf.mxu0
  %4059 = vmatprep.mubr.f32.mxu0 0.0
  %4060 = vmatmul.mubr.f32.gmra.mxu0 %v1242
  %v4061 = vpop.f32.mrf.mxu0
  %v4062 = vadd.f32 0.0, %v4061
  %v4063 = vpop.f32.mrf.mxu0
  %4064 = vmatprep.mubr.f32.mxu0 0.0
  %4065 = vmatmul.mubr.f32.gmra.mxu0 %v1244
  %v4066 = vpop.f32.mrf.mxu0
  %v4067 = vadd.f32 0.0, %v4066
  %v4068 = vpop.f32.mrf.mxu0
  %4069 = vmatprep.mubr.f32.mxu0 0.0
  %4070 = vmatmul.mubr.f32.gmra.mxu0 %v1246
  %v4071 = vpop.f32.mrf.mxu0
  %v4072 = vadd.f32 0.0, %v4071
  %v4073 = vpop.f32.mrf.mxu0
  %4074 = vmatprep.mubr.f32.mxu0 0.0
  %4075 = vmatmul.mubr.f32.gmra.mxu0 %v1248
  %v4076 = vpop.f32.mrf.mxu0
  %v4077 = vadd.f32 0.0, %v4076
  %v4078 = vpop.f32.mrf.mxu0
  %4079 = vmatprep.mubr.f32.mxu0 0.0
  %4080 = vmatmul.mubr.f32.gmra.mxu0 %v1250
  %v4081 = vpop.f32.mrf.mxu0
  %v4082 = vadd.f32 0.0, %v4081
  %v4083 = vpop.f32.mrf.mxu0
  %4084 = vmatprep.mubr.f32.mxu0 0.0
  %4085 = vmatmul.mubr.f32.gmra.mxu0 %v1252
  %v4086 = vpop.f32.mrf.mxu0
  %v4087 = vadd.f32 0.0, %v4086
  %v4088 = vpop.f32.mrf.mxu0
  %4089 = vmatprep.mubr.f32.mxu0 0.0
  %4090 = vmatmul.mubr.f32.gmra.mxu0 %v1254
  %v4091 = vpop.f32.mrf.mxu0
  %v4092 = vadd.f32 0.0, %v4091
  %v4093 = vpop.f32.mrf.mxu0
  %4094 = vmatprep.mubr.f32.mxu0 0.0
  %4095 = vmatmul.mubr.f32.gmra.mxu0 %v1256
  %v4096 = vpop.f32.mrf.mxu0
  %v4097 = vadd.f32 0.0, %v4096
  %v4098 = vpop.f32.mrf.mxu0
  %4099 = vmatprep.mubr.f32.mxu0 0.0
  %4100 = vmatmul.mubr.f32.gmra.mxu0 %v1258
  %v4101 = vpop.f32.mrf.mxu0
  %v4102 = vadd.f32 0.0, %v4101
  %v4103 = vpop.f32.mrf.mxu0
  %4104 = vmatprep.mubr.f32.mxu0 0.0
  %4105 = vmatmul.mubr.f32.gmra.mxu0 %v1260
  %v4106 = vpop.f32.mrf.mxu0
  %v4107 = vadd.f32 0.0, %v4106
  %v4108 = vpop.f32.mrf.mxu0
  %4109 = vmatprep.mubr.f32.mxu0 0.0
  %4110 = vmatmul.mubr.f32.gmra.mxu0 %v1262
  %v4111 = vpop.f32.mrf.mxu0
  %v4112 = vadd.f32 0.0, %v4111
  %v4113 = vpop.f32.mrf.mxu0
  %4114 = vmatprep.mubr.f32.mxu0 0.0
  %4115 = vmatmul.mubr.f32.gmra.mxu0 %v1264
  %v4116 = vpop.f32.mrf.mxu0
  %v4117 = vadd.f32 0.0, %v4116
  %v4118 = vpop.f32.mrf.mxu0
  %4119 = vmatprep.mubr.f32.mxu0 0.0
  %4120 = vmatmul.mubr.f32.gmra.mxu0 %v1266
  %v4121 = vpop.f32.mrf.mxu0
  %v4122 = vadd.f32 0.0, %v4121
  %v4123 = vpop.f32.mrf.mxu0
  %4124 = vmatprep.mubr.f32.mxu0 0.0
  %4125 = vmatmul.mubr.f32.gmra.mxu0 %v1268
  %v4126 = vpop.f32.mrf.mxu0
  %v4127 = vadd.f32 0.0, %v4126
  %v4128 = vpop.f32.mrf.mxu0
  %4129 = vmatprep.mubr.f32.mxu0 0.0
  %4130 = vmatmul.mubr.f32.gmra.mxu0 %v1270
  %v4131 = vpop.f32.mrf.mxu0
  %v4132 = vadd.f32 0.0, %v4131
  %v4133 = vpop.f32.mrf.mxu0
  %4134 = vmatprep.mubr.f32.mxu0 0.0
  %4135 = vmatmul.mubr.f32.gmra.mxu0 %v1272
  %v4136 = vpop.f32.mrf.mxu0
  %v4137 = vadd.f32 0.0, %v4136
  %v4138 = vpop.f32.mrf.mxu0
  %4139 = vmatprep.mubr.f32.mxu0 0.0
  %4140 = vmatmul.mubr.f32.gmra.mxu0 %v1274
  %v4141 = vpop.f32.mrf.mxu0
  %v4142 = vadd.f32 0.0, %v4141
  %v4143 = vpop.f32.mrf.mxu0
  %4144 = vmatprep.mubr.f32.mxu0 0.0
  %4145 = vmatmul.mubr.f32.gmra.mxu0 %v1276
  %v4146 = vpop.f32.mrf.mxu0
  %v4147 = vadd.f32 0.0, %v4146
  %v4148 = vpop.f32.mrf.mxu0
  %4149 = vmatprep.mubr.f32.mxu0 0.0
  %4150 = vmatmul.mubr.f32.gmra.mxu0 %v1278
  %v4151 = vpop.f32.mrf.mxu0
  %v4152 = vadd.f32 0.0, %v4151
  %v4153 = vpop.f32.mrf.mxu0
  %4154 = vmatprep.mubr.f32.mxu0 0.0
  %4155 = vmatmul.mubr.f32.gmra.mxu0 %v2525
  %v4156 = vpop.f32.mrf.mxu0
  %v4157 = vadd.f32 0.0, %v4156
  %v4158 = vpop.f32.mrf.mxu0
  %4159 = vmatprep.mubr.f32.mxu0 0.0
  %4160 = vmatmul.mubr.f32.gmra.mxu0 %v2527
  %v4161 = vpop.f32.mrf.mxu0
  %v4162 = vadd.f32 0.0, %v4161
  %v4163 = vpop.f32.mrf.mxu0
  %4164 = vmatprep.mubr.f32.mxu0 0.0
  %4165 = vmatmul.mubr.f32.gmra.mxu0 %v3939
  %v4166 = vpop.f32.mrf.mxu0
  %v4167 = vadd.f32 0.0, %v4166
  %v4168 = vpop.f32.mrf.mxu0
  %4169 = vmatprep.mubr.f32.mxu0 0.0
  %4170 = vmatmul.mubr.f32.gmra.mxu0 %v3941
  %v4171 = vpop.f32.mrf.mxu0
  %v4172 = vadd.f32 0.0, %v4171
  %v4173 = vpop.f32.mrf.mxu0
  %4174 = vmatprep.mubr.f32.mxu0 0.0
  %4175 = vmatmul.mubr.f32.gmra.mxu0 %v1288
  %v4176 = vpop.f32.mrf.mxu0
  %v4177 = vadd.f32 0.0, %v4176
  %v4178 = vpop.f32.mrf.mxu0
  %4179 = vmatprep.mubr.f32.mxu0 0.0
  %4180 = vmatmul.mubr.f32.gmra.mxu0 %v1290
  %v4181 = vpop.f32.mrf.mxu0
  %v4182 = vadd.f32 0.0, %v4181
  %v4183 = vpop.f32.mrf.mxu0
  %4184 = vmatprep.mubr.f32.mxu0 0.0
  %4185 = vmatmul.mubr.f32.gmra.mxu0 %v1292
  %v4186 = vpop.f32.mrf.mxu0
  %v4187 = vadd.f32 0.0, %v4186
  %v4188 = vpop.f32.mrf.mxu0
  %4189 = vmatprep.mubr.f32.mxu0 0.0
  %4190 = vmatmul.mubr.f32.gmra.mxu0 %v1294
  %v4191 = vpop.f32.mrf.mxu0
  %v4192 = vadd.f32 0.0, %v4191
  %v4193 = vpop.f32.mrf.mxu0
  %4194 = vmatprep.mubr.f32.mxu0 0.0
  %4195 = vmatmul.mubr.f32.gmra.mxu0 %v1296
  %v4196 = vpop.f32.mrf.mxu0
  %v4197 = vadd.f32 0.0, %v4196
  %v4198 = vpop.f32.mrf.mxu0
  %4199 = vmatprep.mubr.f32.mxu0 0.0
  %4200 = vmatmul.mubr.f32.gmra.mxu0 %v1298
  %v4201 = vpop.f32.mrf.mxu0
  %v4202 = vadd.f32 0.0, %v4201
  %v4203 = vpop.f32.mrf.mxu0
  %4204 = vmatprep.mubr.f32.mxu0 0.0
  %4205 = vmatmul.mubr.f32.gmra.mxu0 %v1300
  %v4206 = vpop.f32.mrf.mxu0
  %v4207 = vadd.f32 0.0, %v4206
  %v4208 = vpop.f32.mrf.mxu0
  %4209 = vmatprep.mubr.f32.mxu0 0.0
  %4210 = vmatmul.mubr.f32.gmra.mxu0 %v1302
  %v4211 = vpop.f32.mrf.mxu0
  %v4212 = vadd.f32 0.0, %v4211
  %v4213 = vpop.f32.mrf.mxu0
  %4214 = vmatprep.mubr.f32.mxu0 0.0
  %4215 = vmatmul.mubr.f32.gmra.mxu0 %v1304
  %v4216 = vpop.f32.mrf.mxu0
  %v4217 = vadd.f32 0.0, %v4216
  %v4218 = vpop.f32.mrf.mxu0
  %4219 = vmatprep.mubr.f32.mxu0 0.0
  %4220 = vmatmul.mubr.f32.gmra.mxu0 %v1306
  %v4221 = vpop.f32.mrf.mxu0
  %v4222 = vadd.f32 0.0, %v4221
  %v4223 = vpop.f32.mrf.mxu0
  %4224 = vmatprep.mubr.f32.mxu0 0.0
  %4225 = vmatmul.mubr.f32.gmra.mxu0 %v1308
  %v4226 = vpop.f32.mrf.mxu0
  %v4227 = vadd.f32 0.0, %v4226
  %v4228 = vpop.f32.mrf.mxu0
  %4229 = vmatprep.mubr.f32.mxu0 0.0
  %4230 = vmatmul.mubr.f32.gmra.mxu0 %v1310
  %v4231 = vpop.f32.mrf.mxu0
  %v4232 = vadd.f32 0.0, %v4231
  %v4233 = vpop.f32.mrf.mxu0
  %4234 = vmatprep.mubr.f32.mxu0 0.0
  %4235 = vmatmul.mubr.f32.gmra.mxu0 %v1312
  %v4236 = vpop.f32.mrf.mxu0
  %v4237 = vadd.f32 0.0, %v4236
  %v4238 = vpop.f32.mrf.mxu0
  %4239 = vmatprep.mubr.f32.mxu0 0.0
  %4240 = vmatmul.mubr.f32.gmra.mxu0 %v1314
  %v4241 = vpop.f32.mrf.mxu0
  %v4242 = vadd.f32 0.0, %v4241
  %v4243 = vpop.f32.mrf.mxu0
  %4244 = vmatprep.mubr.f32.mxu0 0.0
  %4245 = vmatmul.mubr.f32.gmra.mxu0 %v1316
  %v4246 = vpop.f32.mrf.mxu0
  %v4247 = vadd.f32 0.0, %v4246
  %v4248 = vpop.f32.mrf.mxu0
  %4249 = vmatprep.mubr.f32.mxu0 0.0
  %4250 = vmatmul.mubr.f32.gmra.mxu0 %v1318
  %v4251 = vpop.f32.mrf.mxu0
  %v4252 = vadd.f32 0.0, %v4251
  %v4253 = vpop.f32.mrf.mxu0
  %4254 = vmatprep.mubr.f32.mxu0 0.0
  %4255 = vmatmul.mubr.f32.gmra.mxu0 %v1320
  %v4256 = vpop.f32.mrf.mxu0
  %v4257 = vadd.f32 0.0, %v4256
  %v4258 = vpop.f32.mrf.mxu0
  %4259 = vmatprep.mubr.f32.mxu0 0.0
  %4260 = vmatmul.mubr.f32.gmra.mxu0 %v1322
  %v4261 = vpop.f32.mrf.mxu0
  %v4262 = vadd.f32 0.0, %v4261
  %v4263 = vpop.f32.mrf.mxu0
  %4264 = vmatprep.mubr.f32.mxu0 0.0
  %4265 = vmatmul.mubr.f32.gmra.mxu0 %v1324
  %v4266 = vpop.f32.mrf.mxu0
  %v4267 = vadd.f32 0.0, %v4266
  %v4268 = vpop.f32.mrf.mxu0
  %4269 = vmatprep.mubr.f32.mxu0 0.0
  %4270 = vmatmul.mubr.f32.gmra.mxu0 %v1326
  %v4271 = vpop.f32.mrf.mxu0
  %v4272 = vadd.f32 0.0, %v4271
  %v4273 = vpop.f32.mrf.mxu0
  %4274 = vmatprep.mubr.f32.mxu0 0.0
  %4275 = vmatmul.mubr.f32.gmra.mxu0 %v1328
  %v4276 = vpop.f32.mrf.mxu0
  %v4277 = vadd.f32 0.0, %v4276
  %v4278 = vpop.f32.mrf.mxu0
  %4279 = vmatprep.mubr.f32.mxu0 0.0
  %4280 = vmatmul.mubr.f32.gmra.mxu0 %v1330
  %v4281 = vpop.f32.mrf.mxu0
  %v4282 = vadd.f32 0.0, %v4281
  %v4283 = vpop.f32.mrf.mxu0
  %4284 = vmatprep.mubr.f32.mxu0 0.0
  %4285 = vmatmul.mubr.f32.gmra.mxu0 %v1332
  %v4286 = vpop.f32.mrf.mxu0
  %v4287 = vadd.f32 0.0, %v4286
  %v4288 = vpop.f32.mrf.mxu0
  %4289 = vmatprep.mubr.f32.mxu0 0.0
  %4290 = vmatmul.mubr.f32.gmra.mxu0 %v1334
  %v4291 = vpop.f32.mrf.mxu0
  %v4292 = vadd.f32 0.0, %v4291
  %v4293 = vpop.f32.mrf.mxu0
  %4294 = vmatprep.mubr.f32.mxu0 0.0
  %4295 = vmatmul.mubr.f32.gmra.mxu0 %v1336
  %v4296 = vpop.f32.mrf.mxu0
  %v4297 = vadd.f32 0.0, %v4296
  %v4298 = vpop.f32.mrf.mxu0
  %4299 = vmatprep.mubr.f32.mxu0 0.0
  %4300 = vmatmul.mubr.f32.gmra.mxu0 %v1338
  %v4301 = vpop.f32.mrf.mxu0
  %v4302 = vadd.f32 0.0, %v4301
  %v4303 = vpop.f32.mrf.mxu0
  %4304 = vmatprep.mubr.f32.mxu0 0.0
  %4305 = vmatmul.mubr.f32.gmra.mxu0 %v1340
  %v4306 = vpop.f32.mrf.mxu0
  %v4307 = vadd.f32 0.0, %v4306
  %v4308 = vpop.f32.mrf.mxu0
  %4309 = vmatprep.mubr.f32.mxu0 0.0
  %4310 = vmatmul.mubr.f32.gmra.mxu0 %v1342
  %v4311 = vpop.f32.mrf.mxu0
  %v4312 = vadd.f32 0.0, %v4311
  %v4313 = vpop.f32.mrf.mxu0
  %4314 = vmatprep.mubr.f32.mxu0 0.0
  %4315 = vmatmul.mubr.f32.gmra.mxu0 %v2529
  %v4316 = vpop.f32.mrf.mxu0
  %v4317 = vadd.f32 0.0, %v4316
  %v4318 = vpop.f32.mrf.mxu0
  %4319 = vmatprep.mubr.f32.mxu0 0.0
  %4320 = vmatmul.mubr.f32.gmra.mxu0 %v2531
  %v4321 = vpop.f32.mrf.mxu0
  %v4322 = vadd.f32 0.0, %v4321
  %v4323 = vpop.f32.mrf.mxu0
  %4324 = vmatprep.mubr.f32.mxu0 0.0
  %4325 = vmatmul.mubr.f32.gmra.mxu0 %v3943
  %v4326 = vpop.f32.mrf.mxu0
  %v4327 = vadd.f32 0.0, %v4326
  %v4328 = vpop.f32.mrf.mxu0
  %4329 = vmatprep.mubr.f32.mxu0 0.0
  %4330 = vmatmul.mubr.f32.gmra.mxu0 %v3945
  %v4331 = vpop.f32.mrf.mxu0
  %v4332 = vadd.f32 0.0, %v4331
  %v4333 = vpop.f32.mrf.mxu0
  %4334 = vdwg.mxu0
  %v4335 = vadd.f32 %v3857, %v4017
  %v4336 = vadd.f32 %v3858, %v4022
  %v4337 = vadd.f32 %v3859, %v4027
  %v4338 = vadd.f32 %v3860, %v4032
  %v4339 = vadd.f32 %v3861, %v4037
  %v4340 = vadd.f32 %v3862, %v4042
  %v4341 = vadd.f32 %v3863, %v4047
  %v4342 = vadd.f32 %v3864, %v4052
  %v4343 = vadd.f32 %v3865, %v4057
  %v4344 = vadd.f32 %v3866, %v4062
  %v4345 = vadd.f32 %v3867, %v4067
  %v4346 = vadd.f32 %v3868, %v4072
  %v4347 = vadd.f32 %v3869, %v4077
  %v4348 = vadd.f32 %v3870, %v4082
  %v4349 = vadd.f32 %v3871, %v4087
  %v4350 = vadd.f32 %v3872, %v4092
  %v4351 = vadd.f32 %v3873, %v4097
  %v4352 = vadd.f32 %v3874, %v4102
  %v4353 = vadd.f32 %v3875, %v4107
  %v4354 = vadd.f32 %v3876, %v4112
  %v4355 = vadd.f32 %v3877, %v4117
  %v4356 = vadd.f32 %v3878, %v4122
  %v4357 = vadd.f32 %v3879, %v4127
  %v4358 = vadd.f32 %v3880, %v4132
  %v4359 = vadd.f32 %v3881, %v4137
  %v4360 = vadd.f32 %v3882, %v4142
  %v4361 = vadd.f32 %v3883, %v4147
  %v4362 = vadd.f32 %v3884, %v4152
  %v4363 = vadd.f32 %v3885, %v4157
  %v4364 = vadd.f32 %v3886, %v4162
  %v4365 = vadd.f32 %v3887, %v4167
  %v4366 = vadd.f32 %v3888, %v4172
  %v4367 = vadd.f32 %v3889, %v4177
  %v4368 = vadd.f32 %v3890, %v4182
  %v4369 = vadd.f32 %v3891, %v4187
  %v4370 = vadd.f32 %v3892, %v4192
  %v4371 = vadd.f32 %v3893, %v4197
  %v4372 = vadd.f32 %v3894, %v4202
  %v4373 = vadd.f32 %v3895, %v4207
  %v4374 = vadd.f32 %v3896, %v4212
  %v4375 = vadd.f32 %v3897, %v4217
  %v4376 = vadd.f32 %v3898, %v4222
  %v4377 = vadd.f32 %v3899, %v4227
  %v4378 = vadd.f32 %v3900, %v4232
  %v4379 = vadd.f32 %v3901, %v4237
  %v4380 = vadd.f32 %v3902, %v4242
  %v4381 = vadd.f32 %v3903, %v4247
  %v4382 = vadd.f32 %v3904, %v4252
  %v4383 = vadd.f32 %v3905, %v4257
  %v4384 = vadd.f32 %v3906, %v4262
  %v4385 = vadd.f32 %v3907, %v4267
  %v4386 = vadd.f32 %v3908, %v4272
  %v4387 = vadd.f32 %v3909, %v4277
  %v4388 = vadd.f32 %v3910, %v4282
  %v4389 = vadd.f32 %v3911, %v4287
  %v4390 = vadd.f32 %v3912, %v4292
  %v4391 = vadd.f32 %v3913, %v4297
  %v4392 = vadd.f32 %v3914, %v4302
  %v4393 = vadd.f32 %v3915, %v4307
  %v4394 = vadd.f32 %v3916, %v4312
  %v4395 = vadd.f32 %v3917, %v4317
  %v4396 = vadd.f32 %v3918, %v4322
  %v4397 = vadd.f32 %v3919, %v4327
  %v4398 = vadd.f32 %v3920, %v4332
  %s4399 = scalar_lea.vmem %s1, 28
  %v4400 = vld [vmem:[%s4399] sm:$0xf]
  %v4401 = vsel %vm84, %v364, 0
  %v4403 = vsel %vm84, %v365, 0
  %v4405 = vsel %vm84, %v436, 0
  %v4407 = vsel %vm84, %v437, 0
  %v4410 = vsel %vm827, %v4400, 0
  %4412 = vmatprep.subr.mxu0 0.0
  %4413 = vmatpush1.msra.mxu0 0.0
  %4414 = vmatprep.subr.mxu0 0.0
  %4415 = vmatpush1.msra.mxu0 0.0
  %4416 = vmatprep.subr.mxu0 0.0
  %4417 = vmatpush1.msra.mxu0 0.0
  %4418 = vmatprep.subr.mxu0 0.0
  %4419 = vmatpush1.msra.mxu0 0.0
  %4420 = vmatprep.subr.mxu0 0.0
  %4421 = vmatpush1.msra.mxu0 0.0
  %4422 = vmatprep.subr.mxu0 0.0
  %4423 = vmatpush1.msra.mxu0 0.0
  %4424 = vmatprep.subr.mxu0 0.0
  %4425 = vmatpush1.msra.mxu0 0.0
  %4426 = vmatprep.subr.mxu0 0.0
  %4427 = vmatpush1.msra.mxu0 0.0
  %4428 = vmatprep.subr.mxu0 0.0
  %4429 = vmatpush1.msra.mxu0 0.0
  %4430 = vmatprep.subr.mxu0 0.0
  %4431 = vmatpush1.msra.mxu0 0.0
  %4432 = vmatprep.subr.mxu0 0.0
  %4433 = vmatpush1.msra.mxu0 0.0
  %4434 = vmatprep.subr.mxu0 0.0
  %4435 = vmatpush1.msra.mxu0 0.0
  %4436 = vmatprep.subr.mxu0 0.0
  %4437 = vmatpush1.msra.mxu0 0.0
  %4438 = vmatprep.subr.mxu0 0.0
  %4439 = vmatpush1.msra.mxu0 0.0
  %4440 = vmatprep.subr.mxu0 0.0
  %4441 = vmatpush1.msra.mxu0 0.0
  %4442 = vmatprep.subr.mxu0 0.0
  %4443 = vmatpush1.msra.mxu0 %v4410
  %4444 = vmatprep.subr.mxu0 0.0
  %4445 = vmatpush2.msra.mxu0 0.0
  %4446 = vmatprep.subr.mxu0 0.0
  %4447 = vmatpush2.msra.mxu0 0.0
  %4448 = vmatprep.subr.mxu0 0.0
  %4449 = vmatpush2.msra.mxu0 0.0
  %4450 = vmatprep.subr.mxu0 0.0
  %4451 = vmatpush2.msra.mxu0 0.0
  %4452 = vmatprep.subr.mxu0 0.0
  %4453 = vmatpush2.msra.mxu0 0.0
  %4454 = vmatprep.subr.mxu0 0.0
  %4455 = vmatpush2.msra.mxu0 0.0
  %4456 = vmatprep.subr.mxu0 0.0
  %4457 = vmatpush2.msra.mxu0 0.0
  %4458 = vmatprep.subr.mxu0 0.0
  %4459 = vmatpush2.msra.mxu0 0.0
  %4460 = vmatprep.subr.mxu0 0.0
  %4461 = vmatpush2.msra.mxu0 0.0
  %4462 = vmatprep.subr.mxu0 0.0
  %4463 = vmatpush2.msra.mxu0 0.0
  %4464 = vmatprep.subr.mxu0 0.0
  %4465 = vmatpush2.msra.mxu0 0.0
  %4466 = vmatprep.subr.mxu0 0.0
  %4467 = vmatpush2.msra.mxu0 0.0
  %4468 = vmatprep.subr.mxu0 0.0
  %4469 = vmatpush2.msra.mxu0 0.0
  %4470 = vmatprep.subr.mxu0 0.0
  %4471 = vmatpush2.msra.mxu0 0.0
  %4472 = vmatprep.subr.mxu0 0.0
  %4473 = vmatpush2.msra.mxu0 0.0
  %4474 = vmatprep.subr.mxu0 0.0
  %4475 = vmatpush2.msra.mxu0 0.0
  %4476 = vmatprep.mubr.f32.mxu0 0.0
  %4477 = vmatmul.mubr.f32.gmra.mxu0 %v707
  %v4478 = vpop.f32.mrf.mxu0
  %v4479 = vadd.f32 0.0, %v4478
  %v4480 = vpop.f32.mrf.mxu0
  %4481 = vmatprep.mubr.f32.mxu0 0.0
  %4482 = vmatmul.mubr.f32.gmra.mxu0 %v709
  %v4483 = vpop.f32.mrf.mxu0
  %v4484 = vadd.f32 0.0, %v4483
  %v4485 = vpop.f32.mrf.mxu0
  %4486 = vmatprep.mubr.f32.mxu0 0.0
  %4487 = vmatmul.mubr.f32.gmra.mxu0 %v711
  %v4488 = vpop.f32.mrf.mxu0
  %v4489 = vadd.f32 0.0, %v4488
  %v4490 = vpop.f32.mrf.mxu0
  %4491 = vmatprep.mubr.f32.mxu0 0.0
  %4492 = vmatmul.mubr.f32.gmra.mxu0 %v713
  %v4493 = vpop.f32.mrf.mxu0
  %v4494 = vadd.f32 0.0, %v4493
  %v4495 = vpop.f32.mrf.mxu0
  %4496 = vmatprep.mubr.f32.mxu0 0.0
  %4497 = vmatmul.mubr.f32.gmra.mxu0 %v715
  %v4498 = vpop.f32.mrf.mxu0
  %v4499 = vadd.f32 0.0, %v4498
  %v4500 = vpop.f32.mrf.mxu0
  %4501 = vmatprep.mubr.f32.mxu0 0.0
  %4502 = vmatmul.mubr.f32.gmra.mxu0 %v717
  %v4503 = vpop.f32.mrf.mxu0
  %v4504 = vadd.f32 0.0, %v4503
  %v4505 = vpop.f32.mrf.mxu0
  %4506 = vmatprep.mubr.f32.mxu0 0.0
  %4507 = vmatmul.mubr.f32.gmra.mxu0 %v719
  %v4508 = vpop.f32.mrf.mxu0
  %v4509 = vadd.f32 0.0, %v4508
  %v4510 = vpop.f32.mrf.mxu0
  %4511 = vmatprep.mubr.f32.mxu0 0.0
  %4512 = vmatmul.mubr.f32.gmra.mxu0 %v721
  %v4513 = vpop.f32.mrf.mxu0
  %v4514 = vadd.f32 0.0, %v4513
  %v4515 = vpop.f32.mrf.mxu0
  %4516 = vmatprep.mubr.f32.mxu0 0.0
  %4517 = vmatmul.mubr.f32.gmra.mxu0 %v723
  %v4518 = vpop.f32.mrf.mxu0
  %v4519 = vadd.f32 0.0, %v4518
  %v4520 = vpop.f32.mrf.mxu0
  %4521 = vmatprep.mubr.f32.mxu0 0.0
  %4522 = vmatmul.mubr.f32.gmra.mxu0 %v725
  %v4523 = vpop.f32.mrf.mxu0
  %v4524 = vadd.f32 0.0, %v4523
  %v4525 = vpop.f32.mrf.mxu0
  %4526 = vmatprep.mubr.f32.mxu0 0.0
  %4527 = vmatmul.mubr.f32.gmra.mxu0 %v727
  %v4528 = vpop.f32.mrf.mxu0
  %v4529 = vadd.f32 0.0, %v4528
  %v4530 = vpop.f32.mrf.mxu0
  %4531 = vmatprep.mubr.f32.mxu0 0.0
  %4532 = vmatmul.mubr.f32.gmra.mxu0 %v729
  %v4533 = vpop.f32.mrf.mxu0
  %v4534 = vadd.f32 0.0, %v4533
  %v4535 = vpop.f32.mrf.mxu0
  %4536 = vmatprep.mubr.f32.mxu0 0.0
  %4537 = vmatmul.mubr.f32.gmra.mxu0 %v731
  %v4538 = vpop.f32.mrf.mxu0
  %v4539 = vadd.f32 0.0, %v4538
  %v4540 = vpop.f32.mrf.mxu0
  %4541 = vmatprep.mubr.f32.mxu0 0.0
  %4542 = vmatmul.mubr.f32.gmra.mxu0 %v733
  %v4543 = vpop.f32.mrf.mxu0
  %v4544 = vadd.f32 0.0, %v4543
  %v4545 = vpop.f32.mrf.mxu0
  %4546 = vmatprep.mubr.f32.mxu0 0.0
  %4547 = vmatmul.mubr.f32.gmra.mxu0 %v735
  %v4548 = vpop.f32.mrf.mxu0
  %v4549 = vadd.f32 0.0, %v4548
  %v4550 = vpop.f32.mrf.mxu0
  %4551 = vmatprep.mubr.f32.mxu0 0.0
  %4552 = vmatmul.mubr.f32.gmra.mxu0 %v737
  %v4553 = vpop.f32.mrf.mxu0
  %v4554 = vadd.f32 0.0, %v4553
  %v4555 = vpop.f32.mrf.mxu0
  %4556 = vmatprep.mubr.f32.mxu0 0.0
  %4557 = vmatmul.mubr.f32.gmra.mxu0 %v739
  %v4558 = vpop.f32.mrf.mxu0
  %v4559 = vadd.f32 0.0, %v4558
  %v4560 = vpop.f32.mrf.mxu0
  %4561 = vmatprep.mubr.f32.mxu0 0.0
  %4562 = vmatmul.mubr.f32.gmra.mxu0 %v741
  %v4563 = vpop.f32.mrf.mxu0
  %v4564 = vadd.f32 0.0, %v4563
  %v4565 = vpop.f32.mrf.mxu0
  %4566 = vmatprep.mubr.f32.mxu0 0.0
  %4567 = vmatmul.mubr.f32.gmra.mxu0 %v743
  %v4568 = vpop.f32.mrf.mxu0
  %v4569 = vadd.f32 0.0, %v4568
  %v4570 = vpop.f32.mrf.mxu0
  %4571 = vmatprep.mubr.f32.mxu0 0.0
  %4572 = vmatmul.mubr.f32.gmra.mxu0 %v745
  %v4573 = vpop.f32.mrf.mxu0
  %v4574 = vadd.f32 0.0, %v4573
  %v4575 = vpop.f32.mrf.mxu0
  %4576 = vmatprep.mubr.f32.mxu0 0.0
  %4577 = vmatmul.mubr.f32.gmra.mxu0 %v747
  %v4578 = vpop.f32.mrf.mxu0
  %v4579 = vadd.f32 0.0, %v4578
  %v4580 = vpop.f32.mrf.mxu0
  %4581 = vmatprep.mubr.f32.mxu0 0.0
  %4582 = vmatmul.mubr.f32.gmra.mxu0 %v749
  %v4583 = vpop.f32.mrf.mxu0
  %v4584 = vadd.f32 0.0, %v4583
  %v4585 = vpop.f32.mrf.mxu0
  %4586 = vmatprep.mubr.f32.mxu0 0.0
  %4587 = vmatmul.mubr.f32.gmra.mxu0 %v751
  %v4588 = vpop.f32.mrf.mxu0
  %v4589 = vadd.f32 0.0, %v4588
  %v4590 = vpop.f32.mrf.mxu0
  %4591 = vmatprep.mubr.f32.mxu0 0.0
  %4592 = vmatmul.mubr.f32.gmra.mxu0 %v753
  %v4593 = vpop.f32.mrf.mxu0
  %v4594 = vadd.f32 0.0, %v4593
  %v4595 = vpop.f32.mrf.mxu0
  %4596 = vmatprep.mubr.f32.mxu0 0.0
  %4597 = vmatmul.mubr.f32.gmra.mxu0 %v755
  %v4598 = vpop.f32.mrf.mxu0
  %v4599 = vadd.f32 0.0, %v4598
  %v4600 = vpop.f32.mrf.mxu0
  %4601 = vmatprep.mubr.f32.mxu0 0.0
  %4602 = vmatmul.mubr.f32.gmra.mxu0 %v757
  %v4603 = vpop.f32.mrf.mxu0
  %v4604 = vadd.f32 0.0, %v4603
  %v4605 = vpop.f32.mrf.mxu0
  %4606 = vmatprep.mubr.f32.mxu0 0.0
  %4607 = vmatmul.mubr.f32.gmra.mxu0 %v759
  %v4608 = vpop.f32.mrf.mxu0
  %v4609 = vadd.f32 0.0, %v4608
  %v4610 = vpop.f32.mrf.mxu0
  %4611 = vmatprep.mubr.f32.mxu0 0.0
  %4612 = vmatmul.mubr.f32.gmra.mxu0 %v761
  %v4613 = vpop.f32.mrf.mxu0
  %v4614 = vadd.f32 0.0, %v4613
  %v4615 = vpop.f32.mrf.mxu0
  %4616 = vmatprep.mubr.f32.mxu0 0.0
  %4617 = vmatmul.mubr.f32.gmra.mxu0 %v2987
  %v4618 = vpop.f32.mrf.mxu0
  %v4619 = vadd.f32 0.0, %v4618
  %v4620 = vpop.f32.mrf.mxu0
  %4621 = vmatprep.mubr.f32.mxu0 0.0
  %4622 = vmatmul.mubr.f32.gmra.mxu0 %v2989
  %v4623 = vpop.f32.mrf.mxu0
  %v4624 = vadd.f32 0.0, %v4623
  %v4625 = vpop.f32.mrf.mxu0
  %4626 = vmatprep.mubr.f32.mxu0 0.0
  %4627 = vmatmul.mubr.f32.gmra.mxu0 %v4401
  %v4628 = vpop.f32.mrf.mxu0
  %v4629 = vadd.f32 0.0, %v4628
  %v4630 = vpop.f32.mrf.mxu0
  %4631 = vmatprep.mubr.f32.mxu0 0.0
  %4632 = vmatmul.mubr.f32.gmra.mxu0 %v4403
  %v4633 = vpop.f32.mrf.mxu0
  %v4634 = vadd.f32 0.0, %v4633
  %v4635 = vpop.f32.mrf.mxu0
  %4636 = vmatprep.mubr.f32.mxu0 0.0
  %4637 = vmatmul.mubr.f32.gmra.mxu0 %v771
  %v4638 = vpop.f32.mrf.mxu0
  %v4639 = vadd.f32 0.0, %v4638
  %v4640 = vpop.f32.mrf.mxu0
  %4641 = vmatprep.mubr.f32.mxu0 0.0
  %4642 = vmatmul.mubr.f32.gmra.mxu0 %v773
  %v4643 = vpop.f32.mrf.mxu0
  %v4644 = vadd.f32 0.0, %v4643
  %v4645 = vpop.f32.mrf.mxu0
  %4646 = vmatprep.mubr.f32.mxu0 0.0
  %4647 = vmatmul.mubr.f32.gmra.mxu0 %v775
  %v4648 = vpop.f32.mrf.mxu0
  %v4649 = vadd.f32 0.0, %v4648
  %v4650 = vpop.f32.mrf.mxu0
  %4651 = vmatprep.mubr.f32.mxu0 0.0
  %4652 = vmatmul.mubr.f32.gmra.mxu0 %v777
  %v4653 = vpop.f32.mrf.mxu0
  %v4654 = vadd.f32 0.0, %v4653
  %v4655 = vpop.f32.mrf.mxu0
  %4656 = vmatprep.mubr.f32.mxu0 0.0
  %4657 = vmatmul.mubr.f32.gmra.mxu0 %v779
  %v4658 = vpop.f32.mrf.mxu0
  %v4659 = vadd.f32 0.0, %v4658
  %v4660 = vpop.f32.mrf.mxu0
  %4661 = vmatprep.mubr.f32.mxu0 0.0
  %4662 = vmatmul.mubr.f32.gmra.mxu0 %v781
  %v4663 = vpop.f32.mrf.mxu0
  %v4664 = vadd.f32 0.0, %v4663
  %v4665 = vpop.f32.mrf.mxu0
  %4666 = vmatprep.mubr.f32.mxu0 0.0
  %4667 = vmatmul.mubr.f32.gmra.mxu0 %v783
  %v4668 = vpop.f32.mrf.mxu0
  %v4669 = vadd.f32 0.0, %v4668
  %v4670 = vpop.f32.mrf.mxu0
  %4671 = vmatprep.mubr.f32.mxu0 0.0
  %4672 = vmatmul.mubr.f32.gmra.mxu0 %v785
  %v4673 = vpop.f32.mrf.mxu0
  %v4674 = vadd.f32 0.0, %v4673
  %v4675 = vpop.f32.mrf.mxu0
  %4676 = vmatprep.mubr.f32.mxu0 0.0
  %4677 = vmatmul.mubr.f32.gmra.mxu0 %v787
  %v4678 = vpop.f32.mrf.mxu0
  %v4679 = vadd.f32 0.0, %v4678
  %v4680 = vpop.f32.mrf.mxu0
  %4681 = vmatprep.mubr.f32.mxu0 0.0
  %4682 = vmatmul.mubr.f32.gmra.mxu0 %v789
  %v4683 = vpop.f32.mrf.mxu0
  %v4684 = vadd.f32 0.0, %v4683
  %v4685 = vpop.f32.mrf.mxu0
  %4686 = vmatprep.mubr.f32.mxu0 0.0
  %4687 = vmatmul.mubr.f32.gmra.mxu0 %v791
  %v4688 = vpop.f32.mrf.mxu0
  %v4689 = vadd.f32 0.0, %v4688
  %v4690 = vpop.f32.mrf.mxu0
  %4691 = vmatprep.mubr.f32.mxu0 0.0
  %4692 = vmatmul.mubr.f32.gmra.mxu0 %v793
  %v4693 = vpop.f32.mrf.mxu0
  %v4694 = vadd.f32 0.0, %v4693
  %v4695 = vpop.f32.mrf.mxu0
  %4696 = vmatprep.mubr.f32.mxu0 0.0
  %4697 = vmatmul.mubr.f32.gmra.mxu0 %v795
  %v4698 = vpop.f32.mrf.mxu0
  %v4699 = vadd.f32 0.0, %v4698
  %v4700 = vpop.f32.mrf.mxu0
  %4701 = vmatprep.mubr.f32.mxu0 0.0
  %4702 = vmatmul.mubr.f32.gmra.mxu0 %v797
  %v4703 = vpop.f32.mrf.mxu0
  %v4704 = vadd.f32 0.0, %v4703
  %v4705 = vpop.f32.mrf.mxu0
  %4706 = vmatprep.mubr.f32.mxu0 0.0
  %4707 = vmatmul.mubr.f32.gmra.mxu0 %v799
  %v4708 = vpop.f32.mrf.mxu0
  %v4709 = vadd.f32 0.0, %v4708
  %v4710 = vpop.f32.mrf.mxu0
  %4711 = vmatprep.mubr.f32.mxu0 0.0
  %4712 = vmatmul.mubr.f32.gmra.mxu0 %v801
  %v4713 = vpop.f32.mrf.mxu0
  %v4714 = vadd.f32 0.0, %v4713
  %v4715 = vpop.f32.mrf.mxu0
  %4716 = vmatprep.mubr.f32.mxu0 0.0
  %4717 = vmatmul.mubr.f32.gmra.mxu0 %v803
  %v4718 = vpop.f32.mrf.mxu0
  %v4719 = vadd.f32 0.0, %v4718
  %v4720 = vpop.f32.mrf.mxu0
  %4721 = vmatprep.mubr.f32.mxu0 0.0
  %4722 = vmatmul.mubr.f32.gmra.mxu0 %v805
  %v4723 = vpop.f32.mrf.mxu0
  %v4724 = vadd.f32 0.0, %v4723
  %v4725 = vpop.f32.mrf.mxu0
  %4726 = vmatprep.mubr.f32.mxu0 0.0
  %4727 = vmatmul.mubr.f32.gmra.mxu0 %v807
  %v4728 = vpop.f32.mrf.mxu0
  %v4729 = vadd.f32 0.0, %v4728
  %v4730 = vpop.f32.mrf.mxu0
  %4731 = vmatprep.mubr.f32.mxu0 0.0
  %4732 = vmatmul.mubr.f32.gmra.mxu0 %v809
  %v4733 = vpop.f32.mrf.mxu0
  %v4734 = vadd.f32 0.0, %v4733
  %v4735 = vpop.f32.mrf.mxu0
  %4736 = vmatprep.mubr.f32.mxu0 0.0
  %4737 = vmatmul.mubr.f32.gmra.mxu0 %v811
  %v4738 = vpop.f32.mrf.mxu0
  %v4739 = vadd.f32 0.0, %v4738
  %v4740 = vpop.f32.mrf.mxu0
  %4741 = vmatprep.mubr.f32.mxu0 0.0
  %4742 = vmatmul.mubr.f32.gmra.mxu0 %v813
  %v4743 = vpop.f32.mrf.mxu0
  %v4744 = vadd.f32 0.0, %v4743
  %v4745 = vpop.f32.mrf.mxu0
  %4746 = vmatprep.mubr.f32.mxu0 0.0
  %4747 = vmatmul.mubr.f32.gmra.mxu0 %v815
  %v4748 = vpop.f32.mrf.mxu0
  %v4749 = vadd.f32 0.0, %v4748
  %v4750 = vpop.f32.mrf.mxu0
  %4751 = vmatprep.mubr.f32.mxu0 0.0
  %4752 = vmatmul.mubr.f32.gmra.mxu0 %v817
  %v4753 = vpop.f32.mrf.mxu0
  %v4754 = vadd.f32 0.0, %v4753
  %v4755 = vpop.f32.mrf.mxu0
  %4756 = vmatprep.mubr.f32.mxu0 0.0
  %4757 = vmatmul.mubr.f32.gmra.mxu0 %v819
  %v4758 = vpop.f32.mrf.mxu0
  %v4759 = vadd.f32 0.0, %v4758
  %v4760 = vpop.f32.mrf.mxu0
  %4761 = vmatprep.mubr.f32.mxu0 0.0
  %4762 = vmatmul.mubr.f32.gmra.mxu0 %v821
  %v4763 = vpop.f32.mrf.mxu0
  %v4764 = vadd.f32 0.0, %v4763
  %v4765 = vpop.f32.mrf.mxu0
  %4766 = vmatprep.mubr.f32.mxu0 0.0
  %4767 = vmatmul.mubr.f32.gmra.mxu0 %v823
  %v4768 = vpop.f32.mrf.mxu0
  %v4769 = vadd.f32 0.0, %v4768
  %v4770 = vpop.f32.mrf.mxu0
  %4771 = vmatprep.mubr.f32.mxu0 0.0
  %4772 = vmatmul.mubr.f32.gmra.mxu0 %v825
  %v4773 = vpop.f32.mrf.mxu0
  %v4774 = vadd.f32 0.0, %v4773
  %v4775 = vpop.f32.mrf.mxu0
  %4776 = vmatprep.mubr.f32.mxu0 0.0
  %4777 = vmatmul.mubr.f32.gmra.mxu0 %v2991
  %v4778 = vpop.f32.mrf.mxu0
  %v4779 = vadd.f32 0.0, %v4778
  %v4780 = vpop.f32.mrf.mxu0
  %4781 = vmatprep.mubr.f32.mxu0 0.0
  %4782 = vmatmul.mubr.f32.gmra.mxu0 %v2993
  %v4783 = vpop.f32.mrf.mxu0
  %v4784 = vadd.f32 0.0, %v4783
  %v4785 = vpop.f32.mrf.mxu0
  %4786 = vmatprep.mubr.f32.mxu0 0.0
  %4787 = vmatmul.mubr.f32.gmra.mxu0 %v4405
  %v4788 = vpop.f32.mrf.mxu0
  %v4789 = vadd.f32 0.0, %v4788
  %v4790 = vpop.f32.mrf.mxu0
  %4791 = vmatprep.mubr.f32.mxu0 0.0
  %4792 = vmatmul.mubr.f32.gmra.mxu0 %v4407
  %v4793 = vpop.f32.mrf.mxu0
  %v4794 = vadd.f32 0.0, %v4793
  %v4795 = vpop.f32.mrf.mxu0
  %4796 = vdwg.mxu0
  %v4797 = vadd.f32 %v4335, %v4479
  %v4798 = vadd.f32 %v4336, %v4484
  %v4799 = vadd.f32 %v4337, %v4489
  %v4800 = vadd.f32 %v4338, %v4494
  %v4801 = vadd.f32 %v4339, %v4499
  %v4802 = vadd.f32 %v4340, %v4504
  %v4803 = vadd.f32 %v4341, %v4509
  %v4804 = vadd.f32 %v4342, %v4514
  %v4805 = vadd.f32 %v4343, %v4519
  %v4806 = vadd.f32 %v4344, %v4524
  %v4807 = vadd.f32 %v4345, %v4529
  %v4808 = vadd.f32 %v4346, %v4534
  %v4809 = vadd.f32 %v4347, %v4539
  %v4810 = vadd.f32 %v4348, %v4544
  %v4811 = vadd.f32 %v4349, %v4549
  %v4812 = vadd.f32 %v4350, %v4554
  %v4813 = vadd.f32 %v4351, %v4559
  %v4814 = vadd.f32 %v4352, %v4564
  %v4815 = vadd.f32 %v4353, %v4569
  %v4816 = vadd.f32 %v4354, %v4574
  %v4817 = vadd.f32 %v4355, %v4579
  %v4818 = vadd.f32 %v4356, %v4584
  %v4819 = vadd.f32 %v4357, %v4589
  %v4820 = vadd.f32 %v4358, %v4594
  %v4821 = vadd.f32 %v4359, %v4599
  %v4822 = vadd.f32 %v4360, %v4604
  %v4823 = vadd.f32 %v4361, %v4609
  %v4824 = vadd.f32 %v4362, %v4614
  %v4825 = vadd.f32 %v4363, %v4619
  %v4826 = vadd.f32 %v4364, %v4624
  %v4827 = vadd.f32 %v4365, %v4629
  %v4828 = vadd.f32 %v4366, %v4634
  %v4829 = vadd.f32 %v4367, %v4639
  %v4830 = vadd.f32 %v4368, %v4644
  %v4831 = vadd.f32 %v4369, %v4649
  %v4832 = vadd.f32 %v4370, %v4654
  %v4833 = vadd.f32 %v4371, %v4659
  %v4834 = vadd.f32 %v4372, %v4664
  %v4835 = vadd.f32 %v4373, %v4669
  %v4836 = vadd.f32 %v4374, %v4674
  %v4837 = vadd.f32 %v4375, %v4679
  %v4838 = vadd.f32 %v4376, %v4684
  %v4839 = vadd.f32 %v4377, %v4689
  %v4840 = vadd.f32 %v4378, %v4694
  %v4841 = vadd.f32 %v4379, %v4699
  %v4842 = vadd.f32 %v4380, %v4704
  %v4843 = vadd.f32 %v4381, %v4709
  %v4844 = vadd.f32 %v4382, %v4714
  %v4845 = vadd.f32 %v4383, %v4719
  %v4846 = vadd.f32 %v4384, %v4724
  %v4847 = vadd.f32 %v4385, %v4729
  %v4848 = vadd.f32 %v4386, %v4734
  %v4849 = vadd.f32 %v4387, %v4739
  %v4850 = vadd.f32 %v4388, %v4744
  %v4851 = vadd.f32 %v4389, %v4749
  %v4852 = vadd.f32 %v4390, %v4754
  %v4853 = vadd.f32 %v4391, %v4759
  %v4854 = vadd.f32 %v4392, %v4764
  %v4855 = vadd.f32 %v4393, %v4769
  %v4856 = vadd.f32 %v4394, %v4774
  %v4857 = vadd.f32 %v4395, %v4779
  %v4858 = vadd.f32 %v4396, %v4784
  %v4859 = vadd.f32 %v4397, %v4789
  %v4860 = vadd.f32 %v4398, %v4794
  %v4863 = vrot.slane %v364, 1
  %v4864 = vrot.slane %v365, 1
  %v4865 = vsel %vm1764, %v4863, %v4864
  %v4866 = vrot.slane %v366, 1
  %v4867 = vsel %vm1764, %v4864, %v4866
  %v4868 = vrot.slane %v436, 1
  %v4869 = vrot.slane %v437, 1
  %v4870 = vsel %vm1764, %v4868, %v4869
  %v4871 = vrot.slane %v438, 1
  %v4872 = vsel %vm1764, %v4869, %v4871
  %s4873 = scalar_lea.vmem %s1, 32
  %v4874 = vld [vmem:[%s4873] sm:$0xf]
  %v4875 = vsel %vm84, %v4865, 0
  %v4877 = vsel %vm84, %v4867, 0
  %v4879 = vsel %vm84, %v4870, 0
  %v4881 = vsel %vm84, %v4872, 0
  %v4884 = vsel %vm827, %v4874, 0
  %4886 = vmatprep.subr.mxu0 0.0
  %4887 = vmatpush1.msra.mxu0 0.0
  %4888 = vmatprep.subr.mxu0 0.0
  %4889 = vmatpush1.msra.mxu0 0.0
  %4890 = vmatprep.subr.mxu0 0.0
  %4891 = vmatpush1.msra.mxu0 0.0
  %4892 = vmatprep.subr.mxu0 0.0
  %4893 = vmatpush1.msra.mxu0 0.0
  %4894 = vmatprep.subr.mxu0 0.0
  %4895 = vmatpush1.msra.mxu0 0.0
  %4896 = vmatprep.subr.mxu0 0.0
  %4897 = vmatpush1.msra.mxu0 0.0
  %4898 = vmatprep.subr.mxu0 0.0
  %4899 = vmatpush1.msra.mxu0 0.0
  %4900 = vmatprep.subr.mxu0 0.0
  %4901 = vmatpush1.msra.mxu0 0.0
  %4902 = vmatprep.subr.mxu0 0.0
  %4903 = vmatpush1.msra.mxu0 0.0
  %4904 = vmatprep.subr.mxu0 0.0
  %4905 = vmatpush1.msra.mxu0 0.0
  %4906 = vmatprep.subr.mxu0 0.0
  %4907 = vmatpush1.msra.mxu0 0.0
  %4908 = vmatprep.subr.mxu0 0.0
  %4909 = vmatpush1.msra.mxu0 0.0
  %4910 = vmatprep.subr.mxu0 0.0
  %4911 = vmatpush1.msra.mxu0 0.0
  %4912 = vmatprep.subr.mxu0 0.0
  %4913 = vmatpush1.msra.mxu0 0.0
  %4914 = vmatprep.subr.mxu0 0.0
  %4915 = vmatpush1.msra.mxu0 0.0
  %4916 = vmatprep.subr.mxu0 0.0
  %4917 = vmatpush1.msra.mxu0 %v4884
  %4918 = vmatprep.subr.mxu0 0.0
  %4919 = vmatpush2.msra.mxu0 0.0
  %4920 = vmatprep.subr.mxu0 0.0
  %4921 = vmatpush2.msra.mxu0 0.0
  %4922 = vmatprep.subr.mxu0 0.0
  %4923 = vmatpush2.msra.mxu0 0.0
  %4924 = vmatprep.subr.mxu0 0.0
  %4925 = vmatpush2.msra.mxu0 0.0
  %4926 = vmatprep.subr.mxu0 0.0
  %4927 = vmatpush2.msra.mxu0 0.0
  %4928 = vmatprep.subr.mxu0 0.0
  %4929 = vmatpush2.msra.mxu0 0.0
  %4930 = vmatprep.subr.mxu0 0.0
  %4931 = vmatpush2.msra.mxu0 0.0
  %4932 = vmatprep.subr.mxu0 0.0
  %4933 = vmatpush2.msra.mxu0 0.0
  %4934 = vmatprep.subr.mxu0 0.0
  %4935 = vmatpush2.msra.mxu0 0.0
  %4936 = vmatprep.subr.mxu0 0.0
  %4937 = vmatpush2.msra.mxu0 0.0
  %4938 = vmatprep.subr.mxu0 0.0
  %4939 = vmatpush2.msra.mxu0 0.0
  %4940 = vmatprep.subr.mxu0 0.0
  %4941 = vmatpush2.msra.mxu0 0.0
  %4942 = vmatprep.subr.mxu0 0.0
  %4943 = vmatpush2.msra.mxu0 0.0
  %4944 = vmatprep.subr.mxu0 0.0
  %4945 = vmatpush2.msra.mxu0 0.0
  %4946 = vmatprep.subr.mxu0 0.0
  %4947 = vmatpush2.msra.mxu0 0.0
  %4948 = vmatprep.subr.mxu0 0.0
  %4949 = vmatpush2.msra.mxu0 0.0
  %4950 = vmatprep.mubr.f32.mxu0 0.0
  %4951 = vmatmul.mubr.f32.gmra.mxu0 %v1935
  %v4952 = vpop.f32.mrf.mxu0
  %v4953 = vadd.f32 0.0, %v4952
  %v4954 = vpop.f32.mrf.mxu0
  %4955 = vmatprep.mubr.f32.mxu0 0.0
  %4956 = vmatmul.mubr.f32.gmra.mxu0 %v1937
  %v4957 = vpop.f32.mrf.mxu0
  %v4958 = vadd.f32 0.0, %v4957
  %v4959 = vpop.f32.mrf.mxu0
  %4960 = vmatprep.mubr.f32.mxu0 0.0
  %4961 = vmatmul.mubr.f32.gmra.mxu0 %v1939
  %v4962 = vpop.f32.mrf.mxu0
  %v4963 = vadd.f32 0.0, %v4962
  %v4964 = vpop.f32.mrf.mxu0
  %4965 = vmatprep.mubr.f32.mxu0 0.0
  %4966 = vmatmul.mubr.f32.gmra.mxu0 %v1941
  %v4967 = vpop.f32.mrf.mxu0
  %v4968 = vadd.f32 0.0, %v4967
  %v4969 = vpop.f32.mrf.mxu0
  %4970 = vmatprep.mubr.f32.mxu0 0.0
  %4971 = vmatmul.mubr.f32.gmra.mxu0 %v1943
  %v4972 = vpop.f32.mrf.mxu0
  %v4973 = vadd.f32 0.0, %v4972
  %v4974 = vpop.f32.mrf.mxu0
  %4975 = vmatprep.mubr.f32.mxu0 0.0
  %4976 = vmatmul.mubr.f32.gmra.mxu0 %v1945
  %v4977 = vpop.f32.mrf.mxu0
  %v4978 = vadd.f32 0.0, %v4977
  %v4979 = vpop.f32.mrf.mxu0
  %4980 = vmatprep.mubr.f32.mxu0 0.0
  %4981 = vmatmul.mubr.f32.gmra.mxu0 %v1947
  %v4982 = vpop.f32.mrf.mxu0
  %v4983 = vadd.f32 0.0, %v4982
  %v4984 = vpop.f32.mrf.mxu0
  %4985 = vmatprep.mubr.f32.mxu0 0.0
  %4986 = vmatmul.mubr.f32.gmra.mxu0 %v1949
  %v4987 = vpop.f32.mrf.mxu0
  %v4988 = vadd.f32 0.0, %v4987
  %v4989 = vpop.f32.mrf.mxu0
  %4990 = vmatprep.mubr.f32.mxu0 0.0
  %4991 = vmatmul.mubr.f32.gmra.mxu0 %v1951
  %v4992 = vpop.f32.mrf.mxu0
  %v4993 = vadd.f32 0.0, %v4992
  %v4994 = vpop.f32.mrf.mxu0
  %4995 = vmatprep.mubr.f32.mxu0 0.0
  %4996 = vmatmul.mubr.f32.gmra.mxu0 %v1953
  %v4997 = vpop.f32.mrf.mxu0
  %v4998 = vadd.f32 0.0, %v4997
  %v4999 = vpop.f32.mrf.mxu0
  %5000 = vmatprep.mubr.f32.mxu0 0.0
  %5001 = vmatmul.mubr.f32.gmra.mxu0 %v1955
  %v5002 = vpop.f32.mrf.mxu0
  %v5003 = vadd.f32 0.0, %v5002
  %v5004 = vpop.f32.mrf.mxu0
  %5005 = vmatprep.mubr.f32.mxu0 0.0
  %5006 = vmatmul.mubr.f32.gmra.mxu0 %v1957
  %v5007 = vpop.f32.mrf.mxu0
  %v5008 = vadd.f32 0.0, %v5007
  %v5009 = vpop.f32.mrf.mxu0
  %5010 = vmatprep.mubr.f32.mxu0 0.0
  %5011 = vmatmul.mubr.f32.gmra.mxu0 %v1959
  %v5012 = vpop.f32.mrf.mxu0
  %v5013 = vadd.f32 0.0, %v5012
  %v5014 = vpop.f32.mrf.mxu0
  %5015 = vmatprep.mubr.f32.mxu0 0.0
  %5016 = vmatmul.mubr.f32.gmra.mxu0 %v1961
  %v5017 = vpop.f32.mrf.mxu0
  %v5018 = vadd.f32 0.0, %v5017
  %v5019 = vpop.f32.mrf.mxu0
  %5020 = vmatprep.mubr.f32.mxu0 0.0
  %5021 = vmatmul.mubr.f32.gmra.mxu0 %v1963
  %v5022 = vpop.f32.mrf.mxu0
  %v5023 = vadd.f32 0.0, %v5022
  %v5024 = vpop.f32.mrf.mxu0
  %5025 = vmatprep.mubr.f32.mxu0 0.0
  %5026 = vmatmul.mubr.f32.gmra.mxu0 %v1965
  %v5027 = vpop.f32.mrf.mxu0
  %v5028 = vadd.f32 0.0, %v5027
  %v5029 = vpop.f32.mrf.mxu0
  %5030 = vmatprep.mubr.f32.mxu0 0.0
  %5031 = vmatmul.mubr.f32.gmra.mxu0 %v1967
  %v5032 = vpop.f32.mrf.mxu0
  %v5033 = vadd.f32 0.0, %v5032
  %v5034 = vpop.f32.mrf.mxu0
  %5035 = vmatprep.mubr.f32.mxu0 0.0
  %5036 = vmatmul.mubr.f32.gmra.mxu0 %v1969
  %v5037 = vpop.f32.mrf.mxu0
  %v5038 = vadd.f32 0.0, %v5037
  %v5039 = vpop.f32.mrf.mxu0
  %5040 = vmatprep.mubr.f32.mxu0 0.0
  %5041 = vmatmul.mubr.f32.gmra.mxu0 %v1971
  %v5042 = vpop.f32.mrf.mxu0
  %v5043 = vadd.f32 0.0, %v5042
  %v5044 = vpop.f32.mrf.mxu0
  %5045 = vmatprep.mubr.f32.mxu0 0.0
  %5046 = vmatmul.mubr.f32.gmra.mxu0 %v1973
  %v5047 = vpop.f32.mrf.mxu0
  %v5048 = vadd.f32 0.0, %v5047
  %v5049 = vpop.f32.mrf.mxu0
  %5050 = vmatprep.mubr.f32.mxu0 0.0
  %5051 = vmatmul.mubr.f32.gmra.mxu0 %v1975
  %v5052 = vpop.f32.mrf.mxu0
  %v5053 = vadd.f32 0.0, %v5052
  %v5054 = vpop.f32.mrf.mxu0
  %5055 = vmatprep.mubr.f32.mxu0 0.0
  %5056 = vmatmul.mubr.f32.gmra.mxu0 %v1977
  %v5057 = vpop.f32.mrf.mxu0
  %v5058 = vadd.f32 0.0, %v5057
  %v5059 = vpop.f32.mrf.mxu0
  %5060 = vmatprep.mubr.f32.mxu0 0.0
  %5061 = vmatmul.mubr.f32.gmra.mxu0 %v1979
  %v5062 = vpop.f32.mrf.mxu0
  %v5063 = vadd.f32 0.0, %v5062
  %v5064 = vpop.f32.mrf.mxu0
  %5065 = vmatprep.mubr.f32.mxu0 0.0
  %5066 = vmatmul.mubr.f32.gmra.mxu0 %v1981
  %v5067 = vpop.f32.mrf.mxu0
  %v5068 = vadd.f32 0.0, %v5067
  %v5069 = vpop.f32.mrf.mxu0
  %5070 = vmatprep.mubr.f32.mxu0 0.0
  %5071 = vmatmul.mubr.f32.gmra.mxu0 %v1983
  %v5072 = vpop.f32.mrf.mxu0
  %v5073 = vadd.f32 0.0, %v5072
  %v5074 = vpop.f32.mrf.mxu0
  %5075 = vmatprep.mubr.f32.mxu0 0.0
  %5076 = vmatmul.mubr.f32.gmra.mxu0 %v1985
  %v5077 = vpop.f32.mrf.mxu0
  %v5078 = vadd.f32 0.0, %v5077
  %v5079 = vpop.f32.mrf.mxu0
  %5080 = vmatprep.mubr.f32.mxu0 0.0
  %5081 = vmatmul.mubr.f32.gmra.mxu0 %v1987
  %v5082 = vpop.f32.mrf.mxu0
  %v5083 = vadd.f32 0.0, %v5082
  %v5084 = vpop.f32.mrf.mxu0
  %5085 = vmatprep.mubr.f32.mxu0 0.0
  %5086 = vmatmul.mubr.f32.gmra.mxu0 %v1989
  %v5087 = vpop.f32.mrf.mxu0
  %v5088 = vadd.f32 0.0, %v5087
  %v5089 = vpop.f32.mrf.mxu0
  %5090 = vmatprep.mubr.f32.mxu0 0.0
  %5091 = vmatmul.mubr.f32.gmra.mxu0 %v3461
  %v5092 = vpop.f32.mrf.mxu0
  %v5093 = vadd.f32 0.0, %v5092
  %v5094 = vpop.f32.mrf.mxu0
  %5095 = vmatprep.mubr.f32.mxu0 0.0
  %5096 = vmatmul.mubr.f32.gmra.mxu0 %v3463
  %v5097 = vpop.f32.mrf.mxu0
  %v5098 = vadd.f32 0.0, %v5097
  %v5099 = vpop.f32.mrf.mxu0
  %5100 = vmatprep.mubr.f32.mxu0 0.0
  %5101 = vmatmul.mubr.f32.gmra.mxu0 %v4875
  %v5102 = vpop.f32.mrf.mxu0
  %v5103 = vadd.f32 0.0, %v5102
  %v5104 = vpop.f32.mrf.mxu0
  %5105 = vmatprep.mubr.f32.mxu0 0.0
  %5106 = vmatmul.mubr.f32.gmra.mxu0 %v4877
  %v5107 = vpop.f32.mrf.mxu0
  %v5108 = vadd.f32 0.0, %v5107
  %v5109 = vpop.f32.mrf.mxu0
  %5110 = vmatprep.mubr.f32.mxu0 0.0
  %5111 = vmatmul.mubr.f32.gmra.mxu0 %v1999
  %v5112 = vpop.f32.mrf.mxu0
  %v5113 = vadd.f32 0.0, %v5112
  %v5114 = vpop.f32.mrf.mxu0
  %5115 = vmatprep.mubr.f32.mxu0 0.0
  %5116 = vmatmul.mubr.f32.gmra.mxu0 %v2001
  %v5117 = vpop.f32.mrf.mxu0
  %v5118 = vadd.f32 0.0, %v5117
  %v5119 = vpop.f32.mrf.mxu0
  %5120 = vmatprep.mubr.f32.mxu0 0.0
  %5121 = vmatmul.mubr.f32.gmra.mxu0 %v2003
  %v5122 = vpop.f32.mrf.mxu0
  %v5123 = vadd.f32 0.0, %v5122
  %v5124 = vpop.f32.mrf.mxu0
  %5125 = vmatprep.mubr.f32.mxu0 0.0
  %5126 = vmatmul.mubr.f32.gmra.mxu0 %v2005
  %v5127 = vpop.f32.mrf.mxu0
  %v5128 = vadd.f32 0.0, %v5127
  %v5129 = vpop.f32.mrf.mxu0
  %5130 = vmatprep.mubr.f32.mxu0 0.0
  %5131 = vmatmul.mubr.f32.gmra.mxu0 %v2007
  %v5132 = vpop.f32.mrf.mxu0
  %v5133 = vadd.f32 0.0, %v5132
  %v5134 = vpop.f32.mrf.mxu0
  %5135 = vmatprep.mubr.f32.mxu0 0.0
  %5136 = vmatmul.mubr.f32.gmra.mxu0 %v2009
  %v5137 = vpop.f32.mrf.mxu0
  %v5138 = vadd.f32 0.0, %v5137
  %v5139 = vpop.f32.mrf.mxu0
  %5140 = vmatprep.mubr.f32.mxu0 0.0
  %5141 = vmatmul.mubr.f32.gmra.mxu0 %v2011
  %v5142 = vpop.f32.mrf.mxu0
  %v5143 = vadd.f32 0.0, %v5142
  %v5144 = vpop.f32.mrf.mxu0
  %5145 = vmatprep.mubr.f32.mxu0 0.0
  %5146 = vmatmul.mubr.f32.gmra.mxu0 %v2013
  %v5147 = vpop.f32.mrf.mxu0
  %v5148 = vadd.f32 0.0, %v5147
  %v5149 = vpop.f32.mrf.mxu0
  %5150 = vmatprep.mubr.f32.mxu0 0.0
  %5151 = vmatmul.mubr.f32.gmra.mxu0 %v2015
  %v5152 = vpop.f32.mrf.mxu0
  %v5153 = vadd.f32 0.0, %v5152
  %v5154 = vpop.f32.mrf.mxu0
  %5155 = vmatprep.mubr.f32.mxu0 0.0
  %5156 = vmatmul.mubr.f32.gmra.mxu0 %v2017
  %v5157 = vpop.f32.mrf.mxu0
  %v5158 = vadd.f32 0.0, %v5157
  %v5159 = vpop.f32.mrf.mxu0
  %5160 = vmatprep.mubr.f32.mxu0 0.0
  %5161 = vmatmul.mubr.f32.gmra.mxu0 %v2019
  %v5162 = vpop.f32.mrf.mxu0
  %v5163 = vadd.f32 0.0, %v5162
  %v5164 = vpop.f32.mrf.mxu0
  %5165 = vmatprep.mubr.f32.mxu0 0.0
  %5166 = vmatmul.mubr.f32.gmra.mxu0 %v2021
  %v5167 = vpop.f32.mrf.mxu0
  %v5168 = vadd.f32 0.0, %v5167
  %v5169 = vpop.f32.mrf.mxu0
  %5170 = vmatprep.mubr.f32.mxu0 0.0
  %5171 = vmatmul.mubr.f32.gmra.mxu0 %v2023
  %v5172 = vpop.f32.mrf.mxu0
  %v5173 = vadd.f32 0.0, %v5172
  %v5174 = vpop.f32.mrf.mxu0
  %5175 = vmatprep.mubr.f32.mxu0 0.0
  %5176 = vmatmul.mubr.f32.gmra.mxu0 %v2025
  %v5177 = vpop.f32.mrf.mxu0
  %v5178 = vadd.f32 0.0, %v5177
  %v5179 = vpop.f32.mrf.mxu0
  %5180 = vmatprep.mubr.f32.mxu0 0.0
  %5181 = vmatmul.mubr.f32.gmra.mxu0 %v2027
  %v5182 = vpop.f32.mrf.mxu0
  %v5183 = vadd.f32 0.0, %v5182
  %v5184 = vpop.f32.mrf.mxu0
  %5185 = vmatprep.mubr.f32.mxu0 0.0
  %5186 = vmatmul.mubr.f32.gmra.mxu0 %v2029
  %v5187 = vpop.f32.mrf.mxu0
  %v5188 = vadd.f32 0.0, %v5187
  %v5189 = vpop.f32.mrf.mxu0
  %5190 = vmatprep.mubr.f32.mxu0 0.0
  %5191 = vmatmul.mubr.f32.gmra.mxu0 %v2031
  %v5192 = vpop.f32.mrf.mxu0
  %v5193 = vadd.f32 0.0, %v5192
  %v5194 = vpop.f32.mrf.mxu0
  %5195 = vmatprep.mubr.f32.mxu0 0.0
  %5196 = vmatmul.mubr.f32.gmra.mxu0 %v2033
  %v5197 = vpop.f32.mrf.mxu0
  %v5198 = vadd.f32 0.0, %v5197
  %v5199 = vpop.f32.mrf.mxu0
  %5200 = vmatprep.mubr.f32.mxu0 0.0
  %5201 = vmatmul.mubr.f32.gmra.mxu0 %v2035
  %v5202 = vpop.f32.mrf.mxu0
  %v5203 = vadd.f32 0.0, %v5202
  %v5204 = vpop.f32.mrf.mxu0
  %5205 = vmatprep.mubr.f32.mxu0 0.0
  %5206 = vmatmul.mubr.f32.gmra.mxu0 %v2037
  %v5207 = vpop.f32.mrf.mxu0
  %v5208 = vadd.f32 0.0, %v5207
  %v5209 = vpop.f32.mrf.mxu0
  %5210 = vmatprep.mubr.f32.mxu0 0.0
  %5211 = vmatmul.mubr.f32.gmra.mxu0 %v2039
  %v5212 = vpop.f32.mrf.mxu0
  %v5213 = vadd.f32 0.0, %v5212
  %v5214 = vpop.f32.mrf.mxu0
  %5215 = vmatprep.mubr.f32.mxu0 0.0
  %5216 = vmatmul.mubr.f32.gmra.mxu0 %v2041
  %v5217 = vpop.f32.mrf.mxu0
  %v5218 = vadd.f32 0.0, %v5217
  %v5219 = vpop.f32.mrf.mxu0
  %5220 = vmatprep.mubr.f32.mxu0 0.0
  %5221 = vmatmul.mubr.f32.gmra.mxu0 %v2043
  %v5222 = vpop.f32.mrf.mxu0
  %v5223 = vadd.f32 0.0, %v5222
  %v5224 = vpop.f32.mrf.mxu0
  %5225 = vmatprep.mubr.f32.mxu0 0.0
  %5226 = vmatmul.mubr.f32.gmra.mxu0 %v2045
  %v5227 = vpop.f32.mrf.mxu0
  %v5228 = vadd.f32 0.0, %v5227
  %v5229 = vpop.f32.mrf.mxu0
  %5230 = vmatprep.mubr.f32.mxu0 0.0
  %5231 = vmatmul.mubr.f32.gmra.mxu0 %v2047
  %v5232 = vpop.f32.mrf.mxu0
  %v5233 = vadd.f32 0.0, %v5232
  %v5234 = vpop.f32.mrf.mxu0
  %5235 = vmatprep.mubr.f32.mxu0 0.0
  %5236 = vmatmul.mubr.f32.gmra.mxu0 %v2049
  %v5237 = vpop.f32.mrf.mxu0
  %v5238 = vadd.f32 0.0, %v5237
  %v5239 = vpop.f32.mrf.mxu0
  %5240 = vmatprep.mubr.f32.mxu0 0.0
  %5241 = vmatmul.mubr.f32.gmra.mxu0 %v2051
  %v5242 = vpop.f32.mrf.mxu0
  %v5243 = vadd.f32 0.0, %v5242
  %v5244 = vpop.f32.mrf.mxu0
  %5245 = vmatprep.mubr.f32.mxu0 0.0
  %5246 = vmatmul.mubr.f32.gmra.mxu0 %v2053
  %v5247 = vpop.f32.mrf.mxu0
  %v5248 = vadd.f32 0.0, %v5247
  %v5249 = vpop.f32.mrf.mxu0
  %5250 = vmatprep.mubr.f32.mxu0 0.0
  %5251 = vmatmul.mubr.f32.gmra.mxu0 %v3465
  %v5252 = vpop.f32.mrf.mxu0
  %v5253 = vadd.f32 0.0, %v5252
  %v5254 = vpop.f32.mrf.mxu0
  %5255 = vmatprep.mubr.f32.mxu0 0.0
  %5256 = vmatmul.mubr.f32.gmra.mxu0 %v3467
  %v5257 = vpop.f32.mrf.mxu0
  %v5258 = vadd.f32 0.0, %v5257
  %v5259 = vpop.f32.mrf.mxu0
  %5260 = vmatprep.mubr.f32.mxu0 0.0
  %5261 = vmatmul.mubr.f32.gmra.mxu0 %v4879
  %v5262 = vpop.f32.mrf.mxu0
  %v5263 = vadd.f32 0.0, %v5262
  %v5264 = vpop.f32.mrf.mxu0
  %5265 = vmatprep.mubr.f32.mxu0 0.0
  %5266 = vmatmul.mubr.f32.gmra.mxu0 %v4881
  %v5267 = vpop.f32.mrf.mxu0
  %v5268 = vadd.f32 0.0, %v5267
  %v5269 = vpop.f32.mrf.mxu0
  %5270 = vdwg.mxu0
  %v5271 = vadd.f32 %v4797, %v4953
  %v5272 = vadd.f32 %v4798, %v4958
  %v5273 = vadd.f32 %v4799, %v4963
  %v5274 = vadd.f32 %v4800, %v4968
  %v5275 = vadd.f32 %v4801, %v4973
  %v5276 = vadd.f32 %v4802, %v4978
  %v5277 = vadd.f32 %v4803, %v4983
  %v5278 = vadd.f32 %v4804, %v4988
  %v5279 = vadd.f32 %v4805, %v4993
  %v5280 = vadd.f32 %v4806, %v4998
  %v5281 = vadd.f32 %v4807, %v5003
  %v5282 = vadd.f32 %v4808, %v5008
  %v5283 = vadd.f32 %v4809, %v5013
  %v5284 = vadd.f32 %v4810, %v5018
  %v5285 = vadd.f32 %v4811, %v5023
  %v5286 = vadd.f32 %v4812, %v5028
  %v5287 = vadd.f32 %v4813, %v5033
  %v5288 = vadd.f32 %v4814, %v5038
  %v5289 = vadd.f32 %v4815, %v5043
  %v5290 = vadd.f32 %v4816, %v5048
  %v5291 = vadd.f32 %v4817, %v5053
  %v5292 = vadd.f32 %v4818, %v5058
  %v5293 = vadd.f32 %v4819, %v5063
  %v5294 = vadd.f32 %v4820, %v5068
  %v5295 = vadd.f32 %v4821, %v5073
  %v5296 = vadd.f32 %v4822, %v5078
  %v5297 = vadd.f32 %v4823, %v5083
  %v5298 = vadd.f32 %v4824, %v5088
  %v5299 = vadd.f32 %v4825, %v5093
  %v5300 = vadd.f32 %v4826, %v5098
  %v5301 = vadd.f32 %v4827, %v5103
  %v5302 = vadd.f32 %v4828, %v5108
  %v5303 = vadd.f32 %v4829, %v5113
  %v5304 = vadd.f32 %v4830, %v5118
  %v5305 = vadd.f32 %v4831, %v5123
  %v5306 = vadd.f32 %v4832, %v5128
  %v5307 = vadd.f32 %v4833, %v5133
  %v5308 = vadd.f32 %v4834, %v5138
  %v5309 = vadd.f32 %v4835, %v5143
  %v5310 = vadd.f32 %v4836, %v5148
  %v5311 = vadd.f32 %v4837, %v5153
  %v5312 = vadd.f32 %v4838, %v5158
  %v5313 = vadd.f32 %v4839, %v5163
  %v5314 = vadd.f32 %v4840, %v5168
  %v5315 = vadd.f32 %v4841, %v5173
  %v5316 = vadd.f32 %v4842, %v5178
  %v5317 = vadd.f32 %v4843, %v5183
  %v5318 = vadd.f32 %v4844, %v5188
  %v5319 = vadd.f32 %v4845, %v5193
  %v5320 = vadd.f32 %v4846, %v5198
  %v5321 = vadd.f32 %v4847, %v5203
  %v5322 = vadd.f32 %v4848, %v5208
  %v5323 = vadd.f32 %v4849, %v5213
  %v5324 = vadd.f32 %v4850, %v5218
  %v5325 = vadd.f32 %v4851, %v5223
  %v5326 = vadd.f32 %v4852, %v5228
  %v5327 = vadd.f32 %v4853, %v5233
  %v5328 = vadd.f32 %v4854, %v5238
  %v5329 = vadd.f32 %v4855, %v5243
  %v5330 = vadd.f32 %v4856, %v5248
  %v5331 = vadd.f32 %v4857, %v5253
  %v5332 = vadd.f32 %v4858, %v5258
  %v5333 = vadd.f32 %v4859, %v5263
  %v5334 = vadd.f32 %v4860, %v5268
  %v5335 = vld [vmem:[%s2] sm:$0x1]
  %v5337 = vlaneseq
  %v5338 = vshrl.u32 %v5337, 7
  %v5339 = vsub.s32 0, %v5338
  %v5340 = vrot.slane %v5335, %v5339
  %v5342 = vadd.f32 %v5271, %v5340
  %v5343 = vadd.f32 %v5272, %v5340
  %v5344 = vadd.f32 %v5273, %v5340
  %v5345 = vadd.f32 %v5274, %v5340
  %v5346 = vadd.f32 %v5275, %v5340
  %v5347 = vadd.f32 %v5276, %v5340
  %v5348 = vadd.f32 %v5277, %v5340
  %v5349 = vadd.f32 %v5278, %v5340
  %v5350 = vadd.f32 %v5279, %v5340
  %v5351 = vadd.f32 %v5280, %v5340
  %v5352 = vadd.f32 %v5281, %v5340
  %v5353 = vadd.f32 %v5282, %v5340
  %v5354 = vadd.f32 %v5283, %v5340
  %v5355 = vadd.f32 %v5284, %v5340
  %v5356 = vadd.f32 %v5285, %v5340
  %v5357 = vadd.f32 %v5286, %v5340
  %v5358 = vadd.f32 %v5287, %v5340
  %v5359 = vadd.f32 %v5288, %v5340
  %v5360 = vadd.f32 %v5289, %v5340
  %v5361 = vadd.f32 %v5290, %v5340
  %v5362 = vadd.f32 %v5291, %v5340
  %v5363 = vadd.f32 %v5292, %v5340
  %v5364 = vadd.f32 %v5293, %v5340
  %v5365 = vadd.f32 %v5294, %v5340
  %v5366 = vadd.f32 %v5295, %v5340
  %v5367 = vadd.f32 %v5296, %v5340
  %v5368 = vadd.f32 %v5297, %v5340
  %v5369 = vadd.f32 %v5298, %v5340
  %v5370 = vadd.f32 %v5299, %v5340
  %v5371 = vadd.f32 %v5300, %v5340
  %v5372 = vadd.f32 %v5301, %v5340
  %v5373 = vadd.f32 %v5302, %v5340
  %v5374 = vadd.f32 %v5303, %v5340
  %v5375 = vadd.f32 %v5304, %v5340
  %v5376 = vadd.f32 %v5305, %v5340
  %v5377 = vadd.f32 %v5306, %v5340
  %v5378 = vadd.f32 %v5307, %v5340
  %v5379 = vadd.f32 %v5308, %v5340
  %v5380 = vadd.f32 %v5309, %v5340
  %v5381 = vadd.f32 %v5310, %v5340
  %v5382 = vadd.f32 %v5311, %v5340
  %v5383 = vadd.f32 %v5312, %v5340
  %v5384 = vadd.f32 %v5313, %v5340
  %v5385 = vadd.f32 %v5314, %v5340
  %v5386 = vadd.f32 %v5315, %v5340
  %v5387 = vadd.f32 %v5316, %v5340
  %v5388 = vadd.f32 %v5317, %v5340
  %v5389 = vadd.f32 %v5318, %v5340
  %v5390 = vadd.f32 %v5319, %v5340
  %v5391 = vadd.f32 %v5320, %v5340
  %v5392 = vadd.f32 %v5321, %v5340
  %v5393 = vadd.f32 %v5322, %v5340
  %v5394 = vadd.f32 %v5323, %v5340
  %v5395 = vadd.f32 %v5324, %v5340
  %v5396 = vadd.f32 %v5325, %v5340
  %v5397 = vadd.f32 %v5326, %v5340
  %v5398 = vadd.f32 %v5327, %v5340
  %v5399 = vadd.f32 %v5328, %v5340
  %v5400 = vadd.f32 %v5329, %v5340
  %v5401 = vadd.f32 %v5330, %v5340
  %v5402 = vadd.f32 %v5331, %v5340
  %v5403 = vadd.f32 %v5332, %v5340
  %v5404 = vadd.f32 %v5333, %v5340
  %v5405 = vadd.f32 %v5334, %v5340
  %v5406 = vmax.f32 %v5342, 0.0
  %v5407 = vmax.f32 %v5343, 0.0
  %v5408 = vmax.f32 %v5344, 0.0
  %v5409 = vmax.f32 %v5345, 0.0
  %v5410 = vmax.f32 %v5346, 0.0
  %v5411 = vmax.f32 %v5347, 0.0
  %v5412 = vmax.f32 %v5348, 0.0
  %v5413 = vmax.f32 %v5349, 0.0
  %v5414 = vmax.f32 %v5350, 0.0
  %v5415 = vmax.f32 %v5351, 0.0
  %v5416 = vmax.f32 %v5352, 0.0
  %v5417 = vmax.f32 %v5353, 0.0
  %v5418 = vmax.f32 %v5354, 0.0
  %v5419 = vmax.f32 %v5355, 0.0
  %v5420 = vmax.f32 %v5356, 0.0
  %v5421 = vmax.f32 %v5357, 0.0
  %v5422 = vmax.f32 %v5358, 0.0
  %v5423 = vmax.f32 %v5359, 0.0
  %v5424 = vmax.f32 %v5360, 0.0
  %v5425 = vmax.f32 %v5361, 0.0
  %v5426 = vmax.f32 %v5362, 0.0
  %v5427 = vmax.f32 %v5363, 0.0
  %v5428 = vmax.f32 %v5364, 0.0
  %v5429 = vmax.f32 %v5365, 0.0
  %v5430 = vmax.f32 %v5366, 0.0
  %v5431 = vmax.f32 %v5367, 0.0
  %v5432 = vmax.f32 %v5368, 0.0
  %v5433 = vmax.f32 %v5369, 0.0
  %v5434 = vmax.f32 %v5370, 0.0
  %v5435 = vmax.f32 %v5371, 0.0
  %v5436 = vmax.f32 %v5372, 0.0
  %v5437 = vmax.f32 %v5373, 0.0
  %v5438 = vmax.f32 %v5374, 0.0
  %v5439 = vmax.f32 %v5375, 0.0
  %v5440 = vmax.f32 %v5376, 0.0
  %v5441 = vmax.f32 %v5377, 0.0
  %v5442 = vmax.f32 %v5378, 0.0
  %v5443 = vmax.f32 %v5379, 0.0
  %v5444 = vmax.f32 %v5380, 0.0
  %v5445 = vmax.f32 %v5381, 0.0
  %v5446 = vmax.f32 %v5382, 0.0
  %v5447 = vmax.f32 %v5383, 0.0
  %v5448 = vmax.f32 %v5384, 0.0
  %v5449 = vmax.f32 %v5385, 0.0
  %v5450 = vmax.f32 %v5386, 0.0
  %v5451 = vmax.f32 %v5387, 0.0
  %v5452 = vmax.f32 %v5388, 0.0
  %v5453 = vmax.f32 %v5389, 0.0
  %v5454 = vmax.f32 %v5390, 0.0
  %v5455 = vmax.f32 %v5391, 0.0
  %v5456 = vmax.f32 %v5392, 0.0
  %v5457 = vmax.f32 %v5393, 0.0
  %v5458 = vmax.f32 %v5394, 0.0
  %v5459 = vmax.f32 %v5395, 0.0
  %v5460 = vmax.f32 %v5396, 0.0
  %v5461 = vmax.f32 %v5397, 0.0
  %v5462 = vmax.f32 %v5398, 0.0
  %v5463 = vmax.f32 %v5399, 0.0
  %v5464 = vmax.f32 %v5400, 0.0
  %v5465 = vmax.f32 %v5401, 0.0
  %v5466 = vmax.f32 %v5402, 0.0
  %v5467 = vmax.f32 %v5403, 0.0
  %v5468 = vmax.f32 %v5404, 0.0
  %v5469 = vmax.f32 %v5405, 0.0
  %vm5470 = vcmask 64512
  %5471 = vst.msk [vmem:[#allocation3] sm:$0xff] %vm5470, 0.0
  %5472 = vst.msk [vmem:[#allocation3 + $0x8] sm:$0xff] %vm5470, 0.0
  %5473 = vst.msk [vmem:[#allocation3 + $0x10] sm:$0xff] %vm5470, 0.0
  %vm5474 = vcmask 57344
  %5475 = vst.msk [vmem:[#allocation3 + $0x18] sm:$0x1] %vm5474, 0.0
  %5476 = vst.msk [vmem:[#allocation3 + $0x20] sm:$0xff] %vm5470, 0.0
  %5477 = vst.msk [vmem:[#allocation3 + $0x28] sm:$0xff] %vm5470, 0.0
  %5478 = vst.msk [vmem:[#allocation3 + $0x30] sm:$0xff] %vm5470, 0.0
  %5479 = vst.msk [vmem:[#allocation3 + $0x38] sm:$0x1] %vm5474, 0.0
  %5480 = vst.msk [vmem:[#allocation3 + $0x40] sm:$0xff] %vm5470, 0.0
  %5481 = vst.msk [vmem:[#allocation3 + $0x48] sm:$0xff] %vm5470, 0.0
  %5482 = vst.msk [vmem:[#allocation3 + $0x50] sm:$0xff] %vm5470, 0.0
  %5483 = vst.msk [vmem:[#allocation3 + $0x58] sm:$0x1] %vm5474, 0.0
  %5484 = vst.msk [vmem:[#allocation3 + $0x60] sm:$0xff] %vm5470, 0.0
  %5485 = vst.msk [vmem:[#allocation3 + $0x68] sm:$0xff] %vm5470, 0.0
  %5486 = vst.msk [vmem:[#allocation3 + $0x70] sm:$0xff] %vm5470, 0.0
  %5487 = vst.msk [vmem:[#allocation3 + $0x78] sm:$0x1] %vm5474, 0.0
  %5488 = vst.msk [vmem:[#allocation3 + $0x80] sm:$0xff] %vm5470, 0.0
  %5489 = vst.msk [vmem:[#allocation3 + $0x88] sm:$0xff] %vm5470, 0.0
  %5490 = vst.msk [vmem:[#allocation3 + $0x90] sm:$0xff] %vm5470, 0.0
  %5491 = vst.msk [vmem:[#allocation3 + $0x98] sm:$0x1] %vm5474, 0.0
  %5492 = vst.msk [vmem:[#allocation3 + $0xa0] sm:$0xff] %vm5470, 0.0
  %5493 = vst.msk [vmem:[#allocation3 + $0xa8] sm:$0xff] %vm5470, 0.0
  %5494 = vst.msk [vmem:[#allocation3 + $0xb0] sm:$0xff] %vm5470, 0.0
  %5495 = vst.msk [vmem:[#allocation3 + $0xb8] sm:$0x1] %vm5474, 0.0
  %5496 = vst.msk [vmem:[#allocation3 + $0xc0] sm:$0xff] %vm5470, 0.0
  %5497 = vst.msk [vmem:[#allocation3 + $0xc8] sm:$0xff] %vm5470, 0.0
  %5498 = vst.msk [vmem:[#allocation3 + $0xd0] sm:$0xff] %vm5470, 0.0
  %5499 = vst.msk [vmem:[#allocation3 + $0xd8] sm:$0x1] %vm5474, 0.0
  %5500 = vst.msk [vmem:[#allocation3 + $0xe0] sm:$0xff] %vm5470, 0.0
  %5501 = vst.msk [vmem:[#allocation3 + $0xe8] sm:$0xff] %vm5470, 0.0
  %5502 = vst.msk [vmem:[#allocation3 + $0xf0] sm:$0xff] %vm5470, 0.0
  %5503 = vst.msk [vmem:[#allocation3 + $0xf8] sm:$0x1] %vm5474, 0.0
  %5504 = vst.msk [vmem:[#allocation3 + $0x100] sm:$0xff] %vm5470, 0.0
  %5505 = vst.msk [vmem:[#allocation3 + $0x108] sm:$0xff] %vm5470, 0.0
  %5506 = vst.msk [vmem:[#allocation3 + $0x110] sm:$0xff] %vm5470, 0.0
  %5507 = vst.msk [vmem:[#allocation3 + $0x118] sm:$0x1] %vm5474, 0.0
  %5508 = vst.msk [vmem:[#allocation3 + $0x120] sm:$0xff] %vm5470, 0.0
  %5509 = vst.msk [vmem:[#allocation3 + $0x128] sm:$0xff] %vm5470, 0.0
  %5510 = vst.msk [vmem:[#allocation3 + $0x130] sm:$0xff] %vm5470, 0.0
  %5511 = vst.msk [vmem:[#allocation3 + $0x138] sm:$0x1] %vm5474, 0.0
  %5512 = vst.msk [vmem:[#allocation3 + $0x140] sm:$0xff] %vm5470, 0.0
  %5513 = vst.msk [vmem:[#allocation3 + $0x148] sm:$0xff] %vm5470, 0.0
  %5514 = vst.msk [vmem:[#allocation3 + $0x150] sm:$0xff] %vm5470, 0.0
  %5515 = vst.msk [vmem:[#allocation3 + $0x158] sm:$0x1] %vm5474, 0.0
  %5516 = vst.msk [vmem:[#allocation3 + $0x160] sm:$0xff] %vm5470, 0.0
  %5517 = vst.msk [vmem:[#allocation3 + $0x168] sm:$0xff] %vm5470, 0.0
  %5518 = vst.msk [vmem:[#allocation3 + $0x170] sm:$0xff] %vm5470, 0.0
  %5519 = vst.msk [vmem:[#allocation3 + $0x178] sm:$0x1] %vm5474, 0.0
  %5520 = vst.msk [vmem:[#allocation3 + $0x180] sm:$0xff] %vm5470, 0.0
  %5521 = vst.msk [vmem:[#allocation3 + $0x188] sm:$0xff] %vm5470, 0.0
  %5522 = vst.msk [vmem:[#allocation3 + $0x190] sm:$0xff] %vm5470, 0.0
  %5523 = vst.msk [vmem:[#allocation3 + $0x198] sm:$0x1] %vm5474, 0.0
  %5524 = vst.msk [vmem:[#allocation3 + $0x1a0] sm:$0xff] %vm5470, 0.0
  %5525 = vst.msk [vmem:[#allocation3 + $0x1a8] sm:$0xff] %vm5470, 0.0
  %5526 = vst.msk [vmem:[#allocation3 + $0x1b0] sm:$0xff] %vm5470, 0.0
  %5527 = vst.msk [vmem:[#allocation3 + $0x1b8] sm:$0x1] %vm5474, 0.0
  %5528 = vst.msk [vmem:[#allocation3 + $0x1c0] sm:$0xff] %vm5470, 0.0
  %5529 = vst.msk [vmem:[#allocation3 + $0x1c8] sm:$0xff] %vm5470, 0.0
  %5530 = vst.msk [vmem:[#allocation3 + $0x1d0] sm:$0xff] %vm5470, 0.0
  %5531 = vst.msk [vmem:[#allocation3 + $0x1d8] sm:$0x1] %vm5474, 0.0
  %5532 = vst.msk [vmem:[#allocation3 + $0x1e0] sm:$0xff] %vm5470, 0.0
  %5533 = vst.msk [vmem:[#allocation3 + $0x1e8] sm:$0xff] %vm5470, 0.0
  %5534 = vst.msk [vmem:[#allocation3 + $0x1f0] sm:$0xff] %vm5470, 0.0
  %5535 = vst.msk [vmem:[#allocation3 + $0x1f8] sm:$0x1] %vm5474, 0.0
  %5536 = vst.msk [vmem:[#allocation3 + $0x200] sm:$0xff] %vm5470, 0.0
  %5537 = vst.msk [vmem:[#allocation3 + $0x208] sm:$0xff] %vm5470, 0.0
  %5538 = vst.msk [vmem:[#allocation3 + $0x210] sm:$0xff] %vm5470, 0.0
  %5539 = vst.msk [vmem:[#allocation3 + $0x218] sm:$0x1] %vm5474, 0.0
  %5540 = vst.msk [vmem:[#allocation3 + $0x220] sm:$0xff] %vm5470, 0.0
  %5541 = vst.msk [vmem:[#allocation3 + $0x228] sm:$0xff] %vm5470, 0.0
  %5542 = vst.msk [vmem:[#allocation3 + $0x230] sm:$0xff] %vm5470, 0.0
  %5543 = vst.msk [vmem:[#allocation3 + $0x238] sm:$0x1] %vm5474, 0.0
  %5544 = vst.msk [vmem:[#allocation3 + $0x240] sm:$0xff] %vm5470, 0.0
  %5545 = vst.msk [vmem:[#allocation3 + $0x248] sm:$0xff] %vm5470, 0.0
  %5546 = vst.msk [vmem:[#allocation3 + $0x250] sm:$0xff] %vm5470, 0.0
  %5547 = vst.msk [vmem:[#allocation3 + $0x258] sm:$0x1] %vm5474, 0.0
  %5548 = vst.msk [vmem:[#allocation3 + $0x260] sm:$0xff] %vm5470, 0.0
  %5549 = vst.msk [vmem:[#allocation3 + $0x268] sm:$0xff] %vm5470, 0.0
  %5550 = vst.msk [vmem:[#allocation3 + $0x270] sm:$0xff] %vm5470, 0.0
  %5551 = vst.msk [vmem:[#allocation3 + $0x278] sm:$0x1] %vm5474, 0.0
  %5552 = vst.msk [vmem:[#allocation3 + $0x280] sm:$0xff] %vm5470, 0.0
  %5553 = vst.msk [vmem:[#allocation3 + $0x288] sm:$0xff] %vm5470, 0.0
  %5554 = vst.msk [vmem:[#allocation3 + $0x290] sm:$0xff] %vm5470, 0.0
  %5555 = vst.msk [vmem:[#allocation3 + $0x298] sm:$0x1] %vm5474, 0.0
  %5556 = vst.msk [vmem:[#allocation3 + $0x2a0] sm:$0xff] %vm5470, 0.0
  %5557 = vst.msk [vmem:[#allocation3 + $0x2a8] sm:$0xff] %vm5470, 0.0
  %5558 = vst.msk [vmem:[#allocation3 + $0x2b0] sm:$0xff] %vm5470, 0.0
  %5559 = vst.msk [vmem:[#allocation3 + $0x2b8] sm:$0x1] %vm5474, 0.0
  %5560 = vst.msk [vmem:[#allocation3 + $0x2c0] sm:$0xff] %vm5470, 0.0
  %5561 = vst.msk [vmem:[#allocation3 + $0x2c8] sm:$0xff] %vm5470, 0.0
  %5562 = vst.msk [vmem:[#allocation3 + $0x2d0] sm:$0xff] %vm5470, 0.0
  %5563 = vst.msk [vmem:[#allocation3 + $0x2d8] sm:$0x1] %vm5474, 0.0
  %5564 = vst.msk [vmem:[#allocation3 + $0x2e0] sm:$0xff] %vm5470, 0.0
  %5565 = vst.msk [vmem:[#allocation3 + $0x2e8] sm:$0xff] %vm5470, 0.0
  %5566 = vst.msk [vmem:[#allocation3 + $0x2f0] sm:$0xff] %vm5470, 0.0
  %5567 = vst.msk [vmem:[#allocation3 + $0x2f8] sm:$0x1] %vm5474, 0.0
  %5568 = vst.msk [vmem:[#allocation3 + $0x300] sm:$0xff] %vm5470, 0.0
  %5569 = vst.msk [vmem:[#allocation3 + $0x308] sm:$0xff] %vm5470, 0.0
  %5570 = vst.msk [vmem:[#allocation3 + $0x310] sm:$0xff] %vm5470, 0.0
  %5571 = vst.msk [vmem:[#allocation3 + $0x318] sm:$0x1] %vm5474, 0.0
  %5572 = vst.msk [vmem:[#allocation3 + $0x320] sm:$0xff] %vm5470, 0.0
  %5573 = vst.msk [vmem:[#allocation3 + $0x328] sm:$0xff] %vm5470, 0.0
  %5574 = vst.msk [vmem:[#allocation3 + $0x330] sm:$0xff] %vm5470, 0.0
  %5575 = vst.msk [vmem:[#allocation3 + $0x338] sm:$0x1] %vm5474, 0.0
  %5576 = vst.msk [vmem:[#allocation3 + $0x340] sm:$0xff] %vm5470, 0.0
  %5577 = vst.msk [vmem:[#allocation3 + $0x348] sm:$0xff] %vm5470, 0.0
  %5578 = vst.msk [vmem:[#allocation3 + $0x350] sm:$0xff] %vm5470, 0.0
  %5579 = vst.msk [vmem:[#allocation3 + $0x358] sm:$0x1] %vm5474, 0.0
  %5580 = vst.msk [vmem:[#allocation3 + $0x360] sm:$0xff] %vm5470, 0.0
  %5581 = vst.msk [vmem:[#allocation3 + $0x368] sm:$0xff] %vm5470, 0.0
  %5582 = vst.msk [vmem:[#allocation3 + $0x370] sm:$0xff] %vm5470, 0.0
  %5583 = vst.msk [vmem:[#allocation3 + $0x378] sm:$0x1] %vm5474, 0.0
  %5584 = vst.msk [vmem:[#allocation3 + $0x380] sm:$0xff] %vm5470, 0.0
  %5585 = vst.msk [vmem:[#allocation3 + $0x388] sm:$0xff] %vm5470, 0.0
  %5586 = vst.msk [vmem:[#allocation3 + $0x390] sm:$0xff] %vm5470, 0.0
  %5587 = vst.msk [vmem:[#allocation3 + $0x398] sm:$0x1] %vm5474, 0.0
  %5588 = vst.msk [vmem:[#allocation3 + $0x3a0] sm:$0xff] %vm5470, 0.0
  %5589 = vst.msk [vmem:[#allocation3 + $0x3a8] sm:$0xff] %vm5470, 0.0
  %5590 = vst.msk [vmem:[#allocation3 + $0x3b0] sm:$0xff] %vm5470, 0.0
  %5591 = vst.msk [vmem:[#allocation3 + $0x3b8] sm:$0x1] %vm5474, 0.0
  %5592 = vst.msk [vmem:[#allocation3 + $0x3c0] sm:$0xff] %vm5470, 0.0
  %5593 = vst.msk [vmem:[#allocation3 + $0x3c8] sm:$0xff] %vm5470, 0.0
  %5594 = vst.msk [vmem:[#allocation3 + $0x3d0] sm:$0xff] %vm5470, 0.0
  %5595 = vst.msk [vmem:[#allocation3 + $0x3d8] sm:$0x1] %vm5474, 0.0
  %5596 = vst.msk [vmem:[#allocation3 + $0x3e0] sm:$0xff] %vm5470, 0.0
  %5597 = vst.msk [vmem:[#allocation3 + $0x3e8] sm:$0xff] %vm5470, 0.0
  %5598 = vst.msk [vmem:[#allocation3 + $0x3f0] sm:$0xff] %vm5470, 0.0
  %5599 = vst.msk [vmem:[#allocation3 + $0x3f8] sm:$0x1] %vm5474, 0.0
  %5600 = vst.msk [vmem:[#allocation3 + $0x400] sm:$0xff] %vm5470, 0.0
  %5601 = vst.msk [vmem:[#allocation3 + $0x408] sm:$0xff] %vm5470, 0.0
  %5602 = vst.msk [vmem:[#allocation3 + $0x410] sm:$0xff] %vm5470, 0.0
  %5603 = vst.msk [vmem:[#allocation3 + $0x418] sm:$0x1] %vm5474, 0.0
  %5604 = vst.msk [vmem:[#allocation3 + $0x420] sm:$0xff] %vm5470, 0.0
  %5605 = vst.msk [vmem:[#allocation3 + $0x428] sm:$0xff] %vm5470, 0.0
  %5606 = vst.msk [vmem:[#allocation3 + $0x430] sm:$0xff] %vm5470, 0.0
  %5607 = vst.msk [vmem:[#allocation3 + $0x438] sm:$0x1] %vm5474, 0.0
  %5608 = vst.msk [vmem:[#allocation3 + $0x440] sm:$0xff] %vm5470, 0.0
  %5609 = vst.msk [vmem:[#allocation3 + $0x448] sm:$0xff] %vm5470, 0.0
  %5610 = vst.msk [vmem:[#allocation3 + $0x450] sm:$0xff] %vm5470, 0.0
  %5611 = vst.msk [vmem:[#allocation3 + $0x458] sm:$0x1] %vm5474, 0.0
  %5612 = vst.msk [vmem:[#allocation3 + $0x460] sm:$0xff] %vm5470, 0.0
  %5613 = vst.msk [vmem:[#allocation3 + $0x468] sm:$0xff] %vm5470, 0.0
  %5614 = vst.msk [vmem:[#allocation3 + $0x470] sm:$0xff] %vm5470, 0.0
  %5615 = vst.msk [vmem:[#allocation3 + $0x478] sm:$0x1] %vm5474, 0.0
  %s5616 = scalar_lea.vmem [#allocation3], 32
  %5617 = vst.msk [vmem:[%s5616 + $0x8] sm:$0xff] %vm5470, %v5406
  %5618 = vst.msk [vmem:[%s5616 + $0x10] sm:$0xff] %vm5470, %v5407
  %5619 = vst.msk [vmem:[%s5616 + $0x28] sm:$0xff] %vm5470, %v5408
  %5620 = vst.msk [vmem:[%s5616 + $0x30] sm:$0xff] %vm5470, %v5409
  %5621 = vst.msk [vmem:[%s5616 + $0x48] sm:$0xff] %vm5470, %v5410
  %5622 = vst.msk [vmem:[%s5616 + $0x50] sm:$0xff] %vm5470, %v5411
  %5623 = vst.msk [vmem:[%s5616 + $0x68] sm:$0xff] %vm5470, %v5412
  %5624 = vst.msk [vmem:[%s5616 + $0x70] sm:$0xff] %vm5470, %v5413
  %5625 = vst.msk [vmem:[%s5616 + $0x88] sm:$0xff] %vm5470, %v5414
  %5626 = vst.msk [vmem:[%s5616 + $0x90] sm:$0xff] %vm5470, %v5415
  %5627 = vst.msk [vmem:[%s5616 + $0xa8] sm:$0xff] %vm5470, %v5416
  %5628 = vst.msk [vmem:[%s5616 + $0xb0] sm:$0xff] %vm5470, %v5417
  %5629 = vst.msk [vmem:[%s5616 + $0xc8] sm:$0xff] %vm5470, %v5418
  %5630 = vst.msk [vmem:[%s5616 + $0xd0] sm:$0xff] %vm5470, %v5419
  %5631 = vst.msk [vmem:[%s5616 + $0xe8] sm:$0xff] %vm5470, %v5420
  %5632 = vst.msk [vmem:[%s5616 + $0xf0] sm:$0xff] %vm5470, %v5421
  %5633 = vst.msk [vmem:[%s5616 + $0x108] sm:$0xff] %vm5470, %v5422
  %5634 = vst.msk [vmem:[%s5616 + $0x110] sm:$0xff] %vm5470, %v5423
  %5635 = vst.msk [vmem:[%s5616 + $0x128] sm:$0xff] %vm5470, %v5424
  %5636 = vst.msk [vmem:[%s5616 + $0x130] sm:$0xff] %vm5470, %v5425
  %5637 = vst.msk [vmem:[%s5616 + $0x148] sm:$0xff] %vm5470, %v5426
  %5638 = vst.msk [vmem:[%s5616 + $0x150] sm:$0xff] %vm5470, %v5427
  %5639 = vst.msk [vmem:[%s5616 + $0x168] sm:$0xff] %vm5470, %v5428
  %5640 = vst.msk [vmem:[%s5616 + $0x170] sm:$0xff] %vm5470, %v5429
  %5641 = vst.msk [vmem:[%s5616 + $0x188] sm:$0xff] %vm5470, %v5430
  %5642 = vst.msk [vmem:[%s5616 + $0x190] sm:$0xff] %vm5470, %v5431
  %5643 = vst.msk [vmem:[%s5616 + $0x1a8] sm:$0xff] %vm5470, %v5432
  %5644 = vst.msk [vmem:[%s5616 + $0x1b0] sm:$0xff] %vm5470, %v5433
  %5645 = vst.msk [vmem:[%s5616 + $0x1c8] sm:$0xff] %vm5470, %v5434
  %5646 = vst.msk [vmem:[%s5616 + $0x1d0] sm:$0xff] %vm5470, %v5435
  %5647 = vst.msk [vmem:[%s5616 + $0x1e8] sm:$0xff] %vm5470, %v5436
  %5648 = vst.msk [vmem:[%s5616 + $0x1f0] sm:$0xff] %vm5470, %v5437
  %5649 = vst.msk [vmem:[%s5616 + $0x248] sm:$0xff] %vm5470, %v5438
  %5650 = vst.msk [vmem:[%s5616 + $0x250] sm:$0xff] %vm5470, %v5439
  %5651 = vst.msk [vmem:[%s5616 + $0x268] sm:$0xff] %vm5470, %v5440
  %5652 = vst.msk [vmem:[%s5616 + $0x270] sm:$0xff] %vm5470, %v5441
  %5653 = vst.msk [vmem:[%s5616 + $0x288] sm:$0xff] %vm5470, %v5442
  %5654 = vst.msk [vmem:[%s5616 + $0x290] sm:$0xff] %vm5470, %v5443
  %5655 = vst.msk [vmem:[%s5616 + $0x2a8] sm:$0xff] %vm5470, %v5444
  %5656 = vst.msk [vmem:[%s5616 + $0x2b0] sm:$0xff] %vm5470, %v5445
  %5657 = vst.msk [vmem:[%s5616 + $0x2c8] sm:$0xff] %vm5470, %v5446
  %5658 = vst.msk [vmem:[%s5616 + $0x2d0] sm:$0xff] %vm5470, %v5447
  %5659 = vst.msk [vmem:[%s5616 + $0x2e8] sm:$0xff] %vm5470, %v5448
  %5660 = vst.msk [vmem:[%s5616 + $0x2f0] sm:$0xff] %vm5470, %v5449
  %5661 = vst.msk [vmem:[%s5616 + $0x308] sm:$0xff] %vm5470, %v5450
  %5662 = vst.msk [vmem:[%s5616 + $0x310] sm:$0xff] %vm5470, %v5451
  %5663 = vst.msk [vmem:[%s5616 + $0x328] sm:$0xff] %vm5470, %v5452
  %5664 = vst.msk [vmem:[%s5616 + $0x330] sm:$0xff] %vm5470, %v5453
  %5665 = vst.msk [vmem:[%s5616 + $0x348] sm:$0xff] %vm5470, %v5454
  %5666 = vst.msk [vmem:[%s5616 + $0x350] sm:$0xff] %vm5470, %v5455
  %5667 = vst.msk [vmem:[%s5616 + $0x368] sm:$0xff] %vm5470, %v5456
  %5668 = vst.msk [vmem:[%s5616 + $0x370] sm:$0xff] %vm5470, %v5457
  %5669 = vst.msk [vmem:[%s5616 + $0x388] sm:$0xff] %vm5470, %v5458
  %5670 = vst.msk [vmem:[%s5616 + $0x390] sm:$0xff] %vm5470, %v5459
  %5671 = vst.msk [vmem:[%s5616 + $0x3a8] sm:$0xff] %vm5470, %v5460
  %5672 = vst.msk [vmem:[%s5616 + $0x3b0] sm:$0xff] %vm5470, %v5461
  %5673 = vst.msk [vmem:[%s5616 + $0x3c8] sm:$0xff] %vm5470, %v5462
  %5674 = vst.msk [vmem:[%s5616 + $0x3d0] sm:$0xff] %vm5470, %v5463
  %5675 = vst.msk [vmem:[%s5616 + $0x3e8] sm:$0xff] %vm5470, %v5464
  %5676 = vst.msk [vmem:[%s5616 + $0x3f0] sm:$0xff] %vm5470, %v5465
  %5677 = vst.msk [vmem:[%s5616 + $0x408] sm:$0xff] %vm5470, %v5466
  %5678 = vst.msk [vmem:[%s5616 + $0x410] sm:$0xff] %vm5470, %v5467
  %5679 = vst.msk [vmem:[%s5616 + $0x428] sm:$0xff] %vm5470, %v5468
  %5680 = vst.msk [vmem:[%s5616 + $0x430] sm:$0xff] %vm5470, %v5469
  %v5681 = vld [vmem:[#allocation3] sm:$0xff]
  %v5682 = vld [vmem:[#allocation3 + $0x8] sm:$0xff]
  %v5683 = vld [vmem:[#allocation3 + $0x10] sm:$0xff]
  %v5684 = vld [vmem:[#allocation3 + $0x18] sm:$0x1]
  %v5685 = vld [vmem:[#allocation3 + $0x20] sm:$0xff]
  %v5686 = vld [vmem:[#allocation3 + $0x28] sm:$0xff]
  %v5687 = vld [vmem:[#allocation3 + $0x30] sm:$0xff]
  %v5688 = vld [vmem:[#allocation3 + $0x38] sm:$0x1]
  %v5689 = vld [vmem:[#allocation3 + $0x40] sm:$0xff]
  %v5690 = vld [vmem:[#allocation3 + $0x48] sm:$0xff]
  %v5691 = vld [vmem:[#allocation3 + $0x50] sm:$0xff]
  %v5692 = vld [vmem:[#allocation3 + $0x58] sm:$0x1]
  %v5693 = vld [vmem:[#allocation3 + $0x60] sm:$0xff]
  %v5694 = vld [vmem:[#allocation3 + $0x68] sm:$0xff]
  %v5695 = vld [vmem:[#allocation3 + $0x70] sm:$0xff]
  %v5696 = vld [vmem:[#allocation3 + $0x78] sm:$0x1]
  %v5697 = vld [vmem:[#allocation3 + $0x80] sm:$0xff]
  %v5698 = vld [vmem:[#allocation3 + $0x88] sm:$0xff]
  %v5699 = vld [vmem:[#allocation3 + $0x90] sm:$0xff]
  %v5700 = vld [vmem:[#allocation3 + $0x98] sm:$0x1]
  %v5701 = vld [vmem:[#allocation3 + $0xa0] sm:$0xff]
  %v5702 = vld [vmem:[#allocation3 + $0xa8] sm:$0xff]
  %v5703 = vld [vmem:[#allocation3 + $0xb0] sm:$0xff]
  %v5704 = vld [vmem:[#allocation3 + $0xb8] sm:$0x1]
  %v5705 = vld [vmem:[#allocation3 + $0xc0] sm:$0xff]
  %v5706 = vld [vmem:[#allocation3 + $0xc8] sm:$0xff]
  %v5707 = vld [vmem:[#allocation3 + $0xd0] sm:$0xff]
  %v5708 = vld [vmem:[#allocation3 + $0xd8] sm:$0x1]
  %v5709 = vld [vmem:[#allocation3 + $0xe0] sm:$0xff]
  %v5710 = vld [vmem:[#allocation3 + $0xe8] sm:$0xff]
  %v5711 = vld [vmem:[#allocation3 + $0xf0] sm:$0xff]
  %v5712 = vld [vmem:[#allocation3 + $0xf8] sm:$0x1]
  %v5713 = vld [vmem:[#allocation3 + $0x100] sm:$0xff]
  %v5714 = vld [vmem:[#allocation3 + $0x108] sm:$0xff]
  %v5715 = vld [vmem:[#allocation3 + $0x110] sm:$0xff]
  %v5716 = vld [vmem:[#allocation3 + $0x118] sm:$0x1]
  %v5717 = vld [vmem:[#allocation3 + $0x120] sm:$0xff]
  %v5718 = vld [vmem:[#allocation3 + $0x128] sm:$0xff]
  %v5719 = vld [vmem:[#allocation3 + $0x130] sm:$0xff]
  %v5720 = vld [vmem:[#allocation3 + $0x138] sm:$0x1]
  %v5721 = vld [vmem:[#allocation3 + $0x140] sm:$0xff]
  %v5722 = vld [vmem:[#allocation3 + $0x148] sm:$0xff]
  %v5723 = vld [vmem:[#allocation3 + $0x150] sm:$0xff]
  %v5724 = vld [vmem:[#allocation3 + $0x158] sm:$0x1]
  %v5725 = vld [vmem:[#allocation3 + $0x160] sm:$0xff]
  %v5726 = vld [vmem:[#allocation3 + $0x168] sm:$0xff]
  %v5727 = vld [vmem:[#allocation3 + $0x170] sm:$0xff]
  %v5728 = vld [vmem:[#allocation3 + $0x178] sm:$0x1]
  %v5729 = vld [vmem:[#allocation3 + $0x180] sm:$0xff]
  %v5730 = vld [vmem:[#allocation3 + $0x188] sm:$0xff]
  %v5731 = vld [vmem:[#allocation3 + $0x190] sm:$0xff]
  %v5732 = vld [vmem:[#allocation3 + $0x198] sm:$0x1]
  %v5733 = vld [vmem:[#allocation3 + $0x1a0] sm:$0xff]
  %v5734 = vld [vmem:[#allocation3 + $0x1a8] sm:$0xff]
  %v5735 = vld [vmem:[#allocation3 + $0x1b0] sm:$0xff]
  %v5736 = vld [vmem:[#allocation3 + $0x1b8] sm:$0x1]
  %v5737 = vld [vmem:[#allocation3 + $0x1c0] sm:$0xff]
  %v5738 = vld [vmem:[#allocation3 + $0x1c8] sm:$0xff]
  %v5739 = vld [vmem:[#allocation3 + $0x1d0] sm:$0xff]
  %v5740 = vld [vmem:[#allocation3 + $0x1d8] sm:$0x1]
  %v5741 = vld [vmem:[#allocation3 + $0x1e0] sm:$0xff]
  %v5742 = vld [vmem:[#allocation3 + $0x1e8] sm:$0xff]
  %v5743 = vld [vmem:[#allocation3 + $0x1f0] sm:$0xff]
  %v5744 = vld [vmem:[#allocation3 + $0x1f8] sm:$0x1]
  %v5745 = vld [vmem:[#allocation3 + $0x200] sm:$0xff]
  %v5746 = vld [vmem:[#allocation3 + $0x208] sm:$0xff]
  %v5747 = vld [vmem:[#allocation3 + $0x210] sm:$0xff]
  %v5748 = vld [vmem:[#allocation3 + $0x218] sm:$0x1]
  %v5749 = vld [vmem:[#allocation3 + $0x220] sm:$0xff]
  %v5750 = vld [vmem:[#allocation3 + $0x228] sm:$0xff]
  %v5751 = vld [vmem:[#allocation3 + $0x230] sm:$0xff]
  %v5752 = vld [vmem:[#allocation3 + $0x238] sm:$0x1]
  %v5753 = vld [vmem:[#allocation3 + $0x240] sm:$0xff]
  %v5754 = vld [vmem:[#allocation3 + $0x248] sm:$0xff]
  %v5755 = vld [vmem:[#allocation3 + $0x250] sm:$0xff]
  %v5756 = vld [vmem:[#allocation3 + $0x258] sm:$0x1]
  %v5757 = vld [vmem:[#allocation3 + $0x260] sm:$0xff]
  %v5758 = vld [vmem:[#allocation3 + $0x268] sm:$0xff]
  %v5759 = vld [vmem:[#allocation3 + $0x270] sm:$0xff]
  %v5760 = vld [vmem:[#allocation3 + $0x278] sm:$0x1]
  %v5761 = vld [vmem:[#allocation3 + $0x280] sm:$0xff]
  %v5762 = vld [vmem:[#allocation3 + $0x288] sm:$0xff]
  %v5763 = vld [vmem:[#allocation3 + $0x290] sm:$0xff]
  %v5764 = vld [vmem:[#allocation3 + $0x298] sm:$0x1]
  %v5765 = vld [vmem:[#allocation3 + $0x2a0] sm:$0xff]
  %v5766 = vld [vmem:[#allocation3 + $0x2a8] sm:$0xff]
  %v5767 = vld [vmem:[#allocation3 + $0x2b0] sm:$0xff]
  %v5768 = vld [vmem:[#allocation3 + $0x2b8] sm:$0x1]
  %v5769 = vld [vmem:[#allocation3 + $0x2c0] sm:$0xff]
  %v5770 = vld [vmem:[#allocation3 + $0x2c8] sm:$0xff]
  %v5771 = vld [vmem:[#allocation3 + $0x2d0] sm:$0xff]
  %v5772 = vld [vmem:[#allocation3 + $0x2d8] sm:$0x1]
  %v5773 = vld [vmem:[#allocation3 + $0x2e0] sm:$0xff]
  %v5774 = vld [vmem:[#allocation3 + $0x2e8] sm:$0xff]
  %v5775 = vld [vmem:[#allocation3 + $0x2f0] sm:$0xff]
  %v5776 = vld [vmem:[#allocation3 + $0x2f8] sm:$0x1]
  %v5777 = vld [vmem:[#allocation3 + $0x300] sm:$0xff]
  %v5778 = vld [vmem:[#allocation3 + $0x308] sm:$0xff]
  %v5779 = vld [vmem:[#allocation3 + $0x310] sm:$0xff]
  %v5780 = vld [vmem:[#allocation3 + $0x318] sm:$0x1]
  %v5781 = vld [vmem:[#allocation3 + $0x320] sm:$0xff]
  %v5782 = vld [vmem:[#allocation3 + $0x328] sm:$0xff]
  %v5783 = vld [vmem:[#allocation3 + $0x330] sm:$0xff]
  %v5784 = vld [vmem:[#allocation3 + $0x338] sm:$0x1]
  %v5785 = vld [vmem:[#allocation3 + $0x340] sm:$0xff]
  %v5786 = vld [vmem:[#allocation3 + $0x348] sm:$0xff]
  %v5787 = vld [vmem:[#allocation3 + $0x350] sm:$0xff]
  %v5788 = vld [vmem:[#allocation3 + $0x358] sm:$0x1]
  %v5789 = vld [vmem:[#allocation3 + $0x360] sm:$0xff]
  %v5790 = vld [vmem:[#allocation3 + $0x368] sm:$0xff]
  %v5791 = vld [vmem:[#allocation3 + $0x370] sm:$0xff]
  %v5792 = vld [vmem:[#allocation3 + $0x378] sm:$0x1]
  %v5793 = vld [vmem:[#allocation3 + $0x380] sm:$0xff]
  %v5794 = vld [vmem:[#allocation3 + $0x388] sm:$0xff]
  %v5795 = vld [vmem:[#allocation3 + $0x390] sm:$0xff]
  %v5796 = vld [vmem:[#allocation3 + $0x398] sm:$0x1]
  %v5797 = vld [vmem:[#allocation3 + $0x3a0] sm:$0xff]
  %v5798 = vld [vmem:[#allocation3 + $0x3a8] sm:$0xff]
  %v5799 = vld [vmem:[#allocation3 + $0x3b0] sm:$0xff]
  %v5800 = vld [vmem:[#allocation3 + $0x3b8] sm:$0x1]
  %v5801 = vld [vmem:[#allocation3 + $0x3c0] sm:$0xff]
  %v5802 = vld [vmem:[#allocation3 + $0x3c8] sm:$0xff]
  %v5803 = vld [vmem:[#allocation3 + $0x3d0] sm:$0xff]
  %v5804 = vld [vmem:[#allocation3 + $0x3d8] sm:$0x1]
  %v5805 = vld [vmem:[#allocation3 + $0x3e0] sm:$0xff]
  %v5806 = vld [vmem:[#allocation3 + $0x3e8] sm:$0xff]
  %v5807 = vld [vmem:[#allocation3 + $0x3f0] sm:$0xff]
  %v5808 = vld [vmem:[#allocation3 + $0x3f8] sm:$0x1]
  %v5809 = vld [vmem:[#allocation3 + $0x400] sm:$0xff]
  %v5810 = vld [vmem:[#allocation3 + $0x408] sm:$0xff]
  %v5811 = vld [vmem:[#allocation3 + $0x410] sm:$0xff]
  %v5812 = vld [vmem:[#allocation3 + $0x418] sm:$0x1]
  %v5813 = vld [vmem:[#allocation3 + $0x420] sm:$0xff]
  %v5814 = vld [vmem:[#allocation3 + $0x428] sm:$0xff]
  %v5815 = vld [vmem:[#allocation3 + $0x430] sm:$0xff]
  %v5816 = vld [vmem:[#allocation3 + $0x438] sm:$0x1]
  %v5817 = vld [vmem:[#allocation3 + $0x440] sm:$0xff]
  %v5818 = vld [vmem:[#allocation3 + $0x448] sm:$0xff]
  %v5819 = vld [vmem:[#allocation3 + $0x450] sm:$0xff]
  %v5820 = vld [vmem:[#allocation3 + $0x458] sm:$0x1]
  %v5821 = vld [vmem:[#allocation3 + $0x460] sm:$0xff]
  %v5822 = vld [vmem:[#allocation3 + $0x468] sm:$0xff]
  %v5823 = vld [vmem:[#allocation3 + $0x470] sm:$0xff]
  %v5824 = vld [vmem:[#allocation3 + $0x478] sm:$0x1]
  %v5921 = vrot.slane %v5681, 7
  %v5922 = vrot.slane %v5682, 7
  %v5923 = vsel %vm535, %v5921, %v5922
  %v5924 = vrot.slane %v5683, 7
  %v5925 = vsel %vm535, %v5922, %v5924
  %v5926 = vrot.slane %v5685, 7
  %v5927 = vrot.slane %v5686, 7
  %v5928 = vsel %vm535, %v5926, %v5927
  %v5929 = vrot.slane %v5687, 7
  %v5930 = vsel %vm535, %v5927, %v5929
  %v5931 = vrot.slane %v5689, 7
  %v5932 = vrot.slane %v5690, 7
  %v5933 = vsel %vm535, %v5931, %v5932
  %v5934 = vrot.slane %v5691, 7
  %v5935 = vsel %vm535, %v5932, %v5934
  %v5936 = vrot.slane %v5693, 7
  %v5937 = vrot.slane %v5694, 7
  %v5938 = vsel %vm535, %v5936, %v5937
  %v5939 = vrot.slane %v5695, 7
  %v5940 = vsel %vm535, %v5937, %v5939
  %v5941 = vrot.slane %v5697, 7
  %v5942 = vrot.slane %v5698, 7
  %v5943 = vsel %vm535, %v5941, %v5942
  %v5944 = vrot.slane %v5699, 7
  %v5945 = vsel %vm535, %v5942, %v5944
  %v5946 = vrot.slane %v5701, 7
  %v5947 = vrot.slane %v5702, 7
  %v5948 = vsel %vm535, %v5946, %v5947
  %v5949 = vrot.slane %v5703, 7
  %v5950 = vsel %vm535, %v5947, %v5949
  %v5951 = vrot.slane %v5705, 7
  %v5952 = vrot.slane %v5706, 7
  %v5953 = vsel %vm535, %v5951, %v5952
  %v5954 = vrot.slane %v5707, 7
  %v5955 = vsel %vm535, %v5952, %v5954
  %v5956 = vrot.slane %v5709, 7
  %v5957 = vrot.slane %v5710, 7
  %v5958 = vsel %vm535, %v5956, %v5957
  %v5959 = vrot.slane %v5711, 7
  %v5960 = vsel %vm535, %v5957, %v5959
  %v5961 = vrot.slane %v5713, 7
  %v5962 = vrot.slane %v5714, 7
  %v5963 = vsel %vm535, %v5961, %v5962
  %v5964 = vrot.slane %v5715, 7
  %v5965 = vsel %vm535, %v5962, %v5964
  %v5966 = vrot.slane %v5717, 7
  %v5967 = vrot.slane %v5718, 7
  %v5968 = vsel %vm535, %v5966, %v5967
  %v5969 = vrot.slane %v5719, 7
  %v5970 = vsel %vm535, %v5967, %v5969
  %v5971 = vrot.slane %v5721, 7
  %v5972 = vrot.slane %v5722, 7
  %v5973 = vsel %vm535, %v5971, %v5972
  %v5974 = vrot.slane %v5723, 7
  %v5975 = vsel %vm535, %v5972, %v5974
  %v5976 = vrot.slane %v5725, 7
  %v5977 = vrot.slane %v5726, 7
  %v5978 = vsel %vm535, %v5976, %v5977
  %v5979 = vrot.slane %v5727, 7
  %v5980 = vsel %vm535, %v5977, %v5979
  %v5981 = vrot.slane %v5729, 7
  %v5982 = vrot.slane %v5730, 7
  %v5983 = vsel %vm535, %v5981, %v5982
  %v5984 = vrot.slane %v5731, 7
  %v5985 = vsel %vm535, %v5982, %v5984
  %v5986 = vrot.slane %v5733, 7
  %v5987 = vrot.slane %v5734, 7
  %v5988 = vsel %vm535, %v5986, %v5987
  %v5989 = vrot.slane %v5735, 7
  %v5990 = vsel %vm535, %v5987, %v5989
  %v5991 = vrot.slane %v5737, 7
  %v5992 = vrot.slane %v5738, 7
  %v5993 = vsel %vm535, %v5991, %v5992
  %v5994 = vrot.slane %v5739, 7
  %v5995 = vsel %vm535, %v5992, %v5994
  %v5996 = vrot.slane %v5741, 7
  %v5997 = vrot.slane %v5742, 7
  %v5998 = vsel %vm535, %v5996, %v5997
  %v5999 = vrot.slane %v5743, 7
  %v6000 = vsel %vm535, %v5997, %v5999
  %v6001 = vrot.slane %v5753, 7
  %v6002 = vrot.slane %v5754, 7
  %v6003 = vsel %vm535, %v6001, %v6002
  %v6004 = vrot.slane %v5755, 7
  %v6005 = vsel %vm535, %v6002, %v6004
  %v6006 = vrot.slane %v5757, 7
  %v6007 = vrot.slane %v5758, 7
  %v6008 = vsel %vm535, %v6006, %v6007
  %v6009 = vrot.slane %v5759, 7
  %v6010 = vsel %vm535, %v6007, %v6009
  %v6011 = vrot.slane %v5761, 7
  %v6012 = vrot.slane %v5762, 7
  %v6013 = vsel %vm535, %v6011, %v6012
  %v6014 = vrot.slane %v5763, 7
  %v6015 = vsel %vm535, %v6012, %v6014
  %v6016 = vrot.slane %v5765, 7
  %v6017 = vrot.slane %v5766, 7
  %v6018 = vsel %vm535, %v6016, %v6017
  %v6019 = vrot.slane %v5767, 7
  %v6020 = vsel %vm535, %v6017, %v6019
  %v6021 = vrot.slane %v5769, 7
  %v6022 = vrot.slane %v5770, 7
  %v6023 = vsel %vm535, %v6021, %v6022
  %v6024 = vrot.slane %v5771, 7
  %v6025 = vsel %vm535, %v6022, %v6024
  %v6026 = vrot.slane %v5773, 7
  %v6027 = vrot.slane %v5774, 7
  %v6028 = vsel %vm535, %v6026, %v6027
  %v6029 = vrot.slane %v5775, 7
  %v6030 = vsel %vm535, %v6027, %v6029
  %v6031 = vrot.slane %v5777, 7
  %v6032 = vrot.slane %v5778, 7
  %v6033 = vsel %vm535, %v6031, %v6032
  %v6034 = vrot.slane %v5779, 7
  %v6035 = vsel %vm535, %v6032, %v6034
  %v6036 = vrot.slane %v5781, 7
  %v6037 = vrot.slane %v5782, 7
  %v6038 = vsel %vm535, %v6036, %v6037
  %v6039 = vrot.slane %v5783, 7
  %v6040 = vsel %vm535, %v6037, %v6039
  %v6041 = vrot.slane %v5785, 7
  %v6042 = vrot.slane %v5786, 7
  %v6043 = vsel %vm535, %v6041, %v6042
  %v6044 = vrot.slane %v5787, 7
  %v6045 = vsel %vm535, %v6042, %v6044
  %v6046 = vrot.slane %v5789, 7
  %v6047 = vrot.slane %v5790, 7
  %v6048 = vsel %vm535, %v6046, %v6047
  %v6049 = vrot.slane %v5791, 7
  %v6050 = vsel %vm535, %v6047, %v6049
  %v6051 = vrot.slane %v5793, 7
  %v6052 = vrot.slane %v5794, 7
  %v6053 = vsel %vm535, %v6051, %v6052
  %v6054 = vrot.slane %v5795, 7
  %v6055 = vsel %vm535, %v6052, %v6054
  %v6056 = vrot.slane %v5797, 7
  %v6057 = vrot.slane %v5798, 7
  %v6058 = vsel %vm535, %v6056, %v6057
  %v6059 = vrot.slane %v5799, 7
  %v6060 = vsel %vm535, %v6057, %v6059
  %v6061 = vrot.slane %v5801, 7
  %v6062 = vrot.slane %v5802, 7
  %v6063 = vsel %vm535, %v6061, %v6062
  %v6064 = vrot.slane %v5803, 7
  %v6065 = vsel %vm535, %v6062, %v6064
  %v6066 = vrot.slane %v5805, 7
  %v6067 = vrot.slane %v5806, 7
  %v6068 = vsel %vm535, %v6066, %v6067
  %v6069 = vrot.slane %v5807, 7
  %v6070 = vsel %vm535, %v6067, %v6069
  %v6071 = vrot.slane %v5809, 7
  %v6072 = vrot.slane %v5810, 7
  %v6073 = vsel %vm535, %v6071, %v6072
  %v6074 = vrot.slane %v5811, 7
  %v6075 = vsel %vm535, %v6072, %v6074
  %v6076 = vrot.slane %v5813, 7
  %v6077 = vrot.slane %v5814, 7
  %v6078 = vsel %vm535, %v6076, %v6077
  %v6079 = vrot.slane %v5815, 7
  %v6080 = vsel %vm535, %v6077, %v6079
  %v6081 = vld [vmem:[%s3] sm:$0xff]
  %s6082 = scalar_lea.vmem %s3, 8
  %v6083 = vld [vmem:[%s6082] sm:$0xff]
  %v6084 = vsel %vm5470, %v5682, 0
  %v6086 = vsel %vm5470, %v5683, 0
  %v6088 = vsel %vm5470, %v5686, 0
  %v6090 = vsel %vm5470, %v5687, 0
  %v6092 = vsel %vm5470, %v5690, 0
  %v6094 = vsel %vm5470, %v5691, 0
  %v6096 = vsel %vm5470, %v5694, 0
  %v6098 = vsel %vm5470, %v5695, 0
  %v6100 = vsel %vm5470, %v5698, 0
  %v6102 = vsel %vm5470, %v5699, 0
  %v6104 = vsel %vm5470, %v5702, 0
  %v6106 = vsel %vm5470, %v5703, 0
  %v6108 = vsel %vm5470, %v5706, 0
  %v6110 = vsel %vm5470, %v5707, 0
  %v6112 = vsel %vm5470, %v5710, 0
  %v6114 = vsel %vm5470, %v5711, 0
  %v6116 = vsel %vm5470, %v5714, 0
  %v6118 = vsel %vm5470, %v5715, 0
  %v6120 = vsel %vm5470, %v5718, 0
  %v6122 = vsel %vm5470, %v5719, 0
  %v6124 = vsel %vm5470, %v5722, 0
  %v6126 = vsel %vm5470, %v5723, 0
  %v6128 = vsel %vm5470, %v5726, 0
  %v6130 = vsel %vm5470, %v5727, 0
  %v6132 = vsel %vm5470, %v5730, 0
  %v6134 = vsel %vm5470, %v5731, 0
  %v6136 = vsel %vm5470, %v5734, 0
  %v6138 = vsel %vm5470, %v5735, 0
  %v6140 = vsel %vm5470, %v5738, 0
  %v6142 = vsel %vm5470, %v5739, 0
  %v6144 = vsel %vm5470, %v5742, 0
  %v6146 = vsel %vm5470, %v5743, 0
  %v6148 = vsel %vm5470, %v5754, 0
  %v6150 = vsel %vm5470, %v5755, 0
  %v6152 = vsel %vm5470, %v5758, 0
  %v6154 = vsel %vm5470, %v5759, 0
  %v6156 = vsel %vm5470, %v5762, 0
  %v6158 = vsel %vm5470, %v5763, 0
  %v6160 = vsel %vm5470, %v5766, 0
  %v6162 = vsel %vm5470, %v5767, 0
  %v6164 = vsel %vm5470, %v5770, 0
  %v6166 = vsel %vm5470, %v5771, 0
  %v6168 = vsel %vm5470, %v5774, 0
  %v6170 = vsel %vm5470, %v5775, 0
  %v6172 = vsel %vm5470, %v5778, 0
  %v6174 = vsel %vm5470, %v5779, 0
  %v6176 = vsel %vm5470, %v5782, 0
  %v6178 = vsel %vm5470, %v5783, 0
  %v6180 = vsel %vm5470, %v5786, 0
  %v6182 = vsel %vm5470, %v5787, 0
  %v6184 = vsel %vm5470, %v5790, 0
  %v6186 = vsel %vm5470, %v5791, 0
  %v6188 = vsel %vm5470, %v5794, 0
  %v6190 = vsel %vm5470, %v5795, 0
  %v6192 = vsel %vm5470, %v5798, 0
  %v6194 = vsel %vm5470, %v5799, 0
  %v6196 = vsel %vm5470, %v5802, 0
  %v6198 = vsel %vm5470, %v5803, 0
  %v6200 = vsel %vm5470, %v5806, 0
  %v6202 = vsel %vm5470, %v5807, 0
  %v6204 = vsel %vm5470, %v5810, 0
  %v6206 = vsel %vm5470, %v5811, 0
  %v6208 = vsel %vm5470, %v5814, 0
  %v6210 = vsel %vm5470, %v5815, 0
  %6212 = vmatprep.subr.mxu0 0.0
  %6213 = vmatpush1.msra.mxu0 0.0
  %6214 = vmatprep.subr.mxu0 0.0
  %6215 = vmatpush1.msra.mxu0 0.0
  %6216 = vmatprep.subr.mxu0 0.0
  %6217 = vmatpush1.msra.mxu0 0.0
  %6218 = vmatprep.subr.mxu0 0.0
  %6219 = vmatpush1.msra.mxu0 0.0
  %6220 = vmatprep.subr.mxu0 0.0
  %6221 = vmatpush1.msra.mxu0 0.0
  %6222 = vmatprep.subr.mxu0 0.0
  %6223 = vmatpush1.msra.mxu0 0.0
  %6224 = vmatprep.subr.mxu0 0.0
  %6225 = vmatpush1.msra.mxu0 0.0
  %6226 = vmatprep.subr.mxu0 0.0
  %6227 = vmatpush1.msra.mxu0 0.0
  %6228 = vmatprep.subr.mxu0 0.0
  %6229 = vmatpush1.msra.mxu0 0.0
  %6230 = vmatprep.subr.mxu0 0.0
  %6231 = vmatpush1.msra.mxu0 0.0
  %6232 = vmatprep.subr.mxu0 0.0
  %6233 = vmatpush1.msra.mxu0 0.0
  %6234 = vmatprep.subr.mxu0 0.0
  %6235 = vmatpush1.msra.mxu0 0.0
  %6236 = vmatprep.subr.mxu0 0.0
  %6237 = vmatpush1.msra.mxu0 0.0
  %6238 = vmatprep.subr.mxu0 0.0
  %6239 = vmatpush1.msra.mxu0 0.0
  %6240 = vmatprep.subr.mxu0 0.0
  %6241 = vmatpush1.msra.mxu0 0.0
  %6242 = vmatprep.subr.mxu0 0.0
  %6243 = vmatpush1.msra.mxu0 %v6083
  %6244 = vmatprep.subr.mxu0 0.0
  %6245 = vmatpush2.msra.mxu0 0.0
  %6246 = vmatprep.subr.mxu0 0.0
  %6247 = vmatpush2.msra.mxu0 0.0
  %6248 = vmatprep.subr.mxu0 0.0
  %6249 = vmatpush2.msra.mxu0 0.0
  %6250 = vmatprep.subr.mxu0 0.0
  %6251 = vmatpush2.msra.mxu0 0.0
  %6252 = vmatprep.subr.mxu0 0.0
  %6253 = vmatpush2.msra.mxu0 0.0
  %6254 = vmatprep.subr.mxu0 0.0
  %6255 = vmatpush2.msra.mxu0 0.0
  %6256 = vmatprep.subr.mxu0 0.0
  %6257 = vmatpush2.msra.mxu0 0.0
  %6258 = vmatprep.subr.mxu0 0.0
  %6259 = vmatpush2.msra.mxu0 0.0
  %6260 = vmatprep.subr.mxu0 0.0
  %6261 = vmatpush2.msra.mxu0 0.0
  %6262 = vmatprep.subr.mxu0 0.0
  %6263 = vmatpush2.msra.mxu0 0.0
  %6264 = vmatprep.subr.mxu0 0.0
  %6265 = vmatpush2.msra.mxu0 0.0
  %6266 = vmatprep.subr.mxu0 0.0
  %6267 = vmatpush2.msra.mxu0 0.0
  %6268 = vmatprep.subr.mxu0 0.0
  %6269 = vmatpush2.msra.mxu0 0.0
  %6270 = vmatprep.subr.mxu0 0.0
  %6271 = vmatpush2.msra.mxu0 0.0
  %6272 = vmatprep.subr.mxu0 0.0
  %6273 = vmatpush2.msra.mxu0 0.0
  %6274 = vmatprep.subr.mxu0 0.0
  %6275 = vmatpush2.msra.mxu0 0.0
  %6276 = vmatprep.mubr.f32.mxu0 0.0
  %6277 = vmatmul.mubr.f32.gmra.mxu0 %v6084
  %v6278 = vpop.f32.mrf.mxu0
  %v6279 = vadd.f32 0.0, %v6278
  %v6280 = vpop.f32.mrf.mxu0
  %6281 = vmatprep.mubr.f32.mxu0 0.0
  %6282 = vmatmul.mubr.f32.gmra.mxu0 %v6086
  %v6283 = vpop.f32.mrf.mxu0
  %v6284 = vadd.f32 0.0, %v6283
  %v6285 = vpop.f32.mrf.mxu0
  %6286 = vmatprep.mubr.f32.mxu0 0.0
  %6287 = vmatmul.mubr.f32.gmra.mxu0 %v6088
  %v6288 = vpop.f32.mrf.mxu0
  %v6289 = vadd.f32 0.0, %v6288
  %v6290 = vpop.f32.mrf.mxu0
  %6291 = vmatprep.mubr.f32.mxu0 0.0
  %6292 = vmatmul.mubr.f32.gmra.mxu0 %v6090
  %v6293 = vpop.f32.mrf.mxu0
  %v6294 = vadd.f32 0.0, %v6293
  %v6295 = vpop.f32.mrf.mxu0
  %6296 = vmatprep.mubr.f32.mxu0 0.0
  %6297 = vmatmul.mubr.f32.gmra.mxu0 %v6092
  %v6298 = vpop.f32.mrf.mxu0
  %v6299 = vadd.f32 0.0, %v6298
  %v6300 = vpop.f32.mrf.mxu0
  %6301 = vmatprep.mubr.f32.mxu0 0.0
  %6302 = vmatmul.mubr.f32.gmra.mxu0 %v6094
  %v6303 = vpop.f32.mrf.mxu0
  %v6304 = vadd.f32 0.0, %v6303
  %v6305 = vpop.f32.mrf.mxu0
  %6306 = vmatprep.mubr.f32.mxu0 0.0
  %6307 = vmatmul.mubr.f32.gmra.mxu0 %v6096
  %v6308 = vpop.f32.mrf.mxu0
  %v6309 = vadd.f32 0.0, %v6308
  %v6310 = vpop.f32.mrf.mxu0
  %6311 = vmatprep.mubr.f32.mxu0 0.0
  %6312 = vmatmul.mubr.f32.gmra.mxu0 %v6098
  %v6313 = vpop.f32.mrf.mxu0
  %v6314 = vadd.f32 0.0, %v6313
  %v6315 = vpop.f32.mrf.mxu0
  %6316 = vmatprep.mubr.f32.mxu0 0.0
  %6317 = vmatmul.mubr.f32.gmra.mxu0 %v6100
  %v6318 = vpop.f32.mrf.mxu0
  %v6319 = vadd.f32 0.0, %v6318
  %v6320 = vpop.f32.mrf.mxu0
  %6321 = vmatprep.mubr.f32.mxu0 0.0
  %6322 = vmatmul.mubr.f32.gmra.mxu0 %v6102
  %v6323 = vpop.f32.mrf.mxu0
  %v6324 = vadd.f32 0.0, %v6323
  %v6325 = vpop.f32.mrf.mxu0
  %6326 = vmatprep.mubr.f32.mxu0 0.0
  %6327 = vmatmul.mubr.f32.gmra.mxu0 %v6104
  %v6328 = vpop.f32.mrf.mxu0
  %v6329 = vadd.f32 0.0, %v6328
  %v6330 = vpop.f32.mrf.mxu0
  %6331 = vmatprep.mubr.f32.mxu0 0.0
  %6332 = vmatmul.mubr.f32.gmra.mxu0 %v6106
  %v6333 = vpop.f32.mrf.mxu0
  %v6334 = vadd.f32 0.0, %v6333
  %v6335 = vpop.f32.mrf.mxu0
  %6336 = vmatprep.mubr.f32.mxu0 0.0
  %6337 = vmatmul.mubr.f32.gmra.mxu0 %v6108
  %v6338 = vpop.f32.mrf.mxu0
  %v6339 = vadd.f32 0.0, %v6338
  %v6340 = vpop.f32.mrf.mxu0
  %6341 = vmatprep.mubr.f32.mxu0 0.0
  %6342 = vmatmul.mubr.f32.gmra.mxu0 %v6110
  %v6343 = vpop.f32.mrf.mxu0
  %v6344 = vadd.f32 0.0, %v6343
  %v6345 = vpop.f32.mrf.mxu0
  %6346 = vmatprep.mubr.f32.mxu0 0.0
  %6347 = vmatmul.mubr.f32.gmra.mxu0 %v6112
  %v6348 = vpop.f32.mrf.mxu0
  %v6349 = vadd.f32 0.0, %v6348
  %v6350 = vpop.f32.mrf.mxu0
  %6351 = vmatprep.mubr.f32.mxu0 0.0
  %6352 = vmatmul.mubr.f32.gmra.mxu0 %v6114
  %v6353 = vpop.f32.mrf.mxu0
  %v6354 = vadd.f32 0.0, %v6353
  %v6355 = vpop.f32.mrf.mxu0
  %6356 = vmatprep.mubr.f32.mxu0 0.0
  %6357 = vmatmul.mubr.f32.gmra.mxu0 %v6116
  %v6358 = vpop.f32.mrf.mxu0
  %v6359 = vadd.f32 0.0, %v6358
  %v6360 = vpop.f32.mrf.mxu0
  %6361 = vmatprep.mubr.f32.mxu0 0.0
  %6362 = vmatmul.mubr.f32.gmra.mxu0 %v6118
  %v6363 = vpop.f32.mrf.mxu0
  %v6364 = vadd.f32 0.0, %v6363
  %v6365 = vpop.f32.mrf.mxu0
  %6366 = vmatprep.mubr.f32.mxu0 0.0
  %6367 = vmatmul.mubr.f32.gmra.mxu0 %v6120
  %v6368 = vpop.f32.mrf.mxu0
  %v6369 = vadd.f32 0.0, %v6368
  %v6370 = vpop.f32.mrf.mxu0
  %6371 = vmatprep.mubr.f32.mxu0 0.0
  %6372 = vmatmul.mubr.f32.gmra.mxu0 %v6122
  %v6373 = vpop.f32.mrf.mxu0
  %v6374 = vadd.f32 0.0, %v6373
  %v6375 = vpop.f32.mrf.mxu0
  %6376 = vmatprep.mubr.f32.mxu0 0.0
  %6377 = vmatmul.mubr.f32.gmra.mxu0 %v6124
  %v6378 = vpop.f32.mrf.mxu0
  %v6379 = vadd.f32 0.0, %v6378
  %v6380 = vpop.f32.mrf.mxu0
  %6381 = vmatprep.mubr.f32.mxu0 0.0
  %6382 = vmatmul.mubr.f32.gmra.mxu0 %v6126
  %v6383 = vpop.f32.mrf.mxu0
  %v6384 = vadd.f32 0.0, %v6383
  %v6385 = vpop.f32.mrf.mxu0
  %6386 = vmatprep.mubr.f32.mxu0 0.0
  %6387 = vmatmul.mubr.f32.gmra.mxu0 %v6128
  %v6388 = vpop.f32.mrf.mxu0
  %v6389 = vadd.f32 0.0, %v6388
  %v6390 = vpop.f32.mrf.mxu0
  %6391 = vmatprep.mubr.f32.mxu0 0.0
  %6392 = vmatmul.mubr.f32.gmra.mxu0 %v6130
  %v6393 = vpop.f32.mrf.mxu0
  %v6394 = vadd.f32 0.0, %v6393
  %v6395 = vpop.f32.mrf.mxu0
  %6396 = vmatprep.mubr.f32.mxu0 0.0
  %6397 = vmatmul.mubr.f32.gmra.mxu0 %v6132
  %v6398 = vpop.f32.mrf.mxu0
  %v6399 = vadd.f32 0.0, %v6398
  %v6400 = vpop.f32.mrf.mxu0
  %6401 = vmatprep.mubr.f32.mxu0 0.0
  %6402 = vmatmul.mubr.f32.gmra.mxu0 %v6134
  %v6403 = vpop.f32.mrf.mxu0
  %v6404 = vadd.f32 0.0, %v6403
  %v6405 = vpop.f32.mrf.mxu0
  %6406 = vmatprep.mubr.f32.mxu0 0.0
  %6407 = vmatmul.mubr.f32.gmra.mxu0 %v6136
  %v6408 = vpop.f32.mrf.mxu0
  %v6409 = vadd.f32 0.0, %v6408
  %v6410 = vpop.f32.mrf.mxu0
  %6411 = vmatprep.mubr.f32.mxu0 0.0
  %6412 = vmatmul.mubr.f32.gmra.mxu0 %v6138
  %v6413 = vpop.f32.mrf.mxu0
  %v6414 = vadd.f32 0.0, %v6413
  %v6415 = vpop.f32.mrf.mxu0
  %6416 = vmatprep.mubr.f32.mxu0 0.0
  %6417 = vmatmul.mubr.f32.gmra.mxu0 %v6140
  %v6418 = vpop.f32.mrf.mxu0
  %v6419 = vadd.f32 0.0, %v6418
  %v6420 = vpop.f32.mrf.mxu0
  %6421 = vmatprep.mubr.f32.mxu0 0.0
  %6422 = vmatmul.mubr.f32.gmra.mxu0 %v6142
  %v6423 = vpop.f32.mrf.mxu0
  %v6424 = vadd.f32 0.0, %v6423
  %v6425 = vpop.f32.mrf.mxu0
  %6426 = vmatprep.mubr.f32.mxu0 0.0
  %6427 = vmatmul.mubr.f32.gmra.mxu0 %v6144
  %v6428 = vpop.f32.mrf.mxu0
  %v6429 = vadd.f32 0.0, %v6428
  %v6430 = vpop.f32.mrf.mxu0
  %6431 = vmatprep.mubr.f32.mxu0 0.0
  %6432 = vmatmul.mubr.f32.gmra.mxu0 %v6146
  %v6433 = vpop.f32.mrf.mxu0
  %v6434 = vadd.f32 0.0, %v6433
  %v6435 = vpop.f32.mrf.mxu0
  %6436 = vmatprep.mubr.f32.mxu0 0.0
  %6437 = vmatmul.mubr.f32.gmra.mxu0 %v6148
  %v6438 = vpop.f32.mrf.mxu0
  %v6439 = vadd.f32 0.0, %v6438
  %v6440 = vpop.f32.mrf.mxu0
  %6441 = vmatprep.mubr.f32.mxu0 0.0
  %6442 = vmatmul.mubr.f32.gmra.mxu0 %v6150
  %v6443 = vpop.f32.mrf.mxu0
  %v6444 = vadd.f32 0.0, %v6443
  %v6445 = vpop.f32.mrf.mxu0
  %6446 = vmatprep.mubr.f32.mxu0 0.0
  %6447 = vmatmul.mubr.f32.gmra.mxu0 %v6152
  %v6448 = vpop.f32.mrf.mxu0
  %v6449 = vadd.f32 0.0, %v6448
  %v6450 = vpop.f32.mrf.mxu0
  %6451 = vmatprep.mubr.f32.mxu0 0.0
  %6452 = vmatmul.mubr.f32.gmra.mxu0 %v6154
  %v6453 = vpop.f32.mrf.mxu0
  %v6454 = vadd.f32 0.0, %v6453
  %v6455 = vpop.f32.mrf.mxu0
  %6456 = vmatprep.mubr.f32.mxu0 0.0
  %6457 = vmatmul.mubr.f32.gmra.mxu0 %v6156
  %v6458 = vpop.f32.mrf.mxu0
  %v6459 = vadd.f32 0.0, %v6458
  %v6460 = vpop.f32.mrf.mxu0
  %6461 = vmatprep.mubr.f32.mxu0 0.0
  %6462 = vmatmul.mubr.f32.gmra.mxu0 %v6158
  %v6463 = vpop.f32.mrf.mxu0
  %v6464 = vadd.f32 0.0, %v6463
  %v6465 = vpop.f32.mrf.mxu0
  %6466 = vmatprep.mubr.f32.mxu0 0.0
  %6467 = vmatmul.mubr.f32.gmra.mxu0 %v6160
  %v6468 = vpop.f32.mrf.mxu0
  %v6469 = vadd.f32 0.0, %v6468
  %v6470 = vpop.f32.mrf.mxu0
  %6471 = vmatprep.mubr.f32.mxu0 0.0
  %6472 = vmatmul.mubr.f32.gmra.mxu0 %v6162
  %v6473 = vpop.f32.mrf.mxu0
  %v6474 = vadd.f32 0.0, %v6473
  %v6475 = vpop.f32.mrf.mxu0
  %6476 = vmatprep.mubr.f32.mxu0 0.0
  %6477 = vmatmul.mubr.f32.gmra.mxu0 %v6164
  %v6478 = vpop.f32.mrf.mxu0
  %v6479 = vadd.f32 0.0, %v6478
  %v6480 = vpop.f32.mrf.mxu0
  %6481 = vmatprep.mubr.f32.mxu0 0.0
  %6482 = vmatmul.mubr.f32.gmra.mxu0 %v6166
  %v6483 = vpop.f32.mrf.mxu0
  %v6484 = vadd.f32 0.0, %v6483
  %v6485 = vpop.f32.mrf.mxu0
  %6486 = vmatprep.mubr.f32.mxu0 0.0
  %6487 = vmatmul.mubr.f32.gmra.mxu0 %v6168
  %v6488 = vpop.f32.mrf.mxu0
  %v6489 = vadd.f32 0.0, %v6488
  %v6490 = vpop.f32.mrf.mxu0
  %6491 = vmatprep.mubr.f32.mxu0 0.0
  %6492 = vmatmul.mubr.f32.gmra.mxu0 %v6170
  %v6493 = vpop.f32.mrf.mxu0
  %v6494 = vadd.f32 0.0, %v6493
  %v6495 = vpop.f32.mrf.mxu0
  %6496 = vmatprep.mubr.f32.mxu0 0.0
  %6497 = vmatmul.mubr.f32.gmra.mxu0 %v6172
  %v6498 = vpop.f32.mrf.mxu0
  %v6499 = vadd.f32 0.0, %v6498
  %v6500 = vpop.f32.mrf.mxu0
  %6501 = vmatprep.mubr.f32.mxu0 0.0
  %6502 = vmatmul.mubr.f32.gmra.mxu0 %v6174
  %v6503 = vpop.f32.mrf.mxu0
  %v6504 = vadd.f32 0.0, %v6503
  %v6505 = vpop.f32.mrf.mxu0
  %6506 = vmatprep.mubr.f32.mxu0 0.0
  %6507 = vmatmul.mubr.f32.gmra.mxu0 %v6176
  %v6508 = vpop.f32.mrf.mxu0
  %v6509 = vadd.f32 0.0, %v6508
  %v6510 = vpop.f32.mrf.mxu0
  %6511 = vmatprep.mubr.f32.mxu0 0.0
  %6512 = vmatmul.mubr.f32.gmra.mxu0 %v6178
  %v6513 = vpop.f32.mrf.mxu0
  %v6514 = vadd.f32 0.0, %v6513
  %v6515 = vpop.f32.mrf.mxu0
  %6516 = vmatprep.mubr.f32.mxu0 0.0
  %6517 = vmatmul.mubr.f32.gmra.mxu0 %v6180
  %v6518 = vpop.f32.mrf.mxu0
  %v6519 = vadd.f32 0.0, %v6518
  %v6520 = vpop.f32.mrf.mxu0
  %6521 = vmatprep.mubr.f32.mxu0 0.0
  %6522 = vmatmul.mubr.f32.gmra.mxu0 %v6182
  %v6523 = vpop.f32.mrf.mxu0
  %v6524 = vadd.f32 0.0, %v6523
  %v6525 = vpop.f32.mrf.mxu0
  %6526 = vmatprep.mubr.f32.mxu0 0.0
  %6527 = vmatmul.mubr.f32.gmra.mxu0 %v6184
  %v6528 = vpop.f32.mrf.mxu0
  %v6529 = vadd.f32 0.0, %v6528
  %v6530 = vpop.f32.mrf.mxu0
  %6531 = vmatprep.mubr.f32.mxu0 0.0
  %6532 = vmatmul.mubr.f32.gmra.mxu0 %v6186
  %v6533 = vpop.f32.mrf.mxu0
  %v6534 = vadd.f32 0.0, %v6533
  %v6535 = vpop.f32.mrf.mxu0
  %6536 = vmatprep.mubr.f32.mxu0 0.0
  %6537 = vmatmul.mubr.f32.gmra.mxu0 %v6188
  %v6538 = vpop.f32.mrf.mxu0
  %v6539 = vadd.f32 0.0, %v6538
  %v6540 = vpop.f32.mrf.mxu0
  %6541 = vmatprep.mubr.f32.mxu0 0.0
  %6542 = vmatmul.mubr.f32.gmra.mxu0 %v6190
  %v6543 = vpop.f32.mrf.mxu0
  %v6544 = vadd.f32 0.0, %v6543
  %v6545 = vpop.f32.mrf.mxu0
  %6546 = vmatprep.mubr.f32.mxu0 0.0
  %6547 = vmatmul.mubr.f32.gmra.mxu0 %v6192
  %v6548 = vpop.f32.mrf.mxu0
  %v6549 = vadd.f32 0.0, %v6548
  %v6550 = vpop.f32.mrf.mxu0
  %6551 = vmatprep.mubr.f32.mxu0 0.0
  %6552 = vmatmul.mubr.f32.gmra.mxu0 %v6194
  %v6553 = vpop.f32.mrf.mxu0
  %v6554 = vadd.f32 0.0, %v6553
  %v6555 = vpop.f32.mrf.mxu0
  %6556 = vmatprep.mubr.f32.mxu0 0.0
  %6557 = vmatmul.mubr.f32.gmra.mxu0 %v6196
  %v6558 = vpop.f32.mrf.mxu0
  %v6559 = vadd.f32 0.0, %v6558
  %v6560 = vpop.f32.mrf.mxu0
  %6561 = vmatprep.mubr.f32.mxu0 0.0
  %6562 = vmatmul.mubr.f32.gmra.mxu0 %v6198
  %v6563 = vpop.f32.mrf.mxu0
  %v6564 = vadd.f32 0.0, %v6563
  %v6565 = vpop.f32.mrf.mxu0
  %6566 = vmatprep.mubr.f32.mxu0 0.0
  %6567 = vmatmul.mubr.f32.gmra.mxu0 %v6200
  %v6568 = vpop.f32.mrf.mxu0
  %v6569 = vadd.f32 0.0, %v6568
  %v6570 = vpop.f32.mrf.mxu0
  %6571 = vmatprep.mubr.f32.mxu0 0.0
  %6572 = vmatmul.mubr.f32.gmra.mxu0 %v6202
  %v6573 = vpop.f32.mrf.mxu0
  %v6574 = vadd.f32 0.0, %v6573
  %v6575 = vpop.f32.mrf.mxu0
  %6576 = vmatprep.mubr.f32.mxu0 0.0
  %6577 = vmatmul.mubr.f32.gmra.mxu0 %v6204
  %v6578 = vpop.f32.mrf.mxu0
  %v6579 = vadd.f32 0.0, %v6578
  %v6580 = vpop.f32.mrf.mxu0
  %6581 = vmatprep.mubr.f32.mxu0 0.0
  %6582 = vmatmul.mubr.f32.gmra.mxu0 %v6206
  %v6583 = vpop.f32.mrf.mxu0
  %v6584 = vadd.f32 0.0, %v6583
  %v6585 = vpop.f32.mrf.mxu0
  %6586 = vmatprep.mubr.f32.mxu0 0.0
  %6587 = vmatmul.mubr.f32.gmra.mxu0 %v6208
  %v6588 = vpop.f32.mrf.mxu0
  %v6589 = vadd.f32 0.0, %v6588
  %v6590 = vpop.f32.mrf.mxu0
  %6591 = vmatprep.mubr.f32.mxu0 0.0
  %6592 = vmatmul.mubr.f32.gmra.mxu0 %v6210
  %v6593 = vpop.f32.mrf.mxu0
  %v6594 = vadd.f32 0.0, %v6593
  %v6595 = vpop.f32.mrf.mxu0
  %6596 = vdwg.mxu0
  %v6597 = vsel %vm5470, %v5923, 0
  %v6599 = vsel %vm5470, %v5925, 0
  %v6601 = vsel %vm5470, %v5928, 0
  %v6603 = vsel %vm5470, %v5930, 0
  %v6605 = vsel %vm5470, %v5933, 0
  %v6607 = vsel %vm5470, %v5935, 0
  %v6609 = vsel %vm5470, %v5938, 0
  %v6611 = vsel %vm5470, %v5940, 0
  %v6613 = vsel %vm5470, %v5943, 0
  %v6615 = vsel %vm5470, %v5945, 0
  %v6617 = vsel %vm5470, %v5948, 0
  %v6619 = vsel %vm5470, %v5950, 0
  %v6621 = vsel %vm5470, %v5953, 0
  %v6623 = vsel %vm5470, %v5955, 0
  %v6625 = vsel %vm5470, %v5958, 0
  %v6627 = vsel %vm5470, %v5960, 0
  %v6629 = vsel %vm5470, %v5963, 0
  %v6631 = vsel %vm5470, %v5965, 0
  %v6633 = vsel %vm5470, %v5968, 0
  %v6635 = vsel %vm5470, %v5970, 0
  %v6637 = vsel %vm5470, %v5973, 0
  %v6639 = vsel %vm5470, %v5975, 0
  %v6641 = vsel %vm5470, %v5978, 0
  %v6643 = vsel %vm5470, %v5980, 0
  %v6645 = vsel %vm5470, %v5983, 0
  %v6647 = vsel %vm5470, %v5985, 0
  %v6649 = vsel %vm5470, %v5988, 0
  %v6651 = vsel %vm5470, %v5990, 0
  %v6653 = vsel %vm5470, %v5993, 0
  %v6655 = vsel %vm5470, %v5995, 0
  %v6657 = vsel %vm5470, %v5998, 0
  %v6659 = vsel %vm5470, %v6000, 0
  %v6661 = vsel %vm5470, %v6003, 0
  %v6663 = vsel %vm5470, %v6005, 0
  %v6665 = vsel %vm5470, %v6008, 0
  %v6667 = vsel %vm5470, %v6010, 0
  %v6669 = vsel %vm5470, %v6013, 0
  %v6671 = vsel %vm5470, %v6015, 0
  %v6673 = vsel %vm5470, %v6018, 0
  %v6675 = vsel %vm5470, %v6020, 0
  %v6677 = vsel %vm5470, %v6023, 0
  %v6679 = vsel %vm5470, %v6025, 0
  %v6681 = vsel %vm5470, %v6028, 0
  %v6683 = vsel %vm5470, %v6030, 0
  %v6685 = vsel %vm5470, %v6033, 0
  %v6687 = vsel %vm5470, %v6035, 0
  %v6689 = vsel %vm5470, %v6038, 0
  %v6691 = vsel %vm5470, %v6040, 0
  %v6693 = vsel %vm5470, %v6043, 0
  %v6695 = vsel %vm5470, %v6045, 0
  %v6697 = vsel %vm5470, %v6048, 0
  %v6699 = vsel %vm5470, %v6050, 0
  %v6701 = vsel %vm5470, %v6053, 0
  %v6703 = vsel %vm5470, %v6055, 0
  %v6705 = vsel %vm5470, %v6058, 0
  %v6707 = vsel %vm5470, %v6060, 0
  %v6709 = vsel %vm5470, %v6063, 0
  %v6711 = vsel %vm5470, %v6065, 0
  %v6713 = vsel %vm5470, %v6068, 0
  %v6715 = vsel %vm5470, %v6070, 0
  %v6717 = vsel %vm5470, %v6073, 0
  %v6719 = vsel %vm5470, %v6075, 0
  %v6721 = vsel %vm5470, %v6078, 0
  %v6723 = vsel %vm5470, %v6080, 0
  %6725 = vmatprep.subr.mxu0 0.0
  %6726 = vmatpush1.msra.mxu0 0.0
  %6727 = vmatprep.subr.mxu0 0.0
  %6728 = vmatpush1.msra.mxu0 0.0
  %6729 = vmatprep.subr.mxu0 0.0
  %6730 = vmatpush1.msra.mxu0 0.0
  %6731 = vmatprep.subr.mxu0 0.0
  %6732 = vmatpush1.msra.mxu0 0.0
  %6733 = vmatprep.subr.mxu0 0.0
  %6734 = vmatpush1.msra.mxu0 0.0
  %6735 = vmatprep.subr.mxu0 0.0
  %6736 = vmatpush1.msra.mxu0 0.0
  %6737 = vmatprep.subr.mxu0 0.0
  %6738 = vmatpush1.msra.mxu0 0.0
  %6739 = vmatprep.subr.mxu0 0.0
  %6740 = vmatpush1.msra.mxu0 0.0
  %6741 = vmatprep.subr.mxu0 0.0
  %6742 = vmatpush1.msra.mxu0 0.0
  %6743 = vmatprep.subr.mxu0 0.0
  %6744 = vmatpush1.msra.mxu0 0.0
  %6745 = vmatprep.subr.mxu0 0.0
  %6746 = vmatpush1.msra.mxu0 0.0
  %6747 = vmatprep.subr.mxu0 0.0
  %6748 = vmatpush1.msra.mxu0 0.0
  %6749 = vmatprep.subr.mxu0 0.0
  %6750 = vmatpush1.msra.mxu0 0.0
  %6751 = vmatprep.subr.mxu0 0.0
  %6752 = vmatpush1.msra.mxu0 0.0
  %6753 = vmatprep.subr.mxu0 0.0
  %6754 = vmatpush1.msra.mxu0 0.0
  %6755 = vmatprep.subr.mxu0 0.0
  %6756 = vmatpush1.msra.mxu0 %v6081
  %6757 = vmatprep.subr.mxu0 0.0
  %6758 = vmatpush2.msra.mxu0 0.0
  %6759 = vmatprep.subr.mxu0 0.0
  %6760 = vmatpush2.msra.mxu0 0.0
  %6761 = vmatprep.subr.mxu0 0.0
  %6762 = vmatpush2.msra.mxu0 0.0
  %6763 = vmatprep.subr.mxu0 0.0
  %6764 = vmatpush2.msra.mxu0 0.0
  %6765 = vmatprep.subr.mxu0 0.0
  %6766 = vmatpush2.msra.mxu0 0.0
  %6767 = vmatprep.subr.mxu0 0.0
  %6768 = vmatpush2.msra.mxu0 0.0
  %6769 = vmatprep.subr.mxu0 0.0
  %6770 = vmatpush2.msra.mxu0 0.0
  %6771 = vmatprep.subr.mxu0 0.0
  %6772 = vmatpush2.msra.mxu0 0.0
  %6773 = vmatprep.subr.mxu0 0.0
  %6774 = vmatpush2.msra.mxu0 0.0
  %6775 = vmatprep.subr.mxu0 0.0
  %6776 = vmatpush2.msra.mxu0 0.0
  %6777 = vmatprep.subr.mxu0 0.0
  %6778 = vmatpush2.msra.mxu0 0.0
  %6779 = vmatprep.subr.mxu0 0.0
  %6780 = vmatpush2.msra.mxu0 0.0
  %6781 = vmatprep.subr.mxu0 0.0
  %6782 = vmatpush2.msra.mxu0 0.0
  %6783 = vmatprep.subr.mxu0 0.0
  %6784 = vmatpush2.msra.mxu0 0.0
  %6785 = vmatprep.subr.mxu0 0.0
  %6786 = vmatpush2.msra.mxu0 0.0
  %6787 = vmatprep.subr.mxu0 0.0
  %6788 = vmatpush2.msra.mxu0 0.0
  %6789 = vmatprep.mubr.f32.mxu0 0.0
  %6790 = vmatmul.mubr.f32.gmra.mxu0 %v6597
  %v6791 = vpop.f32.mrf.mxu0
  %v6792 = vadd.f32 %v6279, %v6791
  %v6793 = vpop.f32.mrf.mxu0
  %6794 = vmatprep.mubr.f32.mxu0 0.0
  %6795 = vmatmul.mubr.f32.gmra.mxu0 %v6599
  %v6796 = vpop.f32.mrf.mxu0
  %v6797 = vadd.f32 %v6284, %v6796
  %v6798 = vpop.f32.mrf.mxu0
  %6799 = vmatprep.mubr.f32.mxu0 0.0
  %6800 = vmatmul.mubr.f32.gmra.mxu0 %v6601
  %v6801 = vpop.f32.mrf.mxu0
  %v6802 = vadd.f32 %v6289, %v6801
  %v6803 = vpop.f32.mrf.mxu0
  %6804 = vmatprep.mubr.f32.mxu0 0.0
  %6805 = vmatmul.mubr.f32.gmra.mxu0 %v6603
  %v6806 = vpop.f32.mrf.mxu0
  %v6807 = vadd.f32 %v6294, %v6806
  %v6808 = vpop.f32.mrf.mxu0
  %6809 = vmatprep.mubr.f32.mxu0 0.0
  %6810 = vmatmul.mubr.f32.gmra.mxu0 %v6605
  %v6811 = vpop.f32.mrf.mxu0
  %v6812 = vadd.f32 %v6299, %v6811
  %v6813 = vpop.f32.mrf.mxu0
  %6814 = vmatprep.mubr.f32.mxu0 0.0
  %6815 = vmatmul.mubr.f32.gmra.mxu0 %v6607
  %v6816 = vpop.f32.mrf.mxu0
  %v6817 = vadd.f32 %v6304, %v6816
  %v6818 = vpop.f32.mrf.mxu0
  %6819 = vmatprep.mubr.f32.mxu0 0.0
  %6820 = vmatmul.mubr.f32.gmra.mxu0 %v6609
  %v6821 = vpop.f32.mrf.mxu0
  %v6822 = vadd.f32 %v6309, %v6821
  %v6823 = vpop.f32.mrf.mxu0
  %6824 = vmatprep.mubr.f32.mxu0 0.0
  %6825 = vmatmul.mubr.f32.gmra.mxu0 %v6611
  %v6826 = vpop.f32.mrf.mxu0
  %v6827 = vadd.f32 %v6314, %v6826
  %v6828 = vpop.f32.mrf.mxu0
  %6829 = vmatprep.mubr.f32.mxu0 0.0
  %6830 = vmatmul.mubr.f32.gmra.mxu0 %v6613
  %v6831 = vpop.f32.mrf.mxu0
  %v6832 = vadd.f32 %v6319, %v6831
  %v6833 = vpop.f32.mrf.mxu0
  %6834 = vmatprep.mubr.f32.mxu0 0.0
  %6835 = vmatmul.mubr.f32.gmra.mxu0 %v6615
  %v6836 = vpop.f32.mrf.mxu0
  %v6837 = vadd.f32 %v6324, %v6836
  %v6838 = vpop.f32.mrf.mxu0
  %6839 = vmatprep.mubr.f32.mxu0 0.0
  %6840 = vmatmul.mubr.f32.gmra.mxu0 %v6617
  %v6841 = vpop.f32.mrf.mxu0
  %v6842 = vadd.f32 %v6329, %v6841
  %v6843 = vpop.f32.mrf.mxu0
  %6844 = vmatprep.mubr.f32.mxu0 0.0
  %6845 = vmatmul.mubr.f32.gmra.mxu0 %v6619
  %v6846 = vpop.f32.mrf.mxu0
  %v6847 = vadd.f32 %v6334, %v6846
  %v6848 = vpop.f32.mrf.mxu0
  %6849 = vmatprep.mubr.f32.mxu0 0.0
  %6850 = vmatmul.mubr.f32.gmra.mxu0 %v6621
  %v6851 = vpop.f32.mrf.mxu0
  %v6852 = vadd.f32 %v6339, %v6851
  %v6853 = vpop.f32.mrf.mxu0
  %6854 = vmatprep.mubr.f32.mxu0 0.0
  %6855 = vmatmul.mubr.f32.gmra.mxu0 %v6623
  %v6856 = vpop.f32.mrf.mxu0
  %v6857 = vadd.f32 %v6344, %v6856
  %v6858 = vpop.f32.mrf.mxu0
  %6859 = vmatprep.mubr.f32.mxu0 0.0
  %6860 = vmatmul.mubr.f32.gmra.mxu0 %v6625
  %v6861 = vpop.f32.mrf.mxu0
  %v6862 = vadd.f32 %v6349, %v6861
  %v6863 = vpop.f32.mrf.mxu0
  %6864 = vmatprep.mubr.f32.mxu0 0.0
  %6865 = vmatmul.mubr.f32.gmra.mxu0 %v6627
  %v6866 = vpop.f32.mrf.mxu0
  %v6867 = vadd.f32 %v6354, %v6866
  %v6868 = vpop.f32.mrf.mxu0
  %6869 = vmatprep.mubr.f32.mxu0 0.0
  %6870 = vmatmul.mubr.f32.gmra.mxu0 %v6629
  %v6871 = vpop.f32.mrf.mxu0
  %v6872 = vadd.f32 %v6359, %v6871
  %v6873 = vpop.f32.mrf.mxu0
  %6874 = vmatprep.mubr.f32.mxu0 0.0
  %6875 = vmatmul.mubr.f32.gmra.mxu0 %v6631
  %v6876 = vpop.f32.mrf.mxu0
  %v6877 = vadd.f32 %v6364, %v6876
  %v6878 = vpop.f32.mrf.mxu0
  %6879 = vmatprep.mubr.f32.mxu0 0.0
  %6880 = vmatmul.mubr.f32.gmra.mxu0 %v6633
  %v6881 = vpop.f32.mrf.mxu0
  %v6882 = vadd.f32 %v6369, %v6881
  %v6883 = vpop.f32.mrf.mxu0
  %6884 = vmatprep.mubr.f32.mxu0 0.0
  %6885 = vmatmul.mubr.f32.gmra.mxu0 %v6635
  %v6886 = vpop.f32.mrf.mxu0
  %v6887 = vadd.f32 %v6374, %v6886
  %v6888 = vpop.f32.mrf.mxu0
  %6889 = vmatprep.mubr.f32.mxu0 0.0
  %6890 = vmatmul.mubr.f32.gmra.mxu0 %v6637
  %v6891 = vpop.f32.mrf.mxu0
  %v6892 = vadd.f32 %v6379, %v6891
  %v6893 = vpop.f32.mrf.mxu0
  %6894 = vmatprep.mubr.f32.mxu0 0.0
  %6895 = vmatmul.mubr.f32.gmra.mxu0 %v6639
  %v6896 = vpop.f32.mrf.mxu0
  %v6897 = vadd.f32 %v6384, %v6896
  %v6898 = vpop.f32.mrf.mxu0
  %6899 = vmatprep.mubr.f32.mxu0 0.0
  %6900 = vmatmul.mubr.f32.gmra.mxu0 %v6641
  %v6901 = vpop.f32.mrf.mxu0
  %v6902 = vadd.f32 %v6389, %v6901
  %v6903 = vpop.f32.mrf.mxu0
  %6904 = vmatprep.mubr.f32.mxu0 0.0
  %6905 = vmatmul.mubr.f32.gmra.mxu0 %v6643
  %v6906 = vpop.f32.mrf.mxu0
  %v6907 = vadd.f32 %v6394, %v6906
  %v6908 = vpop.f32.mrf.mxu0
  %6909 = vmatprep.mubr.f32.mxu0 0.0
  %6910 = vmatmul.mubr.f32.gmra.mxu0 %v6645
  %v6911 = vpop.f32.mrf.mxu0
  %v6912 = vadd.f32 %v6399, %v6911
  %v6913 = vpop.f32.mrf.mxu0
  %6914 = vmatprep.mubr.f32.mxu0 0.0
  %6915 = vmatmul.mubr.f32.gmra.mxu0 %v6647
  %v6916 = vpop.f32.mrf.mxu0
  %v6917 = vadd.f32 %v6404, %v6916
  %v6918 = vpop.f32.mrf.mxu0
  %6919 = vmatprep.mubr.f32.mxu0 0.0
  %6920 = vmatmul.mubr.f32.gmra.mxu0 %v6649
  %v6921 = vpop.f32.mrf.mxu0
  %v6922 = vadd.f32 %v6409, %v6921
  %v6923 = vpop.f32.mrf.mxu0
  %6924 = vmatprep.mubr.f32.mxu0 0.0
  %6925 = vmatmul.mubr.f32.gmra.mxu0 %v6651
  %v6926 = vpop.f32.mrf.mxu0
  %v6927 = vadd.f32 %v6414, %v6926
  %v6928 = vpop.f32.mrf.mxu0
  %6929 = vmatprep.mubr.f32.mxu0 0.0
  %6930 = vmatmul.mubr.f32.gmra.mxu0 %v6653
  %v6931 = vpop.f32.mrf.mxu0
  %v6932 = vadd.f32 %v6419, %v6931
  %v6933 = vpop.f32.mrf.mxu0
  %6934 = vmatprep.mubr.f32.mxu0 0.0
  %6935 = vmatmul.mubr.f32.gmra.mxu0 %v6655
  %v6936 = vpop.f32.mrf.mxu0
  %v6937 = vadd.f32 %v6424, %v6936
  %v6938 = vpop.f32.mrf.mxu0
  %6939 = vmatprep.mubr.f32.mxu0 0.0
  %6940 = vmatmul.mubr.f32.gmra.mxu0 %v6657
  %v6941 = vpop.f32.mrf.mxu0
  %v6942 = vadd.f32 %v6429, %v6941
  %v6943 = vpop.f32.mrf.mxu0
  %6944 = vmatprep.mubr.f32.mxu0 0.0
  %6945 = vmatmul.mubr.f32.gmra.mxu0 %v6659
  %v6946 = vpop.f32.mrf.mxu0
  %v6947 = vadd.f32 %v6434, %v6946
  %v6948 = vpop.f32.mrf.mxu0
  %6949 = vmatprep.mubr.f32.mxu0 0.0
  %6950 = vmatmul.mubr.f32.gmra.mxu0 %v6661
  %v6951 = vpop.f32.mrf.mxu0
  %v6952 = vadd.f32 %v6439, %v6951
  %v6953 = vpop.f32.mrf.mxu0
  %6954 = vmatprep.mubr.f32.mxu0 0.0
  %6955 = vmatmul.mubr.f32.gmra.mxu0 %v6663
  %v6956 = vpop.f32.mrf.mxu0
  %v6957 = vadd.f32 %v6444, %v6956
  %v6958 = vpop.f32.mrf.mxu0
  %6959 = vmatprep.mubr.f32.mxu0 0.0
  %6960 = vmatmul.mubr.f32.gmra.mxu0 %v6665
  %v6961 = vpop.f32.mrf.mxu0
  %v6962 = vadd.f32 %v6449, %v6961
  %v6963 = vpop.f32.mrf.mxu0
  %6964 = vmatprep.mubr.f32.mxu0 0.0
  %6965 = vmatmul.mubr.f32.gmra.mxu0 %v6667
  %v6966 = vpop.f32.mrf.mxu0
  %v6967 = vadd.f32 %v6454, %v6966
  %v6968 = vpop.f32.mrf.mxu0
  %6969 = vmatprep.mubr.f32.mxu0 0.0
  %6970 = vmatmul.mubr.f32.gmra.mxu0 %v6669
  %v6971 = vpop.f32.mrf.mxu0
  %v6972 = vadd.f32 %v6459, %v6971
  %v6973 = vpop.f32.mrf.mxu0
  %6974 = vmatprep.mubr.f32.mxu0 0.0
  %6975 = vmatmul.mubr.f32.gmra.mxu0 %v6671
  %v6976 = vpop.f32.mrf.mxu0
  %v6977 = vadd.f32 %v6464, %v6976
  %v6978 = vpop.f32.mrf.mxu0
  %6979 = vmatprep.mubr.f32.mxu0 0.0
  %6980 = vmatmul.mubr.f32.gmra.mxu0 %v6673
  %v6981 = vpop.f32.mrf.mxu0
  %v6982 = vadd.f32 %v6469, %v6981
  %v6983 = vpop.f32.mrf.mxu0
  %6984 = vmatprep.mubr.f32.mxu0 0.0
  %6985 = vmatmul.mubr.f32.gmra.mxu0 %v6675
  %v6986 = vpop.f32.mrf.mxu0
  %v6987 = vadd.f32 %v6474, %v6986
  %v6988 = vpop.f32.mrf.mxu0
  %6989 = vmatprep.mubr.f32.mxu0 0.0
  %6990 = vmatmul.mubr.f32.gmra.mxu0 %v6677
  %v6991 = vpop.f32.mrf.mxu0
  %v6992 = vadd.f32 %v6479, %v6991
  %v6993 = vpop.f32.mrf.mxu0
  %6994 = vmatprep.mubr.f32.mxu0 0.0
  %6995 = vmatmul.mubr.f32.gmra.mxu0 %v6679
  %v6996 = vpop.f32.mrf.mxu0
  %v6997 = vadd.f32 %v6484, %v6996
  %v6998 = vpop.f32.mrf.mxu0
  %6999 = vmatprep.mubr.f32.mxu0 0.0
  %7000 = vmatmul.mubr.f32.gmra.mxu0 %v6681
  %v7001 = vpop.f32.mrf.mxu0
  %v7002 = vadd.f32 %v6489, %v7001
  %v7003 = vpop.f32.mrf.mxu0
  %7004 = vmatprep.mubr.f32.mxu0 0.0
  %7005 = vmatmul.mubr.f32.gmra.mxu0 %v6683
  %v7006 = vpop.f32.mrf.mxu0
  %v7007 = vadd.f32 %v6494, %v7006
  %v7008 = vpop.f32.mrf.mxu0
  %7009 = vmatprep.mubr.f32.mxu0 0.0
  %7010 = vmatmul.mubr.f32.gmra.mxu0 %v6685
  %v7011 = vpop.f32.mrf.mxu0
  %v7012 = vadd.f32 %v6499, %v7011
  %v7013 = vpop.f32.mrf.mxu0
  %7014 = vmatprep.mubr.f32.mxu0 0.0
  %7015 = vmatmul.mubr.f32.gmra.mxu0 %v6687
  %v7016 = vpop.f32.mrf.mxu0
  %v7017 = vadd.f32 %v6504, %v7016
  %v7018 = vpop.f32.mrf.mxu0
  %7019 = vmatprep.mubr.f32.mxu0 0.0
  %7020 = vmatmul.mubr.f32.gmra.mxu0 %v6689
  %v7021 = vpop.f32.mrf.mxu0
  %v7022 = vadd.f32 %v6509, %v7021
  %v7023 = vpop.f32.mrf.mxu0
  %7024 = vmatprep.mubr.f32.mxu0 0.0
  %7025 = vmatmul.mubr.f32.gmra.mxu0 %v6691
  %v7026 = vpop.f32.mrf.mxu0
  %v7027 = vadd.f32 %v6514, %v7026
  %v7028 = vpop.f32.mrf.mxu0
  %7029 = vmatprep.mubr.f32.mxu0 0.0
  %7030 = vmatmul.mubr.f32.gmra.mxu0 %v6693
  %v7031 = vpop.f32.mrf.mxu0
  %v7032 = vadd.f32 %v6519, %v7031
  %v7033 = vpop.f32.mrf.mxu0
  %7034 = vmatprep.mubr.f32.mxu0 0.0
  %7035 = vmatmul.mubr.f32.gmra.mxu0 %v6695
  %v7036 = vpop.f32.mrf.mxu0
  %v7037 = vadd.f32 %v6524, %v7036
  %v7038 = vpop.f32.mrf.mxu0
  %7039 = vmatprep.mubr.f32.mxu0 0.0
  %7040 = vmatmul.mubr.f32.gmra.mxu0 %v6697
  %v7041 = vpop.f32.mrf.mxu0
  %v7042 = vadd.f32 %v6529, %v7041
  %v7043 = vpop.f32.mrf.mxu0
  %7044 = vmatprep.mubr.f32.mxu0 0.0
  %7045 = vmatmul.mubr.f32.gmra.mxu0 %v6699
  %v7046 = vpop.f32.mrf.mxu0
  %v7047 = vadd.f32 %v6534, %v7046
  %v7048 = vpop.f32.mrf.mxu0
  %7049 = vmatprep.mubr.f32.mxu0 0.0
  %7050 = vmatmul.mubr.f32.gmra.mxu0 %v6701
  %v7051 = vpop.f32.mrf.mxu0
  %v7052 = vadd.f32 %v6539, %v7051
  %v7053 = vpop.f32.mrf.mxu0
  %7054 = vmatprep.mubr.f32.mxu0 0.0
  %7055 = vmatmul.mubr.f32.gmra.mxu0 %v6703
  %v7056 = vpop.f32.mrf.mxu0
  %v7057 = vadd.f32 %v6544, %v7056
  %v7058 = vpop.f32.mrf.mxu0
  %7059 = vmatprep.mubr.f32.mxu0 0.0
  %7060 = vmatmul.mubr.f32.gmra.mxu0 %v6705
  %v7061 = vpop.f32.mrf.mxu0
  %v7062 = vadd.f32 %v6549, %v7061
  %v7063 = vpop.f32.mrf.mxu0
  %7064 = vmatprep.mubr.f32.mxu0 0.0
  %7065 = vmatmul.mubr.f32.gmra.mxu0 %v6707
  %v7066 = vpop.f32.mrf.mxu0
  %v7067 = vadd.f32 %v6554, %v7066
  %v7068 = vpop.f32.mrf.mxu0
  %7069 = vmatprep.mubr.f32.mxu0 0.0
  %7070 = vmatmul.mubr.f32.gmra.mxu0 %v6709
  %v7071 = vpop.f32.mrf.mxu0
  %v7072 = vadd.f32 %v6559, %v7071
  %v7073 = vpop.f32.mrf.mxu0
  %7074 = vmatprep.mubr.f32.mxu0 0.0
  %7075 = vmatmul.mubr.f32.gmra.mxu0 %v6711
  %v7076 = vpop.f32.mrf.mxu0
  %v7077 = vadd.f32 %v6564, %v7076
  %v7078 = vpop.f32.mrf.mxu0
  %7079 = vmatprep.mubr.f32.mxu0 0.0
  %7080 = vmatmul.mubr.f32.gmra.mxu0 %v6713
  %v7081 = vpop.f32.mrf.mxu0
  %v7082 = vadd.f32 %v6569, %v7081
  %v7083 = vpop.f32.mrf.mxu0
  %7084 = vmatprep.mubr.f32.mxu0 0.0
  %7085 = vmatmul.mubr.f32.gmra.mxu0 %v6715
  %v7086 = vpop.f32.mrf.mxu0
  %v7087 = vadd.f32 %v6574, %v7086
  %v7088 = vpop.f32.mrf.mxu0
  %7089 = vmatprep.mubr.f32.mxu0 0.0
  %7090 = vmatmul.mubr.f32.gmra.mxu0 %v6717
  %v7091 = vpop.f32.mrf.mxu0
  %v7092 = vadd.f32 %v6579, %v7091
  %v7093 = vpop.f32.mrf.mxu0
  %7094 = vmatprep.mubr.f32.mxu0 0.0
  %7095 = vmatmul.mubr.f32.gmra.mxu0 %v6719
  %v7096 = vpop.f32.mrf.mxu0
  %v7097 = vadd.f32 %v6584, %v7096
  %v7098 = vpop.f32.mrf.mxu0
  %7099 = vmatprep.mubr.f32.mxu0 0.0
  %7100 = vmatmul.mubr.f32.gmra.mxu0 %v6721
  %v7101 = vpop.f32.mrf.mxu0
  %v7102 = vadd.f32 %v6589, %v7101
  %v7103 = vpop.f32.mrf.mxu0
  %7104 = vmatprep.mubr.f32.mxu0 0.0
  %7105 = vmatmul.mubr.f32.gmra.mxu0 %v6723
  %v7106 = vpop.f32.mrf.mxu0
  %v7107 = vadd.f32 %v6594, %v7106
  %v7108 = vpop.f32.mrf.mxu0
  %7109 = vdwg.mxu0
  %v7142 = vrot.slane %v5682, 1
  %v7143 = vrot.slane %v5683, 1
  %v7144 = vsel %vm1764, %v7142, %v7143
  %v7145 = vrot.slane %v5684, 1
  %v7146 = vsel %vm1764, %v7143, %v7145
  %v7147 = vrot.slane %v5686, 1
  %v7148 = vrot.slane %v5687, 1
  %v7149 = vsel %vm1764, %v7147, %v7148
  %v7150 = vrot.slane %v5688, 1
  %v7151 = vsel %vm1764, %v7148, %v7150
  %v7152 = vrot.slane %v5690, 1
  %v7153 = vrot.slane %v5691, 1
  %v7154 = vsel %vm1764, %v7152, %v7153
  %v7155 = vrot.slane %v5692, 1
  %v7156 = vsel %vm1764, %v7153, %v7155
  %v7157 = vrot.slane %v5694, 1
  %v7158 = vrot.slane %v5695, 1
  %v7159 = vsel %vm1764, %v7157, %v7158
  %v7160 = vrot.slane %v5696, 1
  %v7161 = vsel %vm1764, %v7158, %v7160
  %v7162 = vrot.slane %v5698, 1
  %v7163 = vrot.slane %v5699, 1
  %v7164 = vsel %vm1764, %v7162, %v7163
  %v7165 = vrot.slane %v5700, 1
  %v7166 = vsel %vm1764, %v7163, %v7165
  %v7167 = vrot.slane %v5702, 1
  %v7168 = vrot.slane %v5703, 1
  %v7169 = vsel %vm1764, %v7167, %v7168
  %v7170 = vrot.slane %v5704, 1
  %v7171 = vsel %vm1764, %v7168, %v7170
  %v7172 = vrot.slane %v5706, 1
  %v7173 = vrot.slane %v5707, 1
  %v7174 = vsel %vm1764, %v7172, %v7173
  %v7175 = vrot.slane %v5708, 1
  %v7176 = vsel %vm1764, %v7173, %v7175
  %v7177 = vrot.slane %v5710, 1
  %v7178 = vrot.slane %v5711, 1
  %v7179 = vsel %vm1764, %v7177, %v7178
  %v7180 = vrot.slane %v5712, 1
  %v7181 = vsel %vm1764, %v7178, %v7180
  %v7182 = vrot.slane %v5714, 1
  %v7183 = vrot.slane %v5715, 1
  %v7184 = vsel %vm1764, %v7182, %v7183
  %v7185 = vrot.slane %v5716, 1
  %v7186 = vsel %vm1764, %v7183, %v7185
  %v7187 = vrot.slane %v5718, 1
  %v7188 = vrot.slane %v5719, 1
  %v7189 = vsel %vm1764, %v7187, %v7188
  %v7190 = vrot.slane %v5720, 1
  %v7191 = vsel %vm1764, %v7188, %v7190
  %v7192 = vrot.slane %v5722, 1
  %v7193 = vrot.slane %v5723, 1
  %v7194 = vsel %vm1764, %v7192, %v7193
  %v7195 = vrot.slane %v5724, 1
  %v7196 = vsel %vm1764, %v7193, %v7195
  %v7197 = vrot.slane %v5726, 1
  %v7198 = vrot.slane %v5727, 1
  %v7199 = vsel %vm1764, %v7197, %v7198
  %v7200 = vrot.slane %v5728, 1
  %v7201 = vsel %vm1764, %v7198, %v7200
  %v7202 = vrot.slane %v5730, 1
  %v7203 = vrot.slane %v5731, 1
  %v7204 = vsel %vm1764, %v7202, %v7203
  %v7205 = vrot.slane %v5732, 1
  %v7206 = vsel %vm1764, %v7203, %v7205
  %v7207 = vrot.slane %v5734, 1
  %v7208 = vrot.slane %v5735, 1
  %v7209 = vsel %vm1764, %v7207, %v7208
  %v7210 = vrot.slane %v5736, 1
  %v7211 = vsel %vm1764, %v7208, %v7210
  %v7212 = vrot.slane %v5738, 1
  %v7213 = vrot.slane %v5739, 1
  %v7214 = vsel %vm1764, %v7212, %v7213
  %v7215 = vrot.slane %v5740, 1
  %v7216 = vsel %vm1764, %v7213, %v7215
  %v7217 = vrot.slane %v5742, 1
  %v7218 = vrot.slane %v5743, 1
  %v7219 = vsel %vm1764, %v7217, %v7218
  %v7220 = vrot.slane %v5744, 1
  %v7221 = vsel %vm1764, %v7218, %v7220
  %v7222 = vrot.slane %v5754, 1
  %v7223 = vrot.slane %v5755, 1
  %v7224 = vsel %vm1764, %v7222, %v7223
  %v7225 = vrot.slane %v5756, 1
  %v7226 = vsel %vm1764, %v7223, %v7225
  %v7227 = vrot.slane %v5758, 1
  %v7228 = vrot.slane %v5759, 1
  %v7229 = vsel %vm1764, %v7227, %v7228
  %v7230 = vrot.slane %v5760, 1
  %v7231 = vsel %vm1764, %v7228, %v7230
  %v7232 = vrot.slane %v5762, 1
  %v7233 = vrot.slane %v5763, 1
  %v7234 = vsel %vm1764, %v7232, %v7233
  %v7235 = vrot.slane %v5764, 1
  %v7236 = vsel %vm1764, %v7233, %v7235
  %v7237 = vrot.slane %v5766, 1
  %v7238 = vrot.slane %v5767, 1
  %v7239 = vsel %vm1764, %v7237, %v7238
  %v7240 = vrot.slane %v5768, 1
  %v7241 = vsel %vm1764, %v7238, %v7240
  %v7242 = vrot.slane %v5770, 1
  %v7243 = vrot.slane %v5771, 1
  %v7244 = vsel %vm1764, %v7242, %v7243
  %v7245 = vrot.slane %v5772, 1
  %v7246 = vsel %vm1764, %v7243, %v7245
  %v7247 = vrot.slane %v5774, 1
  %v7248 = vrot.slane %v5775, 1
  %v7249 = vsel %vm1764, %v7247, %v7248
  %v7250 = vrot.slane %v5776, 1
  %v7251 = vsel %vm1764, %v7248, %v7250
  %v7252 = vrot.slane %v5778, 1
  %v7253 = vrot.slane %v5779, 1
  %v7254 = vsel %vm1764, %v7252, %v7253
  %v7255 = vrot.slane %v5780, 1
  %v7256 = vsel %vm1764, %v7253, %v7255
  %v7257 = vrot.slane %v5782, 1
  %v7258 = vrot.slane %v5783, 1
  %v7259 = vsel %vm1764, %v7257, %v7258
  %v7260 = vrot.slane %v5784, 1
  %v7261 = vsel %vm1764, %v7258, %v7260
  %v7262 = vrot.slane %v5786, 1
  %v7263 = vrot.slane %v5787, 1
  %v7264 = vsel %vm1764, %v7262, %v7263
  %v7265 = vrot.slane %v5788, 1
  %v7266 = vsel %vm1764, %v7263, %v7265
  %v7267 = vrot.slane %v5790, 1
  %v7268 = vrot.slane %v5791, 1
  %v7269 = vsel %vm1764, %v7267, %v7268
  %v7270 = vrot.slane %v5792, 1
  %v7271 = vsel %vm1764, %v7268, %v7270
  %v7272 = vrot.slane %v5794, 1
  %v7273 = vrot.slane %v5795, 1
  %v7274 = vsel %vm1764, %v7272, %v7273
  %v7275 = vrot.slane %v5796, 1
  %v7276 = vsel %vm1764, %v7273, %v7275
  %v7277 = vrot.slane %v5798, 1
  %v7278 = vrot.slane %v5799, 1
  %v7279 = vsel %vm1764, %v7277, %v7278
  %v7280 = vrot.slane %v5800, 1
  %v7281 = vsel %vm1764, %v7278, %v7280
  %v7282 = vrot.slane %v5802, 1
  %v7283 = vrot.slane %v5803, 1
  %v7284 = vsel %vm1764, %v7282, %v7283
  %v7285 = vrot.slane %v5804, 1
  %v7286 = vsel %vm1764, %v7283, %v7285
  %v7287 = vrot.slane %v5806, 1
  %v7288 = vrot.slane %v5807, 1
  %v7289 = vsel %vm1764, %v7287, %v7288
  %v7290 = vrot.slane %v5808, 1
  %v7291 = vsel %vm1764, %v7288, %v7290
  %v7292 = vrot.slane %v5810, 1
  %v7293 = vrot.slane %v5811, 1
  %v7294 = vsel %vm1764, %v7292, %v7293
  %v7295 = vrot.slane %v5812, 1
  %v7296 = vsel %vm1764, %v7293, %v7295
  %v7297 = vrot.slane %v5814, 1
  %v7298 = vrot.slane %v5815, 1
  %v7299 = vsel %vm1764, %v7297, %v7298
  %v7300 = vrot.slane %v5816, 1
  %v7301 = vsel %vm1764, %v7298, %v7300
  %s7302 = scalar_lea.vmem %s3, 16
  %v7303 = vld [vmem:[%s7302] sm:$0xff]
  %v7304 = vsel %vm5470, %v7144, 0
  %v7306 = vsel %vm5470, %v7146, 0
  %v7308 = vsel %vm5470, %v7149, 0
  %v7310 = vsel %vm5470, %v7151, 0
  %v7312 = vsel %vm5470, %v7154, 0
  %v7314 = vsel %vm5470, %v7156, 0
  %v7316 = vsel %vm5470, %v7159, 0
  %v7318 = vsel %vm5470, %v7161, 0
  %v7320 = vsel %vm5470, %v7164, 0
  %v7322 = vsel %vm5470, %v7166, 0
  %v7324 = vsel %vm5470, %v7169, 0
  %v7326 = vsel %vm5470, %v7171, 0
  %v7328 = vsel %vm5470, %v7174, 0
  %v7330 = vsel %vm5470, %v7176, 0
  %v7332 = vsel %vm5470, %v7179, 0
  %v7334 = vsel %vm5470, %v7181, 0
  %v7336 = vsel %vm5470, %v7184, 0
  %v7338 = vsel %vm5470, %v7186, 0
  %v7340 = vsel %vm5470, %v7189, 0
  %v7342 = vsel %vm5470, %v7191, 0
  %v7344 = vsel %vm5470, %v7194, 0
  %v7346 = vsel %vm5470, %v7196, 0
  %v7348 = vsel %vm5470, %v7199, 0
  %v7350 = vsel %vm5470, %v7201, 0
  %v7352 = vsel %vm5470, %v7204, 0
  %v7354 = vsel %vm5470, %v7206, 0
  %v7356 = vsel %vm5470, %v7209, 0
  %v7358 = vsel %vm5470, %v7211, 0
  %v7360 = vsel %vm5470, %v7214, 0
  %v7362 = vsel %vm5470, %v7216, 0
  %v7364 = vsel %vm5470, %v7219, 0
  %v7366 = vsel %vm5470, %v7221, 0
  %v7368 = vsel %vm5470, %v7224, 0
  %v7370 = vsel %vm5470, %v7226, 0
  %v7372 = vsel %vm5470, %v7229, 0
  %v7374 = vsel %vm5470, %v7231, 0
  %v7376 = vsel %vm5470, %v7234, 0
  %v7378 = vsel %vm5470, %v7236, 0
  %v7380 = vsel %vm5470, %v7239, 0
  %v7382 = vsel %vm5470, %v7241, 0
  %v7384 = vsel %vm5470, %v7244, 0
  %v7386 = vsel %vm5470, %v7246, 0
  %v7388 = vsel %vm5470, %v7249, 0
  %v7390 = vsel %vm5470, %v7251, 0
  %v7392 = vsel %vm5470, %v7254, 0
  %v7394 = vsel %vm5470, %v7256, 0
  %v7396 = vsel %vm5470, %v7259, 0
  %v7398 = vsel %vm5470, %v7261, 0
  %v7400 = vsel %vm5470, %v7264, 0
  %v7402 = vsel %vm5470, %v7266, 0
  %v7404 = vsel %vm5470, %v7269, 0
  %v7406 = vsel %vm5470, %v7271, 0
  %v7408 = vsel %vm5470, %v7274, 0
  %v7410 = vsel %vm5470, %v7276, 0
  %v7412 = vsel %vm5470, %v7279, 0
  %v7414 = vsel %vm5470, %v7281, 0
  %v7416 = vsel %vm5470, %v7284, 0
  %v7418 = vsel %vm5470, %v7286, 0
  %v7420 = vsel %vm5470, %v7289, 0
  %v7422 = vsel %vm5470, %v7291, 0
  %v7424 = vsel %vm5470, %v7294, 0
  %v7426 = vsel %vm5470, %v7296, 0
  %v7428 = vsel %vm5470, %v7299, 0
  %v7430 = vsel %vm5470, %v7301, 0
  %7432 = vmatprep.subr.mxu0 0.0
  %7433 = vmatpush1.msra.mxu0 0.0
  %7434 = vmatprep.subr.mxu0 0.0
  %7435 = vmatpush1.msra.mxu0 0.0
  %7436 = vmatprep.subr.mxu0 0.0
  %7437 = vmatpush1.msra.mxu0 0.0
  %7438 = vmatprep.subr.mxu0 0.0
  %7439 = vmatpush1.msra.mxu0 0.0
  %7440 = vmatprep.subr.mxu0 0.0
  %7441 = vmatpush1.msra.mxu0 0.0
  %7442 = vmatprep.subr.mxu0 0.0
  %7443 = vmatpush1.msra.mxu0 0.0
  %7444 = vmatprep.subr.mxu0 0.0
  %7445 = vmatpush1.msra.mxu0 0.0
  %7446 = vmatprep.subr.mxu0 0.0
  %7447 = vmatpush1.msra.mxu0 0.0
  %7448 = vmatprep.subr.mxu0 0.0
  %7449 = vmatpush1.msra.mxu0 0.0
  %7450 = vmatprep.subr.mxu0 0.0
  %7451 = vmatpush1.msra.mxu0 0.0
  %7452 = vmatprep.subr.mxu0 0.0
  %7453 = vmatpush1.msra.mxu0 0.0
  %7454 = vmatprep.subr.mxu0 0.0
  %7455 = vmatpush1.msra.mxu0 0.0
  %7456 = vmatprep.subr.mxu0 0.0
  %7457 = vmatpush1.msra.mxu0 0.0
  %7458 = vmatprep.subr.mxu0 0.0
  %7459 = vmatpush1.msra.mxu0 0.0
  %7460 = vmatprep.subr.mxu0 0.0
  %7461 = vmatpush1.msra.mxu0 0.0
  %7462 = vmatprep.subr.mxu0 0.0
  %7463 = vmatpush1.msra.mxu0 %v7303
  %7464 = vmatprep.subr.mxu0 0.0
  %7465 = vmatpush2.msra.mxu0 0.0
  %7466 = vmatprep.subr.mxu0 0.0
  %7467 = vmatpush2.msra.mxu0 0.0
  %7468 = vmatprep.subr.mxu0 0.0
  %7469 = vmatpush2.msra.mxu0 0.0
  %7470 = vmatprep.subr.mxu0 0.0
  %7471 = vmatpush2.msra.mxu0 0.0
  %7472 = vmatprep.subr.mxu0 0.0
  %7473 = vmatpush2.msra.mxu0 0.0
  %7474 = vmatprep.subr.mxu0 0.0
  %7475 = vmatpush2.msra.mxu0 0.0
  %7476 = vmatprep.subr.mxu0 0.0
  %7477 = vmatpush2.msra.mxu0 0.0
  %7478 = vmatprep.subr.mxu0 0.0
  %7479 = vmatpush2.msra.mxu0 0.0
  %7480 = vmatprep.subr.mxu0 0.0
  %7481 = vmatpush2.msra.mxu0 0.0
  %7482 = vmatprep.subr.mxu0 0.0
  %7483 = vmatpush2.msra.mxu0 0.0
  %7484 = vmatprep.subr.mxu0 0.0
  %7485 = vmatpush2.msra.mxu0 0.0
  %7486 = vmatprep.subr.mxu0 0.0
  %7487 = vmatpush2.msra.mxu0 0.0
  %7488 = vmatprep.subr.mxu0 0.0
  %7489 = vmatpush2.msra.mxu0 0.0
  %7490 = vmatprep.subr.mxu0 0.0
  %7491 = vmatpush2.msra.mxu0 0.0
  %7492 = vmatprep.subr.mxu0 0.0
  %7493 = vmatpush2.msra.mxu0 0.0
  %7494 = vmatprep.subr.mxu0 0.0
  %7495 = vmatpush2.msra.mxu0 0.0
  %7496 = vmatprep.mubr.f32.mxu0 0.0
  %7497 = vmatmul.mubr.f32.gmra.mxu0 %v7304
  %v7498 = vpop.f32.mrf.mxu0
  %v7499 = vadd.f32 0.0, %v7498
  %v7500 = vpop.f32.mrf.mxu0
  %7501 = vmatprep.mubr.f32.mxu0 0.0
  %7502 = vmatmul.mubr.f32.gmra.mxu0 %v7306
  %v7503 = vpop.f32.mrf.mxu0
  %v7504 = vadd.f32 0.0, %v7503
  %v7505 = vpop.f32.mrf.mxu0
  %7506 = vmatprep.mubr.f32.mxu0 0.0
  %7507 = vmatmul.mubr.f32.gmra.mxu0 %v7308
  %v7508 = vpop.f32.mrf.mxu0
  %v7509 = vadd.f32 0.0, %v7508
  %v7510 = vpop.f32.mrf.mxu0
  %7511 = vmatprep.mubr.f32.mxu0 0.0
  %7512 = vmatmul.mubr.f32.gmra.mxu0 %v7310
  %v7513 = vpop.f32.mrf.mxu0
  %v7514 = vadd.f32 0.0, %v7513
  %v7515 = vpop.f32.mrf.mxu0
  %7516 = vmatprep.mubr.f32.mxu0 0.0
  %7517 = vmatmul.mubr.f32.gmra.mxu0 %v7312
  %v7518 = vpop.f32.mrf.mxu0
  %v7519 = vadd.f32 0.0, %v7518
  %v7520 = vpop.f32.mrf.mxu0
  %7521 = vmatprep.mubr.f32.mxu0 0.0
  %7522 = vmatmul.mubr.f32.gmra.mxu0 %v7314
  %v7523 = vpop.f32.mrf.mxu0
  %v7524 = vadd.f32 0.0, %v7523
  %v7525 = vpop.f32.mrf.mxu0
  %7526 = vmatprep.mubr.f32.mxu0 0.0
  %7527 = vmatmul.mubr.f32.gmra.mxu0 %v7316
  %v7528 = vpop.f32.mrf.mxu0
  %v7529 = vadd.f32 0.0, %v7528
  %v7530 = vpop.f32.mrf.mxu0
  %7531 = vmatprep.mubr.f32.mxu0 0.0
  %7532 = vmatmul.mubr.f32.gmra.mxu0 %v7318
  %v7533 = vpop.f32.mrf.mxu0
  %v7534 = vadd.f32 0.0, %v7533
  %v7535 = vpop.f32.mrf.mxu0
  %7536 = vmatprep.mubr.f32.mxu0 0.0
  %7537 = vmatmul.mubr.f32.gmra.mxu0 %v7320
  %v7538 = vpop.f32.mrf.mxu0
  %v7539 = vadd.f32 0.0, %v7538
  %v7540 = vpop.f32.mrf.mxu0
  %7541 = vmatprep.mubr.f32.mxu0 0.0
  %7542 = vmatmul.mubr.f32.gmra.mxu0 %v7322
  %v7543 = vpop.f32.mrf.mxu0
  %v7544 = vadd.f32 0.0, %v7543
  %v7545 = vpop.f32.mrf.mxu0
  %7546 = vmatprep.mubr.f32.mxu0 0.0
  %7547 = vmatmul.mubr.f32.gmra.mxu0 %v7324
  %v7548 = vpop.f32.mrf.mxu0
  %v7549 = vadd.f32 0.0, %v7548
  %v7550 = vpop.f32.mrf.mxu0
  %7551 = vmatprep.mubr.f32.mxu0 0.0
  %7552 = vmatmul.mubr.f32.gmra.mxu0 %v7326
  %v7553 = vpop.f32.mrf.mxu0
  %v7554 = vadd.f32 0.0, %v7553
  %v7555 = vpop.f32.mrf.mxu0
  %7556 = vmatprep.mubr.f32.mxu0 0.0
  %7557 = vmatmul.mubr.f32.gmra.mxu0 %v7328
  %v7558 = vpop.f32.mrf.mxu0
  %v7559 = vadd.f32 0.0, %v7558
  %v7560 = vpop.f32.mrf.mxu0
  %7561 = vmatprep.mubr.f32.mxu0 0.0
  %7562 = vmatmul.mubr.f32.gmra.mxu0 %v7330
  %v7563 = vpop.f32.mrf.mxu0
  %v7564 = vadd.f32 0.0, %v7563
  %v7565 = vpop.f32.mrf.mxu0
  %7566 = vmatprep.mubr.f32.mxu0 0.0
  %7567 = vmatmul.mubr.f32.gmra.mxu0 %v7332
  %v7568 = vpop.f32.mrf.mxu0
  %v7569 = vadd.f32 0.0, %v7568
  %v7570 = vpop.f32.mrf.mxu0
  %7571 = vmatprep.mubr.f32.mxu0 0.0
  %7572 = vmatmul.mubr.f32.gmra.mxu0 %v7334
  %v7573 = vpop.f32.mrf.mxu0
  %v7574 = vadd.f32 0.0, %v7573
  %v7575 = vpop.f32.mrf.mxu0
  %7576 = vmatprep.mubr.f32.mxu0 0.0
  %7577 = vmatmul.mubr.f32.gmra.mxu0 %v7336
  %v7578 = vpop.f32.mrf.mxu0
  %v7579 = vadd.f32 0.0, %v7578
  %v7580 = vpop.f32.mrf.mxu0
  %7581 = vmatprep.mubr.f32.mxu0 0.0
  %7582 = vmatmul.mubr.f32.gmra.mxu0 %v7338
  %v7583 = vpop.f32.mrf.mxu0
  %v7584 = vadd.f32 0.0, %v7583
  %v7585 = vpop.f32.mrf.mxu0
  %7586 = vmatprep.mubr.f32.mxu0 0.0
  %7587 = vmatmul.mubr.f32.gmra.mxu0 %v7340
  %v7588 = vpop.f32.mrf.mxu0
  %v7589 = vadd.f32 0.0, %v7588
  %v7590 = vpop.f32.mrf.mxu0
  %7591 = vmatprep.mubr.f32.mxu0 0.0
  %7592 = vmatmul.mubr.f32.gmra.mxu0 %v7342
  %v7593 = vpop.f32.mrf.mxu0
  %v7594 = vadd.f32 0.0, %v7593
  %v7595 = vpop.f32.mrf.mxu0
  %7596 = vmatprep.mubr.f32.mxu0 0.0
  %7597 = vmatmul.mubr.f32.gmra.mxu0 %v7344
  %v7598 = vpop.f32.mrf.mxu0
  %v7599 = vadd.f32 0.0, %v7598
  %v7600 = vpop.f32.mrf.mxu0
  %7601 = vmatprep.mubr.f32.mxu0 0.0
  %7602 = vmatmul.mubr.f32.gmra.mxu0 %v7346
  %v7603 = vpop.f32.mrf.mxu0
  %v7604 = vadd.f32 0.0, %v7603
  %v7605 = vpop.f32.mrf.mxu0
  %7606 = vmatprep.mubr.f32.mxu0 0.0
  %7607 = vmatmul.mubr.f32.gmra.mxu0 %v7348
  %v7608 = vpop.f32.mrf.mxu0
  %v7609 = vadd.f32 0.0, %v7608
  %v7610 = vpop.f32.mrf.mxu0
  %7611 = vmatprep.mubr.f32.mxu0 0.0
  %7612 = vmatmul.mubr.f32.gmra.mxu0 %v7350
  %v7613 = vpop.f32.mrf.mxu0
  %v7614 = vadd.f32 0.0, %v7613
  %v7615 = vpop.f32.mrf.mxu0
  %7616 = vmatprep.mubr.f32.mxu0 0.0
  %7617 = vmatmul.mubr.f32.gmra.mxu0 %v7352
  %v7618 = vpop.f32.mrf.mxu0
  %v7619 = vadd.f32 0.0, %v7618
  %v7620 = vpop.f32.mrf.mxu0
  %7621 = vmatprep.mubr.f32.mxu0 0.0
  %7622 = vmatmul.mubr.f32.gmra.mxu0 %v7354
  %v7623 = vpop.f32.mrf.mxu0
  %v7624 = vadd.f32 0.0, %v7623
  %v7625 = vpop.f32.mrf.mxu0
  %7626 = vmatprep.mubr.f32.mxu0 0.0
  %7627 = vmatmul.mubr.f32.gmra.mxu0 %v7356
  %v7628 = vpop.f32.mrf.mxu0
  %v7629 = vadd.f32 0.0, %v7628
  %v7630 = vpop.f32.mrf.mxu0
  %7631 = vmatprep.mubr.f32.mxu0 0.0
  %7632 = vmatmul.mubr.f32.gmra.mxu0 %v7358
  %v7633 = vpop.f32.mrf.mxu0
  %v7634 = vadd.f32 0.0, %v7633
  %v7635 = vpop.f32.mrf.mxu0
  %7636 = vmatprep.mubr.f32.mxu0 0.0
  %7637 = vmatmul.mubr.f32.gmra.mxu0 %v7360
  %v7638 = vpop.f32.mrf.mxu0
  %v7639 = vadd.f32 0.0, %v7638
  %v7640 = vpop.f32.mrf.mxu0
  %7641 = vmatprep.mubr.f32.mxu0 0.0
  %7642 = vmatmul.mubr.f32.gmra.mxu0 %v7362
  %v7643 = vpop.f32.mrf.mxu0
  %v7644 = vadd.f32 0.0, %v7643
  %v7645 = vpop.f32.mrf.mxu0
  %7646 = vmatprep.mubr.f32.mxu0 0.0
  %7647 = vmatmul.mubr.f32.gmra.mxu0 %v7364
  %v7648 = vpop.f32.mrf.mxu0
  %v7649 = vadd.f32 0.0, %v7648
  %v7650 = vpop.f32.mrf.mxu0
  %7651 = vmatprep.mubr.f32.mxu0 0.0
  %7652 = vmatmul.mubr.f32.gmra.mxu0 %v7366
  %v7653 = vpop.f32.mrf.mxu0
  %v7654 = vadd.f32 0.0, %v7653
  %v7655 = vpop.f32.mrf.mxu0
  %7656 = vmatprep.mubr.f32.mxu0 0.0
  %7657 = vmatmul.mubr.f32.gmra.mxu0 %v7368
  %v7658 = vpop.f32.mrf.mxu0
  %v7659 = vadd.f32 0.0, %v7658
  %v7660 = vpop.f32.mrf.mxu0
  %7661 = vmatprep.mubr.f32.mxu0 0.0
  %7662 = vmatmul.mubr.f32.gmra.mxu0 %v7370
  %v7663 = vpop.f32.mrf.mxu0
  %v7664 = vadd.f32 0.0, %v7663
  %v7665 = vpop.f32.mrf.mxu0
  %7666 = vmatprep.mubr.f32.mxu0 0.0
  %7667 = vmatmul.mubr.f32.gmra.mxu0 %v7372
  %v7668 = vpop.f32.mrf.mxu0
  %v7669 = vadd.f32 0.0, %v7668
  %v7670 = vpop.f32.mrf.mxu0
  %7671 = vmatprep.mubr.f32.mxu0 0.0
  %7672 = vmatmul.mubr.f32.gmra.mxu0 %v7374
  %v7673 = vpop.f32.mrf.mxu0
  %v7674 = vadd.f32 0.0, %v7673
  %v7675 = vpop.f32.mrf.mxu0
  %7676 = vmatprep.mubr.f32.mxu0 0.0
  %7677 = vmatmul.mubr.f32.gmra.mxu0 %v7376
  %v7678 = vpop.f32.mrf.mxu0
  %v7679 = vadd.f32 0.0, %v7678
  %v7680 = vpop.f32.mrf.mxu0
  %7681 = vmatprep.mubr.f32.mxu0 0.0
  %7682 = vmatmul.mubr.f32.gmra.mxu0 %v7378
  %v7683 = vpop.f32.mrf.mxu0
  %v7684 = vadd.f32 0.0, %v7683
  %v7685 = vpop.f32.mrf.mxu0
  %7686 = vmatprep.mubr.f32.mxu0 0.0
  %7687 = vmatmul.mubr.f32.gmra.mxu0 %v7380
  %v7688 = vpop.f32.mrf.mxu0
  %v7689 = vadd.f32 0.0, %v7688
  %v7690 = vpop.f32.mrf.mxu0
  %7691 = vmatprep.mubr.f32.mxu0 0.0
  %7692 = vmatmul.mubr.f32.gmra.mxu0 %v7382
  %v7693 = vpop.f32.mrf.mxu0
  %v7694 = vadd.f32 0.0, %v7693
  %v7695 = vpop.f32.mrf.mxu0
  %7696 = vmatprep.mubr.f32.mxu0 0.0
  %7697 = vmatmul.mubr.f32.gmra.mxu0 %v7384
  %v7698 = vpop.f32.mrf.mxu0
  %v7699 = vadd.f32 0.0, %v7698
  %v7700 = vpop.f32.mrf.mxu0
  %7701 = vmatprep.mubr.f32.mxu0 0.0
  %7702 = vmatmul.mubr.f32.gmra.mxu0 %v7386
  %v7703 = vpop.f32.mrf.mxu0
  %v7704 = vadd.f32 0.0, %v7703
  %v7705 = vpop.f32.mrf.mxu0
  %7706 = vmatprep.mubr.f32.mxu0 0.0
  %7707 = vmatmul.mubr.f32.gmra.mxu0 %v7388
  %v7708 = vpop.f32.mrf.mxu0
  %v7709 = vadd.f32 0.0, %v7708
  %v7710 = vpop.f32.mrf.mxu0
  %7711 = vmatprep.mubr.f32.mxu0 0.0
  %7712 = vmatmul.mubr.f32.gmra.mxu0 %v7390
  %v7713 = vpop.f32.mrf.mxu0
  %v7714 = vadd.f32 0.0, %v7713
  %v7715 = vpop.f32.mrf.mxu0
  %7716 = vmatprep.mubr.f32.mxu0 0.0
  %7717 = vmatmul.mubr.f32.gmra.mxu0 %v7392
  %v7718 = vpop.f32.mrf.mxu0
  %v7719 = vadd.f32 0.0, %v7718
  %v7720 = vpop.f32.mrf.mxu0
  %7721 = vmatprep.mubr.f32.mxu0 0.0
  %7722 = vmatmul.mubr.f32.gmra.mxu0 %v7394
  %v7723 = vpop.f32.mrf.mxu0
  %v7724 = vadd.f32 0.0, %v7723
  %v7725 = vpop.f32.mrf.mxu0
  %7726 = vmatprep.mubr.f32.mxu0 0.0
  %7727 = vmatmul.mubr.f32.gmra.mxu0 %v7396
  %v7728 = vpop.f32.mrf.mxu0
  %v7729 = vadd.f32 0.0, %v7728
  %v7730 = vpop.f32.mrf.mxu0
  %7731 = vmatprep.mubr.f32.mxu0 0.0
  %7732 = vmatmul.mubr.f32.gmra.mxu0 %v7398
  %v7733 = vpop.f32.mrf.mxu0
  %v7734 = vadd.f32 0.0, %v7733
  %v7735 = vpop.f32.mrf.mxu0
  %7736 = vmatprep.mubr.f32.mxu0 0.0
  %7737 = vmatmul.mubr.f32.gmra.mxu0 %v7400
  %v7738 = vpop.f32.mrf.mxu0
  %v7739 = vadd.f32 0.0, %v7738
  %v7740 = vpop.f32.mrf.mxu0
  %7741 = vmatprep.mubr.f32.mxu0 0.0
  %7742 = vmatmul.mubr.f32.gmra.mxu0 %v7402
  %v7743 = vpop.f32.mrf.mxu0
  %v7744 = vadd.f32 0.0, %v7743
  %v7745 = vpop.f32.mrf.mxu0
  %7746 = vmatprep.mubr.f32.mxu0 0.0
  %7747 = vmatmul.mubr.f32.gmra.mxu0 %v7404
  %v7748 = vpop.f32.mrf.mxu0
  %v7749 = vadd.f32 0.0, %v7748
  %v7750 = vpop.f32.mrf.mxu0
  %7751 = vmatprep.mubr.f32.mxu0 0.0
  %7752 = vmatmul.mubr.f32.gmra.mxu0 %v7406
  %v7753 = vpop.f32.mrf.mxu0
  %v7754 = vadd.f32 0.0, %v7753
  %v7755 = vpop.f32.mrf.mxu0
  %7756 = vmatprep.mubr.f32.mxu0 0.0
  %7757 = vmatmul.mubr.f32.gmra.mxu0 %v7408
  %v7758 = vpop.f32.mrf.mxu0
  %v7759 = vadd.f32 0.0, %v7758
  %v7760 = vpop.f32.mrf.mxu0
  %7761 = vmatprep.mubr.f32.mxu0 0.0
  %7762 = vmatmul.mubr.f32.gmra.mxu0 %v7410
  %v7763 = vpop.f32.mrf.mxu0
  %v7764 = vadd.f32 0.0, %v7763
  %v7765 = vpop.f32.mrf.mxu0
  %7766 = vmatprep.mubr.f32.mxu0 0.0
  %7767 = vmatmul.mubr.f32.gmra.mxu0 %v7412
  %v7768 = vpop.f32.mrf.mxu0
  %v7769 = vadd.f32 0.0, %v7768
  %v7770 = vpop.f32.mrf.mxu0
  %7771 = vmatprep.mubr.f32.mxu0 0.0
  %7772 = vmatmul.mubr.f32.gmra.mxu0 %v7414
  %v7773 = vpop.f32.mrf.mxu0
  %v7774 = vadd.f32 0.0, %v7773
  %v7775 = vpop.f32.mrf.mxu0
  %7776 = vmatprep.mubr.f32.mxu0 0.0
  %7777 = vmatmul.mubr.f32.gmra.mxu0 %v7416
  %v7778 = vpop.f32.mrf.mxu0
  %v7779 = vadd.f32 0.0, %v7778
  %v7780 = vpop.f32.mrf.mxu0
  %7781 = vmatprep.mubr.f32.mxu0 0.0
  %7782 = vmatmul.mubr.f32.gmra.mxu0 %v7418
  %v7783 = vpop.f32.mrf.mxu0
  %v7784 = vadd.f32 0.0, %v7783
  %v7785 = vpop.f32.mrf.mxu0
  %7786 = vmatprep.mubr.f32.mxu0 0.0
  %7787 = vmatmul.mubr.f32.gmra.mxu0 %v7420
  %v7788 = vpop.f32.mrf.mxu0
  %v7789 = vadd.f32 0.0, %v7788
  %v7790 = vpop.f32.mrf.mxu0
  %7791 = vmatprep.mubr.f32.mxu0 0.0
  %7792 = vmatmul.mubr.f32.gmra.mxu0 %v7422
  %v7793 = vpop.f32.mrf.mxu0
  %v7794 = vadd.f32 0.0, %v7793
  %v7795 = vpop.f32.mrf.mxu0
  %7796 = vmatprep.mubr.f32.mxu0 0.0
  %7797 = vmatmul.mubr.f32.gmra.mxu0 %v7424
  %v7798 = vpop.f32.mrf.mxu0
  %v7799 = vadd.f32 0.0, %v7798
  %v7800 = vpop.f32.mrf.mxu0
  %7801 = vmatprep.mubr.f32.mxu0 0.0
  %7802 = vmatmul.mubr.f32.gmra.mxu0 %v7426
  %v7803 = vpop.f32.mrf.mxu0
  %v7804 = vadd.f32 0.0, %v7803
  %v7805 = vpop.f32.mrf.mxu0
  %7806 = vmatprep.mubr.f32.mxu0 0.0
  %7807 = vmatmul.mubr.f32.gmra.mxu0 %v7428
  %v7808 = vpop.f32.mrf.mxu0
  %v7809 = vadd.f32 0.0, %v7808
  %v7810 = vpop.f32.mrf.mxu0
  %7811 = vmatprep.mubr.f32.mxu0 0.0
  %7812 = vmatmul.mubr.f32.gmra.mxu0 %v7430
  %v7813 = vpop.f32.mrf.mxu0
  %v7814 = vadd.f32 0.0, %v7813
  %v7815 = vpop.f32.mrf.mxu0
  %7816 = vdwg.mxu0
  %v7817 = vadd.f32 %v6792, %v7499
  %v7818 = vadd.f32 %v6797, %v7504
  %v7819 = vadd.f32 %v6802, %v7509
  %v7820 = vadd.f32 %v6807, %v7514
  %v7821 = vadd.f32 %v6812, %v7519
  %v7822 = vadd.f32 %v6817, %v7524
  %v7823 = vadd.f32 %v6822, %v7529
  %v7824 = vadd.f32 %v6827, %v7534
  %v7825 = vadd.f32 %v6832, %v7539
  %v7826 = vadd.f32 %v6837, %v7544
  %v7827 = vadd.f32 %v6842, %v7549
  %v7828 = vadd.f32 %v6847, %v7554
  %v7829 = vadd.f32 %v6852, %v7559
  %v7830 = vadd.f32 %v6857, %v7564
  %v7831 = vadd.f32 %v6862, %v7569
  %v7832 = vadd.f32 %v6867, %v7574
  %v7833 = vadd.f32 %v6872, %v7579
  %v7834 = vadd.f32 %v6877, %v7584
  %v7835 = vadd.f32 %v6882, %v7589
  %v7836 = vadd.f32 %v6887, %v7594
  %v7837 = vadd.f32 %v6892, %v7599
  %v7838 = vadd.f32 %v6897, %v7604
  %v7839 = vadd.f32 %v6902, %v7609
  %v7840 = vadd.f32 %v6907, %v7614
  %v7841 = vadd.f32 %v6912, %v7619
  %v7842 = vadd.f32 %v6917, %v7624
  %v7843 = vadd.f32 %v6922, %v7629
  %v7844 = vadd.f32 %v6927, %v7634
  %v7845 = vadd.f32 %v6932, %v7639
  %v7846 = vadd.f32 %v6937, %v7644
  %v7847 = vadd.f32 %v6942, %v7649
  %v7848 = vadd.f32 %v6947, %v7654
  %v7849 = vadd.f32 %v6952, %v7659
  %v7850 = vadd.f32 %v6957, %v7664
  %v7851 = vadd.f32 %v6962, %v7669
  %v7852 = vadd.f32 %v6967, %v7674
  %v7853 = vadd.f32 %v6972, %v7679
  %v7854 = vadd.f32 %v6977, %v7684
  %v7855 = vadd.f32 %v6982, %v7689
  %v7856 = vadd.f32 %v6987, %v7694
  %v7857 = vadd.f32 %v6992, %v7699
  %v7858 = vadd.f32 %v6997, %v7704
  %v7859 = vadd.f32 %v7002, %v7709
  %v7860 = vadd.f32 %v7007, %v7714
  %v7861 = vadd.f32 %v7012, %v7719
  %v7862 = vadd.f32 %v7017, %v7724
  %v7863 = vadd.f32 %v7022, %v7729
  %v7864 = vadd.f32 %v7027, %v7734
  %v7865 = vadd.f32 %v7032, %v7739
  %v7866 = vadd.f32 %v7037, %v7744
  %v7867 = vadd.f32 %v7042, %v7749
  %v7868 = vadd.f32 %v7047, %v7754
  %v7869 = vadd.f32 %v7052, %v7759
  %v7870 = vadd.f32 %v7057, %v7764
  %v7871 = vadd.f32 %v7062, %v7769
  %v7872 = vadd.f32 %v7067, %v7774
  %v7873 = vadd.f32 %v7072, %v7779
  %v7874 = vadd.f32 %v7077, %v7784
  %v7875 = vadd.f32 %v7082, %v7789
  %v7876 = vadd.f32 %v7087, %v7794
  %v7877 = vadd.f32 %v7092, %v7799
  %v7878 = vadd.f32 %v7097, %v7804
  %v7879 = vadd.f32 %v7102, %v7809
  %v7880 = vadd.f32 %v7107, %v7814
  %v7887 = vrot.slane %v5745, 7
  %v7888 = vrot.slane %v5746, 7
  %v7889 = vsel %vm535, %v7887, %v7888
  %v7890 = vrot.slane %v5747, 7
  %v7891 = vsel %vm535, %v7888, %v7890
  %v7892 = vrot.slane %v5817, 7
  %v7893 = vrot.slane %v5818, 7
  %v7894 = vsel %vm535, %v7892, %v7893
  %v7895 = vrot.slane %v5819, 7
  %v7896 = vsel %vm535, %v7893, %v7895
  %s7897 = scalar_lea.vmem %s3, 24
  %v7898 = vld [vmem:[%s7897] sm:$0xff]
  %v7899 = vsel %vm5470, %v7889, 0
  %v7901 = vsel %vm5470, %v7891, 0
  %v7903 = vsel %vm5470, %v7894, 0
  %v7905 = vsel %vm5470, %v7896, 0
  %7907 = vmatprep.subr.mxu0 0.0
  %7908 = vmatpush1.msra.mxu0 0.0
  %7909 = vmatprep.subr.mxu0 0.0
  %7910 = vmatpush1.msra.mxu0 0.0
  %7911 = vmatprep.subr.mxu0 0.0
  %7912 = vmatpush1.msra.mxu0 0.0
  %7913 = vmatprep.subr.mxu0 0.0
  %7914 = vmatpush1.msra.mxu0 0.0
  %7915 = vmatprep.subr.mxu0 0.0
  %7916 = vmatpush1.msra.mxu0 0.0
  %7917 = vmatprep.subr.mxu0 0.0
  %7918 = vmatpush1.msra.mxu0 0.0
  %7919 = vmatprep.subr.mxu0 0.0
  %7920 = vmatpush1.msra.mxu0 0.0
  %7921 = vmatprep.subr.mxu0 0.0
  %7922 = vmatpush1.msra.mxu0 0.0
  %7923 = vmatprep.subr.mxu0 0.0
  %7924 = vmatpush1.msra.mxu0 0.0
  %7925 = vmatprep.subr.mxu0 0.0
  %7926 = vmatpush1.msra.mxu0 0.0
  %7927 = vmatprep.subr.mxu0 0.0
  %7928 = vmatpush1.msra.mxu0 0.0
  %7929 = vmatprep.subr.mxu0 0.0
  %7930 = vmatpush1.msra.mxu0 0.0
  %7931 = vmatprep.subr.mxu0 0.0
  %7932 = vmatpush1.msra.mxu0 0.0
  %7933 = vmatprep.subr.mxu0 0.0
  %7934 = vmatpush1.msra.mxu0 0.0
  %7935 = vmatprep.subr.mxu0 0.0
  %7936 = vmatpush1.msra.mxu0 0.0
  %7937 = vmatprep.subr.mxu0 0.0
  %7938 = vmatpush1.msra.mxu0 %v7898
  %7939 = vmatprep.subr.mxu0 0.0
  %7940 = vmatpush2.msra.mxu0 0.0
  %7941 = vmatprep.subr.mxu0 0.0
  %7942 = vmatpush2.msra.mxu0 0.0
  %7943 = vmatprep.subr.mxu0 0.0
  %7944 = vmatpush2.msra.mxu0 0.0
  %7945 = vmatprep.subr.mxu0 0.0
  %7946 = vmatpush2.msra.mxu0 0.0
  %7947 = vmatprep.subr.mxu0 0.0
  %7948 = vmatpush2.msra.mxu0 0.0
  %7949 = vmatprep.subr.mxu0 0.0
  %7950 = vmatpush2.msra.mxu0 0.0
  %7951 = vmatprep.subr.mxu0 0.0
  %7952 = vmatpush2.msra.mxu0 0.0
  %7953 = vmatprep.subr.mxu0 0.0
  %7954 = vmatpush2.msra.mxu0 0.0
  %7955 = vmatprep.subr.mxu0 0.0
  %7956 = vmatpush2.msra.mxu0 0.0
  %7957 = vmatprep.subr.mxu0 0.0
  %7958 = vmatpush2.msra.mxu0 0.0
  %7959 = vmatprep.subr.mxu0 0.0
  %7960 = vmatpush2.msra.mxu0 0.0
  %7961 = vmatprep.subr.mxu0 0.0
  %7962 = vmatpush2.msra.mxu0 0.0
  %7963 = vmatprep.subr.mxu0 0.0
  %7964 = vmatpush2.msra.mxu0 0.0
  %7965 = vmatprep.subr.mxu0 0.0
  %7966 = vmatpush2.msra.mxu0 0.0
  %7967 = vmatprep.subr.mxu0 0.0
  %7968 = vmatpush2.msra.mxu0 0.0
  %7969 = vmatprep.subr.mxu0 0.0
  %7970 = vmatpush2.msra.mxu0 0.0
  %7971 = vmatprep.mubr.f32.mxu0 0.0
  %7972 = vmatmul.mubr.f32.gmra.mxu0 %v6601
  %v7973 = vpop.f32.mrf.mxu0
  %v7974 = vadd.f32 0.0, %v7973
  %v7975 = vpop.f32.mrf.mxu0
  %7976 = vmatprep.mubr.f32.mxu0 0.0
  %7977 = vmatmul.mubr.f32.gmra.mxu0 %v6603
  %v7978 = vpop.f32.mrf.mxu0
  %v7979 = vadd.f32 0.0, %v7978
  %v7980 = vpop.f32.mrf.mxu0
  %7981 = vmatprep.mubr.f32.mxu0 0.0
  %7982 = vmatmul.mubr.f32.gmra.mxu0 %v6605
  %v7983 = vpop.f32.mrf.mxu0
  %v7984 = vadd.f32 0.0, %v7983
  %v7985 = vpop.f32.mrf.mxu0
  %7986 = vmatprep.mubr.f32.mxu0 0.0
  %7987 = vmatmul.mubr.f32.gmra.mxu0 %v6607
  %v7988 = vpop.f32.mrf.mxu0
  %v7989 = vadd.f32 0.0, %v7988
  %v7990 = vpop.f32.mrf.mxu0
  %7991 = vmatprep.mubr.f32.mxu0 0.0
  %7992 = vmatmul.mubr.f32.gmra.mxu0 %v6609
  %v7993 = vpop.f32.mrf.mxu0
  %v7994 = vadd.f32 0.0, %v7993
  %v7995 = vpop.f32.mrf.mxu0
  %7996 = vmatprep.mubr.f32.mxu0 0.0
  %7997 = vmatmul.mubr.f32.gmra.mxu0 %v6611
  %v7998 = vpop.f32.mrf.mxu0
  %v7999 = vadd.f32 0.0, %v7998
  %v8000 = vpop.f32.mrf.mxu0
  %8001 = vmatprep.mubr.f32.mxu0 0.0
  %8002 = vmatmul.mubr.f32.gmra.mxu0 %v6613
  %v8003 = vpop.f32.mrf.mxu0
  %v8004 = vadd.f32 0.0, %v8003
  %v8005 = vpop.f32.mrf.mxu0
  %8006 = vmatprep.mubr.f32.mxu0 0.0
  %8007 = vmatmul.mubr.f32.gmra.mxu0 %v6615
  %v8008 = vpop.f32.mrf.mxu0
  %v8009 = vadd.f32 0.0, %v8008
  %v8010 = vpop.f32.mrf.mxu0
  %8011 = vmatprep.mubr.f32.mxu0 0.0
  %8012 = vmatmul.mubr.f32.gmra.mxu0 %v6617
  %v8013 = vpop.f32.mrf.mxu0
  %v8014 = vadd.f32 0.0, %v8013
  %v8015 = vpop.f32.mrf.mxu0
  %8016 = vmatprep.mubr.f32.mxu0 0.0
  %8017 = vmatmul.mubr.f32.gmra.mxu0 %v6619
  %v8018 = vpop.f32.mrf.mxu0
  %v8019 = vadd.f32 0.0, %v8018
  %v8020 = vpop.f32.mrf.mxu0
  %8021 = vmatprep.mubr.f32.mxu0 0.0
  %8022 = vmatmul.mubr.f32.gmra.mxu0 %v6621
  %v8023 = vpop.f32.mrf.mxu0
  %v8024 = vadd.f32 0.0, %v8023
  %v8025 = vpop.f32.mrf.mxu0
  %8026 = vmatprep.mubr.f32.mxu0 0.0
  %8027 = vmatmul.mubr.f32.gmra.mxu0 %v6623
  %v8028 = vpop.f32.mrf.mxu0
  %v8029 = vadd.f32 0.0, %v8028
  %v8030 = vpop.f32.mrf.mxu0
  %8031 = vmatprep.mubr.f32.mxu0 0.0
  %8032 = vmatmul.mubr.f32.gmra.mxu0 %v6625
  %v8033 = vpop.f32.mrf.mxu0
  %v8034 = vadd.f32 0.0, %v8033
  %v8035 = vpop.f32.mrf.mxu0
  %8036 = vmatprep.mubr.f32.mxu0 0.0
  %8037 = vmatmul.mubr.f32.gmra.mxu0 %v6627
  %v8038 = vpop.f32.mrf.mxu0
  %v8039 = vadd.f32 0.0, %v8038
  %v8040 = vpop.f32.mrf.mxu0
  %8041 = vmatprep.mubr.f32.mxu0 0.0
  %8042 = vmatmul.mubr.f32.gmra.mxu0 %v6629
  %v8043 = vpop.f32.mrf.mxu0
  %v8044 = vadd.f32 0.0, %v8043
  %v8045 = vpop.f32.mrf.mxu0
  %8046 = vmatprep.mubr.f32.mxu0 0.0
  %8047 = vmatmul.mubr.f32.gmra.mxu0 %v6631
  %v8048 = vpop.f32.mrf.mxu0
  %v8049 = vadd.f32 0.0, %v8048
  %v8050 = vpop.f32.mrf.mxu0
  %8051 = vmatprep.mubr.f32.mxu0 0.0
  %8052 = vmatmul.mubr.f32.gmra.mxu0 %v6633
  %v8053 = vpop.f32.mrf.mxu0
  %v8054 = vadd.f32 0.0, %v8053
  %v8055 = vpop.f32.mrf.mxu0
  %8056 = vmatprep.mubr.f32.mxu0 0.0
  %8057 = vmatmul.mubr.f32.gmra.mxu0 %v6635
  %v8058 = vpop.f32.mrf.mxu0
  %v8059 = vadd.f32 0.0, %v8058
  %v8060 = vpop.f32.mrf.mxu0
  %8061 = vmatprep.mubr.f32.mxu0 0.0
  %8062 = vmatmul.mubr.f32.gmra.mxu0 %v6637
  %v8063 = vpop.f32.mrf.mxu0
  %v8064 = vadd.f32 0.0, %v8063
  %v8065 = vpop.f32.mrf.mxu0
  %8066 = vmatprep.mubr.f32.mxu0 0.0
  %8067 = vmatmul.mubr.f32.gmra.mxu0 %v6639
  %v8068 = vpop.f32.mrf.mxu0
  %v8069 = vadd.f32 0.0, %v8068
  %v8070 = vpop.f32.mrf.mxu0
  %8071 = vmatprep.mubr.f32.mxu0 0.0
  %8072 = vmatmul.mubr.f32.gmra.mxu0 %v6641
  %v8073 = vpop.f32.mrf.mxu0
  %v8074 = vadd.f32 0.0, %v8073
  %v8075 = vpop.f32.mrf.mxu0
  %8076 = vmatprep.mubr.f32.mxu0 0.0
  %8077 = vmatmul.mubr.f32.gmra.mxu0 %v6643
  %v8078 = vpop.f32.mrf.mxu0
  %v8079 = vadd.f32 0.0, %v8078
  %v8080 = vpop.f32.mrf.mxu0
  %8081 = vmatprep.mubr.f32.mxu0 0.0
  %8082 = vmatmul.mubr.f32.gmra.mxu0 %v6645
  %v8083 = vpop.f32.mrf.mxu0
  %v8084 = vadd.f32 0.0, %v8083
  %v8085 = vpop.f32.mrf.mxu0
  %8086 = vmatprep.mubr.f32.mxu0 0.0
  %8087 = vmatmul.mubr.f32.gmra.mxu0 %v6647
  %v8088 = vpop.f32.mrf.mxu0
  %v8089 = vadd.f32 0.0, %v8088
  %v8090 = vpop.f32.mrf.mxu0
  %8091 = vmatprep.mubr.f32.mxu0 0.0
  %8092 = vmatmul.mubr.f32.gmra.mxu0 %v6649
  %v8093 = vpop.f32.mrf.mxu0
  %v8094 = vadd.f32 0.0, %v8093
  %v8095 = vpop.f32.mrf.mxu0
  %8096 = vmatprep.mubr.f32.mxu0 0.0
  %8097 = vmatmul.mubr.f32.gmra.mxu0 %v6651
  %v8098 = vpop.f32.mrf.mxu0
  %v8099 = vadd.f32 0.0, %v8098
  %v8100 = vpop.f32.mrf.mxu0
  %8101 = vmatprep.mubr.f32.mxu0 0.0
  %8102 = vmatmul.mubr.f32.gmra.mxu0 %v6653
  %v8103 = vpop.f32.mrf.mxu0
  %v8104 = vadd.f32 0.0, %v8103
  %v8105 = vpop.f32.mrf.mxu0
  %8106 = vmatprep.mubr.f32.mxu0 0.0
  %8107 = vmatmul.mubr.f32.gmra.mxu0 %v6655
  %v8108 = vpop.f32.mrf.mxu0
  %v8109 = vadd.f32 0.0, %v8108
  %v8110 = vpop.f32.mrf.mxu0
  %8111 = vmatprep.mubr.f32.mxu0 0.0
  %8112 = vmatmul.mubr.f32.gmra.mxu0 %v6657
  %v8113 = vpop.f32.mrf.mxu0
  %v8114 = vadd.f32 0.0, %v8113
  %v8115 = vpop.f32.mrf.mxu0
  %8116 = vmatprep.mubr.f32.mxu0 0.0
  %8117 = vmatmul.mubr.f32.gmra.mxu0 %v6659
  %v8118 = vpop.f32.mrf.mxu0
  %v8119 = vadd.f32 0.0, %v8118
  %v8120 = vpop.f32.mrf.mxu0
  %8121 = vmatprep.mubr.f32.mxu0 0.0
  %8122 = vmatmul.mubr.f32.gmra.mxu0 %v7899
  %v8123 = vpop.f32.mrf.mxu0
  %v8124 = vadd.f32 0.0, %v8123
  %v8125 = vpop.f32.mrf.mxu0
  %8126 = vmatprep.mubr.f32.mxu0 0.0
  %8127 = vmatmul.mubr.f32.gmra.mxu0 %v7901
  %v8128 = vpop.f32.mrf.mxu0
  %v8129 = vadd.f32 0.0, %v8128
  %v8130 = vpop.f32.mrf.mxu0
  %8131 = vmatprep.mubr.f32.mxu0 0.0
  %8132 = vmatmul.mubr.f32.gmra.mxu0 %v6665
  %v8133 = vpop.f32.mrf.mxu0
  %v8134 = vadd.f32 0.0, %v8133
  %v8135 = vpop.f32.mrf.mxu0
  %8136 = vmatprep.mubr.f32.mxu0 0.0
  %8137 = vmatmul.mubr.f32.gmra.mxu0 %v6667
  %v8138 = vpop.f32.mrf.mxu0
  %v8139 = vadd.f32 0.0, %v8138
  %v8140 = vpop.f32.mrf.mxu0
  %8141 = vmatprep.mubr.f32.mxu0 0.0
  %8142 = vmatmul.mubr.f32.gmra.mxu0 %v6669
  %v8143 = vpop.f32.mrf.mxu0
  %v8144 = vadd.f32 0.0, %v8143
  %v8145 = vpop.f32.mrf.mxu0
  %8146 = vmatprep.mubr.f32.mxu0 0.0
  %8147 = vmatmul.mubr.f32.gmra.mxu0 %v6671
  %v8148 = vpop.f32.mrf.mxu0
  %v8149 = vadd.f32 0.0, %v8148
  %v8150 = vpop.f32.mrf.mxu0
  %8151 = vmatprep.mubr.f32.mxu0 0.0
  %8152 = vmatmul.mubr.f32.gmra.mxu0 %v6673
  %v8153 = vpop.f32.mrf.mxu0
  %v8154 = vadd.f32 0.0, %v8153
  %v8155 = vpop.f32.mrf.mxu0
  %8156 = vmatprep.mubr.f32.mxu0 0.0
  %8157 = vmatmul.mubr.f32.gmra.mxu0 %v6675
  %v8158 = vpop.f32.mrf.mxu0
  %v8159 = vadd.f32 0.0, %v8158
  %v8160 = vpop.f32.mrf.mxu0
  %8161 = vmatprep.mubr.f32.mxu0 0.0
  %8162 = vmatmul.mubr.f32.gmra.mxu0 %v6677
  %v8163 = vpop.f32.mrf.mxu0
  %v8164 = vadd.f32 0.0, %v8163
  %v8165 = vpop.f32.mrf.mxu0
  %8166 = vmatprep.mubr.f32.mxu0 0.0
  %8167 = vmatmul.mubr.f32.gmra.mxu0 %v6679
  %v8168 = vpop.f32.mrf.mxu0
  %v8169 = vadd.f32 0.0, %v8168
  %v8170 = vpop.f32.mrf.mxu0
  %8171 = vmatprep.mubr.f32.mxu0 0.0
  %8172 = vmatmul.mubr.f32.gmra.mxu0 %v6681
  %v8173 = vpop.f32.mrf.mxu0
  %v8174 = vadd.f32 0.0, %v8173
  %v8175 = vpop.f32.mrf.mxu0
  %8176 = vmatprep.mubr.f32.mxu0 0.0
  %8177 = vmatmul.mubr.f32.gmra.mxu0 %v6683
  %v8178 = vpop.f32.mrf.mxu0
  %v8179 = vadd.f32 0.0, %v8178
  %v8180 = vpop.f32.mrf.mxu0
  %8181 = vmatprep.mubr.f32.mxu0 0.0
  %8182 = vmatmul.mubr.f32.gmra.mxu0 %v6685
  %v8183 = vpop.f32.mrf.mxu0
  %v8184 = vadd.f32 0.0, %v8183
  %v8185 = vpop.f32.mrf.mxu0
  %8186 = vmatprep.mubr.f32.mxu0 0.0
  %8187 = vmatmul.mubr.f32.gmra.mxu0 %v6687
  %v8188 = vpop.f32.mrf.mxu0
  %v8189 = vadd.f32 0.0, %v8188
  %v8190 = vpop.f32.mrf.mxu0
  %8191 = vmatprep.mubr.f32.mxu0 0.0
  %8192 = vmatmul.mubr.f32.gmra.mxu0 %v6689
  %v8193 = vpop.f32.mrf.mxu0
  %v8194 = vadd.f32 0.0, %v8193
  %v8195 = vpop.f32.mrf.mxu0
  %8196 = vmatprep.mubr.f32.mxu0 0.0
  %8197 = vmatmul.mubr.f32.gmra.mxu0 %v6691
  %v8198 = vpop.f32.mrf.mxu0
  %v8199 = vadd.f32 0.0, %v8198
  %v8200 = vpop.f32.mrf.mxu0
  %8201 = vmatprep.mubr.f32.mxu0 0.0
  %8202 = vmatmul.mubr.f32.gmra.mxu0 %v6693
  %v8203 = vpop.f32.mrf.mxu0
  %v8204 = vadd.f32 0.0, %v8203
  %v8205 = vpop.f32.mrf.mxu0
  %8206 = vmatprep.mubr.f32.mxu0 0.0
  %8207 = vmatmul.mubr.f32.gmra.mxu0 %v6695
  %v8208 = vpop.f32.mrf.mxu0
  %v8209 = vadd.f32 0.0, %v8208
  %v8210 = vpop.f32.mrf.mxu0
  %8211 = vmatprep.mubr.f32.mxu0 0.0
  %8212 = vmatmul.mubr.f32.gmra.mxu0 %v6697
  %v8213 = vpop.f32.mrf.mxu0
  %v8214 = vadd.f32 0.0, %v8213
  %v8215 = vpop.f32.mrf.mxu0
  %8216 = vmatprep.mubr.f32.mxu0 0.0
  %8217 = vmatmul.mubr.f32.gmra.mxu0 %v6699
  %v8218 = vpop.f32.mrf.mxu0
  %v8219 = vadd.f32 0.0, %v8218
  %v8220 = vpop.f32.mrf.mxu0
  %8221 = vmatprep.mubr.f32.mxu0 0.0
  %8222 = vmatmul.mubr.f32.gmra.mxu0 %v6701
  %v8223 = vpop.f32.mrf.mxu0
  %v8224 = vadd.f32 0.0, %v8223
  %v8225 = vpop.f32.mrf.mxu0
  %8226 = vmatprep.mubr.f32.mxu0 0.0
  %8227 = vmatmul.mubr.f32.gmra.mxu0 %v6703
  %v8228 = vpop.f32.mrf.mxu0
  %v8229 = vadd.f32 0.0, %v8228
  %v8230 = vpop.f32.mrf.mxu0
  %8231 = vmatprep.mubr.f32.mxu0 0.0
  %8232 = vmatmul.mubr.f32.gmra.mxu0 %v6705
  %v8233 = vpop.f32.mrf.mxu0
  %v8234 = vadd.f32 0.0, %v8233
  %v8235 = vpop.f32.mrf.mxu0
  %8236 = vmatprep.mubr.f32.mxu0 0.0
  %8237 = vmatmul.mubr.f32.gmra.mxu0 %v6707
  %v8238 = vpop.f32.mrf.mxu0
  %v8239 = vadd.f32 0.0, %v8238
  %v8240 = vpop.f32.mrf.mxu0
  %8241 = vmatprep.mubr.f32.mxu0 0.0
  %8242 = vmatmul.mubr.f32.gmra.mxu0 %v6709
  %v8243 = vpop.f32.mrf.mxu0
  %v8244 = vadd.f32 0.0, %v8243
  %v8245 = vpop.f32.mrf.mxu0
  %8246 = vmatprep.mubr.f32.mxu0 0.0
  %8247 = vmatmul.mubr.f32.gmra.mxu0 %v6711
  %v8248 = vpop.f32.mrf.mxu0
  %v8249 = vadd.f32 0.0, %v8248
  %v8250 = vpop.f32.mrf.mxu0
  %8251 = vmatprep.mubr.f32.mxu0 0.0
  %8252 = vmatmul.mubr.f32.gmra.mxu0 %v6713
  %v8253 = vpop.f32.mrf.mxu0
  %v8254 = vadd.f32 0.0, %v8253
  %v8255 = vpop.f32.mrf.mxu0
  %8256 = vmatprep.mubr.f32.mxu0 0.0
  %8257 = vmatmul.mubr.f32.gmra.mxu0 %v6715
  %v8258 = vpop.f32.mrf.mxu0
  %v8259 = vadd.f32 0.0, %v8258
  %v8260 = vpop.f32.mrf.mxu0
  %8261 = vmatprep.mubr.f32.mxu0 0.0
  %8262 = vmatmul.mubr.f32.gmra.mxu0 %v6717
  %v8263 = vpop.f32.mrf.mxu0
  %v8264 = vadd.f32 0.0, %v8263
  %v8265 = vpop.f32.mrf.mxu0
  %8266 = vmatprep.mubr.f32.mxu0 0.0
  %8267 = vmatmul.mubr.f32.gmra.mxu0 %v6719
  %v8268 = vpop.f32.mrf.mxu0
  %v8269 = vadd.f32 0.0, %v8268
  %v8270 = vpop.f32.mrf.mxu0
  %8271 = vmatprep.mubr.f32.mxu0 0.0
  %8272 = vmatmul.mubr.f32.gmra.mxu0 %v6721
  %v8273 = vpop.f32.mrf.mxu0
  %v8274 = vadd.f32 0.0, %v8273
  %v8275 = vpop.f32.mrf.mxu0
  %8276 = vmatprep.mubr.f32.mxu0 0.0
  %8277 = vmatmul.mubr.f32.gmra.mxu0 %v6723
  %v8278 = vpop.f32.mrf.mxu0
  %v8279 = vadd.f32 0.0, %v8278
  %v8280 = vpop.f32.mrf.mxu0
  %8281 = vmatprep.mubr.f32.mxu0 0.0
  %8282 = vmatmul.mubr.f32.gmra.mxu0 %v7903
  %v8283 = vpop.f32.mrf.mxu0
  %v8284 = vadd.f32 0.0, %v8283
  %v8285 = vpop.f32.mrf.mxu0
  %8286 = vmatprep.mubr.f32.mxu0 0.0
  %8287 = vmatmul.mubr.f32.gmra.mxu0 %v7905
  %v8288 = vpop.f32.mrf.mxu0
  %v8289 = vadd.f32 0.0, %v8288
  %v8290 = vpop.f32.mrf.mxu0
  %8291 = vdwg.mxu0
  %v8292 = vadd.f32 %v7817, %v7974
  %v8293 = vadd.f32 %v7818, %v7979
  %v8294 = vadd.f32 %v7819, %v7984
  %v8295 = vadd.f32 %v7820, %v7989
  %v8296 = vadd.f32 %v7821, %v7994
  %v8297 = vadd.f32 %v7822, %v7999
  %v8298 = vadd.f32 %v7823, %v8004
  %v8299 = vadd.f32 %v7824, %v8009
  %v8300 = vadd.f32 %v7825, %v8014
  %v8301 = vadd.f32 %v7826, %v8019
  %v8302 = vadd.f32 %v7827, %v8024
  %v8303 = vadd.f32 %v7828, %v8029
  %v8304 = vadd.f32 %v7829, %v8034
  %v8305 = vadd.f32 %v7830, %v8039
  %v8306 = vadd.f32 %v7831, %v8044
  %v8307 = vadd.f32 %v7832, %v8049
  %v8308 = vadd.f32 %v7833, %v8054
  %v8309 = vadd.f32 %v7834, %v8059
  %v8310 = vadd.f32 %v7835, %v8064
  %v8311 = vadd.f32 %v7836, %v8069
  %v8312 = vadd.f32 %v7837, %v8074
  %v8313 = vadd.f32 %v7838, %v8079
  %v8314 = vadd.f32 %v7839, %v8084
  %v8315 = vadd.f32 %v7840, %v8089
  %v8316 = vadd.f32 %v7841, %v8094
  %v8317 = vadd.f32 %v7842, %v8099
  %v8318 = vadd.f32 %v7843, %v8104
  %v8319 = vadd.f32 %v7844, %v8109
  %v8320 = vadd.f32 %v7845, %v8114
  %v8321 = vadd.f32 %v7846, %v8119
  %v8322 = vadd.f32 %v7847, %v8124
  %v8323 = vadd.f32 %v7848, %v8129
  %v8324 = vadd.f32 %v7849, %v8134
  %v8325 = vadd.f32 %v7850, %v8139
  %v8326 = vadd.f32 %v7851, %v8144
  %v8327 = vadd.f32 %v7852, %v8149
  %v8328 = vadd.f32 %v7853, %v8154
  %v8329 = vadd.f32 %v7854, %v8159
  %v8330 = vadd.f32 %v7855, %v8164
  %v8331 = vadd.f32 %v7856, %v8169
  %v8332 = vadd.f32 %v7857, %v8174
  %v8333 = vadd.f32 %v7858, %v8179
  %v8334 = vadd.f32 %v7859, %v8184
  %v8335 = vadd.f32 %v7860, %v8189
  %v8336 = vadd.f32 %v7861, %v8194
  %v8337 = vadd.f32 %v7862, %v8199
  %v8338 = vadd.f32 %v7863, %v8204
  %v8339 = vadd.f32 %v7864, %v8209
  %v8340 = vadd.f32 %v7865, %v8214
  %v8341 = vadd.f32 %v7866, %v8219
  %v8342 = vadd.f32 %v7867, %v8224
  %v8343 = vadd.f32 %v7868, %v8229
  %v8344 = vadd.f32 %v7869, %v8234
  %v8345 = vadd.f32 %v7870, %v8239
  %v8346 = vadd.f32 %v7871, %v8244
  %v8347 = vadd.f32 %v7872, %v8249
  %v8348 = vadd.f32 %v7873, %v8254
  %v8349 = vadd.f32 %v7874, %v8259
  %v8350 = vadd.f32 %v7875, %v8264
  %v8351 = vadd.f32 %v7876, %v8269
  %v8352 = vadd.f32 %v7877, %v8274
  %v8353 = vadd.f32 %v7878, %v8279
  %v8354 = vadd.f32 %v7879, %v8284
  %v8355 = vadd.f32 %v7880, %v8289
  %s8356 = scalar_lea.vmem %s3, 32
  %v8357 = vld [vmem:[%s8356] sm:$0xff]
  %v8358 = vsel %vm5470, %v5746, 0
  %v8360 = vsel %vm5470, %v5747, 0
  %v8362 = vsel %vm5470, %v5818, 0
  %v8364 = vsel %vm5470, %v5819, 0
  %8366 = vmatprep.subr.mxu0 0.0
  %8367 = vmatpush1.msra.mxu0 0.0
  %8368 = vmatprep.subr.mxu0 0.0
  %8369 = vmatpush1.msra.mxu0 0.0
  %8370 = vmatprep.subr.mxu0 0.0
  %8371 = vmatpush1.msra.mxu0 0.0
  %8372 = vmatprep.subr.mxu0 0.0
  %8373 = vmatpush1.msra.mxu0 0.0
  %8374 = vmatprep.subr.mxu0 0.0
  %8375 = vmatpush1.msra.mxu0 0.0
  %8376 = vmatprep.subr.mxu0 0.0
  %8377 = vmatpush1.msra.mxu0 0.0
  %8378 = vmatprep.subr.mxu0 0.0
  %8379 = vmatpush1.msra.mxu0 0.0
  %8380 = vmatprep.subr.mxu0 0.0
  %8381 = vmatpush1.msra.mxu0 0.0
  %8382 = vmatprep.subr.mxu0 0.0
  %8383 = vmatpush1.msra.mxu0 0.0
  %8384 = vmatprep.subr.mxu0 0.0
  %8385 = vmatpush1.msra.mxu0 0.0
  %8386 = vmatprep.subr.mxu0 0.0
  %8387 = vmatpush1.msra.mxu0 0.0
  %8388 = vmatprep.subr.mxu0 0.0
  %8389 = vmatpush1.msra.mxu0 0.0
  %8390 = vmatprep.subr.mxu0 0.0
  %8391 = vmatpush1.msra.mxu0 0.0
  %8392 = vmatprep.subr.mxu0 0.0
  %8393 = vmatpush1.msra.mxu0 0.0
  %8394 = vmatprep.subr.mxu0 0.0
  %8395 = vmatpush1.msra.mxu0 0.0
  %8396 = vmatprep.subr.mxu0 0.0
  %8397 = vmatpush1.msra.mxu0 %v8357
  %8398 = vmatprep.subr.mxu0 0.0
  %8399 = vmatpush2.msra.mxu0 0.0
  %8400 = vmatprep.subr.mxu0 0.0
  %8401 = vmatpush2.msra.mxu0 0.0
  %8402 = vmatprep.subr.mxu0 0.0
  %8403 = vmatpush2.msra.mxu0 0.0
  %8404 = vmatprep.subr.mxu0 0.0
  %8405 = vmatpush2.msra.mxu0 0.0
  %8406 = vmatprep.subr.mxu0 0.0
  %8407 = vmatpush2.msra.mxu0 0.0
  %8408 = vmatprep.subr.mxu0 0.0
  %8409 = vmatpush2.msra.mxu0 0.0
  %8410 = vmatprep.subr.mxu0 0.0
  %8411 = vmatpush2.msra.mxu0 0.0
  %8412 = vmatprep.subr.mxu0 0.0
  %8413 = vmatpush2.msra.mxu0 0.0
  %8414 = vmatprep.subr.mxu0 0.0
  %8415 = vmatpush2.msra.mxu0 0.0
  %8416 = vmatprep.subr.mxu0 0.0
  %8417 = vmatpush2.msra.mxu0 0.0
  %8418 = vmatprep.subr.mxu0 0.0
  %8419 = vmatpush2.msra.mxu0 0.0
  %8420 = vmatprep.subr.mxu0 0.0
  %8421 = vmatpush2.msra.mxu0 0.0
  %8422 = vmatprep.subr.mxu0 0.0
  %8423 = vmatpush2.msra.mxu0 0.0
  %8424 = vmatprep.subr.mxu0 0.0
  %8425 = vmatpush2.msra.mxu0 0.0
  %8426 = vmatprep.subr.mxu0 0.0
  %8427 = vmatpush2.msra.mxu0 0.0
  %8428 = vmatprep.subr.mxu0 0.0
  %8429 = vmatpush2.msra.mxu0 0.0
  %8430 = vmatprep.mubr.f32.mxu0 0.0
  %8431 = vmatmul.mubr.f32.gmra.mxu0 %v6088
  %v8432 = vpop.f32.mrf.mxu0
  %v8433 = vadd.f32 0.0, %v8432
  %v8434 = vpop.f32.mrf.mxu0
  %8435 = vmatprep.mubr.f32.mxu0 0.0
  %8436 = vmatmul.mubr.f32.gmra.mxu0 %v6090
  %v8437 = vpop.f32.mrf.mxu0
  %v8438 = vadd.f32 0.0, %v8437
  %v8439 = vpop.f32.mrf.mxu0
  %8440 = vmatprep.mubr.f32.mxu0 0.0
  %8441 = vmatmul.mubr.f32.gmra.mxu0 %v6092
  %v8442 = vpop.f32.mrf.mxu0
  %v8443 = vadd.f32 0.0, %v8442
  %v8444 = vpop.f32.mrf.mxu0
  %8445 = vmatprep.mubr.f32.mxu0 0.0
  %8446 = vmatmul.mubr.f32.gmra.mxu0 %v6094
  %v8447 = vpop.f32.mrf.mxu0
  %v8448 = vadd.f32 0.0, %v8447
  %v8449 = vpop.f32.mrf.mxu0
  %8450 = vmatprep.mubr.f32.mxu0 0.0
  %8451 = vmatmul.mubr.f32.gmra.mxu0 %v6096
  %v8452 = vpop.f32.mrf.mxu0
  %v8453 = vadd.f32 0.0, %v8452
  %v8454 = vpop.f32.mrf.mxu0
  %8455 = vmatprep.mubr.f32.mxu0 0.0
  %8456 = vmatmul.mubr.f32.gmra.mxu0 %v6098
  %v8457 = vpop.f32.mrf.mxu0
  %v8458 = vadd.f32 0.0, %v8457
  %v8459 = vpop.f32.mrf.mxu0
  %8460 = vmatprep.mubr.f32.mxu0 0.0
  %8461 = vmatmul.mubr.f32.gmra.mxu0 %v6100
  %v8462 = vpop.f32.mrf.mxu0
  %v8463 = vadd.f32 0.0, %v8462
  %v8464 = vpop.f32.mrf.mxu0
  %8465 = vmatprep.mubr.f32.mxu0 0.0
  %8466 = vmatmul.mubr.f32.gmra.mxu0 %v6102
  %v8467 = vpop.f32.mrf.mxu0
  %v8468 = vadd.f32 0.0, %v8467
  %v8469 = vpop.f32.mrf.mxu0
  %8470 = vmatprep.mubr.f32.mxu0 0.0
  %8471 = vmatmul.mubr.f32.gmra.mxu0 %v6104
  %v8472 = vpop.f32.mrf.mxu0
  %v8473 = vadd.f32 0.0, %v8472
  %v8474 = vpop.f32.mrf.mxu0
  %8475 = vmatprep.mubr.f32.mxu0 0.0
  %8476 = vmatmul.mubr.f32.gmra.mxu0 %v6106
  %v8477 = vpop.f32.mrf.mxu0
  %v8478 = vadd.f32 0.0, %v8477
  %v8479 = vpop.f32.mrf.mxu0
  %8480 = vmatprep.mubr.f32.mxu0 0.0
  %8481 = vmatmul.mubr.f32.gmra.mxu0 %v6108
  %v8482 = vpop.f32.mrf.mxu0
  %v8483 = vadd.f32 0.0, %v8482
  %v8484 = vpop.f32.mrf.mxu0
  %8485 = vmatprep.mubr.f32.mxu0 0.0
  %8486 = vmatmul.mubr.f32.gmra.mxu0 %v6110
  %v8487 = vpop.f32.mrf.mxu0
  %v8488 = vadd.f32 0.0, %v8487
  %v8489 = vpop.f32.mrf.mxu0
  %8490 = vmatprep.mubr.f32.mxu0 0.0
  %8491 = vmatmul.mubr.f32.gmra.mxu0 %v6112
  %v8492 = vpop.f32.mrf.mxu0
  %v8493 = vadd.f32 0.0, %v8492
  %v8494 = vpop.f32.mrf.mxu0
  %8495 = vmatprep.mubr.f32.mxu0 0.0
  %8496 = vmatmul.mubr.f32.gmra.mxu0 %v6114
  %v8497 = vpop.f32.mrf.mxu0
  %v8498 = vadd.f32 0.0, %v8497
  %v8499 = vpop.f32.mrf.mxu0
  %8500 = vmatprep.mubr.f32.mxu0 0.0
  %8501 = vmatmul.mubr.f32.gmra.mxu0 %v6116
  %v8502 = vpop.f32.mrf.mxu0
  %v8503 = vadd.f32 0.0, %v8502
  %v8504 = vpop.f32.mrf.mxu0
  %8505 = vmatprep.mubr.f32.mxu0 0.0
  %8506 = vmatmul.mubr.f32.gmra.mxu0 %v6118
  %v8507 = vpop.f32.mrf.mxu0
  %v8508 = vadd.f32 0.0, %v8507
  %v8509 = vpop.f32.mrf.mxu0
  %8510 = vmatprep.mubr.f32.mxu0 0.0
  %8511 = vmatmul.mubr.f32.gmra.mxu0 %v6120
  %v8512 = vpop.f32.mrf.mxu0
  %v8513 = vadd.f32 0.0, %v8512
  %v8514 = vpop.f32.mrf.mxu0
  %8515 = vmatprep.mubr.f32.mxu0 0.0
  %8516 = vmatmul.mubr.f32.gmra.mxu0 %v6122
  %v8517 = vpop.f32.mrf.mxu0
  %v8518 = vadd.f32 0.0, %v8517
  %v8519 = vpop.f32.mrf.mxu0
  %8520 = vmatprep.mubr.f32.mxu0 0.0
  %8521 = vmatmul.mubr.f32.gmra.mxu0 %v6124
  %v8522 = vpop.f32.mrf.mxu0
  %v8523 = vadd.f32 0.0, %v8522
  %v8524 = vpop.f32.mrf.mxu0
  %8525 = vmatprep.mubr.f32.mxu0 0.0
  %8526 = vmatmul.mubr.f32.gmra.mxu0 %v6126
  %v8527 = vpop.f32.mrf.mxu0
  %v8528 = vadd.f32 0.0, %v8527
  %v8529 = vpop.f32.mrf.mxu0
  %8530 = vmatprep.mubr.f32.mxu0 0.0
  %8531 = vmatmul.mubr.f32.gmra.mxu0 %v6128
  %v8532 = vpop.f32.mrf.mxu0
  %v8533 = vadd.f32 0.0, %v8532
  %v8534 = vpop.f32.mrf.mxu0
  %8535 = vmatprep.mubr.f32.mxu0 0.0
  %8536 = vmatmul.mubr.f32.gmra.mxu0 %v6130
  %v8537 = vpop.f32.mrf.mxu0
  %v8538 = vadd.f32 0.0, %v8537
  %v8539 = vpop.f32.mrf.mxu0
  %8540 = vmatprep.mubr.f32.mxu0 0.0
  %8541 = vmatmul.mubr.f32.gmra.mxu0 %v6132
  %v8542 = vpop.f32.mrf.mxu0
  %v8543 = vadd.f32 0.0, %v8542
  %v8544 = vpop.f32.mrf.mxu0
  %8545 = vmatprep.mubr.f32.mxu0 0.0
  %8546 = vmatmul.mubr.f32.gmra.mxu0 %v6134
  %v8547 = vpop.f32.mrf.mxu0
  %v8548 = vadd.f32 0.0, %v8547
  %v8549 = vpop.f32.mrf.mxu0
  %8550 = vmatprep.mubr.f32.mxu0 0.0
  %8551 = vmatmul.mubr.f32.gmra.mxu0 %v6136
  %v8552 = vpop.f32.mrf.mxu0
  %v8553 = vadd.f32 0.0, %v8552
  %v8554 = vpop.f32.mrf.mxu0
  %8555 = vmatprep.mubr.f32.mxu0 0.0
  %8556 = vmatmul.mubr.f32.gmra.mxu0 %v6138
  %v8557 = vpop.f32.mrf.mxu0
  %v8558 = vadd.f32 0.0, %v8557
  %v8559 = vpop.f32.mrf.mxu0
  %8560 = vmatprep.mubr.f32.mxu0 0.0
  %8561 = vmatmul.mubr.f32.gmra.mxu0 %v6140
  %v8562 = vpop.f32.mrf.mxu0
  %v8563 = vadd.f32 0.0, %v8562
  %v8564 = vpop.f32.mrf.mxu0
  %8565 = vmatprep.mubr.f32.mxu0 0.0
  %8566 = vmatmul.mubr.f32.gmra.mxu0 %v6142
  %v8567 = vpop.f32.mrf.mxu0
  %v8568 = vadd.f32 0.0, %v8567
  %v8569 = vpop.f32.mrf.mxu0
  %8570 = vmatprep.mubr.f32.mxu0 0.0
  %8571 = vmatmul.mubr.f32.gmra.mxu0 %v6144
  %v8572 = vpop.f32.mrf.mxu0
  %v8573 = vadd.f32 0.0, %v8572
  %v8574 = vpop.f32.mrf.mxu0
  %8575 = vmatprep.mubr.f32.mxu0 0.0
  %8576 = vmatmul.mubr.f32.gmra.mxu0 %v6146
  %v8577 = vpop.f32.mrf.mxu0
  %v8578 = vadd.f32 0.0, %v8577
  %v8579 = vpop.f32.mrf.mxu0
  %8580 = vmatprep.mubr.f32.mxu0 0.0
  %8581 = vmatmul.mubr.f32.gmra.mxu0 %v8358
  %v8582 = vpop.f32.mrf.mxu0
  %v8583 = vadd.f32 0.0, %v8582
  %v8584 = vpop.f32.mrf.mxu0
  %8585 = vmatprep.mubr.f32.mxu0 0.0
  %8586 = vmatmul.mubr.f32.gmra.mxu0 %v8360
  %v8587 = vpop.f32.mrf.mxu0
  %v8588 = vadd.f32 0.0, %v8587
  %v8589 = vpop.f32.mrf.mxu0
  %8590 = vmatprep.mubr.f32.mxu0 0.0
  %8591 = vmatmul.mubr.f32.gmra.mxu0 %v6152
  %v8592 = vpop.f32.mrf.mxu0
  %v8593 = vadd.f32 0.0, %v8592
  %v8594 = vpop.f32.mrf.mxu0
  %8595 = vmatprep.mubr.f32.mxu0 0.0
  %8596 = vmatmul.mubr.f32.gmra.mxu0 %v6154
  %v8597 = vpop.f32.mrf.mxu0
  %v8598 = vadd.f32 0.0, %v8597
  %v8599 = vpop.f32.mrf.mxu0
  %8600 = vmatprep.mubr.f32.mxu0 0.0
  %8601 = vmatmul.mubr.f32.gmra.mxu0 %v6156
  %v8602 = vpop.f32.mrf.mxu0
  %v8603 = vadd.f32 0.0, %v8602
  %v8604 = vpop.f32.mrf.mxu0
  %8605 = vmatprep.mubr.f32.mxu0 0.0
  %8606 = vmatmul.mubr.f32.gmra.mxu0 %v6158
  %v8607 = vpop.f32.mrf.mxu0
  %v8608 = vadd.f32 0.0, %v8607
  %v8609 = vpop.f32.mrf.mxu0
  %8610 = vmatprep.mubr.f32.mxu0 0.0
  %8611 = vmatmul.mubr.f32.gmra.mxu0 %v6160
  %v8612 = vpop.f32.mrf.mxu0
  %v8613 = vadd.f32 0.0, %v8612
  %v8614 = vpop.f32.mrf.mxu0
  %8615 = vmatprep.mubr.f32.mxu0 0.0
  %8616 = vmatmul.mubr.f32.gmra.mxu0 %v6162
  %v8617 = vpop.f32.mrf.mxu0
  %v8618 = vadd.f32 0.0, %v8617
  %v8619 = vpop.f32.mrf.mxu0
  %8620 = vmatprep.mubr.f32.mxu0 0.0
  %8621 = vmatmul.mubr.f32.gmra.mxu0 %v6164
  %v8622 = vpop.f32.mrf.mxu0
  %v8623 = vadd.f32 0.0, %v8622
  %v8624 = vpop.f32.mrf.mxu0
  %8625 = vmatprep.mubr.f32.mxu0 0.0
  %8626 = vmatmul.mubr.f32.gmra.mxu0 %v6166
  %v8627 = vpop.f32.mrf.mxu0
  %v8628 = vadd.f32 0.0, %v8627
  %v8629 = vpop.f32.mrf.mxu0
  %8630 = vmatprep.mubr.f32.mxu0 0.0
  %8631 = vmatmul.mubr.f32.gmra.mxu0 %v6168
  %v8632 = vpop.f32.mrf.mxu0
  %v8633 = vadd.f32 0.0, %v8632
  %v8634 = vpop.f32.mrf.mxu0
  %8635 = vmatprep.mubr.f32.mxu0 0.0
  %8636 = vmatmul.mubr.f32.gmra.mxu0 %v6170
  %v8637 = vpop.f32.mrf.mxu0
  %v8638 = vadd.f32 0.0, %v8637
  %v8639 = vpop.f32.mrf.mxu0
  %8640 = vmatprep.mubr.f32.mxu0 0.0
  %8641 = vmatmul.mubr.f32.gmra.mxu0 %v6172
  %v8642 = vpop.f32.mrf.mxu0
  %v8643 = vadd.f32 0.0, %v8642
  %v8644 = vpop.f32.mrf.mxu0
  %8645 = vmatprep.mubr.f32.mxu0 0.0
  %8646 = vmatmul.mubr.f32.gmra.mxu0 %v6174
  %v8647 = vpop.f32.mrf.mxu0
  %v8648 = vadd.f32 0.0, %v8647
  %v8649 = vpop.f32.mrf.mxu0
  %8650 = vmatprep.mubr.f32.mxu0 0.0
  %8651 = vmatmul.mubr.f32.gmra.mxu0 %v6176
  %v8652 = vpop.f32.mrf.mxu0
  %v8653 = vadd.f32 0.0, %v8652
  %v8654 = vpop.f32.mrf.mxu0
  %8655 = vmatprep.mubr.f32.mxu0 0.0
  %8656 = vmatmul.mubr.f32.gmra.mxu0 %v6178
  %v8657 = vpop.f32.mrf.mxu0
  %v8658 = vadd.f32 0.0, %v8657
  %v8659 = vpop.f32.mrf.mxu0
  %8660 = vmatprep.mubr.f32.mxu0 0.0
  %8661 = vmatmul.mubr.f32.gmra.mxu0 %v6180
  %v8662 = vpop.f32.mrf.mxu0
  %v8663 = vadd.f32 0.0, %v8662
  %v8664 = vpop.f32.mrf.mxu0
  %8665 = vmatprep.mubr.f32.mxu0 0.0
  %8666 = vmatmul.mubr.f32.gmra.mxu0 %v6182
  %v8667 = vpop.f32.mrf.mxu0
  %v8668 = vadd.f32 0.0, %v8667
  %v8669 = vpop.f32.mrf.mxu0
  %8670 = vmatprep.mubr.f32.mxu0 0.0
  %8671 = vmatmul.mubr.f32.gmra.mxu0 %v6184
  %v8672 = vpop.f32.mrf.mxu0
  %v8673 = vadd.f32 0.0, %v8672
  %v8674 = vpop.f32.mrf.mxu0
  %8675 = vmatprep.mubr.f32.mxu0 0.0
  %8676 = vmatmul.mubr.f32.gmra.mxu0 %v6186
  %v8677 = vpop.f32.mrf.mxu0
  %v8678 = vadd.f32 0.0, %v8677
  %v8679 = vpop.f32.mrf.mxu0
  %8680 = vmatprep.mubr.f32.mxu0 0.0
  %8681 = vmatmul.mubr.f32.gmra.mxu0 %v6188
  %v8682 = vpop.f32.mrf.mxu0
  %v8683 = vadd.f32 0.0, %v8682
  %v8684 = vpop.f32.mrf.mxu0
  %8685 = vmatprep.mubr.f32.mxu0 0.0
  %8686 = vmatmul.mubr.f32.gmra.mxu0 %v6190
  %v8687 = vpop.f32.mrf.mxu0
  %v8688 = vadd.f32 0.0, %v8687
  %v8689 = vpop.f32.mrf.mxu0
  %8690 = vmatprep.mubr.f32.mxu0 0.0
  %8691 = vmatmul.mubr.f32.gmra.mxu0 %v6192
  %v8692 = vpop.f32.mrf.mxu0
  %v8693 = vadd.f32 0.0, %v8692
  %v8694 = vpop.f32.mrf.mxu0
  %8695 = vmatprep.mubr.f32.mxu0 0.0
  %8696 = vmatmul.mubr.f32.gmra.mxu0 %v6194
  %v8697 = vpop.f32.mrf.mxu0
  %v8698 = vadd.f32 0.0, %v8697
  %v8699 = vpop.f32.mrf.mxu0
  %8700 = vmatprep.mubr.f32.mxu0 0.0
  %8701 = vmatmul.mubr.f32.gmra.mxu0 %v6196
  %v8702 = vpop.f32.mrf.mxu0
  %v8703 = vadd.f32 0.0, %v8702
  %v8704 = vpop.f32.mrf.mxu0
  %8705 = vmatprep.mubr.f32.mxu0 0.0
  %8706 = vmatmul.mubr.f32.gmra.mxu0 %v6198
  %v8707 = vpop.f32.mrf.mxu0
  %v8708 = vadd.f32 0.0, %v8707
  %v8709 = vpop.f32.mrf.mxu0
  %8710 = vmatprep.mubr.f32.mxu0 0.0
  %8711 = vmatmul.mubr.f32.gmra.mxu0 %v6200
  %v8712 = vpop.f32.mrf.mxu0
  %v8713 = vadd.f32 0.0, %v8712
  %v8714 = vpop.f32.mrf.mxu0
  %8715 = vmatprep.mubr.f32.mxu0 0.0
  %8716 = vmatmul.mubr.f32.gmra.mxu0 %v6202
  %v8717 = vpop.f32.mrf.mxu0
  %v8718 = vadd.f32 0.0, %v8717
  %v8719 = vpop.f32.mrf.mxu0
  %8720 = vmatprep.mubr.f32.mxu0 0.0
  %8721 = vmatmul.mubr.f32.gmra.mxu0 %v6204
  %v8722 = vpop.f32.mrf.mxu0
  %v8723 = vadd.f32 0.0, %v8722
  %v8724 = vpop.f32.mrf.mxu0
  %8725 = vmatprep.mubr.f32.mxu0 0.0
  %8726 = vmatmul.mubr.f32.gmra.mxu0 %v6206
  %v8727 = vpop.f32.mrf.mxu0
  %v8728 = vadd.f32 0.0, %v8727
  %v8729 = vpop.f32.mrf.mxu0
  %8730 = vmatprep.mubr.f32.mxu0 0.0
  %8731 = vmatmul.mubr.f32.gmra.mxu0 %v6208
  %v8732 = vpop.f32.mrf.mxu0
  %v8733 = vadd.f32 0.0, %v8732
  %v8734 = vpop.f32.mrf.mxu0
  %8735 = vmatprep.mubr.f32.mxu0 0.0
  %8736 = vmatmul.mubr.f32.gmra.mxu0 %v6210
  %v8737 = vpop.f32.mrf.mxu0
  %v8738 = vadd.f32 0.0, %v8737
  %v8739 = vpop.f32.mrf.mxu0
  %8740 = vmatprep.mubr.f32.mxu0 0.0
  %8741 = vmatmul.mubr.f32.gmra.mxu0 %v8362
  %v8742 = vpop.f32.mrf.mxu0
  %v8743 = vadd.f32 0.0, %v8742
  %v8744 = vpop.f32.mrf.mxu0
  %8745 = vmatprep.mubr.f32.mxu0 0.0
  %8746 = vmatmul.mubr.f32.gmra.mxu0 %v8364
  %v8747 = vpop.f32.mrf.mxu0
  %v8748 = vadd.f32 0.0, %v8747
  %v8749 = vpop.f32.mrf.mxu0
  %8750 = vdwg.mxu0
  %v8751 = vadd.f32 %v8292, %v8433
  %v8752 = vadd.f32 %v8293, %v8438
  %v8753 = vadd.f32 %v8294, %v8443
  %v8754 = vadd.f32 %v8295, %v8448
  %v8755 = vadd.f32 %v8296, %v8453
  %v8756 = vadd.f32 %v8297, %v8458
  %v8757 = vadd.f32 %v8298, %v8463
  %v8758 = vadd.f32 %v8299, %v8468
  %v8759 = vadd.f32 %v8300, %v8473
  %v8760 = vadd.f32 %v8301, %v8478
  %v8761 = vadd.f32 %v8302, %v8483
  %v8762 = vadd.f32 %v8303, %v8488
  %v8763 = vadd.f32 %v8304, %v8493
  %v8764 = vadd.f32 %v8305, %v8498
  %v8765 = vadd.f32 %v8306, %v8503
  %v8766 = vadd.f32 %v8307, %v8508
  %v8767 = vadd.f32 %v8308, %v8513
  %v8768 = vadd.f32 %v8309, %v8518
  %v8769 = vadd.f32 %v8310, %v8523
  %v8770 = vadd.f32 %v8311, %v8528
  %v8771 = vadd.f32 %v8312, %v8533
  %v8772 = vadd.f32 %v8313, %v8538
  %v8773 = vadd.f32 %v8314, %v8543
  %v8774 = vadd.f32 %v8315, %v8548
  %v8775 = vadd.f32 %v8316, %v8553
  %v8776 = vadd.f32 %v8317, %v8558
  %v8777 = vadd.f32 %v8318, %v8563
  %v8778 = vadd.f32 %v8319, %v8568
  %v8779 = vadd.f32 %v8320, %v8573
  %v8780 = vadd.f32 %v8321, %v8578
  %v8781 = vadd.f32 %v8322, %v8583
  %v8782 = vadd.f32 %v8323, %v8588
  %v8783 = vadd.f32 %v8324, %v8593
  %v8784 = vadd.f32 %v8325, %v8598
  %v8785 = vadd.f32 %v8326, %v8603
  %v8786 = vadd.f32 %v8327, %v8608
  %v8787 = vadd.f32 %v8328, %v8613
  %v8788 = vadd.f32 %v8329, %v8618
  %v8789 = vadd.f32 %v8330, %v8623
  %v8790 = vadd.f32 %v8331, %v8628
  %v8791 = vadd.f32 %v8332, %v8633
  %v8792 = vadd.f32 %v8333, %v8638
  %v8793 = vadd.f32 %v8334, %v8643
  %v8794 = vadd.f32 %v8335, %v8648
  %v8795 = vadd.f32 %v8336, %v8653
  %v8796 = vadd.f32 %v8337, %v8658
  %v8797 = vadd.f32 %v8338, %v8663
  %v8798 = vadd.f32 %v8339, %v8668
  %v8799 = vadd.f32 %v8340, %v8673
  %v8800 = vadd.f32 %v8341, %v8678
  %v8801 = vadd.f32 %v8342, %v8683
  %v8802 = vadd.f32 %v8343, %v8688
  %v8803 = vadd.f32 %v8344, %v8693
  %v8804 = vadd.f32 %v8345, %v8698
  %v8805 = vadd.f32 %v8346, %v8703
  %v8806 = vadd.f32 %v8347, %v8708
  %v8807 = vadd.f32 %v8348, %v8713
  %v8808 = vadd.f32 %v8349, %v8718
  %v8809 = vadd.f32 %v8350, %v8723
  %v8810 = vadd.f32 %v8351, %v8728
  %v8811 = vadd.f32 %v8352, %v8733
  %v8812 = vadd.f32 %v8353, %v8738
  %v8813 = vadd.f32 %v8354, %v8743
  %v8814 = vadd.f32 %v8355, %v8748
  %v8817 = vrot.slane %v5746, 1
  %v8818 = vrot.slane %v5747, 1
  %v8819 = vsel %vm1764, %v8817, %v8818
  %v8820 = vrot.slane %v5748, 1
  %v8821 = vsel %vm1764, %v8818, %v8820
  %v8822 = vrot.slane %v5818, 1
  %v8823 = vrot.slane %v5819, 1
  %v8824 = vsel %vm1764, %v8822, %v8823
  %v8825 = vrot.slane %v5820, 1
  %v8826 = vsel %vm1764, %v8823, %v8825
  %s8827 = scalar_lea.vmem %s3, 40
  %v8828 = vld [vmem:[%s8827] sm:$0xff]
  %v8829 = vsel %vm5470, %v8819, 0
  %v8831 = vsel %vm5470, %v8821, 0
  %v8833 = vsel %vm5470, %v8824, 0
  %v8835 = vsel %vm5470, %v8826, 0
  %8837 = vmatprep.subr.mxu0 0.0
  %8838 = vmatpush1.msra.mxu0 0.0
  %8839 = vmatprep.subr.mxu0 0.0
  %8840 = vmatpush1.msra.mxu0 0.0
  %8841 = vmatprep.subr.mxu0 0.0
  %8842 = vmatpush1.msra.mxu0 0.0
  %8843 = vmatprep.subr.mxu0 0.0
  %8844 = vmatpush1.msra.mxu0 0.0
  %8845 = vmatprep.subr.mxu0 0.0
  %8846 = vmatpush1.msra.mxu0 0.0
  %8847 = vmatprep.subr.mxu0 0.0
  %8848 = vmatpush1.msra.mxu0 0.0
  %8849 = vmatprep.subr.mxu0 0.0
  %8850 = vmatpush1.msra.mxu0 0.0
  %8851 = vmatprep.subr.mxu0 0.0
  %8852 = vmatpush1.msra.mxu0 0.0
  %8853 = vmatprep.subr.mxu0 0.0
  %8854 = vmatpush1.msra.mxu0 0.0
  %8855 = vmatprep.subr.mxu0 0.0
  %8856 = vmatpush1.msra.mxu0 0.0
  %8857 = vmatprep.subr.mxu0 0.0
  %8858 = vmatpush1.msra.mxu0 0.0
  %8859 = vmatprep.subr.mxu0 0.0
  %8860 = vmatpush1.msra.mxu0 0.0
  %8861 = vmatprep.subr.mxu0 0.0
  %8862 = vmatpush1.msra.mxu0 0.0
  %8863 = vmatprep.subr.mxu0 0.0
  %8864 = vmatpush1.msra.mxu0 0.0
  %8865 = vmatprep.subr.mxu0 0.0
  %8866 = vmatpush1.msra.mxu0 0.0
  %8867 = vmatprep.subr.mxu0 0.0
  %8868 = vmatpush1.msra.mxu0 %v8828
  %8869 = vmatprep.subr.mxu0 0.0
  %8870 = vmatpush2.msra.mxu0 0.0
  %8871 = vmatprep.subr.mxu0 0.0
  %8872 = vmatpush2.msra.mxu0 0.0
  %8873 = vmatprep.subr.mxu0 0.0
  %8874 = vmatpush2.msra.mxu0 0.0
  %8875 = vmatprep.subr.mxu0 0.0
  %8876 = vmatpush2.msra.mxu0 0.0
  %8877 = vmatprep.subr.mxu0 0.0
  %8878 = vmatpush2.msra.mxu0 0.0
  %8879 = vmatprep.subr.mxu0 0.0
  %8880 = vmatpush2.msra.mxu0 0.0
  %8881 = vmatprep.subr.mxu0 0.0
  %8882 = vmatpush2.msra.mxu0 0.0
  %8883 = vmatprep.subr.mxu0 0.0
  %8884 = vmatpush2.msra.mxu0 0.0
  %8885 = vmatprep.subr.mxu0 0.0
  %8886 = vmatpush2.msra.mxu0 0.0
  %8887 = vmatprep.subr.mxu0 0.0
  %8888 = vmatpush2.msra.mxu0 0.0
  %8889 = vmatprep.subr.mxu0 0.0
  %8890 = vmatpush2.msra.mxu0 0.0
  %8891 = vmatprep.subr.mxu0 0.0
  %8892 = vmatpush2.msra.mxu0 0.0
  %8893 = vmatprep.subr.mxu0 0.0
  %8894 = vmatpush2.msra.mxu0 0.0
  %8895 = vmatprep.subr.mxu0 0.0
  %8896 = vmatpush2.msra.mxu0 0.0
  %8897 = vmatprep.subr.mxu0 0.0
  %8898 = vmatpush2.msra.mxu0 0.0
  %8899 = vmatprep.subr.mxu0 0.0
  %8900 = vmatpush2.msra.mxu0 0.0
  %8901 = vmatprep.mubr.f32.mxu0 0.0
  %8902 = vmatmul.mubr.f32.gmra.mxu0 %v7308
  %v8903 = vpop.f32.mrf.mxu0
  %v8904 = vadd.f32 0.0, %v8903
  %v8905 = vpop.f32.mrf.mxu0
  %8906 = vmatprep.mubr.f32.mxu0 0.0
  %8907 = vmatmul.mubr.f32.gmra.mxu0 %v7310
  %v8908 = vpop.f32.mrf.mxu0
  %v8909 = vadd.f32 0.0, %v8908
  %v8910 = vpop.f32.mrf.mxu0
  %8911 = vmatprep.mubr.f32.mxu0 0.0
  %8912 = vmatmul.mubr.f32.gmra.mxu0 %v7312
  %v8913 = vpop.f32.mrf.mxu0
  %v8914 = vadd.f32 0.0, %v8913
  %v8915 = vpop.f32.mrf.mxu0
  %8916 = vmatprep.mubr.f32.mxu0 0.0
  %8917 = vmatmul.mubr.f32.gmra.mxu0 %v7314
  %v8918 = vpop.f32.mrf.mxu0
  %v8919 = vadd.f32 0.0, %v8918
  %v8920 = vpop.f32.mrf.mxu0
  %8921 = vmatprep.mubr.f32.mxu0 0.0
  %8922 = vmatmul.mubr.f32.gmra.mxu0 %v7316
  %v8923 = vpop.f32.mrf.mxu0
  %v8924 = vadd.f32 0.0, %v8923
  %v8925 = vpop.f32.mrf.mxu0
  %8926 = vmatprep.mubr.f32.mxu0 0.0
  %8927 = vmatmul.mubr.f32.gmra.mxu0 %v7318
  %v8928 = vpop.f32.mrf.mxu0
  %v8929 = vadd.f32 0.0, %v8928
  %v8930 = vpop.f32.mrf.mxu0
  %8931 = vmatprep.mubr.f32.mxu0 0.0
  %8932 = vmatmul.mubr.f32.gmra.mxu0 %v7320
  %v8933 = vpop.f32.mrf.mxu0
  %v8934 = vadd.f32 0.0, %v8933
  %v8935 = vpop.f32.mrf.mxu0
  %8936 = vmatprep.mubr.f32.mxu0 0.0
  %8937 = vmatmul.mubr.f32.gmra.mxu0 %v7322
  %v8938 = vpop.f32.mrf.mxu0
  %v8939 = vadd.f32 0.0, %v8938
  %v8940 = vpop.f32.mrf.mxu0
  %8941 = vmatprep.mubr.f32.mxu0 0.0
  %8942 = vmatmul.mubr.f32.gmra.mxu0 %v7324
  %v8943 = vpop.f32.mrf.mxu0
  %v8944 = vadd.f32 0.0, %v8943
  %v8945 = vpop.f32.mrf.mxu0
  %8946 = vmatprep.mubr.f32.mxu0 0.0
  %8947 = vmatmul.mubr.f32.gmra.mxu0 %v7326
  %v8948 = vpop.f32.mrf.mxu0
  %v8949 = vadd.f32 0.0, %v8948
  %v8950 = vpop.f32.mrf.mxu0
  %8951 = vmatprep.mubr.f32.mxu0 0.0
  %8952 = vmatmul.mubr.f32.gmra.mxu0 %v7328
  %v8953 = vpop.f32.mrf.mxu0
  %v8954 = vadd.f32 0.0, %v8953
  %v8955 = vpop.f32.mrf.mxu0
  %8956 = vmatprep.mubr.f32.mxu0 0.0
  %8957 = vmatmul.mubr.f32.gmra.mxu0 %v7330
  %v8958 = vpop.f32.mrf.mxu0
  %v8959 = vadd.f32 0.0, %v8958
  %v8960 = vpop.f32.mrf.mxu0
  %8961 = vmatprep.mubr.f32.mxu0 0.0
  %8962 = vmatmul.mubr.f32.gmra.mxu0 %v7332
  %v8963 = vpop.f32.mrf.mxu0
  %v8964 = vadd.f32 0.0, %v8963
  %v8965 = vpop.f32.mrf.mxu0
  %8966 = vmatprep.mubr.f32.mxu0 0.0
  %8967 = vmatmul.mubr.f32.gmra.mxu0 %v7334
  %v8968 = vpop.f32.mrf.mxu0
  %v8969 = vadd.f32 0.0, %v8968
  %v8970 = vpop.f32.mrf.mxu0
  %8971 = vmatprep.mubr.f32.mxu0 0.0
  %8972 = vmatmul.mubr.f32.gmra.mxu0 %v7336
  %v8973 = vpop.f32.mrf.mxu0
  %v8974 = vadd.f32 0.0, %v8973
  %v8975 = vpop.f32.mrf.mxu0
  %8976 = vmatprep.mubr.f32.mxu0 0.0
  %8977 = vmatmul.mubr.f32.gmra.mxu0 %v7338
  %v8978 = vpop.f32.mrf.mxu0
  %v8979 = vadd.f32 0.0, %v8978
  %v8980 = vpop.f32.mrf.mxu0
  %8981 = vmatprep.mubr.f32.mxu0 0.0
  %8982 = vmatmul.mubr.f32.gmra.mxu0 %v7340
  %v8983 = vpop.f32.mrf.mxu0
  %v8984 = vadd.f32 0.0, %v8983
  %v8985 = vpop.f32.mrf.mxu0
  %8986 = vmatprep.mubr.f32.mxu0 0.0
  %8987 = vmatmul.mubr.f32.gmra.mxu0 %v7342
  %v8988 = vpop.f32.mrf.mxu0
  %v8989 = vadd.f32 0.0, %v8988
  %v8990 = vpop.f32.mrf.mxu0
  %8991 = vmatprep.mubr.f32.mxu0 0.0
  %8992 = vmatmul.mubr.f32.gmra.mxu0 %v7344
  %v8993 = vpop.f32.mrf.mxu0
  %v8994 = vadd.f32 0.0, %v8993
  %v8995 = vpop.f32.mrf.mxu0
  %8996 = vmatprep.mubr.f32.mxu0 0.0
  %8997 = vmatmul.mubr.f32.gmra.mxu0 %v7346
  %v8998 = vpop.f32.mrf.mxu0
  %v8999 = vadd.f32 0.0, %v8998
  %v9000 = vpop.f32.mrf.mxu0
  %9001 = vmatprep.mubr.f32.mxu0 0.0
  %9002 = vmatmul.mubr.f32.gmra.mxu0 %v7348
  %v9003 = vpop.f32.mrf.mxu0
  %v9004 = vadd.f32 0.0, %v9003
  %v9005 = vpop.f32.mrf.mxu0
  %9006 = vmatprep.mubr.f32.mxu0 0.0
  %9007 = vmatmul.mubr.f32.gmra.mxu0 %v7350
  %v9008 = vpop.f32.mrf.mxu0
  %v9009 = vadd.f32 0.0, %v9008
  %v9010 = vpop.f32.mrf.mxu0
  %9011 = vmatprep.mubr.f32.mxu0 0.0
  %9012 = vmatmul.mubr.f32.gmra.mxu0 %v7352
  %v9013 = vpop.f32.mrf.mxu0
  %v9014 = vadd.f32 0.0, %v9013
  %v9015 = vpop.f32.mrf.mxu0
  %9016 = vmatprep.mubr.f32.mxu0 0.0
  %9017 = vmatmul.mubr.f32.gmra.mxu0 %v7354
  %v9018 = vpop.f32.mrf.mxu0
  %v9019 = vadd.f32 0.0, %v9018
  %v9020 = vpop.f32.mrf.mxu0
  %9021 = vmatprep.mubr.f32.mxu0 0.0
  %9022 = vmatmul.mubr.f32.gmra.mxu0 %v7356
  %v9023 = vpop.f32.mrf.mxu0
  %v9024 = vadd.f32 0.0, %v9023
  %v9025 = vpop.f32.mrf.mxu0
  %9026 = vmatprep.mubr.f32.mxu0 0.0
  %9027 = vmatmul.mubr.f32.gmra.mxu0 %v7358
  %v9028 = vpop.f32.mrf.mxu0
  %v9029 = vadd.f32 0.0, %v9028
  %v9030 = vpop.f32.mrf.mxu0
  %9031 = vmatprep.mubr.f32.mxu0 0.0
  %9032 = vmatmul.mubr.f32.gmra.mxu0 %v7360
  %v9033 = vpop.f32.mrf.mxu0
  %v9034 = vadd.f32 0.0, %v9033
  %v9035 = vpop.f32.mrf.mxu0
  %9036 = vmatprep.mubr.f32.mxu0 0.0
  %9037 = vmatmul.mubr.f32.gmra.mxu0 %v7362
  %v9038 = vpop.f32.mrf.mxu0
  %v9039 = vadd.f32 0.0, %v9038
  %v9040 = vpop.f32.mrf.mxu0
  %9041 = vmatprep.mubr.f32.mxu0 0.0
  %9042 = vmatmul.mubr.f32.gmra.mxu0 %v7364
  %v9043 = vpop.f32.mrf.mxu0
  %v9044 = vadd.f32 0.0, %v9043
  %v9045 = vpop.f32.mrf.mxu0
  %9046 = vmatprep.mubr.f32.mxu0 0.0
  %9047 = vmatmul.mubr.f32.gmra.mxu0 %v7366
  %v9048 = vpop.f32.mrf.mxu0
  %v9049 = vadd.f32 0.0, %v9048
  %v9050 = vpop.f32.mrf.mxu0
  %9051 = vmatprep.mubr.f32.mxu0 0.0
  %9052 = vmatmul.mubr.f32.gmra.mxu0 %v8829
  %v9053 = vpop.f32.mrf.mxu0
  %v9054 = vadd.f32 0.0, %v9053
  %v9055 = vpop.f32.mrf.mxu0
  %9056 = vmatprep.mubr.f32.mxu0 0.0
  %9057 = vmatmul.mubr.f32.gmra.mxu0 %v8831
  %v9058 = vpop.f32.mrf.mxu0
  %v9059 = vadd.f32 0.0, %v9058
  %v9060 = vpop.f32.mrf.mxu0
  %9061 = vmatprep.mubr.f32.mxu0 0.0
  %9062 = vmatmul.mubr.f32.gmra.mxu0 %v7372
  %v9063 = vpop.f32.mrf.mxu0
  %v9064 = vadd.f32 0.0, %v9063
  %v9065 = vpop.f32.mrf.mxu0
  %9066 = vmatprep.mubr.f32.mxu0 0.0
  %9067 = vmatmul.mubr.f32.gmra.mxu0 %v7374
  %v9068 = vpop.f32.mrf.mxu0
  %v9069 = vadd.f32 0.0, %v9068
  %v9070 = vpop.f32.mrf.mxu0
  %9071 = vmatprep.mubr.f32.mxu0 0.0
  %9072 = vmatmul.mubr.f32.gmra.mxu0 %v7376
  %v9073 = vpop.f32.mrf.mxu0
  %v9074 = vadd.f32 0.0, %v9073
  %v9075 = vpop.f32.mrf.mxu0
  %9076 = vmatprep.mubr.f32.mxu0 0.0
  %9077 = vmatmul.mubr.f32.gmra.mxu0 %v7378
  %v9078 = vpop.f32.mrf.mxu0
  %v9079 = vadd.f32 0.0, %v9078
  %v9080 = vpop.f32.mrf.mxu0
  %9081 = vmatprep.mubr.f32.mxu0 0.0
  %9082 = vmatmul.mubr.f32.gmra.mxu0 %v7380
  %v9083 = vpop.f32.mrf.mxu0
  %v9084 = vadd.f32 0.0, %v9083
  %v9085 = vpop.f32.mrf.mxu0
  %9086 = vmatprep.mubr.f32.mxu0 0.0
  %9087 = vmatmul.mubr.f32.gmra.mxu0 %v7382
  %v9088 = vpop.f32.mrf.mxu0
  %v9089 = vadd.f32 0.0, %v9088
  %v9090 = vpop.f32.mrf.mxu0
  %9091 = vmatprep.mubr.f32.mxu0 0.0
  %9092 = vmatmul.mubr.f32.gmra.mxu0 %v7384
  %v9093 = vpop.f32.mrf.mxu0
  %v9094 = vadd.f32 0.0, %v9093
  %v9095 = vpop.f32.mrf.mxu0
  %9096 = vmatprep.mubr.f32.mxu0 0.0
  %9097 = vmatmul.mubr.f32.gmra.mxu0 %v7386
  %v9098 = vpop.f32.mrf.mxu0
  %v9099 = vadd.f32 0.0, %v9098
  %v9100 = vpop.f32.mrf.mxu0
  %9101 = vmatprep.mubr.f32.mxu0 0.0
  %9102 = vmatmul.mubr.f32.gmra.mxu0 %v7388
  %v9103 = vpop.f32.mrf.mxu0
  %v9104 = vadd.f32 0.0, %v9103
  %v9105 = vpop.f32.mrf.mxu0
  %9106 = vmatprep.mubr.f32.mxu0 0.0
  %9107 = vmatmul.mubr.f32.gmra.mxu0 %v7390
  %v9108 = vpop.f32.mrf.mxu0
  %v9109 = vadd.f32 0.0, %v9108
  %v9110 = vpop.f32.mrf.mxu0
  %9111 = vmatprep.mubr.f32.mxu0 0.0
  %9112 = vmatmul.mubr.f32.gmra.mxu0 %v7392
  %v9113 = vpop.f32.mrf.mxu0
  %v9114 = vadd.f32 0.0, %v9113
  %v9115 = vpop.f32.mrf.mxu0
  %9116 = vmatprep.mubr.f32.mxu0 0.0
  %9117 = vmatmul.mubr.f32.gmra.mxu0 %v7394
  %v9118 = vpop.f32.mrf.mxu0
  %v9119 = vadd.f32 0.0, %v9118
  %v9120 = vpop.f32.mrf.mxu0
  %9121 = vmatprep.mubr.f32.mxu0 0.0
  %9122 = vmatmul.mubr.f32.gmra.mxu0 %v7396
  %v9123 = vpop.f32.mrf.mxu0
  %v9124 = vadd.f32 0.0, %v9123
  %v9125 = vpop.f32.mrf.mxu0
  %9126 = vmatprep.mubr.f32.mxu0 0.0
  %9127 = vmatmul.mubr.f32.gmra.mxu0 %v7398
  %v9128 = vpop.f32.mrf.mxu0
  %v9129 = vadd.f32 0.0, %v9128
  %v9130 = vpop.f32.mrf.mxu0
  %9131 = vmatprep.mubr.f32.mxu0 0.0
  %9132 = vmatmul.mubr.f32.gmra.mxu0 %v7400
  %v9133 = vpop.f32.mrf.mxu0
  %v9134 = vadd.f32 0.0, %v9133
  %v9135 = vpop.f32.mrf.mxu0
  %9136 = vmatprep.mubr.f32.mxu0 0.0
  %9137 = vmatmul.mubr.f32.gmra.mxu0 %v7402
  %v9138 = vpop.f32.mrf.mxu0
  %v9139 = vadd.f32 0.0, %v9138
  %v9140 = vpop.f32.mrf.mxu0
  %9141 = vmatprep.mubr.f32.mxu0 0.0
  %9142 = vmatmul.mubr.f32.gmra.mxu0 %v7404
  %v9143 = vpop.f32.mrf.mxu0
  %v9144 = vadd.f32 0.0, %v9143
  %v9145 = vpop.f32.mrf.mxu0
  %9146 = vmatprep.mubr.f32.mxu0 0.0
  %9147 = vmatmul.mubr.f32.gmra.mxu0 %v7406
  %v9148 = vpop.f32.mrf.mxu0
  %v9149 = vadd.f32 0.0, %v9148
  %v9150 = vpop.f32.mrf.mxu0
  %9151 = vmatprep.mubr.f32.mxu0 0.0
  %9152 = vmatmul.mubr.f32.gmra.mxu0 %v7408
  %v9153 = vpop.f32.mrf.mxu0
  %v9154 = vadd.f32 0.0, %v9153
  %v9155 = vpop.f32.mrf.mxu0
  %9156 = vmatprep.mubr.f32.mxu0 0.0
  %9157 = vmatmul.mubr.f32.gmra.mxu0 %v7410
  %v9158 = vpop.f32.mrf.mxu0
  %v9159 = vadd.f32 0.0, %v9158
  %v9160 = vpop.f32.mrf.mxu0
  %9161 = vmatprep.mubr.f32.mxu0 0.0
  %9162 = vmatmul.mubr.f32.gmra.mxu0 %v7412
  %v9163 = vpop.f32.mrf.mxu0
  %v9164 = vadd.f32 0.0, %v9163
  %v9165 = vpop.f32.mrf.mxu0
  %9166 = vmatprep.mubr.f32.mxu0 0.0
  %9167 = vmatmul.mubr.f32.gmra.mxu0 %v7414
  %v9168 = vpop.f32.mrf.mxu0
  %v9169 = vadd.f32 0.0, %v9168
  %v9170 = vpop.f32.mrf.mxu0
  %9171 = vmatprep.mubr.f32.mxu0 0.0
  %9172 = vmatmul.mubr.f32.gmra.mxu0 %v7416
  %v9173 = vpop.f32.mrf.mxu0
  %v9174 = vadd.f32 0.0, %v9173
  %v9175 = vpop.f32.mrf.mxu0
  %9176 = vmatprep.mubr.f32.mxu0 0.0
  %9177 = vmatmul.mubr.f32.gmra.mxu0 %v7418
  %v9178 = vpop.f32.mrf.mxu0
  %v9179 = vadd.f32 0.0, %v9178
  %v9180 = vpop.f32.mrf.mxu0
  %9181 = vmatprep.mubr.f32.mxu0 0.0
  %9182 = vmatmul.mubr.f32.gmra.mxu0 %v7420
  %v9183 = vpop.f32.mrf.mxu0
  %v9184 = vadd.f32 0.0, %v9183
  %v9185 = vpop.f32.mrf.mxu0
  %9186 = vmatprep.mubr.f32.mxu0 0.0
  %9187 = vmatmul.mubr.f32.gmra.mxu0 %v7422
  %v9188 = vpop.f32.mrf.mxu0
  %v9189 = vadd.f32 0.0, %v9188
  %v9190 = vpop.f32.mrf.mxu0
  %9191 = vmatprep.mubr.f32.mxu0 0.0
  %9192 = vmatmul.mubr.f32.gmra.mxu0 %v7424
  %v9193 = vpop.f32.mrf.mxu0
  %v9194 = vadd.f32 0.0, %v9193
  %v9195 = vpop.f32.mrf.mxu0
  %9196 = vmatprep.mubr.f32.mxu0 0.0
  %9197 = vmatmul.mubr.f32.gmra.mxu0 %v7426
  %v9198 = vpop.f32.mrf.mxu0
  %v9199 = vadd.f32 0.0, %v9198
  %v9200 = vpop.f32.mrf.mxu0
  %9201 = vmatprep.mubr.f32.mxu0 0.0
  %9202 = vmatmul.mubr.f32.gmra.mxu0 %v7428
  %v9203 = vpop.f32.mrf.mxu0
  %v9204 = vadd.f32 0.0, %v9203
  %v9205 = vpop.f32.mrf.mxu0
  %9206 = vmatprep.mubr.f32.mxu0 0.0
  %9207 = vmatmul.mubr.f32.gmra.mxu0 %v7430
  %v9208 = vpop.f32.mrf.mxu0
  %v9209 = vadd.f32 0.0, %v9208
  %v9210 = vpop.f32.mrf.mxu0
  %9211 = vmatprep.mubr.f32.mxu0 0.0
  %9212 = vmatmul.mubr.f32.gmra.mxu0 %v8833
  %v9213 = vpop.f32.mrf.mxu0
  %v9214 = vadd.f32 0.0, %v9213
  %v9215 = vpop.f32.mrf.mxu0
  %9216 = vmatprep.mubr.f32.mxu0 0.0
  %9217 = vmatmul.mubr.f32.gmra.mxu0 %v8835
  %v9218 = vpop.f32.mrf.mxu0
  %v9219 = vadd.f32 0.0, %v9218
  %v9220 = vpop.f32.mrf.mxu0
  %9221 = vdwg.mxu0
  %v9222 = vadd.f32 %v8751, %v8904
  %v9223 = vadd.f32 %v8752, %v8909
  %v9224 = vadd.f32 %v8753, %v8914
  %v9225 = vadd.f32 %v8754, %v8919
  %v9226 = vadd.f32 %v8755, %v8924
  %v9227 = vadd.f32 %v8756, %v8929
  %v9228 = vadd.f32 %v8757, %v8934
  %v9229 = vadd.f32 %v8758, %v8939
  %v9230 = vadd.f32 %v8759, %v8944
  %v9231 = vadd.f32 %v8760, %v8949
  %v9232 = vadd.f32 %v8761, %v8954
  %v9233 = vadd.f32 %v8762, %v8959
  %v9234 = vadd.f32 %v8763, %v8964
  %v9235 = vadd.f32 %v8764, %v8969
  %v9236 = vadd.f32 %v8765, %v8974
  %v9237 = vadd.f32 %v8766, %v8979
  %v9238 = vadd.f32 %v8767, %v8984
  %v9239 = vadd.f32 %v8768, %v8989
  %v9240 = vadd.f32 %v8769, %v8994
  %v9241 = vadd.f32 %v8770, %v8999
  %v9242 = vadd.f32 %v8771, %v9004
  %v9243 = vadd.f32 %v8772, %v9009
  %v9244 = vadd.f32 %v8773, %v9014
  %v9245 = vadd.f32 %v8774, %v9019
  %v9246 = vadd.f32 %v8775, %v9024
  %v9247 = vadd.f32 %v8776, %v9029
  %v9248 = vadd.f32 %v8777, %v9034
  %v9249 = vadd.f32 %v8778, %v9039
  %v9250 = vadd.f32 %v8779, %v9044
  %v9251 = vadd.f32 %v8780, %v9049
  %v9252 = vadd.f32 %v8781, %v9054
  %v9253 = vadd.f32 %v8782, %v9059
  %v9254 = vadd.f32 %v8783, %v9064
  %v9255 = vadd.f32 %v8784, %v9069
  %v9256 = vadd.f32 %v8785, %v9074
  %v9257 = vadd.f32 %v8786, %v9079
  %v9258 = vadd.f32 %v8787, %v9084
  %v9259 = vadd.f32 %v8788, %v9089
  %v9260 = vadd.f32 %v8789, %v9094
  %v9261 = vadd.f32 %v8790, %v9099
  %v9262 = vadd.f32 %v8791, %v9104
  %v9263 = vadd.f32 %v8792, %v9109
  %v9264 = vadd.f32 %v8793, %v9114
  %v9265 = vadd.f32 %v8794, %v9119
  %v9266 = vadd.f32 %v8795, %v9124
  %v9267 = vadd.f32 %v8796, %v9129
  %v9268 = vadd.f32 %v8797, %v9134
  %v9269 = vadd.f32 %v8798, %v9139
  %v9270 = vadd.f32 %v8799, %v9144
  %v9271 = vadd.f32 %v8800, %v9149
  %v9272 = vadd.f32 %v8801, %v9154
  %v9273 = vadd.f32 %v8802, %v9159
  %v9274 = vadd.f32 %v8803, %v9164
  %v9275 = vadd.f32 %v8804, %v9169
  %v9276 = vadd.f32 %v8805, %v9174
  %v9277 = vadd.f32 %v8806, %v9179
  %v9278 = vadd.f32 %v8807, %v9184
  %v9279 = vadd.f32 %v8808, %v9189
  %v9280 = vadd.f32 %v8809, %v9194
  %v9281 = vadd.f32 %v8810, %v9199
  %v9282 = vadd.f32 %v8811, %v9204
  %v9283 = vadd.f32 %v8812, %v9209
  %v9284 = vadd.f32 %v8813, %v9214
  %v9285 = vadd.f32 %v8814, %v9219
  %v9292 = vrot.slane %v5749, 7
  %v9293 = vrot.slane %v5750, 7
  %v9294 = vsel %vm535, %v9292, %v9293
  %v9295 = vrot.slane %v5751, 7
  %v9296 = vsel %vm535, %v9293, %v9295
  %v9297 = vrot.slane %v5821, 7
  %v9298 = vrot.slane %v5822, 7
  %v9299 = vsel %vm535, %v9297, %v9298
  %v9300 = vrot.slane %v5823, 7
  %v9301 = vsel %vm535, %v9298, %v9300
  %s9302 = scalar_lea.vmem %s3, 48
  %v9303 = vld [vmem:[%s9302] sm:$0xff]
  %v9304 = vsel %vm5470, %v9294, 0
  %v9306 = vsel %vm5470, %v9296, 0
  %v9308 = vsel %vm5470, %v9299, 0
  %v9310 = vsel %vm5470, %v9301, 0
  %9312 = vmatprep.subr.mxu0 0.0
  %9313 = vmatpush1.msra.mxu0 0.0
  %9314 = vmatprep.subr.mxu0 0.0
  %9315 = vmatpush1.msra.mxu0 0.0
  %9316 = vmatprep.subr.mxu0 0.0
  %9317 = vmatpush1.msra.mxu0 0.0
  %9318 = vmatprep.subr.mxu0 0.0
  %9319 = vmatpush1.msra.mxu0 0.0
  %9320 = vmatprep.subr.mxu0 0.0
  %9321 = vmatpush1.msra.mxu0 0.0
  %9322 = vmatprep.subr.mxu0 0.0
  %9323 = vmatpush1.msra.mxu0 0.0
  %9324 = vmatprep.subr.mxu0 0.0
  %9325 = vmatpush1.msra.mxu0 0.0
  %9326 = vmatprep.subr.mxu0 0.0
  %9327 = vmatpush1.msra.mxu0 0.0
  %9328 = vmatprep.subr.mxu0 0.0
  %9329 = vmatpush1.msra.mxu0 0.0
  %9330 = vmatprep.subr.mxu0 0.0
  %9331 = vmatpush1.msra.mxu0 0.0
  %9332 = vmatprep.subr.mxu0 0.0
  %9333 = vmatpush1.msra.mxu0 0.0
  %9334 = vmatprep.subr.mxu0 0.0
  %9335 = vmatpush1.msra.mxu0 0.0
  %9336 = vmatprep.subr.mxu0 0.0
  %9337 = vmatpush1.msra.mxu0 0.0
  %9338 = vmatprep.subr.mxu0 0.0
  %9339 = vmatpush1.msra.mxu0 0.0
  %9340 = vmatprep.subr.mxu0 0.0
  %9341 = vmatpush1.msra.mxu0 0.0
  %9342 = vmatprep.subr.mxu0 0.0
  %9343 = vmatpush1.msra.mxu0 %v9303
  %9344 = vmatprep.subr.mxu0 0.0
  %9345 = vmatpush2.msra.mxu0 0.0
  %9346 = vmatprep.subr.mxu0 0.0
  %9347 = vmatpush2.msra.mxu0 0.0
  %9348 = vmatprep.subr.mxu0 0.0
  %9349 = vmatpush2.msra.mxu0 0.0
  %9350 = vmatprep.subr.mxu0 0.0
  %9351 = vmatpush2.msra.mxu0 0.0
  %9352 = vmatprep.subr.mxu0 0.0
  %9353 = vmatpush2.msra.mxu0 0.0
  %9354 = vmatprep.subr.mxu0 0.0
  %9355 = vmatpush2.msra.mxu0 0.0
  %9356 = vmatprep.subr.mxu0 0.0
  %9357 = vmatpush2.msra.mxu0 0.0
  %9358 = vmatprep.subr.mxu0 0.0
  %9359 = vmatpush2.msra.mxu0 0.0
  %9360 = vmatprep.subr.mxu0 0.0
  %9361 = vmatpush2.msra.mxu0 0.0
  %9362 = vmatprep.subr.mxu0 0.0
  %9363 = vmatpush2.msra.mxu0 0.0
  %9364 = vmatprep.subr.mxu0 0.0
  %9365 = vmatpush2.msra.mxu0 0.0
  %9366 = vmatprep.subr.mxu0 0.0
  %9367 = vmatpush2.msra.mxu0 0.0
  %9368 = vmatprep.subr.mxu0 0.0
  %9369 = vmatpush2.msra.mxu0 0.0
  %9370 = vmatprep.subr.mxu0 0.0
  %9371 = vmatpush2.msra.mxu0 0.0
  %9372 = vmatprep.subr.mxu0 0.0
  %9373 = vmatpush2.msra.mxu0 0.0
  %9374 = vmatprep.subr.mxu0 0.0
  %9375 = vmatpush2.msra.mxu0 0.0
  %9376 = vmatprep.mubr.f32.mxu0 0.0
  %9377 = vmatmul.mubr.f32.gmra.mxu0 %v6605
  %v9378 = vpop.f32.mrf.mxu0
  %v9379 = vadd.f32 0.0, %v9378
  %v9380 = vpop.f32.mrf.mxu0
  %9381 = vmatprep.mubr.f32.mxu0 0.0
  %9382 = vmatmul.mubr.f32.gmra.mxu0 %v6607
  %v9383 = vpop.f32.mrf.mxu0
  %v9384 = vadd.f32 0.0, %v9383
  %v9385 = vpop.f32.mrf.mxu0
  %9386 = vmatprep.mubr.f32.mxu0 0.0
  %9387 = vmatmul.mubr.f32.gmra.mxu0 %v6609
  %v9388 = vpop.f32.mrf.mxu0
  %v9389 = vadd.f32 0.0, %v9388
  %v9390 = vpop.f32.mrf.mxu0
  %9391 = vmatprep.mubr.f32.mxu0 0.0
  %9392 = vmatmul.mubr.f32.gmra.mxu0 %v6611
  %v9393 = vpop.f32.mrf.mxu0
  %v9394 = vadd.f32 0.0, %v9393
  %v9395 = vpop.f32.mrf.mxu0
  %9396 = vmatprep.mubr.f32.mxu0 0.0
  %9397 = vmatmul.mubr.f32.gmra.mxu0 %v6613
  %v9398 = vpop.f32.mrf.mxu0
  %v9399 = vadd.f32 0.0, %v9398
  %v9400 = vpop.f32.mrf.mxu0
  %9401 = vmatprep.mubr.f32.mxu0 0.0
  %9402 = vmatmul.mubr.f32.gmra.mxu0 %v6615
  %v9403 = vpop.f32.mrf.mxu0
  %v9404 = vadd.f32 0.0, %v9403
  %v9405 = vpop.f32.mrf.mxu0
  %9406 = vmatprep.mubr.f32.mxu0 0.0
  %9407 = vmatmul.mubr.f32.gmra.mxu0 %v6617
  %v9408 = vpop.f32.mrf.mxu0
  %v9409 = vadd.f32 0.0, %v9408
  %v9410 = vpop.f32.mrf.mxu0
  %9411 = vmatprep.mubr.f32.mxu0 0.0
  %9412 = vmatmul.mubr.f32.gmra.mxu0 %v6619
  %v9413 = vpop.f32.mrf.mxu0
  %v9414 = vadd.f32 0.0, %v9413
  %v9415 = vpop.f32.mrf.mxu0
  %9416 = vmatprep.mubr.f32.mxu0 0.0
  %9417 = vmatmul.mubr.f32.gmra.mxu0 %v6621
  %v9418 = vpop.f32.mrf.mxu0
  %v9419 = vadd.f32 0.0, %v9418
  %v9420 = vpop.f32.mrf.mxu0
  %9421 = vmatprep.mubr.f32.mxu0 0.0
  %9422 = vmatmul.mubr.f32.gmra.mxu0 %v6623
  %v9423 = vpop.f32.mrf.mxu0
  %v9424 = vadd.f32 0.0, %v9423
  %v9425 = vpop.f32.mrf.mxu0
  %9426 = vmatprep.mubr.f32.mxu0 0.0
  %9427 = vmatmul.mubr.f32.gmra.mxu0 %v6625
  %v9428 = vpop.f32.mrf.mxu0
  %v9429 = vadd.f32 0.0, %v9428
  %v9430 = vpop.f32.mrf.mxu0
  %9431 = vmatprep.mubr.f32.mxu0 0.0
  %9432 = vmatmul.mubr.f32.gmra.mxu0 %v6627
  %v9433 = vpop.f32.mrf.mxu0
  %v9434 = vadd.f32 0.0, %v9433
  %v9435 = vpop.f32.mrf.mxu0
  %9436 = vmatprep.mubr.f32.mxu0 0.0
  %9437 = vmatmul.mubr.f32.gmra.mxu0 %v6629
  %v9438 = vpop.f32.mrf.mxu0
  %v9439 = vadd.f32 0.0, %v9438
  %v9440 = vpop.f32.mrf.mxu0
  %9441 = vmatprep.mubr.f32.mxu0 0.0
  %9442 = vmatmul.mubr.f32.gmra.mxu0 %v6631
  %v9443 = vpop.f32.mrf.mxu0
  %v9444 = vadd.f32 0.0, %v9443
  %v9445 = vpop.f32.mrf.mxu0
  %9446 = vmatprep.mubr.f32.mxu0 0.0
  %9447 = vmatmul.mubr.f32.gmra.mxu0 %v6633
  %v9448 = vpop.f32.mrf.mxu0
  %v9449 = vadd.f32 0.0, %v9448
  %v9450 = vpop.f32.mrf.mxu0
  %9451 = vmatprep.mubr.f32.mxu0 0.0
  %9452 = vmatmul.mubr.f32.gmra.mxu0 %v6635
  %v9453 = vpop.f32.mrf.mxu0
  %v9454 = vadd.f32 0.0, %v9453
  %v9455 = vpop.f32.mrf.mxu0
  %9456 = vmatprep.mubr.f32.mxu0 0.0
  %9457 = vmatmul.mubr.f32.gmra.mxu0 %v6637
  %v9458 = vpop.f32.mrf.mxu0
  %v9459 = vadd.f32 0.0, %v9458
  %v9460 = vpop.f32.mrf.mxu0
  %9461 = vmatprep.mubr.f32.mxu0 0.0
  %9462 = vmatmul.mubr.f32.gmra.mxu0 %v6639
  %v9463 = vpop.f32.mrf.mxu0
  %v9464 = vadd.f32 0.0, %v9463
  %v9465 = vpop.f32.mrf.mxu0
  %9466 = vmatprep.mubr.f32.mxu0 0.0
  %9467 = vmatmul.mubr.f32.gmra.mxu0 %v6641
  %v9468 = vpop.f32.mrf.mxu0
  %v9469 = vadd.f32 0.0, %v9468
  %v9470 = vpop.f32.mrf.mxu0
  %9471 = vmatprep.mubr.f32.mxu0 0.0
  %9472 = vmatmul.mubr.f32.gmra.mxu0 %v6643
  %v9473 = vpop.f32.mrf.mxu0
  %v9474 = vadd.f32 0.0, %v9473
  %v9475 = vpop.f32.mrf.mxu0
  %9476 = vmatprep.mubr.f32.mxu0 0.0
  %9477 = vmatmul.mubr.f32.gmra.mxu0 %v6645
  %v9478 = vpop.f32.mrf.mxu0
  %v9479 = vadd.f32 0.0, %v9478
  %v9480 = vpop.f32.mrf.mxu0
  %9481 = vmatprep.mubr.f32.mxu0 0.0
  %9482 = vmatmul.mubr.f32.gmra.mxu0 %v6647
  %v9483 = vpop.f32.mrf.mxu0
  %v9484 = vadd.f32 0.0, %v9483
  %v9485 = vpop.f32.mrf.mxu0
  %9486 = vmatprep.mubr.f32.mxu0 0.0
  %9487 = vmatmul.mubr.f32.gmra.mxu0 %v6649
  %v9488 = vpop.f32.mrf.mxu0
  %v9489 = vadd.f32 0.0, %v9488
  %v9490 = vpop.f32.mrf.mxu0
  %9491 = vmatprep.mubr.f32.mxu0 0.0
  %9492 = vmatmul.mubr.f32.gmra.mxu0 %v6651
  %v9493 = vpop.f32.mrf.mxu0
  %v9494 = vadd.f32 0.0, %v9493
  %v9495 = vpop.f32.mrf.mxu0
  %9496 = vmatprep.mubr.f32.mxu0 0.0
  %9497 = vmatmul.mubr.f32.gmra.mxu0 %v6653
  %v9498 = vpop.f32.mrf.mxu0
  %v9499 = vadd.f32 0.0, %v9498
  %v9500 = vpop.f32.mrf.mxu0
  %9501 = vmatprep.mubr.f32.mxu0 0.0
  %9502 = vmatmul.mubr.f32.gmra.mxu0 %v6655
  %v9503 = vpop.f32.mrf.mxu0
  %v9504 = vadd.f32 0.0, %v9503
  %v9505 = vpop.f32.mrf.mxu0
  %9506 = vmatprep.mubr.f32.mxu0 0.0
  %9507 = vmatmul.mubr.f32.gmra.mxu0 %v6657
  %v9508 = vpop.f32.mrf.mxu0
  %v9509 = vadd.f32 0.0, %v9508
  %v9510 = vpop.f32.mrf.mxu0
  %9511 = vmatprep.mubr.f32.mxu0 0.0
  %9512 = vmatmul.mubr.f32.gmra.mxu0 %v6659
  %v9513 = vpop.f32.mrf.mxu0
  %v9514 = vadd.f32 0.0, %v9513
  %v9515 = vpop.f32.mrf.mxu0
  %9516 = vmatprep.mubr.f32.mxu0 0.0
  %9517 = vmatmul.mubr.f32.gmra.mxu0 %v7899
  %v9518 = vpop.f32.mrf.mxu0
  %v9519 = vadd.f32 0.0, %v9518
  %v9520 = vpop.f32.mrf.mxu0
  %9521 = vmatprep.mubr.f32.mxu0 0.0
  %9522 = vmatmul.mubr.f32.gmra.mxu0 %v7901
  %v9523 = vpop.f32.mrf.mxu0
  %v9524 = vadd.f32 0.0, %v9523
  %v9525 = vpop.f32.mrf.mxu0
  %9526 = vmatprep.mubr.f32.mxu0 0.0
  %9527 = vmatmul.mubr.f32.gmra.mxu0 %v9304
  %v9528 = vpop.f32.mrf.mxu0
  %v9529 = vadd.f32 0.0, %v9528
  %v9530 = vpop.f32.mrf.mxu0
  %9531 = vmatprep.mubr.f32.mxu0 0.0
  %9532 = vmatmul.mubr.f32.gmra.mxu0 %v9306
  %v9533 = vpop.f32.mrf.mxu0
  %v9534 = vadd.f32 0.0, %v9533
  %v9535 = vpop.f32.mrf.mxu0
  %9536 = vmatprep.mubr.f32.mxu0 0.0
  %9537 = vmatmul.mubr.f32.gmra.mxu0 %v6669
  %v9538 = vpop.f32.mrf.mxu0
  %v9539 = vadd.f32 0.0, %v9538
  %v9540 = vpop.f32.mrf.mxu0
  %9541 = vmatprep.mubr.f32.mxu0 0.0
  %9542 = vmatmul.mubr.f32.gmra.mxu0 %v6671
  %v9543 = vpop.f32.mrf.mxu0
  %v9544 = vadd.f32 0.0, %v9543
  %v9545 = vpop.f32.mrf.mxu0
  %9546 = vmatprep.mubr.f32.mxu0 0.0
  %9547 = vmatmul.mubr.f32.gmra.mxu0 %v6673
  %v9548 = vpop.f32.mrf.mxu0
  %v9549 = vadd.f32 0.0, %v9548
  %v9550 = vpop.f32.mrf.mxu0
  %9551 = vmatprep.mubr.f32.mxu0 0.0
  %9552 = vmatmul.mubr.f32.gmra.mxu0 %v6675
  %v9553 = vpop.f32.mrf.mxu0
  %v9554 = vadd.f32 0.0, %v9553
  %v9555 = vpop.f32.mrf.mxu0
  %9556 = vmatprep.mubr.f32.mxu0 0.0
  %9557 = vmatmul.mubr.f32.gmra.mxu0 %v6677
  %v9558 = vpop.f32.mrf.mxu0
  %v9559 = vadd.f32 0.0, %v9558
  %v9560 = vpop.f32.mrf.mxu0
  %9561 = vmatprep.mubr.f32.mxu0 0.0
  %9562 = vmatmul.mubr.f32.gmra.mxu0 %v6679
  %v9563 = vpop.f32.mrf.mxu0
  %v9564 = vadd.f32 0.0, %v9563
  %v9565 = vpop.f32.mrf.mxu0
  %9566 = vmatprep.mubr.f32.mxu0 0.0
  %9567 = vmatmul.mubr.f32.gmra.mxu0 %v6681
  %v9568 = vpop.f32.mrf.mxu0
  %v9569 = vadd.f32 0.0, %v9568
  %v9570 = vpop.f32.mrf.mxu0
  %9571 = vmatprep.mubr.f32.mxu0 0.0
  %9572 = vmatmul.mubr.f32.gmra.mxu0 %v6683
  %v9573 = vpop.f32.mrf.mxu0
  %v9574 = vadd.f32 0.0, %v9573
  %v9575 = vpop.f32.mrf.mxu0
  %9576 = vmatprep.mubr.f32.mxu0 0.0
  %9577 = vmatmul.mubr.f32.gmra.mxu0 %v6685
  %v9578 = vpop.f32.mrf.mxu0
  %v9579 = vadd.f32 0.0, %v9578
  %v9580 = vpop.f32.mrf.mxu0
  %9581 = vmatprep.mubr.f32.mxu0 0.0
  %9582 = vmatmul.mubr.f32.gmra.mxu0 %v6687
  %v9583 = vpop.f32.mrf.mxu0
  %v9584 = vadd.f32 0.0, %v9583
  %v9585 = vpop.f32.mrf.mxu0
  %9586 = vmatprep.mubr.f32.mxu0 0.0
  %9587 = vmatmul.mubr.f32.gmra.mxu0 %v6689
  %v9588 = vpop.f32.mrf.mxu0
  %v9589 = vadd.f32 0.0, %v9588
  %v9590 = vpop.f32.mrf.mxu0
  %9591 = vmatprep.mubr.f32.mxu0 0.0
  %9592 = vmatmul.mubr.f32.gmra.mxu0 %v6691
  %v9593 = vpop.f32.mrf.mxu0
  %v9594 = vadd.f32 0.0, %v9593
  %v9595 = vpop.f32.mrf.mxu0
  %9596 = vmatprep.mubr.f32.mxu0 0.0
  %9597 = vmatmul.mubr.f32.gmra.mxu0 %v6693
  %v9598 = vpop.f32.mrf.mxu0
  %v9599 = vadd.f32 0.0, %v9598
  %v9600 = vpop.f32.mrf.mxu0
  %9601 = vmatprep.mubr.f32.mxu0 0.0
  %9602 = vmatmul.mubr.f32.gmra.mxu0 %v6695
  %v9603 = vpop.f32.mrf.mxu0
  %v9604 = vadd.f32 0.0, %v9603
  %v9605 = vpop.f32.mrf.mxu0
  %9606 = vmatprep.mubr.f32.mxu0 0.0
  %9607 = vmatmul.mubr.f32.gmra.mxu0 %v6697
  %v9608 = vpop.f32.mrf.mxu0
  %v9609 = vadd.f32 0.0, %v9608
  %v9610 = vpop.f32.mrf.mxu0
  %9611 = vmatprep.mubr.f32.mxu0 0.0
  %9612 = vmatmul.mubr.f32.gmra.mxu0 %v6699
  %v9613 = vpop.f32.mrf.mxu0
  %v9614 = vadd.f32 0.0, %v9613
  %v9615 = vpop.f32.mrf.mxu0
  %9616 = vmatprep.mubr.f32.mxu0 0.0
  %9617 = vmatmul.mubr.f32.gmra.mxu0 %v6701
  %v9618 = vpop.f32.mrf.mxu0
  %v9619 = vadd.f32 0.0, %v9618
  %v9620 = vpop.f32.mrf.mxu0
  %9621 = vmatprep.mubr.f32.mxu0 0.0
  %9622 = vmatmul.mubr.f32.gmra.mxu0 %v6703
  %v9623 = vpop.f32.mrf.mxu0
  %v9624 = vadd.f32 0.0, %v9623
  %v9625 = vpop.f32.mrf.mxu0
  %9626 = vmatprep.mubr.f32.mxu0 0.0
  %9627 = vmatmul.mubr.f32.gmra.mxu0 %v6705
  %v9628 = vpop.f32.mrf.mxu0
  %v9629 = vadd.f32 0.0, %v9628
  %v9630 = vpop.f32.mrf.mxu0
  %9631 = vmatprep.mubr.f32.mxu0 0.0
  %9632 = vmatmul.mubr.f32.gmra.mxu0 %v6707
  %v9633 = vpop.f32.mrf.mxu0
  %v9634 = vadd.f32 0.0, %v9633
  %v9635 = vpop.f32.mrf.mxu0
  %9636 = vmatprep.mubr.f32.mxu0 0.0
  %9637 = vmatmul.mubr.f32.gmra.mxu0 %v6709
  %v9638 = vpop.f32.mrf.mxu0
  %v9639 = vadd.f32 0.0, %v9638
  %v9640 = vpop.f32.mrf.mxu0
  %9641 = vmatprep.mubr.f32.mxu0 0.0
  %9642 = vmatmul.mubr.f32.gmra.mxu0 %v6711
  %v9643 = vpop.f32.mrf.mxu0
  %v9644 = vadd.f32 0.0, %v9643
  %v9645 = vpop.f32.mrf.mxu0
  %9646 = vmatprep.mubr.f32.mxu0 0.0
  %9647 = vmatmul.mubr.f32.gmra.mxu0 %v6713
  %v9648 = vpop.f32.mrf.mxu0
  %v9649 = vadd.f32 0.0, %v9648
  %v9650 = vpop.f32.mrf.mxu0
  %9651 = vmatprep.mubr.f32.mxu0 0.0
  %9652 = vmatmul.mubr.f32.gmra.mxu0 %v6715
  %v9653 = vpop.f32.mrf.mxu0
  %v9654 = vadd.f32 0.0, %v9653
  %v9655 = vpop.f32.mrf.mxu0
  %9656 = vmatprep.mubr.f32.mxu0 0.0
  %9657 = vmatmul.mubr.f32.gmra.mxu0 %v6717
  %v9658 = vpop.f32.mrf.mxu0
  %v9659 = vadd.f32 0.0, %v9658
  %v9660 = vpop.f32.mrf.mxu0
  %9661 = vmatprep.mubr.f32.mxu0 0.0
  %9662 = vmatmul.mubr.f32.gmra.mxu0 %v6719
  %v9663 = vpop.f32.mrf.mxu0
  %v9664 = vadd.f32 0.0, %v9663
  %v9665 = vpop.f32.mrf.mxu0
  %9666 = vmatprep.mubr.f32.mxu0 0.0
  %9667 = vmatmul.mubr.f32.gmra.mxu0 %v6721
  %v9668 = vpop.f32.mrf.mxu0
  %v9669 = vadd.f32 0.0, %v9668
  %v9670 = vpop.f32.mrf.mxu0
  %9671 = vmatprep.mubr.f32.mxu0 0.0
  %9672 = vmatmul.mubr.f32.gmra.mxu0 %v6723
  %v9673 = vpop.f32.mrf.mxu0
  %v9674 = vadd.f32 0.0, %v9673
  %v9675 = vpop.f32.mrf.mxu0
  %9676 = vmatprep.mubr.f32.mxu0 0.0
  %9677 = vmatmul.mubr.f32.gmra.mxu0 %v7903
  %v9678 = vpop.f32.mrf.mxu0
  %v9679 = vadd.f32 0.0, %v9678
  %v9680 = vpop.f32.mrf.mxu0
  %9681 = vmatprep.mubr.f32.mxu0 0.0
  %9682 = vmatmul.mubr.f32.gmra.mxu0 %v7905
  %v9683 = vpop.f32.mrf.mxu0
  %v9684 = vadd.f32 0.0, %v9683
  %v9685 = vpop.f32.mrf.mxu0
  %9686 = vmatprep.mubr.f32.mxu0 0.0
  %9687 = vmatmul.mubr.f32.gmra.mxu0 %v9308
  %v9688 = vpop.f32.mrf.mxu0
  %v9689 = vadd.f32 0.0, %v9688
  %v9690 = vpop.f32.mrf.mxu0
  %9691 = vmatprep.mubr.f32.mxu0 0.0
  %9692 = vmatmul.mubr.f32.gmra.mxu0 %v9310
  %v9693 = vpop.f32.mrf.mxu0
  %v9694 = vadd.f32 0.0, %v9693
  %v9695 = vpop.f32.mrf.mxu0
  %9696 = vdwg.mxu0
  %v9697 = vadd.f32 %v9222, %v9379
  %v9698 = vadd.f32 %v9223, %v9384
  %v9699 = vadd.f32 %v9224, %v9389
  %v9700 = vadd.f32 %v9225, %v9394
  %v9701 = vadd.f32 %v9226, %v9399
  %v9702 = vadd.f32 %v9227, %v9404
  %v9703 = vadd.f32 %v9228, %v9409
  %v9704 = vadd.f32 %v9229, %v9414
  %v9705 = vadd.f32 %v9230, %v9419
  %v9706 = vadd.f32 %v9231, %v9424
  %v9707 = vadd.f32 %v9232, %v9429
  %v9708 = vadd.f32 %v9233, %v9434
  %v9709 = vadd.f32 %v9234, %v9439
  %v9710 = vadd.f32 %v9235, %v9444
  %v9711 = vadd.f32 %v9236, %v9449
  %v9712 = vadd.f32 %v9237, %v9454
  %v9713 = vadd.f32 %v9238, %v9459
  %v9714 = vadd.f32 %v9239, %v9464
  %v9715 = vadd.f32 %v9240, %v9469
  %v9716 = vadd.f32 %v9241, %v9474
  %v9717 = vadd.f32 %v9242, %v9479
  %v9718 = vadd.f32 %v9243, %v9484
  %v9719 = vadd.f32 %v9244, %v9489
  %v9720 = vadd.f32 %v9245, %v9494
  %v9721 = vadd.f32 %v9246, %v9499
  %v9722 = vadd.f32 %v9247, %v9504
  %v9723 = vadd.f32 %v9248, %v9509
  %v9724 = vadd.f32 %v9249, %v9514
  %v9725 = vadd.f32 %v9250, %v9519
  %v9726 = vadd.f32 %v9251, %v9524
  %v9727 = vadd.f32 %v9252, %v9529
  %v9728 = vadd.f32 %v9253, %v9534
  %v9729 = vadd.f32 %v9254, %v9539
  %v9730 = vadd.f32 %v9255, %v9544
  %v9731 = vadd.f32 %v9256, %v9549
  %v9732 = vadd.f32 %v9257, %v9554
  %v9733 = vadd.f32 %v9258, %v9559
  %v9734 = vadd.f32 %v9259, %v9564
  %v9735 = vadd.f32 %v9260, %v9569
  %v9736 = vadd.f32 %v9261, %v9574
  %v9737 = vadd.f32 %v9262, %v9579
  %v9738 = vadd.f32 %v9263, %v9584
  %v9739 = vadd.f32 %v9264, %v9589
  %v9740 = vadd.f32 %v9265, %v9594
  %v9741 = vadd.f32 %v9266, %v9599
  %v9742 = vadd.f32 %v9267, %v9604
  %v9743 = vadd.f32 %v9268, %v9609
  %v9744 = vadd.f32 %v9269, %v9614
  %v9745 = vadd.f32 %v9270, %v9619
  %v9746 = vadd.f32 %v9271, %v9624
  %v9747 = vadd.f32 %v9272, %v9629
  %v9748 = vadd.f32 %v9273, %v9634
  %v9749 = vadd.f32 %v9274, %v9639
  %v9750 = vadd.f32 %v9275, %v9644
  %v9751 = vadd.f32 %v9276, %v9649
  %v9752 = vadd.f32 %v9277, %v9654
  %v9753 = vadd.f32 %v9278, %v9659
  %v9754 = vadd.f32 %v9279, %v9664
  %v9755 = vadd.f32 %v9280, %v9669
  %v9756 = vadd.f32 %v9281, %v9674
  %v9757 = vadd.f32 %v9282, %v9679
  %v9758 = vadd.f32 %v9283, %v9684
  %v9759 = vadd.f32 %v9284, %v9689
  %v9760 = vadd.f32 %v9285, %v9694
  %s9761 = scalar_lea.vmem %s3, 56
  %v9762 = vld [vmem:[%s9761] sm:$0xff]
  %v9763 = vsel %vm5470, %v5750, 0
  %v9765 = vsel %vm5470, %v5751, 0
  %v9767 = vsel %vm5470, %v5822, 0
  %v9769 = vsel %vm5470, %v5823, 0
  %9771 = vmatprep.subr.mxu0 0.0
  %9772 = vmatpush1.msra.mxu0 0.0
  %9773 = vmatprep.subr.mxu0 0.0
  %9774 = vmatpush1.msra.mxu0 0.0
  %9775 = vmatprep.subr.mxu0 0.0
  %9776 = vmatpush1.msra.mxu0 0.0
  %9777 = vmatprep.subr.mxu0 0.0
  %9778 = vmatpush1.msra.mxu0 0.0
  %9779 = vmatprep.subr.mxu0 0.0
  %9780 = vmatpush1.msra.mxu0 0.0
  %9781 = vmatprep.subr.mxu0 0.0
  %9782 = vmatpush1.msra.mxu0 0.0
  %9783 = vmatprep.subr.mxu0 0.0
  %9784 = vmatpush1.msra.mxu0 0.0
  %9785 = vmatprep.subr.mxu0 0.0
  %9786 = vmatpush1.msra.mxu0 0.0
  %9787 = vmatprep.subr.mxu0 0.0
  %9788 = vmatpush1.msra.mxu0 0.0
  %9789 = vmatprep.subr.mxu0 0.0
  %9790 = vmatpush1.msra.mxu0 0.0
  %9791 = vmatprep.subr.mxu0 0.0
  %9792 = vmatpush1.msra.mxu0 0.0
  %9793 = vmatprep.subr.mxu0 0.0
  %9794 = vmatpush1.msra.mxu0 0.0
  %9795 = vmatprep.subr.mxu0 0.0
  %9796 = vmatpush1.msra.mxu0 0.0
  %9797 = vmatprep.subr.mxu0 0.0
  %9798 = vmatpush1.msra.mxu0 0.0
  %9799 = vmatprep.subr.mxu0 0.0
  %9800 = vmatpush1.msra.mxu0 0.0
  %9801 = vmatprep.subr.mxu0 0.0
  %9802 = vmatpush1.msra.mxu0 %v9762
  %9803 = vmatprep.subr.mxu0 0.0
  %9804 = vmatpush2.msra.mxu0 0.0
  %9805 = vmatprep.subr.mxu0 0.0
  %9806 = vmatpush2.msra.mxu0 0.0
  %9807 = vmatprep.subr.mxu0 0.0
  %9808 = vmatpush2.msra.mxu0 0.0
  %9809 = vmatprep.subr.mxu0 0.0
  %9810 = vmatpush2.msra.mxu0 0.0
  %9811 = vmatprep.subr.mxu0 0.0
  %9812 = vmatpush2.msra.mxu0 0.0
  %9813 = vmatprep.subr.mxu0 0.0
  %9814 = vmatpush2.msra.mxu0 0.0
  %9815 = vmatprep.subr.mxu0 0.0
  %9816 = vmatpush2.msra.mxu0 0.0
  %9817 = vmatprep.subr.mxu0 0.0
  %9818 = vmatpush2.msra.mxu0 0.0
  %9819 = vmatprep.subr.mxu0 0.0
  %9820 = vmatpush2.msra.mxu0 0.0
  %9821 = vmatprep.subr.mxu0 0.0
  %9822 = vmatpush2.msra.mxu0 0.0
  %9823 = vmatprep.subr.mxu0 0.0
  %9824 = vmatpush2.msra.mxu0 0.0
  %9825 = vmatprep.subr.mxu0 0.0
  %9826 = vmatpush2.msra.mxu0 0.0
  %9827 = vmatprep.subr.mxu0 0.0
  %9828 = vmatpush2.msra.mxu0 0.0
  %9829 = vmatprep.subr.mxu0 0.0
  %9830 = vmatpush2.msra.mxu0 0.0
  %9831 = vmatprep.subr.mxu0 0.0
  %9832 = vmatpush2.msra.mxu0 0.0
  %9833 = vmatprep.subr.mxu0 0.0
  %9834 = vmatpush2.msra.mxu0 0.0
  %9835 = vmatprep.mubr.f32.mxu0 0.0
  %9836 = vmatmul.mubr.f32.gmra.mxu0 %v6092
  %v9837 = vpop.f32.mrf.mxu0
  %v9838 = vadd.f32 0.0, %v9837
  %v9839 = vpop.f32.mrf.mxu0
  %9840 = vmatprep.mubr.f32.mxu0 0.0
  %9841 = vmatmul.mubr.f32.gmra.mxu0 %v6094
  %v9842 = vpop.f32.mrf.mxu0
  %v9843 = vadd.f32 0.0, %v9842
  %v9844 = vpop.f32.mrf.mxu0
  %9845 = vmatprep.mubr.f32.mxu0 0.0
  %9846 = vmatmul.mubr.f32.gmra.mxu0 %v6096
  %v9847 = vpop.f32.mrf.mxu0
  %v9848 = vadd.f32 0.0, %v9847
  %v9849 = vpop.f32.mrf.mxu0
  %9850 = vmatprep.mubr.f32.mxu0 0.0
  %9851 = vmatmul.mubr.f32.gmra.mxu0 %v6098
  %v9852 = vpop.f32.mrf.mxu0
  %v9853 = vadd.f32 0.0, %v9852
  %v9854 = vpop.f32.mrf.mxu0
  %9855 = vmatprep.mubr.f32.mxu0 0.0
  %9856 = vmatmul.mubr.f32.gmra.mxu0 %v6100
  %v9857 = vpop.f32.mrf.mxu0
  %v9858 = vadd.f32 0.0, %v9857
  %v9859 = vpop.f32.mrf.mxu0
  %9860 = vmatprep.mubr.f32.mxu0 0.0
  %9861 = vmatmul.mubr.f32.gmra.mxu0 %v6102
  %v9862 = vpop.f32.mrf.mxu0
  %v9863 = vadd.f32 0.0, %v9862
  %v9864 = vpop.f32.mrf.mxu0
  %9865 = vmatprep.mubr.f32.mxu0 0.0
  %9866 = vmatmul.mubr.f32.gmra.mxu0 %v6104
  %v9867 = vpop.f32.mrf.mxu0
  %v9868 = vadd.f32 0.0, %v9867
  %v9869 = vpop.f32.mrf.mxu0
  %9870 = vmatprep.mubr.f32.mxu0 0.0
  %9871 = vmatmul.mubr.f32.gmra.mxu0 %v6106
  %v9872 = vpop.f32.mrf.mxu0
  %v9873 = vadd.f32 0.0, %v9872
  %v9874 = vpop.f32.mrf.mxu0
  %9875 = vmatprep.mubr.f32.mxu0 0.0
  %9876 = vmatmul.mubr.f32.gmra.mxu0 %v6108
  %v9877 = vpop.f32.mrf.mxu0
  %v9878 = vadd.f32 0.0, %v9877
  %v9879 = vpop.f32.mrf.mxu0
  %9880 = vmatprep.mubr.f32.mxu0 0.0
  %9881 = vmatmul.mubr.f32.gmra.mxu0 %v6110
  %v9882 = vpop.f32.mrf.mxu0
  %v9883 = vadd.f32 0.0, %v9882
  %v9884 = vpop.f32.mrf.mxu0
  %9885 = vmatprep.mubr.f32.mxu0 0.0
  %9886 = vmatmul.mubr.f32.gmra.mxu0 %v6112
  %v9887 = vpop.f32.mrf.mxu0
  %v9888 = vadd.f32 0.0, %v9887
  %v9889 = vpop.f32.mrf.mxu0
  %9890 = vmatprep.mubr.f32.mxu0 0.0
  %9891 = vmatmul.mubr.f32.gmra.mxu0 %v6114
  %v9892 = vpop.f32.mrf.mxu0
  %v9893 = vadd.f32 0.0, %v9892
  %v9894 = vpop.f32.mrf.mxu0
  %9895 = vmatprep.mubr.f32.mxu0 0.0
  %9896 = vmatmul.mubr.f32.gmra.mxu0 %v6116
  %v9897 = vpop.f32.mrf.mxu0
  %v9898 = vadd.f32 0.0, %v9897
  %v9899 = vpop.f32.mrf.mxu0
  %9900 = vmatprep.mubr.f32.mxu0 0.0
  %9901 = vmatmul.mubr.f32.gmra.mxu0 %v6118
  %v9902 = vpop.f32.mrf.mxu0
  %v9903 = vadd.f32 0.0, %v9902
  %v9904 = vpop.f32.mrf.mxu0
  %9905 = vmatprep.mubr.f32.mxu0 0.0
  %9906 = vmatmul.mubr.f32.gmra.mxu0 %v6120
  %v9907 = vpop.f32.mrf.mxu0
  %v9908 = vadd.f32 0.0, %v9907
  %v9909 = vpop.f32.mrf.mxu0
  %9910 = vmatprep.mubr.f32.mxu0 0.0
  %9911 = vmatmul.mubr.f32.gmra.mxu0 %v6122
  %v9912 = vpop.f32.mrf.mxu0
  %v9913 = vadd.f32 0.0, %v9912
  %v9914 = vpop.f32.mrf.mxu0
  %9915 = vmatprep.mubr.f32.mxu0 0.0
  %9916 = vmatmul.mubr.f32.gmra.mxu0 %v6124
  %v9917 = vpop.f32.mrf.mxu0
  %v9918 = vadd.f32 0.0, %v9917
  %v9919 = vpop.f32.mrf.mxu0
  %9920 = vmatprep.mubr.f32.mxu0 0.0
  %9921 = vmatmul.mubr.f32.gmra.mxu0 %v6126
  %v9922 = vpop.f32.mrf.mxu0
  %v9923 = vadd.f32 0.0, %v9922
  %v9924 = vpop.f32.mrf.mxu0
  %9925 = vmatprep.mubr.f32.mxu0 0.0
  %9926 = vmatmul.mubr.f32.gmra.mxu0 %v6128
  %v9927 = vpop.f32.mrf.mxu0
  %v9928 = vadd.f32 0.0, %v9927
  %v9929 = vpop.f32.mrf.mxu0
  %9930 = vmatprep.mubr.f32.mxu0 0.0
  %9931 = vmatmul.mubr.f32.gmra.mxu0 %v6130
  %v9932 = vpop.f32.mrf.mxu0
  %v9933 = vadd.f32 0.0, %v9932
  %v9934 = vpop.f32.mrf.mxu0
  %9935 = vmatprep.mubr.f32.mxu0 0.0
  %9936 = vmatmul.mubr.f32.gmra.mxu0 %v6132
  %v9937 = vpop.f32.mrf.mxu0
  %v9938 = vadd.f32 0.0, %v9937
  %v9939 = vpop.f32.mrf.mxu0
  %9940 = vmatprep.mubr.f32.mxu0 0.0
  %9941 = vmatmul.mubr.f32.gmra.mxu0 %v6134
  %v9942 = vpop.f32.mrf.mxu0
  %v9943 = vadd.f32 0.0, %v9942
  %v9944 = vpop.f32.mrf.mxu0
  %9945 = vmatprep.mubr.f32.mxu0 0.0
  %9946 = vmatmul.mubr.f32.gmra.mxu0 %v6136
  %v9947 = vpop.f32.mrf.mxu0
  %v9948 = vadd.f32 0.0, %v9947
  %v9949 = vpop.f32.mrf.mxu0
  %9950 = vmatprep.mubr.f32.mxu0 0.0
  %9951 = vmatmul.mubr.f32.gmra.mxu0 %v6138
  %v9952 = vpop.f32.mrf.mxu0
  %v9953 = vadd.f32 0.0, %v9952
  %v9954 = vpop.f32.mrf.mxu0
  %9955 = vmatprep.mubr.f32.mxu0 0.0
  %9956 = vmatmul.mubr.f32.gmra.mxu0 %v6140
  %v9957 = vpop.f32.mrf.mxu0
  %v9958 = vadd.f32 0.0, %v9957
  %v9959 = vpop.f32.mrf.mxu0
  %9960 = vmatprep.mubr.f32.mxu0 0.0
  %9961 = vmatmul.mubr.f32.gmra.mxu0 %v6142
  %v9962 = vpop.f32.mrf.mxu0
  %v9963 = vadd.f32 0.0, %v9962
  %v9964 = vpop.f32.mrf.mxu0
  %9965 = vmatprep.mubr.f32.mxu0 0.0
  %9966 = vmatmul.mubr.f32.gmra.mxu0 %v6144
  %v9967 = vpop.f32.mrf.mxu0
  %v9968 = vadd.f32 0.0, %v9967
  %v9969 = vpop.f32.mrf.mxu0
  %9970 = vmatprep.mubr.f32.mxu0 0.0
  %9971 = vmatmul.mubr.f32.gmra.mxu0 %v6146
  %v9972 = vpop.f32.mrf.mxu0
  %v9973 = vadd.f32 0.0, %v9972
  %v9974 = vpop.f32.mrf.mxu0
  %9975 = vmatprep.mubr.f32.mxu0 0.0
  %9976 = vmatmul.mubr.f32.gmra.mxu0 %v8358
  %v9977 = vpop.f32.mrf.mxu0
  %v9978 = vadd.f32 0.0, %v9977
  %v9979 = vpop.f32.mrf.mxu0
  %9980 = vmatprep.mubr.f32.mxu0 0.0
  %9981 = vmatmul.mubr.f32.gmra.mxu0 %v8360
  %v9982 = vpop.f32.mrf.mxu0
  %v9983 = vadd.f32 0.0, %v9982
  %v9984 = vpop.f32.mrf.mxu0
  %9985 = vmatprep.mubr.f32.mxu0 0.0
  %9986 = vmatmul.mubr.f32.gmra.mxu0 %v9763
  %v9987 = vpop.f32.mrf.mxu0
  %v9988 = vadd.f32 0.0, %v9987
  %v9989 = vpop.f32.mrf.mxu0
  %9990 = vmatprep.mubr.f32.mxu0 0.0
  %9991 = vmatmul.mubr.f32.gmra.mxu0 %v9765
  %v9992 = vpop.f32.mrf.mxu0
  %v9993 = vadd.f32 0.0, %v9992
  %v9994 = vpop.f32.mrf.mxu0
  %9995 = vmatprep.mubr.f32.mxu0 0.0
  %9996 = vmatmul.mubr.f32.gmra.mxu0 %v6156
  %v9997 = vpop.f32.mrf.mxu0
  %v9998 = vadd.f32 0.0, %v9997
  %v9999 = vpop.f32.mrf.mxu0
  %10000 = vmatprep.mubr.f32.mxu0 0.0
  %10001 = vmatmul.mubr.f32.gmra.mxu0 %v6158
  %v10002 = vpop.f32.mrf.mxu0
  %v10003 = vadd.f32 0.0, %v10002
  %v10004 = vpop.f32.mrf.mxu0
  %10005 = vmatprep.mubr.f32.mxu0 0.0
  %10006 = vmatmul.mubr.f32.gmra.mxu0 %v6160
  %v10007 = vpop.f32.mrf.mxu0
  %v10008 = vadd.f32 0.0, %v10007
  %v10009 = vpop.f32.mrf.mxu0
  %10010 = vmatprep.mubr.f32.mxu0 0.0
  %10011 = vmatmul.mubr.f32.gmra.mxu0 %v6162
  %v10012 = vpop.f32.mrf.mxu0
  %v10013 = vadd.f32 0.0, %v10012
  %v10014 = vpop.f32.mrf.mxu0
  %10015 = vmatprep.mubr.f32.mxu0 0.0
  %10016 = vmatmul.mubr.f32.gmra.mxu0 %v6164
  %v10017 = vpop.f32.mrf.mxu0
  %v10018 = vadd.f32 0.0, %v10017
  %v10019 = vpop.f32.mrf.mxu0
  %10020 = vmatprep.mubr.f32.mxu0 0.0
  %10021 = vmatmul.mubr.f32.gmra.mxu0 %v6166
  %v10022 = vpop.f32.mrf.mxu0
  %v10023 = vadd.f32 0.0, %v10022
  %v10024 = vpop.f32.mrf.mxu0
  %10025 = vmatprep.mubr.f32.mxu0 0.0
  %10026 = vmatmul.mubr.f32.gmra.mxu0 %v6168
  %v10027 = vpop.f32.mrf.mxu0
  %v10028 = vadd.f32 0.0, %v10027
  %v10029 = vpop.f32.mrf.mxu0
  %10030 = vmatprep.mubr.f32.mxu0 0.0
  %10031 = vmatmul.mubr.f32.gmra.mxu0 %v6170
  %v10032 = vpop.f32.mrf.mxu0
  %v10033 = vadd.f32 0.0, %v10032
  %v10034 = vpop.f32.mrf.mxu0
  %10035 = vmatprep.mubr.f32.mxu0 0.0
  %10036 = vmatmul.mubr.f32.gmra.mxu0 %v6172
  %v10037 = vpop.f32.mrf.mxu0
  %v10038 = vadd.f32 0.0, %v10037
  %v10039 = vpop.f32.mrf.mxu0
  %10040 = vmatprep.mubr.f32.mxu0 0.0
  %10041 = vmatmul.mubr.f32.gmra.mxu0 %v6174
  %v10042 = vpop.f32.mrf.mxu0
  %v10043 = vadd.f32 0.0, %v10042
  %v10044 = vpop.f32.mrf.mxu0
  %10045 = vmatprep.mubr.f32.mxu0 0.0
  %10046 = vmatmul.mubr.f32.gmra.mxu0 %v6176
  %v10047 = vpop.f32.mrf.mxu0
  %v10048 = vadd.f32 0.0, %v10047
  %v10049 = vpop.f32.mrf.mxu0
  %10050 = vmatprep.mubr.f32.mxu0 0.0
  %10051 = vmatmul.mubr.f32.gmra.mxu0 %v6178
  %v10052 = vpop.f32.mrf.mxu0
  %v10053 = vadd.f32 0.0, %v10052
  %v10054 = vpop.f32.mrf.mxu0
  %10055 = vmatprep.mubr.f32.mxu0 0.0
  %10056 = vmatmul.mubr.f32.gmra.mxu0 %v6180
  %v10057 = vpop.f32.mrf.mxu0
  %v10058 = vadd.f32 0.0, %v10057
  %v10059 = vpop.f32.mrf.mxu0
  %10060 = vmatprep.mubr.f32.mxu0 0.0
  %10061 = vmatmul.mubr.f32.gmra.mxu0 %v6182
  %v10062 = vpop.f32.mrf.mxu0
  %v10063 = vadd.f32 0.0, %v10062
  %v10064 = vpop.f32.mrf.mxu0
  %10065 = vmatprep.mubr.f32.mxu0 0.0
  %10066 = vmatmul.mubr.f32.gmra.mxu0 %v6184
  %v10067 = vpop.f32.mrf.mxu0
  %v10068 = vadd.f32 0.0, %v10067
  %v10069 = vpop.f32.mrf.mxu0
  %10070 = vmatprep.mubr.f32.mxu0 0.0
  %10071 = vmatmul.mubr.f32.gmra.mxu0 %v6186
  %v10072 = vpop.f32.mrf.mxu0
  %v10073 = vadd.f32 0.0, %v10072
  %v10074 = vpop.f32.mrf.mxu0
  %10075 = vmatprep.mubr.f32.mxu0 0.0
  %10076 = vmatmul.mubr.f32.gmra.mxu0 %v6188
  %v10077 = vpop.f32.mrf.mxu0
  %v10078 = vadd.f32 0.0, %v10077
  %v10079 = vpop.f32.mrf.mxu0
  %10080 = vmatprep.mubr.f32.mxu0 0.0
  %10081 = vmatmul.mubr.f32.gmra.mxu0 %v6190
  %v10082 = vpop.f32.mrf.mxu0
  %v10083 = vadd.f32 0.0, %v10082
  %v10084 = vpop.f32.mrf.mxu0
  %10085 = vmatprep.mubr.f32.mxu0 0.0
  %10086 = vmatmul.mubr.f32.gmra.mxu0 %v6192
  %v10087 = vpop.f32.mrf.mxu0
  %v10088 = vadd.f32 0.0, %v10087
  %v10089 = vpop.f32.mrf.mxu0
  %10090 = vmatprep.mubr.f32.mxu0 0.0
  %10091 = vmatmul.mubr.f32.gmra.mxu0 %v6194
  %v10092 = vpop.f32.mrf.mxu0
  %v10093 = vadd.f32 0.0, %v10092
  %v10094 = vpop.f32.mrf.mxu0
  %10095 = vmatprep.mubr.f32.mxu0 0.0
  %10096 = vmatmul.mubr.f32.gmra.mxu0 %v6196
  %v10097 = vpop.f32.mrf.mxu0
  %v10098 = vadd.f32 0.0, %v10097
  %v10099 = vpop.f32.mrf.mxu0
  %10100 = vmatprep.mubr.f32.mxu0 0.0
  %10101 = vmatmul.mubr.f32.gmra.mxu0 %v6198
  %v10102 = vpop.f32.mrf.mxu0
  %v10103 = vadd.f32 0.0, %v10102
  %v10104 = vpop.f32.mrf.mxu0
  %10105 = vmatprep.mubr.f32.mxu0 0.0
  %10106 = vmatmul.mubr.f32.gmra.mxu0 %v6200
  %v10107 = vpop.f32.mrf.mxu0
  %v10108 = vadd.f32 0.0, %v10107
  %v10109 = vpop.f32.mrf.mxu0
  %10110 = vmatprep.mubr.f32.mxu0 0.0
  %10111 = vmatmul.mubr.f32.gmra.mxu0 %v6202
  %v10112 = vpop.f32.mrf.mxu0
  %v10113 = vadd.f32 0.0, %v10112
  %v10114 = vpop.f32.mrf.mxu0
  %10115 = vmatprep.mubr.f32.mxu0 0.0
  %10116 = vmatmul.mubr.f32.gmra.mxu0 %v6204
  %v10117 = vpop.f32.mrf.mxu0
  %v10118 = vadd.f32 0.0, %v10117
  %v10119 = vpop.f32.mrf.mxu0
  %10120 = vmatprep.mubr.f32.mxu0 0.0
  %10121 = vmatmul.mubr.f32.gmra.mxu0 %v6206
  %v10122 = vpop.f32.mrf.mxu0
  %v10123 = vadd.f32 0.0, %v10122
  %v10124 = vpop.f32.mrf.mxu0
  %10125 = vmatprep.mubr.f32.mxu0 0.0
  %10126 = vmatmul.mubr.f32.gmra.mxu0 %v6208
  %v10127 = vpop.f32.mrf.mxu0
  %v10128 = vadd.f32 0.0, %v10127
  %v10129 = vpop.f32.mrf.mxu0
  %10130 = vmatprep.mubr.f32.mxu0 0.0
  %10131 = vmatmul.mubr.f32.gmra.mxu0 %v6210
  %v10132 = vpop.f32.mrf.mxu0
  %v10133 = vadd.f32 0.0, %v10132
  %v10134 = vpop.f32.mrf.mxu0
  %10135 = vmatprep.mubr.f32.mxu0 0.0
  %10136 = vmatmul.mubr.f32.gmra.mxu0 %v8362
  %v10137 = vpop.f32.mrf.mxu0
  %v10138 = vadd.f32 0.0, %v10137
  %v10139 = vpop.f32.mrf.mxu0
  %10140 = vmatprep.mubr.f32.mxu0 0.0
  %10141 = vmatmul.mubr.f32.gmra.mxu0 %v8364
  %v10142 = vpop.f32.mrf.mxu0
  %v10143 = vadd.f32 0.0, %v10142
  %v10144 = vpop.f32.mrf.mxu0
  %10145 = vmatprep.mubr.f32.mxu0 0.0
  %10146 = vmatmul.mubr.f32.gmra.mxu0 %v9767
  %v10147 = vpop.f32.mrf.mxu0
  %v10148 = vadd.f32 0.0, %v10147
  %v10149 = vpop.f32.mrf.mxu0
  %10150 = vmatprep.mubr.f32.mxu0 0.0
  %10151 = vmatmul.mubr.f32.gmra.mxu0 %v9769
  %v10152 = vpop.f32.mrf.mxu0
  %v10153 = vadd.f32 0.0, %v10152
  %v10154 = vpop.f32.mrf.mxu0
  %10155 = vdwg.mxu0
  %v10156 = vadd.f32 %v9697, %v9838
  %v10157 = vadd.f32 %v9698, %v9843
  %v10158 = vadd.f32 %v9699, %v9848
  %v10159 = vadd.f32 %v9700, %v9853
  %v10160 = vadd.f32 %v9701, %v9858
  %v10161 = vadd.f32 %v9702, %v9863
  %v10162 = vadd.f32 %v9703, %v9868
  %v10163 = vadd.f32 %v9704, %v9873
  %v10164 = vadd.f32 %v9705, %v9878
  %v10165 = vadd.f32 %v9706, %v9883
  %v10166 = vadd.f32 %v9707, %v9888
  %v10167 = vadd.f32 %v9708, %v9893
  %v10168 = vadd.f32 %v9709, %v9898
  %v10169 = vadd.f32 %v9710, %v9903
  %v10170 = vadd.f32 %v9711, %v9908
  %v10171 = vadd.f32 %v9712, %v9913
  %v10172 = vadd.f32 %v9713, %v9918
  %v10173 = vadd.f32 %v9714, %v9923
  %v10174 = vadd.f32 %v9715, %v9928
  %v10175 = vadd.f32 %v9716, %v9933
  %v10176 = vadd.f32 %v9717, %v9938
  %v10177 = vadd.f32 %v9718, %v9943
  %v10178 = vadd.f32 %v9719, %v9948
  %v10179 = vadd.f32 %v9720, %v9953
  %v10180 = vadd.f32 %v9721, %v9958
  %v10181 = vadd.f32 %v9722, %v9963
  %v10182 = vadd.f32 %v9723, %v9968
  %v10183 = vadd.f32 %v9724, %v9973
  %v10184 = vadd.f32 %v9725, %v9978
  %v10185 = vadd.f32 %v9726, %v9983
  %v10186 = vadd.f32 %v9727, %v9988
  %v10187 = vadd.f32 %v9728, %v9993
  %v10188 = vadd.f32 %v9729, %v9998
  %v10189 = vadd.f32 %v9730, %v10003
  %v10190 = vadd.f32 %v9731, %v10008
  %v10191 = vadd.f32 %v9732, %v10013
  %v10192 = vadd.f32 %v9733, %v10018
  %v10193 = vadd.f32 %v9734, %v10023
  %v10194 = vadd.f32 %v9735, %v10028
  %v10195 = vadd.f32 %v9736, %v10033
  %v10196 = vadd.f32 %v9737, %v10038
  %v10197 = vadd.f32 %v9738, %v10043
  %v10198 = vadd.f32 %v9739, %v10048
  %v10199 = vadd.f32 %v9740, %v10053
  %v10200 = vadd.f32 %v9741, %v10058
  %v10201 = vadd.f32 %v9742, %v10063
  %v10202 = vadd.f32 %v9743, %v10068
  %v10203 = vadd.f32 %v9744, %v10073
  %v10204 = vadd.f32 %v9745, %v10078
  %v10205 = vadd.f32 %v9746, %v10083
  %v10206 = vadd.f32 %v9747, %v10088
  %v10207 = vadd.f32 %v9748, %v10093
  %v10208 = vadd.f32 %v9749, %v10098
  %v10209 = vadd.f32 %v9750, %v10103
  %v10210 = vadd.f32 %v9751, %v10108
  %v10211 = vadd.f32 %v9752, %v10113
  %v10212 = vadd.f32 %v9753, %v10118
  %v10213 = vadd.f32 %v9754, %v10123
  %v10214 = vadd.f32 %v9755, %v10128
  %v10215 = vadd.f32 %v9756, %v10133
  %v10216 = vadd.f32 %v9757, %v10138
  %v10217 = vadd.f32 %v9758, %v10143
  %v10218 = vadd.f32 %v9759, %v10148
  %v10219 = vadd.f32 %v9760, %v10153
  %v10222 = vrot.slane %v5750, 1
  %v10223 = vrot.slane %v5751, 1
  %v10224 = vsel %vm1764, %v10222, %v10223
  %v10225 = vrot.slane %v5752, 1
  %v10226 = vsel %vm1764, %v10223, %v10225
  %v10227 = vrot.slane %v5822, 1
  %v10228 = vrot.slane %v5823, 1
  %v10229 = vsel %vm1764, %v10227, %v10228
  %v10230 = vrot.slane %v5824, 1
  %v10231 = vsel %vm1764, %v10228, %v10230
  %s10232 = scalar_lea.vmem %s3, 64
  %v10233 = vld [vmem:[%s10232] sm:$0xff]
  %v10234 = vsel %vm5470, %v10224, 0
  %v10236 = vsel %vm5470, %v10226, 0
  %v10238 = vsel %vm5470, %v10229, 0
  %v10240 = vsel %vm5470, %v10231, 0
  %10242 = vmatprep.subr.mxu0 0.0
  %10243 = vmatpush1.msra.mxu0 0.0
  %10244 = vmatprep.subr.mxu0 0.0
  %10245 = vmatpush1.msra.mxu0 0.0
  %10246 = vmatprep.subr.mxu0 0.0
  %10247 = vmatpush1.msra.mxu0 0.0
  %10248 = vmatprep.subr.mxu0 0.0
  %10249 = vmatpush1.msra.mxu0 0.0
  %10250 = vmatprep.subr.mxu0 0.0
  %10251 = vmatpush1.msra.mxu0 0.0
  %10252 = vmatprep.subr.mxu0 0.0
  %10253 = vmatpush1.msra.mxu0 0.0
  %10254 = vmatprep.subr.mxu0 0.0
  %10255 = vmatpush1.msra.mxu0 0.0
  %10256 = vmatprep.subr.mxu0 0.0
  %10257 = vmatpush1.msra.mxu0 0.0
  %10258 = vmatprep.subr.mxu0 0.0
  %10259 = vmatpush1.msra.mxu0 0.0
  %10260 = vmatprep.subr.mxu0 0.0
  %10261 = vmatpush1.msra.mxu0 0.0
  %10262 = vmatprep.subr.mxu0 0.0
  %10263 = vmatpush1.msra.mxu0 0.0
  %10264 = vmatprep.subr.mxu0 0.0
  %10265 = vmatpush1.msra.mxu0 0.0
  %10266 = vmatprep.subr.mxu0 0.0
  %10267 = vmatpush1.msra.mxu0 0.0
  %10268 = vmatprep.subr.mxu0 0.0
  %10269 = vmatpush1.msra.mxu0 0.0
  %10270 = vmatprep.subr.mxu0 0.0
  %10271 = vmatpush1.msra.mxu0 0.0
  %10272 = vmatprep.subr.mxu0 0.0
  %10273 = vmatpush1.msra.mxu0 %v10233
  %10274 = vmatprep.subr.mxu0 0.0
  %10275 = vmatpush2.msra.mxu0 0.0
  %10276 = vmatprep.subr.mxu0 0.0
  %10277 = vmatpush2.msra.mxu0 0.0
  %10278 = vmatprep.subr.mxu0 0.0
  %10279 = vmatpush2.msra.mxu0 0.0
  %10280 = vmatprep.subr.mxu0 0.0
  %10281 = vmatpush2.msra.mxu0 0.0
  %10282 = vmatprep.subr.mxu0 0.0
  %10283 = vmatpush2.msra.mxu0 0.0
  %10284 = vmatprep.subr.mxu0 0.0
  %10285 = vmatpush2.msra.mxu0 0.0
  %10286 = vmatprep.subr.mxu0 0.0
  %10287 = vmatpush2.msra.mxu0 0.0
  %10288 = vmatprep.subr.mxu0 0.0
  %10289 = vmatpush2.msra.mxu0 0.0
  %10290 = vmatprep.subr.mxu0 0.0
  %10291 = vmatpush2.msra.mxu0 0.0
  %10292 = vmatprep.subr.mxu0 0.0
  %10293 = vmatpush2.msra.mxu0 0.0
  %10294 = vmatprep.subr.mxu0 0.0
  %10295 = vmatpush2.msra.mxu0 0.0
  %10296 = vmatprep.subr.mxu0 0.0
  %10297 = vmatpush2.msra.mxu0 0.0
  %10298 = vmatprep.subr.mxu0 0.0
  %10299 = vmatpush2.msra.mxu0 0.0
  %10300 = vmatprep.subr.mxu0 0.0
  %10301 = vmatpush2.msra.mxu0 0.0
  %10302 = vmatprep.subr.mxu0 0.0
  %10303 = vmatpush2.msra.mxu0 0.0
  %10304 = vmatprep.subr.mxu0 0.0
  %10305 = vmatpush2.msra.mxu0 0.0
  %10306 = vmatprep.mubr.f32.mxu0 0.0
  %10307 = vmatmul.mubr.f32.gmra.mxu0 %v7312
  %v10308 = vpop.f32.mrf.mxu0
  %v10309 = vadd.f32 0.0, %v10308
  %v10310 = vpop.f32.mrf.mxu0
  %10311 = vmatprep.mubr.f32.mxu0 0.0
  %10312 = vmatmul.mubr.f32.gmra.mxu0 %v7314
  %v10313 = vpop.f32.mrf.mxu0
  %v10314 = vadd.f32 0.0, %v10313
  %v10315 = vpop.f32.mrf.mxu0
  %10316 = vmatprep.mubr.f32.mxu0 0.0
  %10317 = vmatmul.mubr.f32.gmra.mxu0 %v7316
  %v10318 = vpop.f32.mrf.mxu0
  %v10319 = vadd.f32 0.0, %v10318
  %v10320 = vpop.f32.mrf.mxu0
  %10321 = vmatprep.mubr.f32.mxu0 0.0
  %10322 = vmatmul.mubr.f32.gmra.mxu0 %v7318
  %v10323 = vpop.f32.mrf.mxu0
  %v10324 = vadd.f32 0.0, %v10323
  %v10325 = vpop.f32.mrf.mxu0
  %10326 = vmatprep.mubr.f32.mxu0 0.0
  %10327 = vmatmul.mubr.f32.gmra.mxu0 %v7320
  %v10328 = vpop.f32.mrf.mxu0
  %v10329 = vadd.f32 0.0, %v10328
  %v10330 = vpop.f32.mrf.mxu0
  %10331 = vmatprep.mubr.f32.mxu0 0.0
  %10332 = vmatmul.mubr.f32.gmra.mxu0 %v7322
  %v10333 = vpop.f32.mrf.mxu0
  %v10334 = vadd.f32 0.0, %v10333
  %v10335 = vpop.f32.mrf.mxu0
  %10336 = vmatprep.mubr.f32.mxu0 0.0
  %10337 = vmatmul.mubr.f32.gmra.mxu0 %v7324
  %v10338 = vpop.f32.mrf.mxu0
  %v10339 = vadd.f32 0.0, %v10338
  %v10340 = vpop.f32.mrf.mxu0
  %10341 = vmatprep.mubr.f32.mxu0 0.0
  %10342 = vmatmul.mubr.f32.gmra.mxu0 %v7326
  %v10343 = vpop.f32.mrf.mxu0
  %v10344 = vadd.f32 0.0, %v10343
  %v10345 = vpop.f32.mrf.mxu0
  %10346 = vmatprep.mubr.f32.mxu0 0.0
  %10347 = vmatmul.mubr.f32.gmra.mxu0 %v7328
  %v10348 = vpop.f32.mrf.mxu0
  %v10349 = vadd.f32 0.0, %v10348
  %v10350 = vpop.f32.mrf.mxu0
  %10351 = vmatprep.mubr.f32.mxu0 0.0
  %10352 = vmatmul.mubr.f32.gmra.mxu0 %v7330
  %v10353 = vpop.f32.mrf.mxu0
  %v10354 = vadd.f32 0.0, %v10353
  %v10355 = vpop.f32.mrf.mxu0
  %10356 = vmatprep.mubr.f32.mxu0 0.0
  %10357 = vmatmul.mubr.f32.gmra.mxu0 %v7332
  %v10358 = vpop.f32.mrf.mxu0
  %v10359 = vadd.f32 0.0, %v10358
  %v10360 = vpop.f32.mrf.mxu0
  %10361 = vmatprep.mubr.f32.mxu0 0.0
  %10362 = vmatmul.mubr.f32.gmra.mxu0 %v7334
  %v10363 = vpop.f32.mrf.mxu0
  %v10364 = vadd.f32 0.0, %v10363
  %v10365 = vpop.f32.mrf.mxu0
  %10366 = vmatprep.mubr.f32.mxu0 0.0
  %10367 = vmatmul.mubr.f32.gmra.mxu0 %v7336
  %v10368 = vpop.f32.mrf.mxu0
  %v10369 = vadd.f32 0.0, %v10368
  %v10370 = vpop.f32.mrf.mxu0
  %10371 = vmatprep.mubr.f32.mxu0 0.0
  %10372 = vmatmul.mubr.f32.gmra.mxu0 %v7338
  %v10373 = vpop.f32.mrf.mxu0
  %v10374 = vadd.f32 0.0, %v10373
  %v10375 = vpop.f32.mrf.mxu0
  %10376 = vmatprep.mubr.f32.mxu0 0.0
  %10377 = vmatmul.mubr.f32.gmra.mxu0 %v7340
  %v10378 = vpop.f32.mrf.mxu0
  %v10379 = vadd.f32 0.0, %v10378
  %v10380 = vpop.f32.mrf.mxu0
  %10381 = vmatprep.mubr.f32.mxu0 0.0
  %10382 = vmatmul.mubr.f32.gmra.mxu0 %v7342
  %v10383 = vpop.f32.mrf.mxu0
  %v10384 = vadd.f32 0.0, %v10383
  %v10385 = vpop.f32.mrf.mxu0
  %10386 = vmatprep.mubr.f32.mxu0 0.0
  %10387 = vmatmul.mubr.f32.gmra.mxu0 %v7344
  %v10388 = vpop.f32.mrf.mxu0
  %v10389 = vadd.f32 0.0, %v10388
  %v10390 = vpop.f32.mrf.mxu0
  %10391 = vmatprep.mubr.f32.mxu0 0.0
  %10392 = vmatmul.mubr.f32.gmra.mxu0 %v7346
  %v10393 = vpop.f32.mrf.mxu0
  %v10394 = vadd.f32 0.0, %v10393
  %v10395 = vpop.f32.mrf.mxu0
  %10396 = vmatprep.mubr.f32.mxu0 0.0
  %10397 = vmatmul.mubr.f32.gmra.mxu0 %v7348
  %v10398 = vpop.f32.mrf.mxu0
  %v10399 = vadd.f32 0.0, %v10398
  %v10400 = vpop.f32.mrf.mxu0
  %10401 = vmatprep.mubr.f32.mxu0 0.0
  %10402 = vmatmul.mubr.f32.gmra.mxu0 %v7350
  %v10403 = vpop.f32.mrf.mxu0
  %v10404 = vadd.f32 0.0, %v10403
  %v10405 = vpop.f32.mrf.mxu0
  %10406 = vmatprep.mubr.f32.mxu0 0.0
  %10407 = vmatmul.mubr.f32.gmra.mxu0 %v7352
  %v10408 = vpop.f32.mrf.mxu0
  %v10409 = vadd.f32 0.0, %v10408
  %v10410 = vpop.f32.mrf.mxu0
  %10411 = vmatprep.mubr.f32.mxu0 0.0
  %10412 = vmatmul.mubr.f32.gmra.mxu0 %v7354
  %v10413 = vpop.f32.mrf.mxu0
  %v10414 = vadd.f32 0.0, %v10413
  %v10415 = vpop.f32.mrf.mxu0
  %10416 = vmatprep.mubr.f32.mxu0 0.0
  %10417 = vmatmul.mubr.f32.gmra.mxu0 %v7356
  %v10418 = vpop.f32.mrf.mxu0
  %v10419 = vadd.f32 0.0, %v10418
  %v10420 = vpop.f32.mrf.mxu0
  %10421 = vmatprep.mubr.f32.mxu0 0.0
  %10422 = vmatmul.mubr.f32.gmra.mxu0 %v7358
  %v10423 = vpop.f32.mrf.mxu0
  %v10424 = vadd.f32 0.0, %v10423
  %v10425 = vpop.f32.mrf.mxu0
  %10426 = vmatprep.mubr.f32.mxu0 0.0
  %10427 = vmatmul.mubr.f32.gmra.mxu0 %v7360
  %v10428 = vpop.f32.mrf.mxu0
  %v10429 = vadd.f32 0.0, %v10428
  %v10430 = vpop.f32.mrf.mxu0
  %10431 = vmatprep.mubr.f32.mxu0 0.0
  %10432 = vmatmul.mubr.f32.gmra.mxu0 %v7362
  %v10433 = vpop.f32.mrf.mxu0
  %v10434 = vadd.f32 0.0, %v10433
  %v10435 = vpop.f32.mrf.mxu0
  %10436 = vmatprep.mubr.f32.mxu0 0.0
  %10437 = vmatmul.mubr.f32.gmra.mxu0 %v7364
  %v10438 = vpop.f32.mrf.mxu0
  %v10439 = vadd.f32 0.0, %v10438
  %v10440 = vpop.f32.mrf.mxu0
  %10441 = vmatprep.mubr.f32.mxu0 0.0
  %10442 = vmatmul.mubr.f32.gmra.mxu0 %v7366
  %v10443 = vpop.f32.mrf.mxu0
  %v10444 = vadd.f32 0.0, %v10443
  %v10445 = vpop.f32.mrf.mxu0
  %10446 = vmatprep.mubr.f32.mxu0 0.0
  %10447 = vmatmul.mubr.f32.gmra.mxu0 %v8829
  %v10448 = vpop.f32.mrf.mxu0
  %v10449 = vadd.f32 0.0, %v10448
  %v10450 = vpop.f32.mrf.mxu0
  %10451 = vmatprep.mubr.f32.mxu0 0.0
  %10452 = vmatmul.mubr.f32.gmra.mxu0 %v8831
  %v10453 = vpop.f32.mrf.mxu0
  %v10454 = vadd.f32 0.0, %v10453
  %v10455 = vpop.f32.mrf.mxu0
  %10456 = vmatprep.mubr.f32.mxu0 0.0
  %10457 = vmatmul.mubr.f32.gmra.mxu0 %v10234
  %v10458 = vpop.f32.mrf.mxu0
  %v10459 = vadd.f32 0.0, %v10458
  %v10460 = vpop.f32.mrf.mxu0
  %10461 = vmatprep.mubr.f32.mxu0 0.0
  %10462 = vmatmul.mubr.f32.gmra.mxu0 %v10236
  %v10463 = vpop.f32.mrf.mxu0
  %v10464 = vadd.f32 0.0, %v10463
  %v10465 = vpop.f32.mrf.mxu0
  %10466 = vmatprep.mubr.f32.mxu0 0.0
  %10467 = vmatmul.mubr.f32.gmra.mxu0 %v7376
  %v10468 = vpop.f32.mrf.mxu0
  %v10469 = vadd.f32 0.0, %v10468
  %v10470 = vpop.f32.mrf.mxu0
  %10471 = vmatprep.mubr.f32.mxu0 0.0
  %10472 = vmatmul.mubr.f32.gmra.mxu0 %v7378
  %v10473 = vpop.f32.mrf.mxu0
  %v10474 = vadd.f32 0.0, %v10473
  %v10475 = vpop.f32.mrf.mxu0
  %10476 = vmatprep.mubr.f32.mxu0 0.0
  %10477 = vmatmul.mubr.f32.gmra.mxu0 %v7380
  %v10478 = vpop.f32.mrf.mxu0
  %v10479 = vadd.f32 0.0, %v10478
  %v10480 = vpop.f32.mrf.mxu0
  %10481 = vmatprep.mubr.f32.mxu0 0.0
  %10482 = vmatmul.mubr.f32.gmra.mxu0 %v7382
  %v10483 = vpop.f32.mrf.mxu0
  %v10484 = vadd.f32 0.0, %v10483
  %v10485 = vpop.f32.mrf.mxu0
  %10486 = vmatprep.mubr.f32.mxu0 0.0
  %10487 = vmatmul.mubr.f32.gmra.mxu0 %v7384
  %v10488 = vpop.f32.mrf.mxu0
  %v10489 = vadd.f32 0.0, %v10488
  %v10490 = vpop.f32.mrf.mxu0
  %10491 = vmatprep.mubr.f32.mxu0 0.0
  %10492 = vmatmul.mubr.f32.gmra.mxu0 %v7386
  %v10493 = vpop.f32.mrf.mxu0
  %v10494 = vadd.f32 0.0, %v10493
  %v10495 = vpop.f32.mrf.mxu0
  %10496 = vmatprep.mubr.f32.mxu0 0.0
  %10497 = vmatmul.mubr.f32.gmra.mxu0 %v7388
  %v10498 = vpop.f32.mrf.mxu0
  %v10499 = vadd.f32 0.0, %v10498
  %v10500 = vpop.f32.mrf.mxu0
  %10501 = vmatprep.mubr.f32.mxu0 0.0
  %10502 = vmatmul.mubr.f32.gmra.mxu0 %v7390
  %v10503 = vpop.f32.mrf.mxu0
  %v10504 = vadd.f32 0.0, %v10503
  %v10505 = vpop.f32.mrf.mxu0
  %10506 = vmatprep.mubr.f32.mxu0 0.0
  %10507 = vmatmul.mubr.f32.gmra.mxu0 %v7392
  %v10508 = vpop.f32.mrf.mxu0
  %v10509 = vadd.f32 0.0, %v10508
  %v10510 = vpop.f32.mrf.mxu0
  %10511 = vmatprep.mubr.f32.mxu0 0.0
  %10512 = vmatmul.mubr.f32.gmra.mxu0 %v7394
  %v10513 = vpop.f32.mrf.mxu0
  %v10514 = vadd.f32 0.0, %v10513
  %v10515 = vpop.f32.mrf.mxu0
  %10516 = vmatprep.mubr.f32.mxu0 0.0
  %10517 = vmatmul.mubr.f32.gmra.mxu0 %v7396
  %v10518 = vpop.f32.mrf.mxu0
  %v10519 = vadd.f32 0.0, %v10518
  %v10520 = vpop.f32.mrf.mxu0
  %10521 = vmatprep.mubr.f32.mxu0 0.0
  %10522 = vmatmul.mubr.f32.gmra.mxu0 %v7398
  %v10523 = vpop.f32.mrf.mxu0
  %v10524 = vadd.f32 0.0, %v10523
  %v10525 = vpop.f32.mrf.mxu0
  %10526 = vmatprep.mubr.f32.mxu0 0.0
  %10527 = vmatmul.mubr.f32.gmra.mxu0 %v7400
  %v10528 = vpop.f32.mrf.mxu0
  %v10529 = vadd.f32 0.0, %v10528
  %v10530 = vpop.f32.mrf.mxu0
  %10531 = vmatprep.mubr.f32.mxu0 0.0
  %10532 = vmatmul.mubr.f32.gmra.mxu0 %v7402
  %v10533 = vpop.f32.mrf.mxu0
  %v10534 = vadd.f32 0.0, %v10533
  %v10535 = vpop.f32.mrf.mxu0
  %10536 = vmatprep.mubr.f32.mxu0 0.0
  %10537 = vmatmul.mubr.f32.gmra.mxu0 %v7404
  %v10538 = vpop.f32.mrf.mxu0
  %v10539 = vadd.f32 0.0, %v10538
  %v10540 = vpop.f32.mrf.mxu0
  %10541 = vmatprep.mubr.f32.mxu0 0.0
  %10542 = vmatmul.mubr.f32.gmra.mxu0 %v7406
  %v10543 = vpop.f32.mrf.mxu0
  %v10544 = vadd.f32 0.0, %v10543
  %v10545 = vpop.f32.mrf.mxu0
  %10546 = vmatprep.mubr.f32.mxu0 0.0
  %10547 = vmatmul.mubr.f32.gmra.mxu0 %v7408
  %v10548 = vpop.f32.mrf.mxu0
  %v10549 = vadd.f32 0.0, %v10548
  %v10550 = vpop.f32.mrf.mxu0
  %10551 = vmatprep.mubr.f32.mxu0 0.0
  %10552 = vmatmul.mubr.f32.gmra.mxu0 %v7410
  %v10553 = vpop.f32.mrf.mxu0
  %v10554 = vadd.f32 0.0, %v10553
  %v10555 = vpop.f32.mrf.mxu0
  %10556 = vmatprep.mubr.f32.mxu0 0.0
  %10557 = vmatmul.mubr.f32.gmra.mxu0 %v7412
  %v10558 = vpop.f32.mrf.mxu0
  %v10559 = vadd.f32 0.0, %v10558
  %v10560 = vpop.f32.mrf.mxu0
  %10561 = vmatprep.mubr.f32.mxu0 0.0
  %10562 = vmatmul.mubr.f32.gmra.mxu0 %v7414
  %v10563 = vpop.f32.mrf.mxu0
  %v10564 = vadd.f32 0.0, %v10563
  %v10565 = vpop.f32.mrf.mxu0
  %10566 = vmatprep.mubr.f32.mxu0 0.0
  %10567 = vmatmul.mubr.f32.gmra.mxu0 %v7416
  %v10568 = vpop.f32.mrf.mxu0
  %v10569 = vadd.f32 0.0, %v10568
  %v10570 = vpop.f32.mrf.mxu0
  %10571 = vmatprep.mubr.f32.mxu0 0.0
  %10572 = vmatmul.mubr.f32.gmra.mxu0 %v7418
  %v10573 = vpop.f32.mrf.mxu0
  %v10574 = vadd.f32 0.0, %v10573
  %v10575 = vpop.f32.mrf.mxu0
  %10576 = vmatprep.mubr.f32.mxu0 0.0
  %10577 = vmatmul.mubr.f32.gmra.mxu0 %v7420
  %v10578 = vpop.f32.mrf.mxu0
  %v10579 = vadd.f32 0.0, %v10578
  %v10580 = vpop.f32.mrf.mxu0
  %10581 = vmatprep.mubr.f32.mxu0 0.0
  %10582 = vmatmul.mubr.f32.gmra.mxu0 %v7422
  %v10583 = vpop.f32.mrf.mxu0
  %v10584 = vadd.f32 0.0, %v10583
  %v10585 = vpop.f32.mrf.mxu0
  %10586 = vmatprep.mubr.f32.mxu0 0.0
  %10587 = vmatmul.mubr.f32.gmra.mxu0 %v7424
  %v10588 = vpop.f32.mrf.mxu0
  %v10589 = vadd.f32 0.0, %v10588
  %v10590 = vpop.f32.mrf.mxu0
  %10591 = vmatprep.mubr.f32.mxu0 0.0
  %10592 = vmatmul.mubr.f32.gmra.mxu0 %v7426
  %v10593 = vpop.f32.mrf.mxu0
  %v10594 = vadd.f32 0.0, %v10593
  %v10595 = vpop.f32.mrf.mxu0
  %10596 = vmatprep.mubr.f32.mxu0 0.0
  %10597 = vmatmul.mubr.f32.gmra.mxu0 %v7428
  %v10598 = vpop.f32.mrf.mxu0
  %v10599 = vadd.f32 0.0, %v10598
  %v10600 = vpop.f32.mrf.mxu0
  %10601 = vmatprep.mubr.f32.mxu0 0.0
  %10602 = vmatmul.mubr.f32.gmra.mxu0 %v7430
  %v10603 = vpop.f32.mrf.mxu0
  %v10604 = vadd.f32 0.0, %v10603
  %v10605 = vpop.f32.mrf.mxu0
  %10606 = vmatprep.mubr.f32.mxu0 0.0
  %10607 = vmatmul.mubr.f32.gmra.mxu0 %v8833
  %v10608 = vpop.f32.mrf.mxu0
  %v10609 = vadd.f32 0.0, %v10608
  %v10610 = vpop.f32.mrf.mxu0
  %10611 = vmatprep.mubr.f32.mxu0 0.0
  %10612 = vmatmul.mubr.f32.gmra.mxu0 %v8835
  %v10613 = vpop.f32.mrf.mxu0
  %v10614 = vadd.f32 0.0, %v10613
  %v10615 = vpop.f32.mrf.mxu0
  %10616 = vmatprep.mubr.f32.mxu0 0.0
  %10617 = vmatmul.mubr.f32.gmra.mxu0 %v10238
  %v10618 = vpop.f32.mrf.mxu0
  %v10619 = vadd.f32 0.0, %v10618
  %v10620 = vpop.f32.mrf.mxu0
  %10621 = vmatprep.mubr.f32.mxu0 0.0
  %10622 = vmatmul.mubr.f32.gmra.mxu0 %v10240
  %v10623 = vpop.f32.mrf.mxu0
  %v10624 = vadd.f32 0.0, %v10623
  %v10625 = vpop.f32.mrf.mxu0
  %10626 = vdwg.mxu0
  %v10627 = vadd.f32 %v10156, %v10309
  %v10628 = vadd.f32 %v10157, %v10314
  %v10629 = vadd.f32 %v10158, %v10319
  %v10630 = vadd.f32 %v10159, %v10324
  %v10631 = vadd.f32 %v10160, %v10329
  %v10632 = vadd.f32 %v10161, %v10334
  %v10633 = vadd.f32 %v10162, %v10339
  %v10634 = vadd.f32 %v10163, %v10344
  %v10635 = vadd.f32 %v10164, %v10349
  %v10636 = vadd.f32 %v10165, %v10354
  %v10637 = vadd.f32 %v10166, %v10359
  %v10638 = vadd.f32 %v10167, %v10364
  %v10639 = vadd.f32 %v10168, %v10369
  %v10640 = vadd.f32 %v10169, %v10374
  %v10641 = vadd.f32 %v10170, %v10379
  %v10642 = vadd.f32 %v10171, %v10384
  %v10643 = vadd.f32 %v10172, %v10389
  %v10644 = vadd.f32 %v10173, %v10394
  %v10645 = vadd.f32 %v10174, %v10399
  %v10646 = vadd.f32 %v10175, %v10404
  %v10647 = vadd.f32 %v10176, %v10409
  %v10648 = vadd.f32 %v10177, %v10414
  %v10649 = vadd.f32 %v10178, %v10419
  %v10650 = vadd.f32 %v10179, %v10424
  %v10651 = vadd.f32 %v10180, %v10429
  %v10652 = vadd.f32 %v10181, %v10434
  %v10653 = vadd.f32 %v10182, %v10439
  %v10654 = vadd.f32 %v10183, %v10444
  %v10655 = vadd.f32 %v10184, %v10449
  %v10656 = vadd.f32 %v10185, %v10454
  %v10657 = vadd.f32 %v10186, %v10459
  %v10658 = vadd.f32 %v10187, %v10464
  %v10659 = vadd.f32 %v10188, %v10469
  %v10660 = vadd.f32 %v10189, %v10474
  %v10661 = vadd.f32 %v10190, %v10479
  %v10662 = vadd.f32 %v10191, %v10484
  %v10663 = vadd.f32 %v10192, %v10489
  %v10664 = vadd.f32 %v10193, %v10494
  %v10665 = vadd.f32 %v10194, %v10499
  %v10666 = vadd.f32 %v10195, %v10504
  %v10667 = vadd.f32 %v10196, %v10509
  %v10668 = vadd.f32 %v10197, %v10514
  %v10669 = vadd.f32 %v10198, %v10519
  %v10670 = vadd.f32 %v10199, %v10524
  %v10671 = vadd.f32 %v10200, %v10529
  %v10672 = vadd.f32 %v10201, %v10534
  %v10673 = vadd.f32 %v10202, %v10539
  %v10674 = vadd.f32 %v10203, %v10544
  %v10675 = vadd.f32 %v10204, %v10549
  %v10676 = vadd.f32 %v10205, %v10554
  %v10677 = vadd.f32 %v10206, %v10559
  %v10678 = vadd.f32 %v10207, %v10564
  %v10679 = vadd.f32 %v10208, %v10569
  %v10680 = vadd.f32 %v10209, %v10574
  %v10681 = vadd.f32 %v10210, %v10579
  %v10682 = vadd.f32 %v10211, %v10584
  %v10683 = vadd.f32 %v10212, %v10589
  %v10684 = vadd.f32 %v10213, %v10594
  %v10685 = vadd.f32 %v10214, %v10599
  %v10686 = vadd.f32 %v10215, %v10604
  %v10687 = vadd.f32 %v10216, %v10609
  %v10688 = vadd.f32 %v10217, %v10614
  %v10689 = vadd.f32 %v10218, %v10619
  %v10690 = vadd.f32 %v10219, %v10624
  %v10691 = vld [vmem:[%s4] sm:$0x1]
  %v10693 = vlaneseq
  %v10694 = vshrl.u32 %v10693, 7
  %v10695 = vsub.s32 0, %v10694
  %v10696 = vrot.slane %v10691, %v10695
  %v10698 = vadd.f32 %v10627, %v10696
  %v10699 = vadd.f32 %v10628, %v10696
  %v10700 = vadd.f32 %v10629, %v10696
  %v10701 = vadd.f32 %v10630, %v10696
  %v10702 = vadd.f32 %v10631, %v10696
  %v10703 = vadd.f32 %v10632, %v10696
  %v10704 = vadd.f32 %v10633, %v10696
  %v10705 = vadd.f32 %v10634, %v10696
  %v10706 = vadd.f32 %v10635, %v10696
  %v10707 = vadd.f32 %v10636, %v10696
  %v10708 = vadd.f32 %v10637, %v10696
  %v10709 = vadd.f32 %v10638, %v10696
  %v10710 = vadd.f32 %v10639, %v10696
  %v10711 = vadd.f32 %v10640, %v10696
  %v10712 = vadd.f32 %v10641, %v10696
  %v10713 = vadd.f32 %v10642, %v10696
  %v10714 = vadd.f32 %v10643, %v10696
  %v10715 = vadd.f32 %v10644, %v10696
  %v10716 = vadd.f32 %v10645, %v10696
  %v10717 = vadd.f32 %v10646, %v10696
  %v10718 = vadd.f32 %v10647, %v10696
  %v10719 = vadd.f32 %v10648, %v10696
  %v10720 = vadd.f32 %v10649, %v10696
  %v10721 = vadd.f32 %v10650, %v10696
  %v10722 = vadd.f32 %v10651, %v10696
  %v10723 = vadd.f32 %v10652, %v10696
  %v10724 = vadd.f32 %v10653, %v10696
  %v10725 = vadd.f32 %v10654, %v10696
  %v10726 = vadd.f32 %v10655, %v10696
  %v10727 = vadd.f32 %v10656, %v10696
  %v10728 = vadd.f32 %v10657, %v10696
  %v10729 = vadd.f32 %v10658, %v10696
  %v10730 = vadd.f32 %v10659, %v10696
  %v10731 = vadd.f32 %v10660, %v10696
  %v10732 = vadd.f32 %v10661, %v10696
  %v10733 = vadd.f32 %v10662, %v10696
  %v10734 = vadd.f32 %v10663, %v10696
  %v10735 = vadd.f32 %v10664, %v10696
  %v10736 = vadd.f32 %v10665, %v10696
  %v10737 = vadd.f32 %v10666, %v10696
  %v10738 = vadd.f32 %v10667, %v10696
  %v10739 = vadd.f32 %v10668, %v10696
  %v10740 = vadd.f32 %v10669, %v10696
  %v10741 = vadd.f32 %v10670, %v10696
  %v10742 = vadd.f32 %v10671, %v10696
  %v10743 = vadd.f32 %v10672, %v10696
  %v10744 = vadd.f32 %v10673, %v10696
  %v10745 = vadd.f32 %v10674, %v10696
  %v10746 = vadd.f32 %v10675, %v10696
  %v10747 = vadd.f32 %v10676, %v10696
  %v10748 = vadd.f32 %v10677, %v10696
  %v10749 = vadd.f32 %v10678, %v10696
  %v10750 = vadd.f32 %v10679, %v10696
  %v10751 = vadd.f32 %v10680, %v10696
  %v10752 = vadd.f32 %v10681, %v10696
  %v10753 = vadd.f32 %v10682, %v10696
  %v10754 = vadd.f32 %v10683, %v10696
  %v10755 = vadd.f32 %v10684, %v10696
  %v10756 = vadd.f32 %v10685, %v10696
  %v10757 = vadd.f32 %v10686, %v10696
  %v10758 = vadd.f32 %v10687, %v10696
  %v10759 = vadd.f32 %v10688, %v10696
  %v10760 = vadd.f32 %v10689, %v10696
  %v10761 = vadd.f32 %v10690, %v10696
  %v10762 = vmax.f32 %v10698, 0.0
  %v10763 = vmax.f32 %v10699, 0.0
  %v10764 = vmax.f32 %v10700, 0.0
  %v10765 = vmax.f32 %v10701, 0.0
  %v10766 = vmax.f32 %v10702, 0.0
  %v10767 = vmax.f32 %v10703, 0.0
  %v10768 = vmax.f32 %v10704, 0.0
  %v10769 = vmax.f32 %v10705, 0.0
  %v10770 = vmax.f32 %v10706, 0.0
  %v10771 = vmax.f32 %v10707, 0.0
  %v10772 = vmax.f32 %v10708, 0.0
  %v10773 = vmax.f32 %v10709, 0.0
  %v10774 = vmax.f32 %v10710, 0.0
  %v10775 = vmax.f32 %v10711, 0.0
  %v10776 = vmax.f32 %v10712, 0.0
  %v10777 = vmax.f32 %v10713, 0.0
  %v10778 = vmax.f32 %v10714, 0.0
  %v10779 = vmax.f32 %v10715, 0.0
  %v10780 = vmax.f32 %v10716, 0.0
  %v10781 = vmax.f32 %v10717, 0.0
  %v10782 = vmax.f32 %v10718, 0.0
  %v10783 = vmax.f32 %v10719, 0.0
  %v10784 = vmax.f32 %v10720, 0.0
  %v10785 = vmax.f32 %v10721, 0.0
  %v10786 = vmax.f32 %v10722, 0.0
  %v10787 = vmax.f32 %v10723, 0.0
  %v10788 = vmax.f32 %v10724, 0.0
  %v10789 = vmax.f32 %v10725, 0.0
  %v10790 = vmax.f32 %v10726, 0.0
  %v10791 = vmax.f32 %v10727, 0.0
  %v10792 = vmax.f32 %v10728, 0.0
  %v10793 = vmax.f32 %v10729, 0.0
  %v10794 = vmax.f32 %v10730, 0.0
  %v10795 = vmax.f32 %v10731, 0.0
  %v10796 = vmax.f32 %v10732, 0.0
  %v10797 = vmax.f32 %v10733, 0.0
  %v10798 = vmax.f32 %v10734, 0.0
  %v10799 = vmax.f32 %v10735, 0.0
  %v10800 = vmax.f32 %v10736, 0.0
  %v10801 = vmax.f32 %v10737, 0.0
  %v10802 = vmax.f32 %v10738, 0.0
  %v10803 = vmax.f32 %v10739, 0.0
  %v10804 = vmax.f32 %v10740, 0.0
  %v10805 = vmax.f32 %v10741, 0.0
  %v10806 = vmax.f32 %v10742, 0.0
  %v10807 = vmax.f32 %v10743, 0.0
  %v10808 = vmax.f32 %v10744, 0.0
  %v10809 = vmax.f32 %v10745, 0.0
  %v10810 = vmax.f32 %v10746, 0.0
  %v10811 = vmax.f32 %v10747, 0.0
  %v10812 = vmax.f32 %v10748, 0.0
  %v10813 = vmax.f32 %v10749, 0.0
  %v10814 = vmax.f32 %v10750, 0.0
  %v10815 = vmax.f32 %v10751, 0.0
  %v10816 = vmax.f32 %v10752, 0.0
  %v10817 = vmax.f32 %v10753, 0.0
  %v10818 = vmax.f32 %v10754, 0.0
  %v10819 = vmax.f32 %v10755, 0.0
  %v10820 = vmax.f32 %v10756, 0.0
  %v10821 = vmax.f32 %v10757, 0.0
  %v10822 = vmax.f32 %v10758, 0.0
  %v10823 = vmax.f32 %v10759, 0.0
  %v10824 = vmax.f32 %v10760, 0.0
  %v10825 = vmax.f32 %v10761, 0.0
  %10826 = vst.msk [vmem:[%s5] sm:$0xff] %vm5470, %v10762
  %10827 = vst.msk [vmem:[%s5 + $0x8] sm:$0xff] %vm5470, %v10763
  %10828 = vst.msk [vmem:[%s5 + $0x10] sm:$0xff] %vm5470, %v10764
  %10829 = vst.msk [vmem:[%s5 + $0x18] sm:$0xff] %vm5470, %v10765
  %10830 = vst.msk [vmem:[%s5 + $0x20] sm:$0xff] %vm5470, %v10766
  %10831 = vst.msk [vmem:[%s5 + $0x28] sm:$0xff] %vm5470, %v10767
  %10832 = vst.msk [vmem:[%s5 + $0x30] sm:$0xff] %vm5470, %v10768
  %10833 = vst.msk [vmem:[%s5 + $0x38] sm:$0xff] %vm5470, %v10769
  %10834 = vst.msk [vmem:[%s5 + $0x40] sm:$0xff] %vm5470, %v10770
  %10835 = vst.msk [vmem:[%s5 + $0x48] sm:$0xff] %vm5470, %v10771
  %10836 = vst.msk [vmem:[%s5 + $0x50] sm:$0xff] %vm5470, %v10772
  %10837 = vst.msk [vmem:[%s5 + $0x58] sm:$0xff] %vm5470, %v10773
  %10838 = vst.msk [vmem:[%s5 + $0x60] sm:$0xff] %vm5470, %v10774
  %10839 = vst.msk [vmem:[%s5 + $0x68] sm:$0xff] %vm5470, %v10775
  %10840 = vst.msk [vmem:[%s5 + $0x70] sm:$0xff] %vm5470, %v10776
  %10841 = vst.msk [vmem:[%s5 + $0x78] sm:$0xff] %vm5470, %v10777
  %10842 = vst.msk [vmem:[%s5 + $0x80] sm:$0xff] %vm5470, %v10778
  %10843 = vst.msk [vmem:[%s5 + $0x88] sm:$0xff] %vm5470, %v10779
  %10844 = vst.msk [vmem:[%s5 + $0x90] sm:$0xff] %vm5470, %v10780
  %10845 = vst.msk [vmem:[%s5 + $0x98] sm:$0xff] %vm5470, %v10781
  %10846 = vst.msk [vmem:[%s5 + $0xa0] sm:$0xff] %vm5470, %v10782
  %10847 = vst.msk [vmem:[%s5 + $0xa8] sm:$0xff] %vm5470, %v10783
  %10848 = vst.msk [vmem:[%s5 + $0xb0] sm:$0xff] %vm5470, %v10784
  %10849 = vst.msk [vmem:[%s5 + $0xb8] sm:$0xff] %vm5470, %v10785
  %10850 = vst.msk [vmem:[%s5 + $0xc0] sm:$0xff] %vm5470, %v10786
  %10851 = vst.msk [vmem:[%s5 + $0xc8] sm:$0xff] %vm5470, %v10787
  %10852 = vst.msk [vmem:[%s5 + $0xd0] sm:$0xff] %vm5470, %v10788
  %10853 = vst.msk [vmem:[%s5 + $0xd8] sm:$0xff] %vm5470, %v10789
  %10854 = vst.msk [vmem:[%s5 + $0xe0] sm:$0xff] %vm5470, %v10790
  %10855 = vst.msk [vmem:[%s5 + $0xe8] sm:$0xff] %vm5470, %v10791
  %10856 = vst.msk [vmem:[%s5 + $0xf0] sm:$0xff] %vm5470, %v10792
  %10857 = vst.msk [vmem:[%s5 + $0xf8] sm:$0xff] %vm5470, %v10793
  %10858 = vst.msk [vmem:[%s5 + $0x100] sm:$0xff] %vm5470, %v10794
  %10859 = vst.msk [vmem:[%s5 + $0x108] sm:$0xff] %vm5470, %v10795
  %10860 = vst.msk [vmem:[%s5 + $0x110] sm:$0xff] %vm5470, %v10796
  %10861 = vst.msk [vmem:[%s5 + $0x118] sm:$0xff] %vm5470, %v10797
  %10862 = vst.msk [vmem:[%s5 + $0x120] sm:$0xff] %vm5470, %v10798
  %10863 = vst.msk [vmem:[%s5 + $0x128] sm:$0xff] %vm5470, %v10799
  %10864 = vst.msk [vmem:[%s5 + $0x130] sm:$0xff] %vm5470, %v10800
  %10865 = vst.msk [vmem:[%s5 + $0x138] sm:$0xff] %vm5470, %v10801
  %10866 = vst.msk [vmem:[%s5 + $0x140] sm:$0xff] %vm5470, %v10802
  %10867 = vst.msk [vmem:[%s5 + $0x148] sm:$0xff] %vm5470, %v10803
  %10868 = vst.msk [vmem:[%s5 + $0x150] sm:$0xff] %vm5470, %v10804
  %10869 = vst.msk [vmem:[%s5 + $0x158] sm:$0xff] %vm5470, %v10805
  %10870 = vst.msk [vmem:[%s5 + $0x160] sm:$0xff] %vm5470, %v10806
  %10871 = vst.msk [vmem:[%s5 + $0x168] sm:$0xff] %vm5470, %v10807
  %10872 = vst.msk [vmem:[%s5 + $0x170] sm:$0xff] %vm5470, %v10808
  %10873 = vst.msk [vmem:[%s5 + $0x178] sm:$0xff] %vm5470, %v10809
  %10874 = vst.msk [vmem:[%s5 + $0x180] sm:$0xff] %vm5470, %v10810
  %10875 = vst.msk [vmem:[%s5 + $0x188] sm:$0xff] %vm5470, %v10811
  %10876 = vst.msk [vmem:[%s5 + $0x190] sm:$0xff] %vm5470, %v10812
  %10877 = vst.msk [vmem:[%s5 + $0x198] sm:$0xff] %vm5470, %v10813
  %10878 = vst.msk [vmem:[%s5 + $0x1a0] sm:$0xff] %vm5470, %v10814
  %10879 = vst.msk [vmem:[%s5 + $0x1a8] sm:$0xff] %vm5470, %v10815
  %10880 = vst.msk [vmem:[%s5 + $0x1b0] sm:$0xff] %vm5470, %v10816
  %10881 = vst.msk [vmem:[%s5 + $0x1b8] sm:$0xff] %vm5470, %v10817
  %10882 = vst.msk [vmem:[%s5 + $0x1c0] sm:$0xff] %vm5470, %v10818
  %10883 = vst.msk [vmem:[%s5 + $0x1c8] sm:$0xff] %vm5470, %v10819
  %10884 = vst.msk [vmem:[%s5 + $0x1d0] sm:$0xff] %vm5470, %v10820
  %10885 = vst.msk [vmem:[%s5 + $0x1d8] sm:$0xff] %vm5470, %v10821
  %10886 = vst.msk [vmem:[%s5 + $0x1e0] sm:$0xff] %vm5470, %v10822
  %10887 = vst.msk [vmem:[%s5 + $0x1e8] sm:$0xff] %vm5470, %v10823
  %10888 = vst.msk [vmem:[%s5 + $0x1f0] sm:$0xff] %vm5470, %v10824
  %10889 = vst.msk [vmem:[%s5 + $0x1f8] sm:$0xff] %vm5470, %v10825
  // Predicated region
  $region22: #{model_forward.2} parent=0 // pred_check
    _
  $region23: #{model_forward.2} parent=0 // pred_check_branch
    %10891 = sbr.rel (0) target = $region25
  $region24: #{model_forward.2} parent=0 // pred_region
    _
  $region25: #{model_forward.2} parent=0 // pred_fallthru
    _
  // Predicated region
  $region26: #{model_forward.2} parent=0 // pred_check
    _
  $region27: #{model_forward.2} parent=0 // pred_check_branch
    %10893 = sbr.rel (0) target = $region29
  $region28: #{model_forward.2} parent=0 // pred_region
    _
  $region29: #{model_forward.2} parent=0 // pred_fallthru
    _

</llo_original>
